<compile_context>
chip_gen: v7x
topology: tpu7x:2x2x1
jax: 0.10.0
libtpu: 0.0.40
codegen_flags: <defaults>
</compile_context>

<pallas_src>
import functools
import math

import jax
import jax.numpy as jnp
from jax import lax
from jax.experimental import pallas as pl
from jax.experimental.pallas import tpu as pltpu

_SQRT_HALF = 0.7071067811865476


def _erf_f32(x):
    # Abramowitz & Stegun 7.1.26 rational approximation, max abs error 1.5e-7.
    # Uses only exp / mul / add / div / where -> safe Mosaic lowering; the exp
    # goes to the EUP slot.
    ax = jnp.abs(x)
    t = 1.0 / (1.0 + 0.3275911 * ax)
    poly = t * (0.254829592 +
                t * (-0.284496736 +
                     t * (1.421413741 +
                          t * (-1.453152027 + t * 1.061405429))))
    y = 1.0 - poly * jnp.exp(-(ax * ax))
    return jnp.where(x < 0.0, -y, y)


def _gelu_exact(x):
    # PyTorch nn.GELU() default = exact erf formulation.
    return 0.5 * x * (1.0 + _erf_f32(x * _SQRT_HALF))


def block_kernel(x_ref, dww_ref, w1_ref, b1_ref, w2_ref, b2_ref, o_ref,
                 pad_ref, *, H, W, C):
    # Per grid step (= one image):
    #   x_ref  : (1, C, H*W)   f32   input, NCHW flattened (lane-dense loads)
    #   dww_ref: (49, C)       f32   depthwise taps, row index = kh*7 + kw
    #   w1_ref : (C, 4C)       bf16  pwconv1 weight (transposed)
    #   b1_ref : (1, 4C)       f32   pwconv1 bias with depthwise bias folded in
    #   w2_ref : (4C, C)       bf16  pwconv2 weight (transposed)
    #   b2_ref : (1, C)        f32
    #   o_ref  : (1, C, H*W)   f32   output, NCHW flattened (lane-dense stores)
    #   pad_ref: (H+6, W+6, C) f32   VMEM scratch: zero-padded image
    HW = H * W

    x_chw = x_ref[0]                         # (C, H*W) lane-dense load
    x_hwc = x_chw.T                          # (H*W, C): XLU transpose -> channels on lanes

    # Build the zero-padded image in VMEM (no padded copy of x ever hits HBM).
    # Re-zeroed every step: cheap (~66 vreg stores), and safe even when the
    # batch grid axis is sharded across TensorCores.
    pad_ref[...] = jnp.zeros_like(pad_ref)
    pad_ref[3:3 + H, 3:3 + W, :] = x_hwc.reshape(H, W, C)

    # ---- depthwise 7x7 conv, stride 1, padding 3 -------------------------
    # Hoist the W-axis (sublane) shift out of the kh loop: 7 sublane-offset
    # loads instead of 49.  Tap rows are tiny (1, C) VMEM loads (cheap vld
    # slots) rather than sublane extracts from a loaded (49, C) value.
    acc = jnp.zeros((H, W, C), jnp.float32)
    for kw in range(7):
        xkw = pad_ref[:, kw:kw + W, :]       # (H+6, W, C)
        for kh in range(7):
            idx = kh * 7 + kw
            tap = dww_ref[idx:idx + 1, :]    # (1, C), broadcasts over (H, W)
            acc = acc + xkw[kh:kh + H] * tap
    acc = acc.reshape(HW, C)                 # trivial reshape (leading dims only)

    # ---- pointwise MLP on the MXU (bf16 inputs, f32 accumulation) --------
    y = jnp.dot(acc.astype(jnp.bfloat16), w1_ref[...],
                preferred_element_type=jnp.float32) + b1_ref[...]
    y = _gelu_exact(y)
    y = jnp.dot(y.astype(jnp.bfloat16), w2_ref[...],
                preferred_element_type=jnp.float32) + b2_ref[...]

    # ---- residual: GELU(input) + branch, stored lane-dense as (C, H*W) ---
    out = _gelu_exact(x_hwc) + y             # (H*W, C)
    o_ref[0] = out.T                         # (C, H*W): 256-lane unmasked stores


def block_forward(x_nchw, params):
    """x_nchw: (B, C, H, W) float32. Returns (B, C, H, W) float32."""
    dw_w, dw_b, w1, b1, w2, b2 = (params["dw_w"], params["dw_b"], params["w1"],
                                  params["b1"], params["w2"], params["b2"])
    B, C, H, W = x_nchw.shape
    C4 = 4 * C
    HW = H * W

    # Pure metadata reshape: NCHW -> (B, C, H*W). No wrapper-side pad/transpose.
    x_flat = x_nchw.reshape(B, C, HW)

    # Depthwise taps as a flat (49, C) table (row = kh*7 + kw).
    dww = jnp.transpose(dw_w[:, 0, :, :], (1, 2, 0)).reshape(49, C)

    # Fold the depthwise bias through pwconv1 (exact in real arithmetic):
    #   (conv + b_dw) @ w1^T + b1  =  conv @ w1^T + (b1 + w1 @ b_dw)
    b1_eff = (b1 + jnp.dot(w1, dw_b)).reshape(1, C4).astype(jnp.float32)
    b2_r = b2.reshape(1, C).astype(jnp.float32)

    # bf16 weights for the MXU (f32 accumulation happens in-kernel).
    w1_t = w1.T.astype(jnp.bfloat16)          # (C, 4C)
    w2_t = w2.T.astype(jnp.bfloat16)          # (4C, C)

    kernel = functools.partial(block_kernel, H=H, W=W, C=C)

    out_flat = pl.pallas_call(
        kernel,
        out_shape=jax.ShapeDtypeStruct((B, C, HW), jnp.float32),
        grid_spec=pltpu.PrefetchScalarGridSpec(
            num_scalar_prefetch=0,
            grid=(B,),                        # parallel over images (2 TCs on v7x)
            in_specs=[
                pl.BlockSpec((1, C, HW), lambda b: (b, 0, 0)),
                pl.BlockSpec((49, C), lambda b: (0, 0)),
                pl.BlockSpec((C, C4), lambda b: (0, 0)),
                pl.BlockSpec((1, C4), lambda b: (0, 0)),
                pl.BlockSpec((C4, C), lambda b: (0, 0)),
                pl.BlockSpec((1, C), lambda b: (0, 0)),
            ],
            out_specs=pl.BlockSpec((1, C, HW), lambda b: (b, 0, 0)),
            scratch_shapes=[pltpu.VMEM((H + 6, W + 6, C), jnp.float32)],
        ),
        compiler_params=pltpu.CompilerParams(
            dimension_semantics=("parallel",),
        ),
    )(x_flat, dww, w1_t, b1_eff, w2_t, b2_r)

    return out_flat.reshape(B, C, H, W)


def block_reference(x_nchw, params):
    """Pure-JAX f32 reference matching the PyTorch forward (exact GELU)."""
    dw_w, dw_b, w1, b1, w2, b2 = (params["dw_w"], params["dw_b"], params["w1"],
                                  params["b1"], params["w2"], params["b2"])
    B, C, H, W = x_nchw.shape
    dw = lax.conv_general_dilated(
        x_nchw, dw_w, window_strides=(1, 1), padding=((3, 3), (3, 3)),
        dimension_numbers=("NCHW", "OIHW", "NCHW"), feature_group_count=C,
        precision=lax.Precision.HIGHEST)
    dw = dw + dw_b[None, :, None, None]
    y = jnp.transpose(dw, (0, 2, 3, 1))                              # NHWC
    y = jnp.einsum("bhwc,dc->bhwd", y, w1,
                   precision=lax.Precision.HIGHEST) + b1
    y = jax.nn.gelu(y, approximate=False)
    y = jnp.einsum("bhwd,cd->bhwc", y, w2,
                   precision=lax.Precision.HIGHEST) + b2
    y = jnp.transpose(y, (0, 3, 1, 2))                               # NCHW
    return jax.nn.gelu(x_nchw, approximate=False) + y


def init_params(key, dim):
    ks = jax.random.split(key, 6)
    scale_dw = 1.0 / math.sqrt(7 * 7)
    scale1 = 1.0 / math.sqrt(dim)
    scale2 = 1.0 / math.sqrt(4 * dim)
    return {
        "dw_w": jax.random.normal(ks[0], (dim, 1, 7, 7), jnp.float32) * scale_dw,
        "dw_b": jax.random.normal(ks[1], (dim,), jnp.float32) * 0.01,
        "w1": jax.random.normal(ks[2], (4 * dim, dim), jnp.float32) * scale1,
        "b1": jax.random.normal(ks[3], (4 * dim,), jnp.float32) * 0.01,
        "w2": jax.random.normal(ks[4], (dim, 4 * dim), jnp.float32) * scale2,
        "b2": jax.random.normal(ks[5], (dim,), jnp.float32) * 0.01,
    }


if __name__ == "__main__":
    key = jax.random.PRNGKey(0)
    k_x, k_p = jax.random.split(key)

    B, dim, H, W = 2, 32, 16, 16
    x = jax.random.normal(k_x, (B, dim, H, W), jnp.float32)
    params = init_params(k_p, dim)

    out = jax.block_until_ready(block_forward(x, params))
    ref = jax.block_until_ready(block_reference(x, params))

    assert out.shape == (B, dim, H, W)
    assert bool(jnp.all(jnp.isfinite(out)))
    # Kernel uses bf16 MXU inputs (f32 accumulation); compare against the
    # f32 HIGHEST-precision reference with a bf16-appropriate tolerance.
    assert bool(jnp.allclose(out, ref, rtol=5e-2, atol=5e-2)), \
        f"max abs diff = {float(jnp.max(jnp.abs(out - ref)))}"

    print("KERNEL_OK")
</pallas_src>

<mosaic_0001>
module attributes {stable_mosaic.version = 11 : i64} {
  func.func @block_kernel(%arg0: i32, %arg1: memref<1x32x256xf32, #tpu.memory_space<vmem>>, %arg2: memref<49x32xf32, #tpu.memory_space<vmem>>, %arg3: memref<32x128xbf16, #tpu.memory_space<vmem>>, %arg4: memref<1x128xf32, #tpu.memory_space<vmem>>, %arg5: memref<128x32xbf16, #tpu.memory_space<vmem>>, %arg6: memref<1x32xf32, #tpu.memory_space<vmem>>, %arg7: memref<1x32x256xf32, #tpu.memory_space<vmem>>, %arg8: memref<22x22x32xf32, #tpu.memory_space<vmem>>) attributes {dimension_semantics = [#tpu.dimension_semantics<parallel>], iteration_bounds = array<i64: 2>, scalar_prefetch = 0 : i64, scratch_operands = 1 : i64, tpu.core_type = #tpu.core_type<tc>, window_params = [{transform_indices = @transform_0, window_bounds = array<i64: 1, 32, 256>}, {pipeline_mode = #tpu.pipeline_mode<synchronous>, transform_indices = @transform_1, window_bounds = array<i64: 49, 32>}, {pipeline_mode = #tpu.pipeline_mode<synchronous>, transform_indices = @transform_2, window_bounds = array<i64: 32, 128>}, {pipeline_mode = #tpu.pipeline_mode<synchronous>, transform_indices = @transform_3, window_bounds = array<i64: 1, 128>}, {pipeline_mode = #tpu.pipeline_mode<synchronous>, transform_indices = @transform_4, window_bounds = array<i64: 128, 32>}, {pipeline_mode = #tpu.pipeline_mode<synchronous>, transform_indices = @transform_5, window_bounds = array<i64: 1, 32>}, {transform_indices = @transform_6, window_bounds = array<i64: 1, 32, 256>}]} {
    %c0 = arith.constant 0 : index
    %c0_0 = arith.constant 0 : index
    %c0_1 = arith.constant 0 : index
    %0 = vector.load %arg1[%c0, %c0_0, %c0_1] : memref<1x32x256xf32, #tpu.memory_space<vmem>>, vector<1x32x256xf32>
    %1 = vector.shape_cast %0 : vector<1x32x256xf32> to vector<32x256xf32>
    %2 = tpu.transpose %1, [1, 0] : vector<32x256xf32> -> vector<256x32xf32>
    %cst = arith.constant 0.000000e+00 : f32
    %3 = vector.broadcast %cst : f32 to vector<22x22x32xf32>
    %c0_2 = arith.constant 0 : index
    %c0_3 = arith.constant 0 : index
    %c0_4 = arith.constant 0 : index
    %4 = vector.load %arg8[%c0_2, %c0_3, %c0_4] : memref<22x22x32xf32, #tpu.memory_space<vmem>>, vector<22x22x32xf32>
    tpu.vector_store %arg8[%c0_2, %c0_3, %c0_4], %3 {strides = array<i32>} : memref<22x22x32xf32, #tpu.memory_space<vmem>>, vector<22x22x32xf32>,
    %5 = vector.shape_cast %2 : vector<256x32xf32> to vector<16x16x32xf32>
    %c3 = arith.constant 3 : index
    %c3_5 = arith.constant 3 : index
    %c0_6 = arith.constant 0 : index
    %6 = vector.load %arg8[%c3, %c3_5, %c0_6] : memref<22x22x32xf32, #tpu.memory_space<vmem>>, vector<16x16x32xf32>
    tpu.vector_store %arg8[%c3, %c3_5, %c0_6], %5 {strides = array<i32>} : memref<22x22x32xf32, #tpu.memory_space<vmem>>, vector<16x16x32xf32>,
    %cst_7 = arith.constant 0.000000e+00 : f32
    %7 = vector.broadcast %cst_7 : f32 to vector<16x16x32xf32>
    %c0_8 = arith.constant 0 : index
    %c0_9 = arith.constant 0 : index
    %c0_10 = arith.constant 0 : index
    %8 = vector.load %arg8[%c0_8, %c0_9, %c0_10] : memref<22x22x32xf32, #tpu.memory_space<vmem>>, vector<22x16x32xf32>
    %c0_11 = arith.constant 0 : index
    %c0_12 = arith.constant 0 : index
    %9 = vector.load %arg2[%c0_11, %c0_12] : memref<49x32xf32, #tpu.memory_space<vmem>>, vector<1x32xf32>
    %10 = vector.extract_strided_slice %8 {offsets = [0, 0, 0], sizes = [16, 16, 32], strides = [1, 1, 1]} : vector<22x16x32xf32> to vector<16x16x32xf32>
    %11 = vector.shape_cast %9 : vector<1x32xf32> to vector<1x1x32xf32>
    %12 = vector.broadcast %11 : vector<1x1x32xf32> to vector<16x16x32xf32>
    %13 = arith.mulf %10, %12 : vector<16x16x32xf32>
    %14 = arith.addf %7, %13 : vector<16x16x32xf32>
    %c7 = arith.constant 7 : index
    %c0_13 = arith.constant 0 : index
    %15 = vector.load %arg2[%c7, %c0_13] : memref<49x32xf32, #tpu.memory_space<vmem>>, vector<1x32xf32>
    %16 = vector.extract_strided_slice %8 {offsets = [1, 0, 0], sizes = [16, 16, 32], strides = [1, 1, 1]} : vector<22x16x32xf32> to vector<16x16x32xf32>
    %17 = vector.shape_cast %15 : vector<1x32xf32> to vector<1x1x32xf32>
    %18 = vector.broadcast %17 : vector<1x1x32xf32> to vector<16x16x32xf32>
    %19 = arith.mulf %16, %18 : vector<16x16x32xf32>
    %20 = arith.addf %14, %19 : vector<16x16x32xf32>
    %c14 = arith.constant 14 : index
    %c0_14 = arith.constant 0 : index
    %21 = vector.load %arg2[%c14, %c0_14] : memref<49x32xf32, #tpu.memory_space<vmem>>, vector<1x32xf32>
    %22 = vector.extract_strided_slice %8 {offsets = [2, 0, 0], sizes = [16, 16, 32], strides = [1, 1, 1]} : vector<22x16x32xf32> to vector<16x16x32xf32>
    %23 = vector.shape_cast %21 : vector<1x32xf32> to vector<1x1x32xf32>
    %24 = vector.broadcast %23 : vector<1x1x32xf32> to vector<16x16x32xf32>
    %25 = arith.mulf %22, %24 : vector<16x16x32xf32>
    %26 = arith.addf %20, %25 : vector<16x16x32xf32>
    %c21 = arith.constant 21 : index
    %c0_15 = arith.constant 0 : index
    %27 = vector.load %arg2[%c21, %c0_15] : memref<49x32xf32, #tpu.memory_space<vmem>>, vector<1x32xf32>
    %28 = vector.extract_strided_slice %8 {offsets = [3, 0, 0], sizes = [16, 16, 32], strides = [1, 1, 1]} : vector<22x16x32xf32> to vector<16x16x32xf32>
    %29 = vector.shape_cast %27 : vector<1x32xf32> to vector<1x1x32xf32>
    %30 = vector.broadcast %29 : vector<1x1x32xf32> to vector<16x16x32xf32>
    %31 = arith.mulf %28, %30 : vector<16x16x32xf32>
    %32 = arith.addf %26, %31 : vector<16x16x32xf32>
    %c28 = arith.constant 28 : index
    %c0_16 = arith.constant 0 : index
    %33 = vector.load %arg2[%c28, %c0_16] : memref<49x32xf32, #tpu.memory_space<vmem>>, vector<1x32xf32>
    %34 = vector.extract_strided_slice %8 {offsets = [4, 0, 0], sizes = [16, 16, 32], strides = [1, 1, 1]} : vector<22x16x32xf32> to vector<16x16x32xf32>
    %35 = vector.shape_cast %33 : vector<1x32xf32> to vector<1x1x32xf32>
    %36 = vector.broadcast %35 : vector<1x1x32xf32> to vector<16x16x32xf32>
    %37 = arith.mulf %34, %36 : vector<16x16x32xf32>
    %38 = arith.addf %32, %37 : vector<16x16x32xf32>
    %c35 = arith.constant 35 : index
    %c0_17 = arith.constant 0 : index
    %39 = vector.load %arg2[%c35, %c0_17] : memref<49x32xf32, #tpu.memory_space<vmem>>, vector<1x32xf32>
    %40 = vector.extract_strided_slice %8 {offsets = [5, 0, 0], sizes = [16, 16, 32], strides = [1, 1, 1]} : vector<22x16x32xf32> to vector<16x16x32xf32>
    %41 = vector.shape_cast %39 : vector<1x32xf32> to vector<1x1x32xf32>
    %42 = vector.broadcast %41 : vector<1x1x32xf32> to vector<16x16x32xf32>
    %43 = arith.mulf %40, %42 : vector<16x16x32xf32>
    %44 = arith.addf %38, %43 : vector<16x16x32xf32>
    %c42 = arith.constant 42 : index
    %c0_18 = arith.constant 0 : index
    %45 = vector.load %arg2[%c42, %c0_18] : memref<49x32xf32, #tpu.memory_space<vmem>>, vector<1x32xf32>
    %46 = vector.extract_strided_slice %8 {offsets = [6, 0, 0], sizes = [16, 16, 32], strides = [1, 1, 1]} : vector<22x16x32xf32> to vector<16x16x32xf32>
    %47 = vector.shape_cast %45 : vector<1x32xf32> to vector<1x1x32xf32>
    %48 = vector.broadcast %47 : vector<1x1x32xf32> to vector<16x16x32xf32>
    %49 = arith.mulf %46, %48 : vector<16x16x32xf32>
    %50 = arith.addf %44, %49 : vector<16x16x32xf32>
    %c0_19 = arith.constant 0 : index
    %c1 = arith.constant 1 : index
    %c0_20 = arith.constant 0 : index
    %51 = vector.load %arg8[%c0_19, %c1, %c0_20] : memref<22x22x32xf32, #tpu.memory_space<vmem>>, vector<22x16x32xf32>
    %c1_21 = arith.constant 1 : index
    %c0_22 = arith.constant 0 : index
    %52 = vector.load %arg2[%c1_21, %c0_22] : memref<49x32xf32, #tpu.memory_space<vmem>>, vector<1x32xf32>
    %53 = vector.extract_strided_slice %51 {offsets = [0, 0, 0], sizes = [16, 16, 32], strides = [1, 1, 1]} : vector<22x16x32xf32> to vector<16x16x32xf32>
    %54 = vector.shape_cast %52 : vector<1x32xf32> to vector<1x1x32xf32>
    %55 = vector.broadcast %54 : vector<1x1x32xf32> to vector<16x16x32xf32>
    %56 = arith.mulf %53, %55 : vector<16x16x32xf32>
    %57 = arith.addf %50, %56 : vector<16x16x32xf32>
    %c8 = arith.constant 8 : index
    %c0_23 = arith.constant 0 : index
    %58 = vector.load %arg2[%c8, %c0_23] : memref<49x32xf32, #tpu.memory_space<vmem>>, vector<1x32xf32>
    %59 = vector.extract_strided_slice %51 {offsets = [1, 0, 0], sizes = [16, 16, 32], strides = [1, 1, 1]} : vector<22x16x32xf32> to vector<16x16x32xf32>
    %60 = vector.shape_cast %58 : vector<1x32xf32> to vector<1x1x32xf32>
    %61 = vector.broadcast %60 : vector<1x1x32xf32> to vector<16x16x32xf32>
    %62 = arith.mulf %59, %61 : vector<16x16x32xf32>
    %63 = arith.addf %57, %62 : vector<16x16x32xf32>
    %c15 = arith.constant 15 : index
    %c0_24 = arith.constant 0 : index
    %64 = vector.load %arg2[%c15, %c0_24] : memref<49x32xf32, #tpu.memory_space<vmem>>, vector<1x32xf32>
    %65 = vector.extract_strided_slice %51 {offsets = [2, 0, 0], sizes = [16, 16, 32], strides = [1, 1, 1]} : vector<22x16x32xf32> to vector<16x16x32xf32>
    %66 = vector.shape_cast %64 : vector<1x32xf32> to vector<1x1x32xf32>
    %67 = vector.broadcast %66 : vector<1x1x32xf32> to vector<16x16x32xf32>
    %68 = arith.mulf %65, %67 : vector<16x16x32xf32>
    %69 = arith.addf %63, %68 : vector<16x16x32xf32>
    %c22 = arith.constant 22 : index
    %c0_25 = arith.constant 0 : index
    %70 = vector.load %arg2[%c22, %c0_25] : memref<49x32xf32, #tpu.memory_space<vmem>>, vector<1x32xf32>
    %71 = vector.extract_strided_slice %51 {offsets = [3, 0, 0], sizes = [16, 16, 32], strides = [1, 1, 1]} : vector<22x16x32xf32> to vector<16x16x32xf32>
    %72 = vector.shape_cast %70 : vector<1x32xf32> to vector<1x1x32xf32>
    %73 = vector.broadcast %72 : vector<1x1x32xf32> to vector<16x16x32xf32>
    %74 = arith.mulf %71, %73 : vector<16x16x32xf32>
    %75 = arith.addf %69, %74 : vector<16x16x32xf32>
    %c29 = arith.constant 29 : index
    %c0_26 = arith.constant 0 : index
    %76 = vector.load %arg2[%c29, %c0_26] : memref<49x32xf32, #tpu.memory_space<vmem>>, vector<1x32xf32>
    %77 = vector.extract_strided_slice %51 {offsets = [4, 0, 0], sizes = [16, 16, 32], strides = [1, 1, 1]} : vector<22x16x32xf32> to vector<16x16x32xf32>
    %78 = vector.shape_cast %76 : vector<1x32xf32> to vector<1x1x32xf32>
    %79 = vector.broadcast %78 : vector<1x1x32xf32> to vector<16x16x32xf32>
    %80 = arith.mulf %77, %79 : vector<16x16x32xf32>
    %81 = arith.addf %75, %80 : vector<16x16x32xf32>
    %c36 = arith.constant 36 : index
    %c0_27 = arith.constant 0 : index
    %82 = vector.load %arg2[%c36, %c0_27] : memref<49x32xf32, #tpu.memory_space<vmem>>, vector<1x32xf32>
    %83 = vector.extract_strided_slice %51 {offsets = [5, 0, 0], sizes = [16, 16, 32], strides = [1, 1, 1]} : vector<22x16x32xf32> to vector<16x16x32xf32>
    %84 = vector.shape_cast %82 : vector<1x32xf32> to vector<1x1x32xf32>
    %85 = vector.broadcast %84 : vector<1x1x32xf32> to vector<16x16x32xf32>
    %86 = arith.mulf %83, %85 : vector<16x16x32xf32>
    %87 = arith.addf %81, %86 : vector<16x16x32xf32>
    %c43 = arith.constant 43 : index
    %c0_28 = arith.constant 0 : index
    %88 = vector.load %arg2[%c43, %c0_28] : memref<49x32xf32, #tpu.memory_space<vmem>>, vector<1x32xf32>
    %89 = vector.extract_strided_slice %51 {offsets = [6, 0, 0], sizes = [16, 16, 32], strides = [1, 1, 1]} : vector<22x16x32xf32> to vector<16x16x32xf32>
    %90 = vector.shape_cast %88 : vector<1x32xf32> to vector<1x1x32xf32>
    %91 = vector.broadcast %90 : vector<1x1x32xf32> to vector<16x16x32xf32>
    %92 = arith.mulf %89, %91 : vector<16x16x32xf32>
    %93 = arith.addf %87, %92 : vector<16x16x32xf32>
    %c0_29 = arith.constant 0 : index
    %c2 = arith.constant 2 : index
    %c0_30 = arith.constant 0 : index
    %94 = vector.load %arg8[%c0_29, %c2, %c0_30] : memref<22x22x32xf32, #tpu.memory_space<vmem>>, vector<22x16x32xf32>
    %c2_31 = arith.constant 2 : index
    %c0_32 = arith.constant 0 : index
    %95 = vector.load %arg2[%c2_31, %c0_32] : memref<49x32xf32, #tpu.memory_space<vmem>>, vector<1x32xf32>
    %96 = vector.extract_strided_slice %94 {offsets = [0, 0, 0], sizes = [16, 16, 32], strides = [1, 1, 1]} : vector<22x16x32xf32> to vector<16x16x32xf32>
    %97 = vector.shape_cast %95 : vector<1x32xf32> to vector<1x1x32xf32>
    %98 = vector.broadcast %97 : vector<1x1x32xf32> to vector<16x16x32xf32>
    %99 = arith.mulf %96, %98 : vector<16x16x32xf32>
    %100 = arith.addf %93, %99 : vector<16x16x32xf32>
    %c9 = arith.constant 9 : index
    %c0_33 = arith.constant 0 : index
    %101 = vector.load %arg2[%c9, %c0_33] : memref<49x32xf32, #tpu.memory_space<vmem>>, vector<1x32xf32>
    %102 = vector.extract_strided_slice %94 {offsets = [1, 0, 0], sizes = [16, 16, 32], strides = [1, 1, 1]} : vector<22x16x32xf32> to vector<16x16x32xf32>
    %103 = vector.shape_cast %101 : vector<1x32xf32> to vector<1x1x32xf32>
    %104 = vector.broadcast %103 : vector<1x1x32xf32> to vector<16x16x32xf32>
    %105 = arith.mulf %102, %104 : vector<16x16x32xf32>
    %106 = arith.addf %100, %105 : vector<16x16x32xf32>
    %c16 = arith.constant 16 : index
    %c0_34 = arith.constant 0 : index
    %107 = vector.load %arg2[%c16, %c0_34] : memref<49x32xf32, #tpu.memory_space<vmem>>, vector<1x32xf32>
    %108 = vector.extract_strided_slice %94 {offsets = [2, 0, 0], sizes = [16, 16, 32], strides = [1, 1, 1]} : vector<22x16x32xf32> to vector<16x16x32xf32>
    %109 = vector.shape_cast %107 : vector<1x32xf32> to vector<1x1x32xf32>
    %110 = vector.broadcast %109 : vector<1x1x32xf32> to vector<16x16x32xf32>
    %111 = arith.mulf %108, %110 : vector<16x16x32xf32>
    %112 = arith.addf %106, %111 : vector<16x16x32xf32>
    %c23 = arith.constant 23 : index
    %c0_35 = arith.constant 0 : index
    %113 = vector.load %arg2[%c23, %c0_35] : memref<49x32xf32, #tpu.memory_space<vmem>>, vector<1x32xf32>
    %114 = vector.extract_strided_slice %94 {offsets = [3, 0, 0], sizes = [16, 16, 32], strides = [1, 1, 1]} : vector<22x16x32xf32> to vector<16x16x32xf32>
    %115 = vector.shape_cast %113 : vector<1x32xf32> to vector<1x1x32xf32>
    %116 = vector.broadcast %115 : vector<1x1x32xf32> to vector<16x16x32xf32>
    %117 = arith.mulf %114, %116 : vector<16x16x32xf32>
    %118 = arith.addf %112, %117 : vector<16x16x32xf32>
    %c30 = arith.constant 30 : index
    %c0_36 = arith.constant 0 : index
    %119 = vector.load %arg2[%c30, %c0_36] : memref<49x32xf32, #tpu.memory_space<vmem>>, vector<1x32xf32>
    %120 = vector.extract_strided_slice %94 {offsets = [4, 0, 0], sizes = [16, 16, 32], strides = [1, 1, 1]} : vector<22x16x32xf32> to vector<16x16x32xf32>
    %121 = vector.shape_cast %119 : vector<1x32xf32> to vector<1x1x32xf32>
    %122 = vector.broadcast %121 : vector<1x1x32xf32> to vector<16x16x32xf32>
    %123 = arith.mulf %120, %122 : vector<16x16x32xf32>
    %124 = arith.addf %118, %123 : vector<16x16x32xf32>
    %c37 = arith.constant 37 : index
    %c0_37 = arith.constant 0 : index
    %125 = vector.load %arg2[%c37, %c0_37] : memref<49x32xf32, #tpu.memory_space<vmem>>, vector<1x32xf32>
    %126 = vector.extract_strided_slice %94 {offsets = [5, 0, 0], sizes = [16, 16, 32], strides = [1, 1, 1]} : vector<22x16x32xf32> to vector<16x16x32xf32>
    %127 = vector.shape_cast %125 : vector<1x32xf32> to vector<1x1x32xf32>
    %128 = vector.broadcast %127 : vector<1x1x32xf32> to vector<16x16x32xf32>
    %129 = arith.mulf %126, %128 : vector<16x16x32xf32>
    %130 = arith.addf %124, %129 : vector<16x16x32xf32>
    %c44 = arith.constant 44 : index
    %c0_38 = arith.constant 0 : index
    %131 = vector.load %arg2[%c44, %c0_38] : memref<49x32xf32, #tpu.memory_space<vmem>>, vector<1x32xf32>
    %132 = vector.extract_strided_slice %94 {offsets = [6, 0, 0], sizes = [16, 16, 32], strides = [1, 1, 1]} : vector<22x16x32xf32> to vector<16x16x32xf32>
    %133 = vector.shape_cast %131 : vector<1x32xf32> to vector<1x1x32xf32>
    %134 = vector.broadcast %133 : vector<1x1x32xf32> to vector<16x16x32xf32>
    %135 = arith.mulf %132, %134 : vector<16x16x32xf32>
    %136 = arith.addf %130, %135 : vector<16x16x32xf32>
    %c0_39 = arith.constant 0 : index
    %c3_40 = arith.constant 3 : index
    %c0_41 = arith.constant 0 : index
    %137 = vector.load %arg8[%c0_39, %c3_40, %c0_41] : memref<22x22x32xf32, #tpu.memory_space<vmem>>, vector<22x16x32xf32>
    %c3_42 = arith.constant 3 : index
    %c0_43 = arith.constant 0 : index
    %138 = vector.load %arg2[%c3_42, %c0_43] : memref<49x32xf32, #tpu.memory_space<vmem>>, vector<1x32xf32>
    %139 = vector.extract_strided_slice %137 {offsets = [0, 0, 0], sizes = [16, 16, 32], strides = [1, 1, 1]} : vector<22x16x32xf32> to vector<16x16x32xf32>
    %140 = vector.shape_cast %138 : vector<1x32xf32> to vector<1x1x32xf32>
    %141 = vector.broadcast %140 : vector<1x1x32xf32> to vector<16x16x32xf32>
    %142 = arith.mulf %139, %141 : vector<16x16x32xf32>
    %143 = arith.addf %136, %142 : vector<16x16x32xf32>
    %c10 = arith.constant 10 : index
    %c0_44 = arith.constant 0 : index
    %144 = vector.load %arg2[%c10, %c0_44] : memref<49x32xf32, #tpu.memory_space<vmem>>, vector<1x32xf32>
    %145 = vector.extract_strided_slice %137 {offsets = [1, 0, 0], sizes = [16, 16, 32], strides = [1, 1, 1]} : vector<22x16x32xf32> to vector<16x16x32xf32>
    %146 = vector.shape_cast %144 : vector<1x32xf32> to vector<1x1x32xf32>
    %147 = vector.broadcast %146 : vector<1x1x32xf32> to vector<16x16x32xf32>
    %148 = arith.mulf %145, %147 : vector<16x16x32xf32>
    %149 = arith.addf %143, %148 : vector<16x16x32xf32>
    %c17 = arith.constant 17 : index
    %c0_45 = arith.constant 0 : index
    %150 = vector.load %arg2[%c17, %c0_45] : memref<49x32xf32, #tpu.memory_space<vmem>>, vector<1x32xf32>
    %151 = vector.extract_strided_slice %137 {offsets = [2, 0, 0], sizes = [16, 16, 32], strides = [1, 1, 1]} : vector<22x16x32xf32> to vector<16x16x32xf32>
    %152 = vector.shape_cast %150 : vector<1x32xf32> to vector<1x1x32xf32>
    %153 = vector.broadcast %152 : vector<1x1x32xf32> to vector<16x16x32xf32>
    %154 = arith.mulf %151, %153 : vector<16x16x32xf32>
    %155 = arith.addf %149, %154 : vector<16x16x32xf32>
    %c24 = arith.constant 24 : index
    %c0_46 = arith.constant 0 : index
    %156 = vector.load %arg2[%c24, %c0_46] : memref<49x32xf32, #tpu.memory_space<vmem>>, vector<1x32xf32>
    %157 = vector.extract_strided_slice %137 {offsets = [3, 0, 0], sizes = [16, 16, 32], strides = [1, 1, 1]} : vector<22x16x32xf32> to vector<16x16x32xf32>
    %158 = vector.shape_cast %156 : vector<1x32xf32> to vector<1x1x32xf32>
    %159 = vector.broadcast %158 : vector<1x1x32xf32> to vector<16x16x32xf32>
    %160 = arith.mulf %157, %159 : vector<16x16x32xf32>
    %161 = arith.addf %155, %160 : vector<16x16x32xf32>
    %c31 = arith.constant 31 : index
    %c0_47 = arith.constant 0 : index
    %162 = vector.load %arg2[%c31, %c0_47] : memref<49x32xf32, #tpu.memory_space<vmem>>, vector<1x32xf32>
    %163 = vector.extract_strided_slice %137 {offsets = [4, 0, 0], sizes = [16, 16, 32], strides = [1, 1, 1]} : vector<22x16x32xf32> to vector<16x16x32xf32>
    %164 = vector.shape_cast %162 : vector<1x32xf32> to vector<1x1x32xf32>
    %165 = vector.broadcast %164 : vector<1x1x32xf32> to vector<16x16x32xf32>
    %166 = arith.mulf %163, %165 : vector<16x16x32xf32>
    %167 = arith.addf %161, %166 : vector<16x16x32xf32>
    %c38 = arith.constant 38 : index
    %c0_48 = arith.constant 0 : index
    %168 = vector.load %arg2[%c38, %c0_48] : memref<49x32xf32, #tpu.memory_space<vmem>>, vector<1x32xf32>
    %169 = vector.extract_strided_slice %137 {offsets = [5, 0, 0], sizes = [16, 16, 32], strides = [1, 1, 1]} : vector<22x16x32xf32> to vector<16x16x32xf32>
    %170 = vector.shape_cast %168 : vector<1x32xf32> to vector<1x1x32xf32>
    %171 = vector.broadcast %170 : vector<1x1x32xf32> to vector<16x16x32xf32>
    %172 = arith.mulf %169, %171 : vector<16x16x32xf32>
    %173 = arith.addf %167, %172 : vector<16x16x32xf32>
    %c45 = arith.constant 45 : index
    %c0_49 = arith.constant 0 : index
    %174 = vector.load %arg2[%c45, %c0_49] : memref<49x32xf32, #tpu.memory_space<vmem>>, vector<1x32xf32>
    %175 = vector.extract_strided_slice %137 {offsets = [6, 0, 0], sizes = [16, 16, 32], strides = [1, 1, 1]} : vector<22x16x32xf32> to vector<16x16x32xf32>
    %176 = vector.shape_cast %174 : vector<1x32xf32> to vector<1x1x32xf32>
    %177 = vector.broadcast %176 : vector<1x1x32xf32> to vector<16x16x32xf32>
    %178 = arith.mulf %175, %177 : vector<16x16x32xf32>
    %179 = arith.addf %173, %178 : vector<16x16x32xf32>
    %c0_50 = arith.constant 0 : index
    %c4 = arith.constant 4 : index
    %c0_51 = arith.constant 0 : index
    %180 = vector.load %arg8[%c0_50, %c4, %c0_51] : memref<22x22x32xf32, #tpu.memory_space<vmem>>, vector<22x16x32xf32>
    %c4_52 = arith.constant 4 : index
    %c0_53 = arith.constant 0 : index
    %181 = vector.load %arg2[%c4_52, %c0_53] : memref<49x32xf32, #tpu.memory_space<vmem>>, vector<1x32xf32>
    %182 = vector.extract_strided_slice %180 {offsets = [0, 0, 0], sizes = [16, 16, 32], strides = [1, 1, 1]} : vector<22x16x32xf32> to vector<16x16x32xf32>
    %183 = vector.shape_cast %181 : vector<1x32xf32> to vector<1x1x32xf32>
    %184 = vector.broadcast %183 : vector<1x1x32xf32> to vector<16x16x32xf32>
    %185 = arith.mulf %182, %184 : vector<16x16x32xf32>
    %186 = arith.addf %179, %185 : vector<16x16x32xf32>
    %c11 = arith.constant 11 : index
    %c0_54 = arith.constant 0 : index
    %187 = vector.load %arg2[%c11, %c0_54] : memref<49x32xf32, #tpu.memory_space<vmem>>, vector<1x32xf32>
    %188 = vector.extract_strided_slice %180 {offsets = [1, 0, 0], sizes = [16, 16, 32], strides = [1, 1, 1]} : vector<22x16x32xf32> to vector<16x16x32xf32>
    %189 = vector.shape_cast %187 : vector<1x32xf32> to vector<1x1x32xf32>
    %190 = vector.broadcast %189 : vector<1x1x32xf32> to vector<16x16x32xf32>
    %191 = arith.mulf %188, %190 : vector<16x16x32xf32>
    %192 = arith.addf %186, %191 : vector<16x16x32xf32>
    %c18 = arith.constant 18 : index
    %c0_55 = arith.constant 0 : index
    %193 = vector.load %arg2[%c18, %c0_55] : memref<49x32xf32, #tpu.memory_space<vmem>>, vector<1x32xf32>
    %194 = vector.extract_strided_slice %180 {offsets = [2, 0, 0], sizes = [16, 16, 32], strides = [1, 1, 1]} : vector<22x16x32xf32> to vector<16x16x32xf32>
    %195 = vector.shape_cast %193 : vector<1x32xf32> to vector<1x1x32xf32>
    %196 = vector.broadcast %195 : vector<1x1x32xf32> to vector<16x16x32xf32>
    %197 = arith.mulf %194, %196 : vector<16x16x32xf32>
    %198 = arith.addf %192, %197 : vector<16x16x32xf32>
    %c25 = arith.constant 25 : index
    %c0_56 = arith.constant 0 : index
    %199 = vector.load %arg2[%c25, %c0_56] : memref<49x32xf32, #tpu.memory_space<vmem>>, vector<1x32xf32>
    %200 = vector.extract_strided_slice %180 {offsets = [3, 0, 0], sizes = [16, 16, 32], strides = [1, 1, 1]} : vector<22x16x32xf32> to vector<16x16x32xf32>
    %201 = vector.shape_cast %199 : vector<1x32xf32> to vector<1x1x32xf32>
    %202 = vector.broadcast %201 : vector<1x1x32xf32> to vector<16x16x32xf32>
    %203 = arith.mulf %200, %202 : vector<16x16x32xf32>
    %204 = arith.addf %198, %203 : vector<16x16x32xf32>
    %c32 = arith.constant 32 : index
    %c0_57 = arith.constant 0 : index
    %205 = vector.load %arg2[%c32, %c0_57] : memref<49x32xf32, #tpu.memory_space<vmem>>, vector<1x32xf32>
    %206 = vector.extract_strided_slice %180 {offsets = [4, 0, 0], sizes = [16, 16, 32], strides = [1, 1, 1]} : vector<22x16x32xf32> to vector<16x16x32xf32>
    %207 = vector.shape_cast %205 : vector<1x32xf32> to vector<1x1x32xf32>
    %208 = vector.broadcast %207 : vector<1x1x32xf32> to vector<16x16x32xf32>
    %209 = arith.mulf %206, %208 : vector<16x16x32xf32>
    %210 = arith.addf %204, %209 : vector<16x16x32xf32>
    %c39 = arith.constant 39 : index
    %c0_58 = arith.constant 0 : index
    %211 = vector.load %arg2[%c39, %c0_58] : memref<49x32xf32, #tpu.memory_space<vmem>>, vector<1x32xf32>
    %212 = vector.extract_strided_slice %180 {offsets = [5, 0, 0], sizes = [16, 16, 32], strides = [1, 1, 1]} : vector<22x16x32xf32> to vector<16x16x32xf32>
    %213 = vector.shape_cast %211 : vector<1x32xf32> to vector<1x1x32xf32>
    %214 = vector.broadcast %213 : vector<1x1x32xf32> to vector<16x16x32xf32>
    %215 = arith.mulf %212, %214 : vector<16x16x32xf32>
    %216 = arith.addf %210, %215 : vector<16x16x32xf32>
    %c46 = arith.constant 46 : index
    %c0_59 = arith.constant 0 : index
    %217 = vector.load %arg2[%c46, %c0_59] : memref<49x32xf32, #tpu.memory_space<vmem>>, vector<1x32xf32>
    %218 = vector.extract_strided_slice %180 {offsets = [6, 0, 0], sizes = [16, 16, 32], strides = [1, 1, 1]} : vector<22x16x32xf32> to vector<16x16x32xf32>
    %219 = vector.shape_cast %217 : vector<1x32xf32> to vector<1x1x32xf32>
    %220 = vector.broadcast %219 : vector<1x1x32xf32> to vector<16x16x32xf32>
    %221 = arith.mulf %218, %220 : vector<16x16x32xf32>
    %222 = arith.addf %216, %221 : vector<16x16x32xf32>
    %c0_60 = arith.constant 0 : index
    %c5 = arith.constant 5 : index
    %c0_61 = arith.constant 0 : index
    %223 = vector.load %arg8[%c0_60, %c5, %c0_61] : memref<22x22x32xf32, #tpu.memory_space<vmem>>, vector<22x16x32xf32>
    %c5_62 = arith.constant 5 : index
    %c0_63 = arith.constant 0 : index
    %224 = vector.load %arg2[%c5_62, %c0_63] : memref<49x32xf32, #tpu.memory_space<vmem>>, vector<1x32xf32>
    %225 = vector.extract_strided_slice %223 {offsets = [0, 0, 0], sizes = [16, 16, 32], strides = [1, 1, 1]} : vector<22x16x32xf32> to vector<16x16x32xf32>
    %226 = vector.shape_cast %224 : vector<1x32xf32> to vector<1x1x32xf32>
    %227 = vector.broadcast %226 : vector<1x1x32xf32> to vector<16x16x32xf32>
    %228 = arith.mulf %225, %227 : vector<16x16x32xf32>
    %229 = arith.addf %222, %228 : vector<16x16x32xf32>
    %c12 = arith.constant 12 : index
    %c0_64 = arith.constant 0 : index
    %230 = vector.load %arg2[%c12, %c0_64] : memref<49x32xf32, #tpu.memory_space<vmem>>, vector<1x32xf32>
    %231 = vector.extract_strided_slice %223 {offsets = [1, 0, 0], sizes = [16, 16, 32], strides = [1, 1, 1]} : vector<22x16x32xf32> to vector<16x16x32xf32>
    %232 = vector.shape_cast %230 : vector<1x32xf32> to vector<1x1x32xf32>
    %233 = vector.broadcast %232 : vector<1x1x32xf32> to vector<16x16x32xf32>
    %234 = arith.mulf %231, %233 : vector<16x16x32xf32>
    %235 = arith.addf %229, %234 : vector<16x16x32xf32>
    %c19 = arith.constant 19 : index
    %c0_65 = arith.constant 0 : index
    %236 = vector.load %arg2[%c19, %c0_65] : memref<49x32xf32, #tpu.memory_space<vmem>>, vector<1x32xf32>
    %237 = vector.extract_strided_slice %223 {offsets = [2, 0, 0], sizes = [16, 16, 32], strides = [1, 1, 1]} : vector<22x16x32xf32> to vector<16x16x32xf32>
    %238 = vector.shape_cast %236 : vector<1x32xf32> to vector<1x1x32xf32>
    %239 = vector.broadcast %238 : vector<1x1x32xf32> to vector<16x16x32xf32>
    %240 = arith.mulf %237, %239 : vector<16x16x32xf32>
    %241 = arith.addf %235, %240 : vector<16x16x32xf32>
    %c26 = arith.constant 26 : index
    %c0_66 = arith.constant 0 : index
    %242 = vector.load %arg2[%c26, %c0_66] : memref<49x32xf32, #tpu.memory_space<vmem>>, vector<1x32xf32>
    %243 = vector.extract_strided_slice %223 {offsets = [3, 0, 0], sizes = [16, 16, 32], strides = [1, 1, 1]} : vector<22x16x32xf32> to vector<16x16x32xf32>
    %244 = vector.shape_cast %242 : vector<1x32xf32> to vector<1x1x32xf32>
    %245 = vector.broadcast %244 : vector<1x1x32xf32> to vector<16x16x32xf32>
    %246 = arith.mulf %243, %245 : vector<16x16x32xf32>
    %247 = arith.addf %241, %246 : vector<16x16x32xf32>
    %c33 = arith.constant 33 : index
    %c0_67 = arith.constant 0 : index
    %248 = vector.load %arg2[%c33, %c0_67] : memref<49x32xf32, #tpu.memory_space<vmem>>, vector<1x32xf32>
    %249 = vector.extract_strided_slice %223 {offsets = [4, 0, 0], sizes = [16, 16, 32], strides = [1, 1, 1]} : vector<22x16x32xf32> to vector<16x16x32xf32>
    %250 = vector.shape_cast %248 : vector<1x32xf32> to vector<1x1x32xf32>
    %251 = vector.broadcast %250 : vector<1x1x32xf32> to vector<16x16x32xf32>
    %252 = arith.mulf %249, %251 : vector<16x16x32xf32>
    %253 = arith.addf %247, %252 : vector<16x16x32xf32>
    %c40 = arith.constant 40 : index
    %c0_68 = arith.constant 0 : index
    %254 = vector.load %arg2[%c40, %c0_68] : memref<49x32xf32, #tpu.memory_space<vmem>>, vector<1x32xf32>
    %255 = vector.extract_strided_slice %223 {offsets = [5, 0, 0], sizes = [16, 16, 32], strides = [1, 1, 1]} : vector<22x16x32xf32> to vector<16x16x32xf32>
    %256 = vector.shape_cast %254 : vector<1x32xf32> to vector<1x1x32xf32>
    %257 = vector.broadcast %256 : vector<1x1x32xf32> to vector<16x16x32xf32>
    %258 = arith.mulf %255, %257 : vector<16x16x32xf32>
    %259 = arith.addf %253, %258 : vector<16x16x32xf32>
    %c47 = arith.constant 47 : index
    %c0_69 = arith.constant 0 : index
    %260 = vector.load %arg2[%c47, %c0_69] : memref<49x32xf32, #tpu.memory_space<vmem>>, vector<1x32xf32>
    %261 = vector.extract_strided_slice %223 {offsets = [6, 0, 0], sizes = [16, 16, 32], strides = [1, 1, 1]} : vector<22x16x32xf32> to vector<16x16x32xf32>
    %262 = vector.shape_cast %260 : vector<1x32xf32> to vector<1x1x32xf32>
    %263 = vector.broadcast %262 : vector<1x1x32xf32> to vector<16x16x32xf32>
    %264 = arith.mulf %261, %263 : vector<16x16x32xf32>
    %265 = arith.addf %259, %264 : vector<16x16x32xf32>
    %c0_70 = arith.constant 0 : index
    %c6 = arith.constant 6 : index
    %c0_71 = arith.constant 0 : index
    %266 = vector.load %arg8[%c0_70, %c6, %c0_71] : memref<22x22x32xf32, #tpu.memory_space<vmem>>, vector<22x16x32xf32>
    %c6_72 = arith.constant 6 : index
    %c0_73 = arith.constant 0 : index
    %267 = vector.load %arg2[%c6_72, %c0_73] : memref<49x32xf32, #tpu.memory_space<vmem>>, vector<1x32xf32>
    %268 = vector.extract_strided_slice %266 {offsets = [0, 0, 0], sizes = [16, 16, 32], strides = [1, 1, 1]} : vector<22x16x32xf32> to vector<16x16x32xf32>
    %269 = vector.shape_cast %267 : vector<1x32xf32> to vector<1x1x32xf32>
    %270 = vector.broadcast %269 : vector<1x1x32xf32> to vector<16x16x32xf32>
    %271 = arith.mulf %268, %270 : vector<16x16x32xf32>
    %272 = arith.addf %265, %271 : vector<16x16x32xf32>
    %c13 = arith.constant 13 : index
    %c0_74 = arith.constant 0 : index
    %273 = vector.load %arg2[%c13, %c0_74] : memref<49x32xf32, #tpu.memory_space<vmem>>, vector<1x32xf32>
    %274 = vector.extract_strided_slice %266 {offsets = [1, 0, 0], sizes = [16, 16, 32], strides = [1, 1, 1]} : vector<22x16x32xf32> to vector<16x16x32xf32>
    %275 = vector.shape_cast %273 : vector<1x32xf32> to vector<1x1x32xf32>
    %276 = vector.broadcast %275 : vector<1x1x32xf32> to vector<16x16x32xf32>
    %277 = arith.mulf %274, %276 : vector<16x16x32xf32>
    %278 = arith.addf %272, %277 : vector<16x16x32xf32>
    %c20 = arith.constant 20 : index
    %c0_75 = arith.constant 0 : index
    %279 = vector.load %arg2[%c20, %c0_75] : memref<49x32xf32, #tpu.memory_space<vmem>>, vector<1x32xf32>
    %280 = vector.extract_strided_slice %266 {offsets = [2, 0, 0], sizes = [16, 16, 32], strides = [1, 1, 1]} : vector<22x16x32xf32> to vector<16x16x32xf32>
    %281 = vector.shape_cast %279 : vector<1x32xf32> to vector<1x1x32xf32>
    %282 = vector.broadcast %281 : vector<1x1x32xf32> to vector<16x16x32xf32>
    %283 = arith.mulf %280, %282 : vector<16x16x32xf32>
    %284 = arith.addf %278, %283 : vector<16x16x32xf32>
    %c27 = arith.constant 27 : index
    %c0_76 = arith.constant 0 : index
    %285 = vector.load %arg2[%c27, %c0_76] : memref<49x32xf32, #tpu.memory_space<vmem>>, vector<1x32xf32>
    %286 = vector.extract_strided_slice %266 {offsets = [3, 0, 0], sizes = [16, 16, 32], strides = [1, 1, 1]} : vector<22x16x32xf32> to vector<16x16x32xf32>
    %287 = vector.shape_cast %285 : vector<1x32xf32> to vector<1x1x32xf32>
    %288 = vector.broadcast %287 : vector<1x1x32xf32> to vector<16x16x32xf32>
    %289 = arith.mulf %286, %288 : vector<16x16x32xf32>
    %290 = arith.addf %284, %289 : vector<16x16x32xf32>
    %c34 = arith.constant 34 : index
    %c0_77 = arith.constant 0 : index
    %291 = vector.load %arg2[%c34, %c0_77] : memref<49x32xf32, #tpu.memory_space<vmem>>, vector<1x32xf32>
    %292 = vector.extract_strided_slice %266 {offsets = [4, 0, 0], sizes = [16, 16, 32], strides = [1, 1, 1]} : vector<22x16x32xf32> to vector<16x16x32xf32>
    %293 = vector.shape_cast %291 : vector<1x32xf32> to vector<1x1x32xf32>
    %294 = vector.broadcast %293 : vector<1x1x32xf32> to vector<16x16x32xf32>
    %295 = arith.mulf %292, %294 : vector<16x16x32xf32>
    %296 = arith.addf %290, %295 : vector<16x16x32xf32>
    %c41 = arith.constant 41 : index
    %c0_78 = arith.constant 0 : index
    %297 = vector.load %arg2[%c41, %c0_78] : memref<49x32xf32, #tpu.memory_space<vmem>>, vector<1x32xf32>
    %298 = vector.extract_strided_slice %266 {offsets = [5, 0, 0], sizes = [16, 16, 32], strides = [1, 1, 1]} : vector<22x16x32xf32> to vector<16x16x32xf32>
    %299 = vector.shape_cast %297 : vector<1x32xf32> to vector<1x1x32xf32>
    %300 = vector.broadcast %299 : vector<1x1x32xf32> to vector<16x16x32xf32>
    %301 = arith.mulf %298, %300 : vector<16x16x32xf32>
    %302 = arith.addf %296, %301 : vector<16x16x32xf32>
    %c48 = arith.constant 48 : index
    %c0_79 = arith.constant 0 : index
    %303 = vector.load %arg2[%c48, %c0_79] : memref<49x32xf32, #tpu.memory_space<vmem>>, vector<1x32xf32>
    %304 = vector.extract_strided_slice %266 {offsets = [6, 0, 0], sizes = [16, 16, 32], strides = [1, 1, 1]} : vector<22x16x32xf32> to vector<16x16x32xf32>
    %305 = vector.shape_cast %303 : vector<1x32xf32> to vector<1x1x32xf32>
    %306 = vector.broadcast %305 : vector<1x1x32xf32> to vector<16x16x32xf32>
    %307 = arith.mulf %304, %306 : vector<16x16x32xf32>
    %308 = arith.addf %302, %307 : vector<16x16x32xf32>
    %309 = vector.shape_cast %308 : vector<16x16x32xf32> to vector<256x32xf32>
    %310 = arith.truncf %309 : vector<256x32xf32> to vector<256x32xbf16>
    %c0_80 = arith.constant 0 : index
    %c0_81 = arith.constant 0 : index
    %311 = vector.load %arg3[%c0_80, %c0_81] : memref<32x128xbf16, #tpu.memory_space<vmem>>, vector<32x128xbf16>
    %cst_82 = arith.constant dense<0.000000e+00> : vector<256x128xf32>
    %312 = tpu.matmul %310, %311, %cst_82 {dimension_numbers = #tpu.dot_dimension_numbers<[1], [0], [0], [1], [0, 0, 1, 1], [], []>} : vector<256x32xbf16>, vector<32x128xbf16>, vector<256x128xf32> -> vector<256x128xf32>
    %c0_83 = arith.constant 0 : index
    %c0_84 = arith.constant 0 : index
    %313 = vector.load %arg4[%c0_83, %c0_84] : memref<1x128xf32, #tpu.memory_space<vmem>>, vector<1x128xf32>
    %314 = vector.broadcast %313 : vector<1x128xf32> to vector<256x128xf32>
    %315 = arith.addf %312, %314 : vector<256x128xf32>
    %cst_85 = arith.constant 5.000000e-01 : f32
    %316 = vector.broadcast %cst_85 : f32 to vector<256x128xf32>
    %317 = arith.mulf %316, %315 : vector<256x128xf32>
    %cst_86 = arith.constant 0.707106769 : f32
    %318 = vector.broadcast %cst_86 : f32 to vector<256x128xf32>
    %319 = arith.mulf %315, %318 : vector<256x128xf32>
    %320 = math.absf %319 : vector<256x128xf32>
    %cst_87 = arith.constant 0.327591091 : f32
    %321 = vector.broadcast %cst_87 : f32 to vector<256x128xf32>
    %322 = arith.mulf %321, %320 : vector<256x128xf32>
    %cst_88 = arith.constant 1.000000e+00 : f32
    %323 = vector.broadcast %cst_88 : f32 to vector<256x128xf32>
    %324 = arith.addf %323, %322 : vector<256x128xf32>
    %cst_89 = arith.constant 1.000000e+00 : f32
    %325 = vector.broadcast %cst_89 : f32 to vector<256x128xf32>
    %326 = arith.divf %325, %324 : vector<256x128xf32>
    %cst_90 = arith.constant 1.06140542 : f32
    %327 = vector.broadcast %cst_90 : f32 to vector<256x128xf32>
    %328 = arith.mulf %326, %327 : vector<256x128xf32>
    %cst_91 = arith.constant -1.45315206 : f32
    %329 = vector.broadcast %cst_91 : f32 to vector<256x128xf32>
    %330 = arith.addf %329, %328 : vector<256x128xf32>
    %331 = arith.mulf %326, %330 : vector<256x128xf32>
    %cst_92 = arith.constant 1.42141378 : f32
    %332 = vector.broadcast %cst_92 : f32 to vector<256x128xf32>
    %333 = arith.addf %332, %331 : vector<256x128xf32>
    %334 = arith.mulf %326, %333 : vector<256x128xf32>
    %cst_93 = arith.constant -0.284496725 : f32
    %335 = vector.broadcast %cst_93 : f32 to vector<256x128xf32>
    %336 = arith.addf %335, %334 : vector<256x128xf32>
    %337 = arith.mulf %326, %336 : vector<256x128xf32>
    %cst_94 = arith.constant 0.254829586 : f32
    %338 = vector.broadcast %cst_94 : f32 to vector<256x128xf32>
    %339 = arith.addf %338, %337 : vector<256x128xf32>
    %340 = arith.mulf %326, %339 : vector<256x128xf32>
    %341 = arith.mulf %320, %320 : vector<256x128xf32>
    %cst_95 = arith.constant 0.000000e+00 : f32
    %342 = vector.broadcast %cst_95 : f32 to vector<256x128xf32>
    %343 = arith.subf %342, %341 : vector<256x128xf32>
    %344 = math.exp %343 : vector<256x128xf32>
    %345 = arith.mulf %340, %344 : vector<256x128xf32>
    %cst_96 = arith.constant 1.000000e+00 : f32
    %346 = vector.broadcast %cst_96 : f32 to vector<256x128xf32>
    %347 = arith.subf %346, %345 : vector<256x128xf32>
    %cst_97 = arith.constant 0.000000e+00 : f32
    %348 = vector.broadcast %cst_97 : f32 to vector<256x128xf32>
    %349 = arith.cmpf olt, %319, %348 : vector<256x128xf32>
    %cst_98 = arith.constant 0.000000e+00 : f32
    %350 = vector.broadcast %cst_98 : f32 to vector<256x128xf32>
    %351 = arith.subf %350, %347 : vector<256x128xf32>
    %352 = arith.select %349, %351, %347 : vector<256x128xi1>, vector<256x128xf32>
    %cst_99 = arith.constant 1.000000e+00 : f32
    %353 = vector.broadcast %cst_99 : f32 to vector<256x128xf32>
    %354 = arith.addf %353, %352 : vector<256x128xf32>
    %355 = arith.mulf %317, %354 : vector<256x128xf32>
    %356 = arith.truncf %355 : vector<256x128xf32> to vector<256x128xbf16>
    %c0_100 = arith.constant 0 : index
    %c0_101 = arith.constant 0 : index
    %357 = vector.load %arg5[%c0_100, %c0_101] : memref<128x32xbf16, #tpu.memory_space<vmem>>, vector<128x32xbf16>
    %cst_102 = arith.constant dense<0.000000e+00> : vector<256x32xf32>
    %358 = tpu.matmul %356, %357, %cst_102 {dimension_numbers = #tpu.dot_dimension_numbers<[1], [0], [0], [1], [0, 0, 1, 1], [], []>} : vector<256x128xbf16>, vector<128x32xbf16>, vector<256x32xf32> -> vector<256x32xf32>
    %c0_103 = arith.constant 0 : index
    %c0_104 = arith.constant 0 : index
    %359 = vector.load %arg6[%c0_103, %c0_104] : memref<1x32xf32, #tpu.memory_space<vmem>>, vector<1x32xf32>
    %360 = vector.broadcast %359 : vector<1x32xf32> to vector<256x32xf32>
    %361 = arith.addf %358, %360 : vector<256x32xf32>
    %cst_105 = arith.constant 5.000000e-01 : f32
    %362 = vector.broadcast %cst_105 : f32 to vector<256x32xf32>
    %363 = arith.mulf %362, %2 : vector<256x32xf32>
    %cst_106 = arith.constant 0.707106769 : f32
    %364 = vector.broadcast %cst_106 : f32 to vector<256x32xf32>
    %365 = arith.mulf %2, %364 : vector<256x32xf32>
    %366 = math.absf %365 : vector<256x32xf32>
    %cst_107 = arith.constant 0.327591091 : f32
    %367 = vector.broadcast %cst_107 : f32 to vector<256x32xf32>
    %368 = arith.mulf %367, %366 : vector<256x32xf32>
    %cst_108 = arith.constant 1.000000e+00 : f32
    %369 = vector.broadcast %cst_108 : f32 to vector<256x32xf32>
    %370 = arith.addf %369, %368 : vector<256x32xf32>
    %cst_109 = arith.constant 1.000000e+00 : f32
    %371 = vector.broadcast %cst_109 : f32 to vector<256x32xf32>
    %372 = arith.divf %371, %370 : vector<256x32xf32>
    %cst_110 = arith.constant 1.06140542 : f32
    %373 = vector.broadcast %cst_110 : f32 to vector<256x32xf32>
    %374 = arith.mulf %372, %373 : vector<256x32xf32>
    %cst_111 = arith.constant -1.45315206 : f32
    %375 = vector.broadcast %cst_111 : f32 to vector<256x32xf32>
    %376 = arith.addf %375, %374 : vector<256x32xf32>
    %377 = arith.mulf %372, %376 : vector<256x32xf32>
    %cst_112 = arith.constant 1.42141378 : f32
    %378 = vector.broadcast %cst_112 : f32 to vector<256x32xf32>
    %379 = arith.addf %378, %377 : vector<256x32xf32>
    %380 = arith.mulf %372, %379 : vector<256x32xf32>
    %cst_113 = arith.constant -0.284496725 : f32
    %381 = vector.broadcast %cst_113 : f32 to vector<256x32xf32>
    %382 = arith.addf %381, %380 : vector<256x32xf32>
    %383 = arith.mulf %372, %382 : vector<256x32xf32>
    %cst_114 = arith.constant 0.254829586 : f32
    %384 = vector.broadcast %cst_114 : f32 to vector<256x32xf32>
    %385 = arith.addf %384, %383 : vector<256x32xf32>
    %386 = arith.mulf %372, %385 : vector<256x32xf32>
    %387 = arith.mulf %366, %366 : vector<256x32xf32>
    %cst_115 = arith.constant 0.000000e+00 : f32
    %388 = vector.broadcast %cst_115 : f32 to vector<256x32xf32>
    %389 = arith.subf %388, %387 : vector<256x32xf32>
    %390 = math.exp %389 : vector<256x32xf32>
    %391 = arith.mulf %386, %390 : vector<256x32xf32>
    %cst_116 = arith.constant 1.000000e+00 : f32
    %392 = vector.broadcast %cst_116 : f32 to vector<256x32xf32>
    %393 = arith.subf %392, %391 : vector<256x32xf32>
    %cst_117 = arith.constant 0.000000e+00 : f32
    %394 = vector.broadcast %cst_117 : f32 to vector<256x32xf32>
    %395 = arith.cmpf olt, %365, %394 : vector<256x32xf32>
    %cst_118 = arith.constant 0.000000e+00 : f32
    %396 = vector.broadcast %cst_118 : f32 to vector<256x32xf32>
    %397 = arith.subf %396, %393 : vector<256x32xf32>
    %398 = arith.select %395, %397, %393 : vector<256x32xi1>, vector<256x32xf32>
    %cst_119 = arith.constant 1.000000e+00 : f32
    %399 = vector.broadcast %cst_119 : f32 to vector<256x32xf32>
    %400 = arith.addf %399, %398 : vector<256x32xf32>
    %401 = arith.mulf %363, %400 : vector<256x32xf32>
    %402 = arith.addf %401, %361 : vector<256x32xf32>
    %403 = tpu.transpose %402, [1, 0] : vector<256x32xf32> -> vector<32x256xf32>
    %c0_120 = arith.constant 0 : index
    %c0_121 = arith.constant 0 : index
    %c0_122 = arith.constant 0 : index
    %404 = vector.load %arg7[%c0_120, %c0_121, %c0_122] : memref<1x32x256xf32, #tpu.memory_space<vmem>>, vector<1x32x256xf32>
    %405 = vector.shape_cast %404 : vector<1x32x256xf32> to vector<32x256xf32>
    %406 = vector.shape_cast %403 : vector<32x256xf32> to vector<1x32x256xf32>
    tpu.vector_store %arg7[%c0_120, %c0_121, %c0_122], %406 {strides = array<i32>} : memref<1x32x256xf32, #tpu.memory_space<vmem>>, vector<1x32x256xf32>,
    return
  }
  func.func @transform_0(%arg0: i32) -> (i32, i32, i32) {
    %c0_i32 = arith.constant 0 : i32
    %c0_i32_0 = arith.constant 0 : i32
    %c0_i32_1 = arith.constant 0 : i32
    return %arg0, %c0_i32, %c0_i32_0 : i32, i32, i32
  }
  func.func @transform_1(%arg0: i32) -> (i32, i32) {
    %c0_i32 = arith.constant 0 : i32
    %c0_i32_0 = arith.constant 0 : i32
    %c0_i32_1 = arith.constant 0 : i32
    return %c0_i32, %c0_i32_0 : i32, i32
  }
  func.func @transform_2(%arg0: i32) -> (i32, i32) {
    %c0_i32 = arith.constant 0 : i32
    %c0_i32_0 = arith.constant 0 : i32
    %c0_i32_1 = arith.constant 0 : i32
    return %c0_i32, %c0_i32_0 : i32, i32
  }
  func.func @transform_3(%arg0: i32) -> (i32, i32) {
    %c0_i32 = arith.constant 0 : i32
    %c0_i32_0 = arith.constant 0 : i32
    %c0_i32_1 = arith.constant 0 : i32
    return %c0_i32, %c0_i32_0 : i32, i32
  }
  func.func @transform_4(%arg0: i32) -> (i32, i32) {
    %c0_i32 = arith.constant 0 : i32
    %c0_i32_0 = arith.constant 0 : i32
    %c0_i32_1 = arith.constant 0 : i32
    return %c0_i32, %c0_i32_0 : i32, i32
  }
  func.func @transform_5(%arg0: i32) -> (i32, i32) {
    %c0_i32 = arith.constant 0 : i32
    %c0_i32_0 = arith.constant 0 : i32
    %c0_i32_1 = arith.constant 0 : i32
    return %c0_i32, %c0_i32_0 : i32, i32
  }
  func.func @transform_6(%arg0: i32) -> (i32, i32, i32) {
    %c0_i32 = arith.constant 0 : i32
    %c0_i32_0 = arith.constant 0 : i32
    %c0_i32_1 = arith.constant 0 : i32
    return %arg0, %c0_i32, %c0_i32_0 : i32, i32, i32
  }
}

</mosaic_0001>

<llo_original>
// kernel: tpu_custom_call.1
$region0: #{tpu_custom_call.1}
  #allocation0 [shape = 'u32[]', space=smem, size = 0x4, offset = 0x4, fixed_abs, tag = 'smem constant byte address 0x4 - core index']
  #allocation1 [shape = 'u32[144,128]{1,0:T(1,128)}', space=vmem, size = 0x12000, scoped, tag = 'internal scratch']
  #allocation2 [shape = 'f32[22,22,32]{2,1,0:T(8,128)}', space=vmem, size = 0x42000, scoped, tag = 'scratch operand']
  %s0 = inlined_call_operand.vmem [shape: f32[2,32,256], index: 0, kind: input, shape index: {}]
  %s1 = inlined_call_operand.vmem [shape: f32[49,32], index: 1, kind: input, shape index: {}]
  %s2 = inlined_call_operand.vmem [shape: bf16[32,128], index: 2, kind: input, shape index: {}]
  %s3 = inlined_call_operand.vmem [shape: f32[1,128], index: 3, kind: input, shape index: {}]
  %s4 = inlined_call_operand.vmem [shape: bf16[128,32], index: 4, kind: input, shape index: {}]
  %s5 = inlined_call_operand.vmem [shape: f32[1,32], index: 5, kind: input, shape index: {}]
  %s6 = inlined_call_operand.hbm [shape: f32[2,32,256], index: 6, kind: output, shape index: {}]
  %s7 = sld [smem:[#allocation0]]
  $region57: #{tpu_custom_call.1} parent=0
    _
  %s9 = ssub.s32 1, %s7
  %s10 = scalar_select 0, %s9, %s7
  $region1: #{tpu_custom_call.1} parent=0
    #allocation3 [shape = 'u8[65536]{0}', space=vmem, size = 0x10000, scoped, tag = 'output window, operand 0']
    #allocation4 [shape = 's32[2]{0}', space=sflag, size = 0x8, scoped, tag = 'scoped memory for tpu_custom_call.1']
    %11 = vsyncpa [#allocation4], 0
    %s12 = scalar_lea.sflag [#allocation4], 1
    %13 = vsyncpa %s12, 0
    loop: start=0, step=1, limit=4
    $region2: #{tpu_custom_call.1} parent=1 // loop_pre_header
      _
    $region3: #{tpu_custom_call.1} parent=1 // loop_header
      %s15 = sphi 0, %s19
      %p16 = scmp.ge.s32.totalorder %s15, 4
      %s25 = sphi 0, %s27
      %s28 = sphi 0, %s25
      %s29 = sphi 0, %s28
      %s45 = sphi 0, %s29
      %s49 = sphi 0, %s49
      %s51 = sphi 0, %s49
      %s52 = sphi 0, %s51
      %s66 = sphi 0, %s52
      %s70 = sphi 0, %s70
      %s72 = sphi 0, %s70
      %s73 = sphi 0, %s72
      %s87 = sphi 0, %s73
      %s91 = sphi 0, %s91
      %s93 = sphi 0, %s91
      %s94 = sphi 0, %s93
      %s108 = sphi 0, %s94
      %s112 = sphi 0, %s112
      %s114 = sphi 0, %s112
      %s115 = sphi 0, %s114
      %s129 = sphi 0, %s115
      %s133 = sphi 0, %s133
      %s135 = sphi 0, %s133
      %s136 = sphi 0, %s135
      %s150 = sphi 0, %s136
      %s156 = sphi 0, %s158
      %s159 = sphi 0, %s156
      %s160 = sphi 0, %s159
      %s176 = sphi 0, %s160
    $region4: #{tpu_custom_call.1} parent=1 // loop_header_branch
      %18 = sbr.rel (%p16) target = $region8
    $region5: #{tpu_custom_call.1} parent=1 // loop_body
      %s20 = ssub.s32 %s15, 1
      %s21 = ssub.s32 %s15, 2
      %s22 = sadd.s32 %s15, 1
      %s23 = ssub.s32 %s15, %s22
      %p24 = scmp.eq.s32.totalorder %s23, 0
      %s26 = sadd.s32 %s25, 1
      %s27 = scalar_select %p24, %s25, %s26
      %p30 = pneg %p24
      %p31 = scmp.eq.s32.totalorder %s15, 1
      %p32 = por %p30, %p31
      %p33 = scmp.ne.s32.totalorder %s25, %s28
      %p34 = scmp.eq.s32.totalorder %s15, 0
      %p35 = por %p33, %p34
      %p36 = scmp.ne.s32.totalorder %s25, %s28
      %p37 = scmp.eq.s32.totalorder %s20, 1
      %p38 = por %p36, %p37
      %p39 = scmp.ne.s32.totalorder %s28, %s29
      %p40 = scmp.eq.s32.totalorder %s20, 0
      %p41 = por %p39, %p40
      %p42 = scmp.ne.s32.totalorder %s28, %s29
      %p43 = scmp.eq.s32.totalorder %s21, 1
      %p44 = por %p42, %p43
      %p46 = scmp.ne.s32.totalorder %s29, %s45
      %p47 = scmp.eq.s32.totalorder %s21, 0
      %p48 = por %p46, %p47
      %s50 = sadd.s32 %s49, 1
      %p53 = scmp.eq.s32.totalorder %s15, 1
      %p54 = scmp.ne.s32.totalorder %s49, %s51
      %p55 = scmp.eq.s32.totalorder %s15, 0
      %p56 = por %p54, %p55
      %p57 = scmp.ne.s32.totalorder %s49, %s51
      %p58 = scmp.eq.s32.totalorder %s20, 1
      %p59 = por %p57, %p58
      %p60 = scmp.ne.s32.totalorder %s51, %s52
      %p61 = scmp.eq.s32.totalorder %s20, 0
      %p62 = por %p60, %p61
      %p63 = scmp.ne.s32.totalorder %s51, %s52
      %p64 = scmp.eq.s32.totalorder %s21, 1
      %p65 = por %p63, %p64
      %p67 = scmp.ne.s32.totalorder %s52, %s66
      %p68 = scmp.eq.s32.totalorder %s21, 0
      %p69 = por %p67, %p68
      %s71 = sadd.s32 %s70, 1
      %p74 = scmp.eq.s32.totalorder %s15, 1
      %p75 = scmp.ne.s32.totalorder %s70, %s72
      %p76 = scmp.eq.s32.totalorder %s15, 0
      %p77 = por %p75, %p76
      %p78 = scmp.ne.s32.totalorder %s70, %s72
      %p79 = scmp.eq.s32.totalorder %s20, 1
      %p80 = por %p78, %p79
      %p81 = scmp.ne.s32.totalorder %s72, %s73
      %p82 = scmp.eq.s32.totalorder %s20, 0
      %p83 = por %p81, %p82
      %p84 = scmp.ne.s32.totalorder %s72, %s73
      %p85 = scmp.eq.s32.totalorder %s21, 1
      %p86 = por %p84, %p85
      %p88 = scmp.ne.s32.totalorder %s73, %s87
      %p89 = scmp.eq.s32.totalorder %s21, 0
      %p90 = por %p88, %p89
      %s92 = sadd.s32 %s91, 1
      %p95 = scmp.eq.s32.totalorder %s15, 1
      %p96 = scmp.ne.s32.totalorder %s91, %s93
      %p97 = scmp.eq.s32.totalorder %s15, 0
      %p98 = por %p96, %p97
      %p99 = scmp.ne.s32.totalorder %s91, %s93
      %p100 = scmp.eq.s32.totalorder %s20, 1
      %p101 = por %p99, %p100
      %p102 = scmp.ne.s32.totalorder %s93, %s94
      %p103 = scmp.eq.s32.totalorder %s20, 0
      %p104 = por %p102, %p103
      %p105 = scmp.ne.s32.totalorder %s93, %s94
      %p106 = scmp.eq.s32.totalorder %s21, 1
      %p107 = por %p105, %p106
      %p109 = scmp.ne.s32.totalorder %s94, %s108
      %p110 = scmp.eq.s32.totalorder %s21, 0
      %p111 = por %p109, %p110
      %s113 = sadd.s32 %s112, 1
      %p116 = scmp.eq.s32.totalorder %s15, 1
      %p117 = scmp.ne.s32.totalorder %s112, %s114
      %p118 = scmp.eq.s32.totalorder %s15, 0
      %p119 = por %p117, %p118
      %p120 = scmp.ne.s32.totalorder %s112, %s114
      %p121 = scmp.eq.s32.totalorder %s20, 1
      %p122 = por %p120, %p121
      %p123 = scmp.ne.s32.totalorder %s114, %s115
      %p124 = scmp.eq.s32.totalorder %s20, 0
      %p125 = por %p123, %p124
      %p126 = scmp.ne.s32.totalorder %s114, %s115
      %p127 = scmp.eq.s32.totalorder %s21, 1
      %p128 = por %p126, %p127
      %p130 = scmp.ne.s32.totalorder %s115, %s129
      %p131 = scmp.eq.s32.totalorder %s21, 0
      %p132 = por %p130, %p131
      %s134 = sadd.s32 %s133, 1
      %p137 = scmp.eq.s32.totalorder %s15, 1
      %p138 = scmp.ne.s32.totalorder %s133, %s135
      %p139 = scmp.eq.s32.totalorder %s15, 0
      %p140 = por %p138, %p139
      %p141 = scmp.ne.s32.totalorder %s133, %s135
      %p142 = scmp.eq.s32.totalorder %s20, 1
      %p143 = por %p141, %p142
      %p144 = scmp.ne.s32.totalorder %s135, %s136
      %p145 = scmp.eq.s32.totalorder %s20, 0
      %p146 = por %p144, %p145
      %p147 = scmp.ne.s32.totalorder %s135, %s136
      %p148 = scmp.eq.s32.totalorder %s21, 1
      %p149 = por %p147, %p148
      %p151 = scmp.ne.s32.totalorder %s136, %s150
      %p152 = scmp.eq.s32.totalorder %s21, 0
      %p153 = por %p151, %p152
      %s154 = ssub.s32 %s15, %s22
      %p155 = scmp.eq.s32.totalorder %s154, 0
      %s157 = sadd.s32 %s156, 1
      %s158 = scalar_select %p155, %s156, %s157
      %p161 = pneg %p155
      %p162 = scmp.eq.s32.totalorder %s15, 1
      %p163 = por %p161, %p162
      %p164 = scmp.ne.s32.totalorder %s156, %s159
      %p165 = scmp.eq.s32.totalorder %s15, 0
      %p166 = por %p164, %p165
      %p167 = scmp.ne.s32.totalorder %s156, %s159
      %p168 = scmp.eq.s32.totalorder %s20, 1
      %p169 = por %p167, %p168
      %p170 = scmp.ne.s32.totalorder %s159, %s160
      %p171 = scmp.eq.s32.totalorder %s20, 0
      %p172 = por %p170, %p171
      %p173 = scmp.ne.s32.totalorder %s159, %s160
      %p174 = scmp.eq.s32.totalorder %s21, 1
      %p175 = por %p173, %p174
      %p177 = scmp.ne.s32.totalorder %s160, %s176
      %p178 = scmp.eq.s32.totalorder %s21, 0
      %p179 = por %p177, %p178
      %p180 = scmp.le.s32.totalorder 1, %s15
      %p181 = scmp.lt.s32.totalorder %s15, 3
      %p182 = pnand %p180, %p181
      %p183 = pneg %p182
      // Predicated region
      $region9: #{tpu_custom_call.1} parent=5 // pred_check
        _
      $region10: #{tpu_custom_call.1} parent=5 // pred_check_branch
        %185 = sbr.rel (%p182) target = $region12
      $region11: #{tpu_custom_call.1} parent=5 // pred_region
        %s186 = ssub.s32 %s15, 1
        // Predicated region
        $region13: #{tpu_custom_call.1} parent=11 // pred_check
          %p187 = pneg %p62
        $region14: #{tpu_custom_call.1} parent=11 // pred_check_branch
          %189 = sbr.rel (%p187) target = $region16
        $region15: #{tpu_custom_call.1} parent=11 // pred_region
          _
        $region16: #{tpu_custom_call.1} parent=11 // pred_fallthru
          _
        // Predicated region
        $region17: #{tpu_custom_call.1} parent=11 // pred_check
          %p190 = pneg %p83
        $region18: #{tpu_custom_call.1} parent=11 // pred_check_branch
          %192 = sbr.rel (%p190) target = $region20
        $region19: #{tpu_custom_call.1} parent=11 // pred_region
          _
        $region20: #{tpu_custom_call.1} parent=11 // pred_fallthru
          _
        // Predicated region
        $region21: #{tpu_custom_call.1} parent=11 // pred_check
          %p193 = pneg %p104
        $region22: #{tpu_custom_call.1} parent=11 // pred_check_branch
          %195 = sbr.rel (%p193) target = $region24
        $region23: #{tpu_custom_call.1} parent=11 // pred_region
          _
        $region24: #{tpu_custom_call.1} parent=11 // pred_fallthru
          _
        // Predicated region
        $region25: #{tpu_custom_call.1} parent=11 // pred_check
          %p196 = pneg %p125
        $region26: #{tpu_custom_call.1} parent=11 // pred_check_branch
          %198 = sbr.rel (%p196) target = $region28
        $region27: #{tpu_custom_call.1} parent=11 // pred_region
          _
        $region28: #{tpu_custom_call.1} parent=11 // pred_fallthru
          _
        // Predicated region
        $region29: #{tpu_custom_call.1} parent=11 // pred_check
          %p199 = pneg %p146
        $region30: #{tpu_custom_call.1} parent=11 // pred_check_branch
          %201 = sbr.rel (%p199) target = $region32
        $region31: #{tpu_custom_call.1} parent=11 // pred_region
          _
        $region32: #{tpu_custom_call.1} parent=11 // pred_fallthru
          _
      $region12: #{tpu_custom_call.1} parent=5 // pred_fallthru
        _
      %p202 = scmp.lt.s32.totalorder %s15, 2
      // Predicated region
      $region33: #{tpu_custom_call.1} parent=5 // pred_check
        %p203 = pneg %p202
      $region34: #{tpu_custom_call.1} parent=5 // pred_check_branch
        %205 = sbr.rel (%p203) target = $region36
      $region35: #{tpu_custom_call.1} parent=5 // pred_region
        // Predicated region
        $region37: #{tpu_custom_call.1} parent=35 // pred_check
          %p206 = pneg %p35
        $region38: #{tpu_custom_call.1} parent=35 // pred_check_branch
          %208 = sbr.rel (%p206) target = $region40
        $region39: #{tpu_custom_call.1} parent=35 // pred_region
          %p209 = scmp.lt.s32.totalorder %s15, 1
          %s210 = scalar_select %p209, %s15, 1
          %s211 = smul.addr %s210, 8
          %s212 = smul.addr %s211, 8
          %s213 = scalar_lea.vmem %s0, %s212
        $region40: #{tpu_custom_call.1} parent=35 // pred_fallthru
          _
      $region36: #{tpu_custom_call.1} parent=5 // pred_fallthru
        _
      %p214 = scmp.le.s32.totalorder 1, %s15
      %p215 = scmp.lt.s32.totalorder %s15, 3
      %p216 = pnand %p214, %p215
      %p217 = pneg %p216
      // Predicated region
      $region41: #{tpu_custom_call.1} parent=5 // pred_check
        _
      $region42: #{tpu_custom_call.1} parent=5 // pred_check_branch
        %219 = sbr.rel (%p216) target = $region44
      $region43: #{tpu_custom_call.1} parent=5 // pred_region
        %s220 = ssub.s32 %s15, 1
        %p221 = scmp.lt.s32.totalorder %s20, 1
        %s222 = scalar_select %p221, %s20, 1
        %s223 = smul.addr %s222, 8
        %s224 = smul.addr %s223, 8
        %s225 = scalar_lea.vmem %s0, %s224
        %p226 = pneg %p41
        %p227 = pneg %p38
        %p228 = pneg %p62
        %p229 = pneg %p59
        %p230 = pneg %p83
        %p231 = pneg %p80
        %p232 = pneg %p104
        %p233 = pneg %p101
        %p234 = pneg %p125
        %p235 = pneg %p122
        %p236 = pneg %p146
        %p237 = pneg %p143
        %p238 = pneg %p172
        %p239 = pneg %p169
        %s240 = sand.u32 %s159, 1
        %s241 = scalar_lea.sflag [#allocation4], %s240
        %s242 = sand.u32 %s159, 1
        %s243 = smul.addr %s242, 64
        %s244 = scalar_lea.vmem [#allocation3], %s243
        %p245 = scmp.lt.s32.totalorder %s20, 1
        %s246 = scalar_select %p245, %s20, 1
        %s247 = smul.addr %s246, 8
        %s248 = smul.addr %s247, 8
        %s249 = scalar_lea.vmem %s0, %s248
        %v251 = vld [vmem:[%s249] sm:$0xff]
        %v252 = vld [vmem:[%s249 + $0x8] sm:$0xff]
        %v253 = vld [vmem:[%s249 + $0x10] sm:$0xff]
        %v254 = vld [vmem:[%s249 + $0x18] sm:$0xff]
        %v255 = vld [vmem:[%s249 + $0x20] sm:$0xff]
        %v256 = vld [vmem:[%s249 + $0x28] sm:$0xff]
        %v257 = vld [vmem:[%s249 + $0x30] sm:$0xff]
        %v258 = vld [vmem:[%s249 + $0x38] sm:$0xff]
        %259 = vxpose.xlu0.b32.start [1/16] %v251, 128
        %260 = vxpose.xlu0.b32.cont [2/16] %v253, 128
        %261 = vxpose.xlu0.b32.cont [3/16] %v255, 128
        %262 = vxpose.xlu0.b32.cont [4/16] %v257, 128
        %263 = vxpose.xlu0.b32.cont [5/16] 0.0, 128
        %264 = vxpose.xlu0.b32.cont [6/16] 0.0, 128
        %265 = vxpose.xlu0.b32.cont [7/16] 0.0, 128
        %266 = vxpose.xlu0.b32.cont [8/16] 0.0, 128
        %267 = vxpose.xlu0.b32.cont [9/16] 0.0, 128
        %268 = vxpose.xlu0.b32.cont [10/16] 0.0, 128
        %269 = vxpose.xlu0.b32.cont [11/16] 0.0, 128
        %270 = vxpose.xlu0.b32.cont [12/16] 0.0, 128
        %271 = vxpose.xlu0.b32.cont [13/16] 0.0, 128
        %272 = vxpose.xlu0.b32.cont [14/16] 0.0, 128
        %273 = vxpose.xlu0.b32.cont [15/16] 0.0, 128
        %274 = vxpose.xlu0.b32.end [16/16] 0.0, 128
        %v275 = vpop.trf.xlu0
        %v276 = vpop.trf.xlu0
        %v277 = vpop.trf.xlu0
        %v278 = vpop.trf.xlu0
        %v279 = vpop.trf.xlu0
        %v280 = vpop.trf.xlu0
        %v281 = vpop.trf.xlu0
        %v282 = vpop.trf.xlu0
        %v283 = vpop.trf.xlu0
        %v284 = vpop.trf.xlu0
        %v285 = vpop.trf.xlu0
        %v286 = vpop.trf.xlu0
        %v287 = vpop.trf.xlu0
        %v288 = vpop.trf.xlu0
        %v289 = vpop.trf.xlu0
        %v290 = vpop.trf.xlu0
        %291 = vxpose.xlu0.b32.start [1/16] %v252, 128
        %292 = vxpose.xlu0.b32.cont [2/16] %v254, 128
        %293 = vxpose.xlu0.b32.cont [3/16] %v256, 128
        %294 = vxpose.xlu0.b32.cont [4/16] %v258, 128
        %295 = vxpose.xlu0.b32.cont [5/16] 0.0, 128
        %296 = vxpose.xlu0.b32.cont [6/16] 0.0, 128
        %297 = vxpose.xlu0.b32.cont [7/16] 0.0, 128
        %298 = vxpose.xlu0.b32.cont [8/16] 0.0, 128
        %299 = vxpose.xlu0.b32.cont [9/16] 0.0, 128
        %300 = vxpose.xlu0.b32.cont [10/16] 0.0, 128
        %301 = vxpose.xlu0.b32.cont [11/16] 0.0, 128
        %302 = vxpose.xlu0.b32.cont [12/16] 0.0, 128
        %303 = vxpose.xlu0.b32.cont [13/16] 0.0, 128
        %304 = vxpose.xlu0.b32.cont [14/16] 0.0, 128
        %305 = vxpose.xlu0.b32.cont [15/16] 0.0, 128
        %306 = vxpose.xlu0.b32.end [16/16] 0.0, 128
        %v307 = vpop.trf.xlu0
        %v308 = vpop.trf.xlu0
        %v309 = vpop.trf.xlu0
        %v310 = vpop.trf.xlu0
        %v311 = vpop.trf.xlu0
        %v312 = vpop.trf.xlu0
        %v313 = vpop.trf.xlu0
        %v314 = vpop.trf.xlu0
        %v315 = vpop.trf.xlu0
        %v316 = vpop.trf.xlu0
        %v317 = vpop.trf.xlu0
        %v318 = vpop.trf.xlu0
        %v319 = vpop.trf.xlu0
        %v320 = vpop.trf.xlu0
        %v321 = vpop.trf.xlu0
        %v322 = vpop.trf.xlu0
        %vm323 = vcmask 261120
        %324 = vst.msk [vmem:[#allocation2] sm:$0xff] %vm323, 0.0
        %325 = vst.msk [vmem:[#allocation2 + $0x8] sm:$0xff] %vm323, 0.0
        %vm326 = vcmask 259072
        %327 = vst.msk [vmem:[#allocation2 + $0x10] sm:$0x3f] %vm326, 0.0
        %328 = vst.msk [vmem:[#allocation2 + $0x18] sm:$0xff] %vm323, 0.0
        %329 = vst.msk [vmem:[#allocation2 + $0x20] sm:$0xff] %vm323, 0.0
        %330 = vst.msk [vmem:[#allocation2 + $0x28] sm:$0x3f] %vm326, 0.0
        %331 = vst.msk [vmem:[#allocation2 + $0x30] sm:$0xff] %vm323, 0.0
        %332 = vst.msk [vmem:[#allocation2 + $0x38] sm:$0xff] %vm323, 0.0
        %333 = vst.msk [vmem:[#allocation2 + $0x40] sm:$0x3f] %vm326, 0.0
        %334 = vst.msk [vmem:[#allocation2 + $0x48] sm:$0xff] %vm323, 0.0
        %335 = vst.msk [vmem:[#allocation2 + $0x50] sm:$0xff] %vm323, 0.0
        %336 = vst.msk [vmem:[#allocation2 + $0x58] sm:$0x3f] %vm326, 0.0
        %337 = vst.msk [vmem:[#allocation2 + $0x60] sm:$0xff] %vm323, 0.0
        %338 = vst.msk [vmem:[#allocation2 + $0x68] sm:$0xff] %vm323, 0.0
        %339 = vst.msk [vmem:[#allocation2 + $0x70] sm:$0x3f] %vm326, 0.0
        %340 = vst.msk [vmem:[#allocation2 + $0x78] sm:$0xff] %vm323, 0.0
        %341 = vst.msk [vmem:[#allocation2 + $0x80] sm:$0xff] %vm323, 0.0
        %342 = vst.msk [vmem:[#allocation2 + $0x88] sm:$0x3f] %vm326, 0.0
        %343 = vst.msk [vmem:[#allocation2 + $0x90] sm:$0xff] %vm323, 0.0
        %344 = vst.msk [vmem:[#allocation2 + $0x98] sm:$0xff] %vm323, 0.0
        %345 = vst.msk [vmem:[#allocation2 + $0xa0] sm:$0x3f] %vm326, 0.0
        %346 = vst.msk [vmem:[#allocation2 + $0xa8] sm:$0xff] %vm323, 0.0
        %347 = vst.msk [vmem:[#allocation2 + $0xb0] sm:$0xff] %vm323, 0.0
        %348 = vst.msk [vmem:[#allocation2 + $0xb8] sm:$0x3f] %vm326, 0.0
        %349 = vst.msk [vmem:[#allocation2 + $0xc0] sm:$0xff] %vm323, 0.0
        %350 = vst.msk [vmem:[#allocation2 + $0xc8] sm:$0xff] %vm323, 0.0
        %351 = vst.msk [vmem:[#allocation2 + $0xd0] sm:$0x3f] %vm326, 0.0
        %352 = vst.msk [vmem:[#allocation2 + $0xd8] sm:$0xff] %vm323, 0.0
        %353 = vst.msk [vmem:[#allocation2 + $0xe0] sm:$0xff] %vm323, 0.0
        %354 = vst.msk [vmem:[#allocation2 + $0xe8] sm:$0x3f] %vm326, 0.0
        %355 = vst.msk [vmem:[#allocation2 + $0xf0] sm:$0xff] %vm323, 0.0
        %356 = vst.msk [vmem:[#allocation2 + $0xf8] sm:$0xff] %vm323, 0.0
        %357 = vst.msk [vmem:[#allocation2 + $0x100] sm:$0x3f] %vm326, 0.0
        %358 = vst.msk [vmem:[#allocation2 + $0x108] sm:$0xff] %vm323, 0.0
        %359 = vst.msk [vmem:[#allocation2 + $0x110] sm:$0xff] %vm323, 0.0
        %360 = vst.msk [vmem:[#allocation2 + $0x118] sm:$0x3f] %vm326, 0.0
        %361 = vst.msk [vmem:[#allocation2 + $0x120] sm:$0xff] %vm323, 0.0
        %362 = vst.msk [vmem:[#allocation2 + $0x128] sm:$0xff] %vm323, 0.0
        %363 = vst.msk [vmem:[#allocation2 + $0x130] sm:$0x3f] %vm326, 0.0
        %364 = vst.msk [vmem:[#allocation2 + $0x138] sm:$0xff] %vm323, 0.0
        %365 = vst.msk [vmem:[#allocation2 + $0x140] sm:$0xff] %vm323, 0.0
        %366 = vst.msk [vmem:[#allocation2 + $0x148] sm:$0x3f] %vm326, 0.0
        %367 = vst.msk [vmem:[#allocation2 + $0x150] sm:$0xff] %vm323, 0.0
        %368 = vst.msk [vmem:[#allocation2 + $0x158] sm:$0xff] %vm323, 0.0
        %369 = vst.msk [vmem:[#allocation2 + $0x160] sm:$0x3f] %vm326, 0.0
        %370 = vst.msk [vmem:[#allocation2 + $0x168] sm:$0xff] %vm323, 0.0
        %371 = vst.msk [vmem:[#allocation2 + $0x170] sm:$0xff] %vm323, 0.0
        %372 = vst.msk [vmem:[#allocation2 + $0x178] sm:$0x3f] %vm326, 0.0
        %373 = vst.msk [vmem:[#allocation2 + $0x180] sm:$0xff] %vm323, 0.0
        %374 = vst.msk [vmem:[#allocation2 + $0x188] sm:$0xff] %vm323, 0.0
        %375 = vst.msk [vmem:[#allocation2 + $0x190] sm:$0x3f] %vm326, 0.0
        %376 = vst.msk [vmem:[#allocation2 + $0x198] sm:$0xff] %vm323, 0.0
        %377 = vst.msk [vmem:[#allocation2 + $0x1a0] sm:$0xff] %vm323, 0.0
        %378 = vst.msk [vmem:[#allocation2 + $0x1a8] sm:$0x3f] %vm326, 0.0
        %379 = vst.msk [vmem:[#allocation2 + $0x1b0] sm:$0xff] %vm323, 0.0
        %380 = vst.msk [vmem:[#allocation2 + $0x1b8] sm:$0xff] %vm323, 0.0
        %381 = vst.msk [vmem:[#allocation2 + $0x1c0] sm:$0x3f] %vm326, 0.0
        %382 = vst.msk [vmem:[#allocation2 + $0x1c8] sm:$0xff] %vm323, 0.0
        %383 = vst.msk [vmem:[#allocation2 + $0x1d0] sm:$0xff] %vm323, 0.0
        %384 = vst.msk [vmem:[#allocation2 + $0x1d8] sm:$0x3f] %vm326, 0.0
        %385 = vst.msk [vmem:[#allocation2 + $0x1e0] sm:$0xff] %vm323, 0.0
        %386 = vst.msk [vmem:[#allocation2 + $0x1e8] sm:$0xff] %vm323, 0.0
        %387 = vst.msk [vmem:[#allocation2 + $0x1f0] sm:$0x3f] %vm326, 0.0
        %388 = vst.msk [vmem:[#allocation2 + $0x1f8] sm:$0xff] %vm323, 0.0
        %389 = vst.msk [vmem:[#allocation2 + $0x200] sm:$0xff] %vm323, 0.0
        %390 = vst.msk [vmem:[#allocation2 + $0x208] sm:$0x3f] %vm326, 0.0
        %s391 = scalar_lea.vmem [#allocation2], 72
        %392 = vst.msk [vmem:[%s391 + $0x3] sm:$0xff] %vm323, %v275
        %393 = vst.msk [vmem:[%s391 + $0xb] sm:$0xff] %vm323, %v276
        %394 = vst.msk [vmem:[%s391 + $0x1b] sm:$0xff] %vm323, %v277
        %395 = vst.msk [vmem:[%s391 + $0x23] sm:$0xff] %vm323, %v278
        %396 = vst.msk [vmem:[%s391 + $0x33] sm:$0xff] %vm323, %v279
        %397 = vst.msk [vmem:[%s391 + $0x3b] sm:$0xff] %vm323, %v280
        %398 = vst.msk [vmem:[%s391 + $0x4b] sm:$0xff] %vm323, %v281
        %399 = vst.msk [vmem:[%s391 + $0x53] sm:$0xff] %vm323, %v282
        %400 = vst.msk [vmem:[%s391 + $0x63] sm:$0xff] %vm323, %v283
        %401 = vst.msk [vmem:[%s391 + $0x6b] sm:$0xff] %vm323, %v284
        %402 = vst.msk [vmem:[%s391 + $0x7b] sm:$0xff] %vm323, %v285
        %403 = vst.msk [vmem:[%s391 + $0x83] sm:$0xff] %vm323, %v286
        %404 = vst.msk [vmem:[%s391 + $0x93] sm:$0xff] %vm323, %v287
        %405 = vst.msk [vmem:[%s391 + $0x9b] sm:$0xff] %vm323, %v288
        %406 = vst.msk [vmem:[%s391 + $0xab] sm:$0xff] %vm323, %v289
        %407 = vst.msk [vmem:[%s391 + $0xb3] sm:$0xff] %vm323, %v290
        %408 = vst.msk [vmem:[%s391 + $0xc3] sm:$0xff] %vm323, %v307
        %409 = vst.msk [vmem:[%s391 + $0xcb] sm:$0xff] %vm323, %v308
        %410 = vst.msk [vmem:[%s391 + $0xdb] sm:$0xff] %vm323, %v309
        %411 = vst.msk [vmem:[%s391 + $0xe3] sm:$0xff] %vm323, %v310
        %412 = vst.msk [vmem:[%s391 + $0xf3] sm:$0xff] %vm323, %v311
        %413 = vst.msk [vmem:[%s391 + $0xfb] sm:$0xff] %vm323, %v312
        %414 = vst.msk [vmem:[%s391 + $0x10b] sm:$0xff] %vm323, %v313
        %415 = vst.msk [vmem:[%s391 + $0x113] sm:$0xff] %vm323, %v314
        %416 = vst.msk [vmem:[%s391 + $0x123] sm:$0xff] %vm323, %v315
        %417 = vst.msk [vmem:[%s391 + $0x12b] sm:$0xff] %vm323, %v316
        %418 = vst.msk [vmem:[%s391 + $0x13b] sm:$0xff] %vm323, %v317
        %419 = vst.msk [vmem:[%s391 + $0x143] sm:$0xff] %vm323, %v318
        %420 = vst.msk [vmem:[%s391 + $0x153] sm:$0xff] %vm323, %v319
        %421 = vst.msk [vmem:[%s391 + $0x15b] sm:$0xff] %vm323, %v320
        %422 = vst.msk [vmem:[%s391 + $0x16b] sm:$0xff] %vm323, %v321
        %423 = vst.msk [vmem:[%s391 + $0x173] sm:$0xff] %vm323, %v322
        %v424 = vld [vmem:[#allocation2] sm:$0xff]
        %v425 = vld [vmem:[#allocation2 + $0x8] sm:$0xff]
        %v426 = vld [vmem:[#allocation2 + $0x18] sm:$0xff]
        %v427 = vld [vmem:[#allocation2 + $0x20] sm:$0xff]
        %v428 = vld [vmem:[#allocation2 + $0x30] sm:$0xff]
        %v429 = vld [vmem:[#allocation2 + $0x38] sm:$0xff]
        %v430 = vld [vmem:[#allocation2 + $0x48] sm:$0xff]
        %v431 = vld [vmem:[#allocation2 + $0x50] sm:$0xff]
        %v432 = vld [vmem:[#allocation2 + $0x60] sm:$0xff]
        %v433 = vld [vmem:[#allocation2 + $0x68] sm:$0xff]
        %v434 = vld [vmem:[#allocation2 + $0x78] sm:$0xff]
        %v435 = vld [vmem:[#allocation2 + $0x80] sm:$0xff]
        %v436 = vld [vmem:[#allocation2 + $0x90] sm:$0xff]
        %v437 = vld [vmem:[#allocation2 + $0x98] sm:$0xff]
        %v438 = vld [vmem:[#allocation2 + $0xa8] sm:$0xff]
        %v439 = vld [vmem:[#allocation2 + $0xb0] sm:$0xff]
        %v440 = vld [vmem:[#allocation2 + $0xc0] sm:$0xff]
        %v441 = vld [vmem:[#allocation2 + $0xc8] sm:$0xff]
        %v442 = vld [vmem:[#allocation2 + $0xd8] sm:$0xff]
        %v443 = vld [vmem:[#allocation2 + $0xe0] sm:$0xff]
        %v444 = vld [vmem:[#allocation2 + $0xf0] sm:$0xff]
        %v445 = vld [vmem:[#allocation2 + $0xf8] sm:$0xff]
        %v446 = vld [vmem:[#allocation2 + $0x108] sm:$0xff]
        %v447 = vld [vmem:[#allocation2 + $0x110] sm:$0xff]
        %v448 = vld [vmem:[#allocation2 + $0x120] sm:$0xff]
        %v449 = vld [vmem:[#allocation2 + $0x128] sm:$0xff]
        %v450 = vld [vmem:[#allocation2 + $0x138] sm:$0xff]
        %v451 = vld [vmem:[#allocation2 + $0x140] sm:$0xff]
        %v452 = vld [vmem:[#allocation2 + $0x150] sm:$0xff]
        %v453 = vld [vmem:[#allocation2 + $0x158] sm:$0xff]
        %v454 = vld [vmem:[#allocation2 + $0x168] sm:$0xff]
        %v455 = vld [vmem:[#allocation2 + $0x170] sm:$0xff]
        %v456 = vld [vmem:[#allocation2 + $0x180] sm:$0xff]
        %v457 = vld [vmem:[#allocation2 + $0x188] sm:$0xff]
        %v458 = vld [vmem:[#allocation2 + $0x198] sm:$0xff]
        %v459 = vld [vmem:[#allocation2 + $0x1a0] sm:$0xff]
        %v460 = vld [vmem:[#allocation2 + $0x1b0] sm:$0xff]
        %v461 = vld [vmem:[#allocation2 + $0x1b8] sm:$0xff]
        %v462 = vld [vmem:[#allocation2 + $0x1c8] sm:$0xff]
        %v463 = vld [vmem:[#allocation2 + $0x1d0] sm:$0xff]
        %v464 = vld [vmem:[#allocation2 + $0x1e0] sm:$0xff]
        %v465 = vld [vmem:[#allocation2 + $0x1e8] sm:$0xff]
        %v466 = vld [vmem:[#allocation2 + $0x1f8] sm:$0xff]
        %v467 = vld [vmem:[#allocation2 + $0x200] sm:$0xff]
        %v468 = vld [vmem:[%s1] sm:$0x1]
        %v469 = vlaneseq
        %v470 = vshrl.u32 %v469, 7
        %v471 = vsub.s32 0, %v470
        %v472 = vrot.slane %v468, %v471
        %v473 = vmul.f32 %v424, %v472
        %v474 = vmul.f32 %v425, %v472
        %v475 = vmul.f32 %v426, %v472
        %v476 = vmul.f32 %v427, %v472
        %v477 = vmul.f32 %v428, %v472
        %v478 = vmul.f32 %v429, %v472
        %v479 = vmul.f32 %v430, %v472
        %v480 = vmul.f32 %v431, %v472
        %v481 = vmul.f32 %v432, %v472
        %v482 = vmul.f32 %v433, %v472
        %v483 = vmul.f32 %v434, %v472
        %v484 = vmul.f32 %v435, %v472
        %v485 = vmul.f32 %v436, %v472
        %v486 = vmul.f32 %v437, %v472
        %v487 = vmul.f32 %v438, %v472
        %v488 = vmul.f32 %v439, %v472
        %v489 = vmul.f32 %v440, %v472
        %v490 = vmul.f32 %v441, %v472
        %v491 = vmul.f32 %v442, %v472
        %v492 = vmul.f32 %v443, %v472
        %v493 = vmul.f32 %v444, %v472
        %v494 = vmul.f32 %v445, %v472
        %v495 = vmul.f32 %v446, %v472
        %v496 = vmul.f32 %v447, %v472
        %v497 = vmul.f32 %v448, %v472
        %v498 = vmul.f32 %v449, %v472
        %v499 = vmul.f32 %v450, %v472
        %v500 = vmul.f32 %v451, %v472
        %v501 = vmul.f32 %v452, %v472
        %v502 = vmul.f32 %v453, %v472
        %v503 = vmul.f32 %v454, %v472
        %v504 = vmul.f32 %v455, %v472
        %v505 = vadd.f32 %v473, 0.0
        %v506 = vadd.f32 %v474, 0.0
        %v507 = vadd.f32 %v475, 0.0
        %v508 = vadd.f32 %v476, 0.0
        %v509 = vadd.f32 %v477, 0.0
        %v510 = vadd.f32 %v478, 0.0
        %v511 = vadd.f32 %v479, 0.0
        %v512 = vadd.f32 %v480, 0.0
        %v513 = vadd.f32 %v481, 0.0
        %v514 = vadd.f32 %v482, 0.0
        %v515 = vadd.f32 %v483, 0.0
        %v516 = vadd.f32 %v484, 0.0
        %v517 = vadd.f32 %v485, 0.0
        %v518 = vadd.f32 %v486, 0.0
        %v519 = vadd.f32 %v487, 0.0
        %v520 = vadd.f32 %v488, 0.0
        %v521 = vadd.f32 %v489, 0.0
        %v522 = vadd.f32 %v490, 0.0
        %v523 = vadd.f32 %v491, 0.0
        %v524 = vadd.f32 %v492, 0.0
        %v525 = vadd.f32 %v493, 0.0
        %v526 = vadd.f32 %v494, 0.0
        %v527 = vadd.f32 %v495, 0.0
        %v528 = vadd.f32 %v496, 0.0
        %v529 = vadd.f32 %v497, 0.0
        %v530 = vadd.f32 %v498, 0.0
        %v531 = vadd.f32 %v499, 0.0
        %v532 = vadd.f32 %v500, 0.0
        %v533 = vadd.f32 %v501, 0.0
        %v534 = vadd.f32 %v502, 0.0
        %v535 = vadd.f32 %v503, 0.0
        %v536 = vadd.f32 %v504, 0.0
        %v537 = vld [vmem:[%s1 + $0x7] sm:$0x1]
        %v538 = vlaneseq
        %v539 = vshrl.u32 %v538, 7
        %v540 = vsub.s32 0, %v539
        %v541 = vrot.slane %v537, %v540
        %v542 = vmul.f32 %v426, %v541
        %v543 = vmul.f32 %v427, %v541
        %v544 = vmul.f32 %v428, %v541
        %v545 = vmul.f32 %v429, %v541
        %v546 = vmul.f32 %v430, %v541
        %v547 = vmul.f32 %v431, %v541
        %v548 = vmul.f32 %v432, %v541
        %v549 = vmul.f32 %v433, %v541
        %v550 = vmul.f32 %v434, %v541
        %v551 = vmul.f32 %v435, %v541
        %v552 = vmul.f32 %v436, %v541
        %v553 = vmul.f32 %v437, %v541
        %v554 = vmul.f32 %v438, %v541
        %v555 = vmul.f32 %v439, %v541
        %v556 = vmul.f32 %v440, %v541
        %v557 = vmul.f32 %v441, %v541
        %v558 = vmul.f32 %v442, %v541
        %v559 = vmul.f32 %v443, %v541
        %v560 = vmul.f32 %v444, %v541
        %v561 = vmul.f32 %v445, %v541
        %v562 = vmul.f32 %v446, %v541
        %v563 = vmul.f32 %v447, %v541
        %v564 = vmul.f32 %v448, %v541
        %v565 = vmul.f32 %v449, %v541
        %v566 = vmul.f32 %v450, %v541
        %v567 = vmul.f32 %v451, %v541
        %v568 = vmul.f32 %v452, %v541
        %v569 = vmul.f32 %v453, %v541
        %v570 = vmul.f32 %v454, %v541
        %v571 = vmul.f32 %v455, %v541
        %v572 = vmul.f32 %v456, %v541
        %v573 = vmul.f32 %v457, %v541
        %v574 = vadd.f32 %v505, %v542
        %v575 = vadd.f32 %v506, %v543
        %v576 = vadd.f32 %v507, %v544
        %v577 = vadd.f32 %v508, %v545
        %v578 = vadd.f32 %v509, %v546
        %v579 = vadd.f32 %v510, %v547
        %v580 = vadd.f32 %v511, %v548
        %v581 = vadd.f32 %v512, %v549
        %v582 = vadd.f32 %v513, %v550
        %v583 = vadd.f32 %v514, %v551
        %v584 = vadd.f32 %v515, %v552
        %v585 = vadd.f32 %v516, %v553
        %v586 = vadd.f32 %v517, %v554
        %v587 = vadd.f32 %v518, %v555
        %v588 = vadd.f32 %v519, %v556
        %v589 = vadd.f32 %v520, %v557
        %v590 = vadd.f32 %v521, %v558
        %v591 = vadd.f32 %v522, %v559
        %v592 = vadd.f32 %v523, %v560
        %v593 = vadd.f32 %v524, %v561
        %v594 = vadd.f32 %v525, %v562
        %v595 = vadd.f32 %v526, %v563
        %v596 = vadd.f32 %v527, %v564
        %v597 = vadd.f32 %v528, %v565
        %v598 = vadd.f32 %v529, %v566
        %v599 = vadd.f32 %v530, %v567
        %v600 = vadd.f32 %v531, %v568
        %v601 = vadd.f32 %v532, %v569
        %v602 = vadd.f32 %v533, %v570
        %v603 = vadd.f32 %v534, %v571
        %v604 = vadd.f32 %v535, %v572
        %v605 = vadd.f32 %v536, %v573
        %v606 = vld [vmem:[%s1 + $0xe] sm:$0x1]
        %v607 = vlaneseq
        %v608 = vshrl.u32 %v607, 7
        %v609 = vsub.s32 0, %v608
        %v610 = vrot.slane %v606, %v609
        %v611 = vmul.f32 %v428, %v610
        %v612 = vmul.f32 %v429, %v610
        %v613 = vmul.f32 %v430, %v610
        %v614 = vmul.f32 %v431, %v610
        %v615 = vmul.f32 %v432, %v610
        %v616 = vmul.f32 %v433, %v610
        %v617 = vmul.f32 %v434, %v610
        %v618 = vmul.f32 %v435, %v610
        %v619 = vmul.f32 %v436, %v610
        %v620 = vmul.f32 %v437, %v610
        %v621 = vmul.f32 %v438, %v610
        %v622 = vmul.f32 %v439, %v610
        %v623 = vmul.f32 %v440, %v610
        %v624 = vmul.f32 %v441, %v610
        %v625 = vmul.f32 %v442, %v610
        %v626 = vmul.f32 %v443, %v610
        %v627 = vmul.f32 %v444, %v610
        %v628 = vmul.f32 %v445, %v610
        %v629 = vmul.f32 %v446, %v610
        %v630 = vmul.f32 %v447, %v610
        %v631 = vmul.f32 %v448, %v610
        %v632 = vmul.f32 %v449, %v610
        %v633 = vmul.f32 %v450, %v610
        %v634 = vmul.f32 %v451, %v610
        %v635 = vmul.f32 %v452, %v610
        %v636 = vmul.f32 %v453, %v610
        %v637 = vmul.f32 %v454, %v610
        %v638 = vmul.f32 %v455, %v610
        %v639 = vmul.f32 %v456, %v610
        %v640 = vmul.f32 %v457, %v610
        %v641 = vmul.f32 %v458, %v610
        %v642 = vmul.f32 %v459, %v610
        %v643 = vadd.f32 %v574, %v611
        %v644 = vadd.f32 %v575, %v612
        %v645 = vadd.f32 %v576, %v613
        %v646 = vadd.f32 %v577, %v614
        %v647 = vadd.f32 %v578, %v615
        %v648 = vadd.f32 %v579, %v616
        %v649 = vadd.f32 %v580, %v617
        %v650 = vadd.f32 %v581, %v618
        %v651 = vadd.f32 %v582, %v619
        %v652 = vadd.f32 %v583, %v620
        %v653 = vadd.f32 %v584, %v621
        %v654 = vadd.f32 %v585, %v622
        %v655 = vadd.f32 %v586, %v623
        %v656 = vadd.f32 %v587, %v624
        %v657 = vadd.f32 %v588, %v625
        %v658 = vadd.f32 %v589, %v626
        %v659 = vadd.f32 %v590, %v627
        %v660 = vadd.f32 %v591, %v628
        %v661 = vadd.f32 %v592, %v629
        %v662 = vadd.f32 %v593, %v630
        %v663 = vadd.f32 %v594, %v631
        %v664 = vadd.f32 %v595, %v632
        %v665 = vadd.f32 %v596, %v633
        %v666 = vadd.f32 %v597, %v634
        %v667 = vadd.f32 %v598, %v635
        %v668 = vadd.f32 %v599, %v636
        %v669 = vadd.f32 %v600, %v637
        %v670 = vadd.f32 %v601, %v638
        %v671 = vadd.f32 %v602, %v639
        %v672 = vadd.f32 %v603, %v640
        %v673 = vadd.f32 %v604, %v641
        %v674 = vadd.f32 %v605, %v642
        %v675 = vld [vmem:[%s1 + $0x15] sm:$0x1]
        %v676 = vlaneseq
        %v677 = vshrl.u32 %v676, 7
        %v678 = vsub.s32 0, %v677
        %v679 = vrot.slane %v675, %v678
        %v680 = vmul.f32 %v430, %v679
        %v681 = vmul.f32 %v431, %v679
        %v682 = vmul.f32 %v432, %v679
        %v683 = vmul.f32 %v433, %v679
        %v684 = vmul.f32 %v434, %v679
        %v685 = vmul.f32 %v435, %v679
        %v686 = vmul.f32 %v436, %v679
        %v687 = vmul.f32 %v437, %v679
        %v688 = vmul.f32 %v438, %v679
        %v689 = vmul.f32 %v439, %v679
        %v690 = vmul.f32 %v440, %v679
        %v691 = vmul.f32 %v441, %v679
        %v692 = vmul.f32 %v442, %v679
        %v693 = vmul.f32 %v443, %v679
        %v694 = vmul.f32 %v444, %v679
        %v695 = vmul.f32 %v445, %v679
        %v696 = vmul.f32 %v446, %v679
        %v697 = vmul.f32 %v447, %v679
        %v698 = vmul.f32 %v448, %v679
        %v699 = vmul.f32 %v449, %v679
        %v700 = vmul.f32 %v450, %v679
        %v701 = vmul.f32 %v451, %v679
        %v702 = vmul.f32 %v452, %v679
        %v703 = vmul.f32 %v453, %v679
        %v704 = vmul.f32 %v454, %v679
        %v705 = vmul.f32 %v455, %v679
        %v706 = vmul.f32 %v456, %v679
        %v707 = vmul.f32 %v457, %v679
        %v708 = vmul.f32 %v458, %v679
        %v709 = vmul.f32 %v459, %v679
        %v710 = vmul.f32 %v460, %v679
        %v711 = vmul.f32 %v461, %v679
        %v712 = vadd.f32 %v643, %v680
        %v713 = vadd.f32 %v644, %v681
        %v714 = vadd.f32 %v645, %v682
        %v715 = vadd.f32 %v646, %v683
        %v716 = vadd.f32 %v647, %v684
        %v717 = vadd.f32 %v648, %v685
        %v718 = vadd.f32 %v649, %v686
        %v719 = vadd.f32 %v650, %v687
        %v720 = vadd.f32 %v651, %v688
        %v721 = vadd.f32 %v652, %v689
        %v722 = vadd.f32 %v653, %v690
        %v723 = vadd.f32 %v654, %v691
        %v724 = vadd.f32 %v655, %v692
        %v725 = vadd.f32 %v656, %v693
        %v726 = vadd.f32 %v657, %v694
        %v727 = vadd.f32 %v658, %v695
        %v728 = vadd.f32 %v659, %v696
        %v729 = vadd.f32 %v660, %v697
        %v730 = vadd.f32 %v661, %v698
        %v731 = vadd.f32 %v662, %v699
        %v732 = vadd.f32 %v663, %v700
        %v733 = vadd.f32 %v664, %v701
        %v734 = vadd.f32 %v665, %v702
        %v735 = vadd.f32 %v666, %v703
        %v736 = vadd.f32 %v667, %v704
        %v737 = vadd.f32 %v668, %v705
        %v738 = vadd.f32 %v669, %v706
        %v739 = vadd.f32 %v670, %v707
        %v740 = vadd.f32 %v671, %v708
        %v741 = vadd.f32 %v672, %v709
        %v742 = vadd.f32 %v673, %v710
        %v743 = vadd.f32 %v674, %v711
        %v744 = vld [vmem:[%s1 + $0x1c] sm:$0x1]
        %v745 = vlaneseq
        %v746 = vshrl.u32 %v745, 7
        %v747 = vsub.s32 0, %v746
        %v748 = vrot.slane %v744, %v747
        %v749 = vmul.f32 %v432, %v748
        %v750 = vmul.f32 %v433, %v748
        %v751 = vmul.f32 %v434, %v748
        %v752 = vmul.f32 %v435, %v748
        %v753 = vmul.f32 %v436, %v748
        %v754 = vmul.f32 %v437, %v748
        %v755 = vmul.f32 %v438, %v748
        %v756 = vmul.f32 %v439, %v748
        %v757 = vmul.f32 %v440, %v748
        %v758 = vmul.f32 %v441, %v748
        %v759 = vmul.f32 %v442, %v748
        %v760 = vmul.f32 %v443, %v748
        %v761 = vmul.f32 %v444, %v748
        %v762 = vmul.f32 %v445, %v748
        %v763 = vmul.f32 %v446, %v748
        %v764 = vmul.f32 %v447, %v748
        %v765 = vmul.f32 %v448, %v748
        %v766 = vmul.f32 %v449, %v748
        %v767 = vmul.f32 %v450, %v748
        %v768 = vmul.f32 %v451, %v748
        %v769 = vmul.f32 %v452, %v748
        %v770 = vmul.f32 %v453, %v748
        %v771 = vmul.f32 %v454, %v748
        %v772 = vmul.f32 %v455, %v748
        %v773 = vmul.f32 %v456, %v748
        %v774 = vmul.f32 %v457, %v748
        %v775 = vmul.f32 %v458, %v748
        %v776 = vmul.f32 %v459, %v748
        %v777 = vmul.f32 %v460, %v748
        %v778 = vmul.f32 %v461, %v748
        %v779 = vmul.f32 %v462, %v748
        %v780 = vmul.f32 %v463, %v748
        %v781 = vadd.f32 %v712, %v749
        %v782 = vadd.f32 %v713, %v750
        %v783 = vadd.f32 %v714, %v751
        %v784 = vadd.f32 %v715, %v752
        %v785 = vadd.f32 %v716, %v753
        %v786 = vadd.f32 %v717, %v754
        %v787 = vadd.f32 %v718, %v755
        %v788 = vadd.f32 %v719, %v756
        %v789 = vadd.f32 %v720, %v757
        %v790 = vadd.f32 %v721, %v758
        %v791 = vadd.f32 %v722, %v759
        %v792 = vadd.f32 %v723, %v760
        %v793 = vadd.f32 %v724, %v761
        %v794 = vadd.f32 %v725, %v762
        %v795 = vadd.f32 %v726, %v763
        %v796 = vadd.f32 %v727, %v764
        %v797 = vadd.f32 %v728, %v765
        %v798 = vadd.f32 %v729, %v766
        %v799 = vadd.f32 %v730, %v767
        %v800 = vadd.f32 %v731, %v768
        %v801 = vadd.f32 %v732, %v769
        %v802 = vadd.f32 %v733, %v770
        %v803 = vadd.f32 %v734, %v771
        %v804 = vadd.f32 %v735, %v772
        %v805 = vadd.f32 %v736, %v773
        %v806 = vadd.f32 %v737, %v774
        %v807 = vadd.f32 %v738, %v775
        %v808 = vadd.f32 %v739, %v776
        %v809 = vadd.f32 %v740, %v777
        %v810 = vadd.f32 %v741, %v778
        %v811 = vadd.f32 %v742, %v779
        %v812 = vadd.f32 %v743, %v780
        %v813 = vld [vmem:[%s1 + $0x23] sm:$0x1]
        %v814 = vlaneseq
        %v815 = vshrl.u32 %v814, 7
        %v816 = vsub.s32 0, %v815
        %v817 = vrot.slane %v813, %v816
        %v818 = vmul.f32 %v434, %v817
        %v819 = vmul.f32 %v435, %v817
        %v820 = vmul.f32 %v436, %v817
        %v821 = vmul.f32 %v437, %v817
        %v822 = vmul.f32 %v438, %v817
        %v823 = vmul.f32 %v439, %v817
        %v824 = vmul.f32 %v440, %v817
        %v825 = vmul.f32 %v441, %v817
        %v826 = vmul.f32 %v442, %v817
        %v827 = vmul.f32 %v443, %v817
        %v828 = vmul.f32 %v444, %v817
        %v829 = vmul.f32 %v445, %v817
        %v830 = vmul.f32 %v446, %v817
        %v831 = vmul.f32 %v447, %v817
        %v832 = vmul.f32 %v448, %v817
        %v833 = vmul.f32 %v449, %v817
        %v834 = vmul.f32 %v450, %v817
        %v835 = vmul.f32 %v451, %v817
        %v836 = vmul.f32 %v452, %v817
        %v837 = vmul.f32 %v453, %v817
        %v838 = vmul.f32 %v454, %v817
        %v839 = vmul.f32 %v455, %v817
        %v840 = vmul.f32 %v456, %v817
        %v841 = vmul.f32 %v457, %v817
        %v842 = vmul.f32 %v458, %v817
        %v843 = vmul.f32 %v459, %v817
        %v844 = vmul.f32 %v460, %v817
        %v845 = vmul.f32 %v461, %v817
        %v846 = vmul.f32 %v462, %v817
        %v847 = vmul.f32 %v463, %v817
        %v848 = vmul.f32 %v464, %v817
        %v849 = vmul.f32 %v465, %v817
        %v850 = vadd.f32 %v781, %v818
        %v851 = vadd.f32 %v782, %v819
        %v852 = vadd.f32 %v783, %v820
        %v853 = vadd.f32 %v784, %v821
        %v854 = vadd.f32 %v785, %v822
        %v855 = vadd.f32 %v786, %v823
        %v856 = vadd.f32 %v787, %v824
        %v857 = vadd.f32 %v788, %v825
        %v858 = vadd.f32 %v789, %v826
        %v859 = vadd.f32 %v790, %v827
        %v860 = vadd.f32 %v791, %v828
        %v861 = vadd.f32 %v792, %v829
        %v862 = vadd.f32 %v793, %v830
        %v863 = vadd.f32 %v794, %v831
        %v864 = vadd.f32 %v795, %v832
        %v865 = vadd.f32 %v796, %v833
        %v866 = vadd.f32 %v797, %v834
        %v867 = vadd.f32 %v798, %v835
        %v868 = vadd.f32 %v799, %v836
        %v869 = vadd.f32 %v800, %v837
        %v870 = vadd.f32 %v801, %v838
        %v871 = vadd.f32 %v802, %v839
        %v872 = vadd.f32 %v803, %v840
        %v873 = vadd.f32 %v804, %v841
        %v874 = vadd.f32 %v805, %v842
        %v875 = vadd.f32 %v806, %v843
        %v876 = vadd.f32 %v807, %v844
        %v877 = vadd.f32 %v808, %v845
        %v878 = vadd.f32 %v809, %v846
        %v879 = vadd.f32 %v810, %v847
        %v880 = vadd.f32 %v811, %v848
        %v881 = vadd.f32 %v812, %v849
        %v882 = vld [vmem:[%s1 + $0x2a] sm:$0x1]
        %v883 = vlaneseq
        %v884 = vshrl.u32 %v883, 7
        %v885 = vsub.s32 0, %v884
        %v886 = vrot.slane %v882, %v885
        %v887 = vmul.f32 %v436, %v886
        %v888 = vmul.f32 %v437, %v886
        %v889 = vmul.f32 %v438, %v886
        %v890 = vmul.f32 %v439, %v886
        %v891 = vmul.f32 %v440, %v886
        %v892 = vmul.f32 %v441, %v886
        %v893 = vmul.f32 %v442, %v886
        %v894 = vmul.f32 %v443, %v886
        %v895 = vmul.f32 %v444, %v886
        %v896 = vmul.f32 %v445, %v886
        %v897 = vmul.f32 %v446, %v886
        %v898 = vmul.f32 %v447, %v886
        %v899 = vmul.f32 %v448, %v886
        %v900 = vmul.f32 %v449, %v886
        %v901 = vmul.f32 %v450, %v886
        %v902 = vmul.f32 %v451, %v886
        %v903 = vmul.f32 %v452, %v886
        %v904 = vmul.f32 %v453, %v886
        %v905 = vmul.f32 %v454, %v886
        %v906 = vmul.f32 %v455, %v886
        %v907 = vmul.f32 %v456, %v886
        %v908 = vmul.f32 %v457, %v886
        %v909 = vmul.f32 %v458, %v886
        %v910 = vmul.f32 %v459, %v886
        %v911 = vmul.f32 %v460, %v886
        %v912 = vmul.f32 %v461, %v886
        %v913 = vmul.f32 %v462, %v886
        %v914 = vmul.f32 %v463, %v886
        %v915 = vmul.f32 %v464, %v886
        %v916 = vmul.f32 %v465, %v886
        %v917 = vmul.f32 %v466, %v886
        %v918 = vmul.f32 %v467, %v886
        %v919 = vadd.f32 %v850, %v887
        %v920 = vadd.f32 %v851, %v888
        %v921 = vadd.f32 %v852, %v889
        %v922 = vadd.f32 %v853, %v890
        %v923 = vadd.f32 %v854, %v891
        %v924 = vadd.f32 %v855, %v892
        %v925 = vadd.f32 %v856, %v893
        %v926 = vadd.f32 %v857, %v894
        %v927 = vadd.f32 %v858, %v895
        %v928 = vadd.f32 %v859, %v896
        %v929 = vadd.f32 %v860, %v897
        %v930 = vadd.f32 %v861, %v898
        %v931 = vadd.f32 %v862, %v899
        %v932 = vadd.f32 %v863, %v900
        %v933 = vadd.f32 %v864, %v901
        %v934 = vadd.f32 %v865, %v902
        %v935 = vadd.f32 %v866, %v903
        %v936 = vadd.f32 %v867, %v904
        %v937 = vadd.f32 %v868, %v905
        %v938 = vadd.f32 %v869, %v906
        %v939 = vadd.f32 %v870, %v907
        %v940 = vadd.f32 %v871, %v908
        %v941 = vadd.f32 %v872, %v909
        %v942 = vadd.f32 %v873, %v910
        %v943 = vadd.f32 %v874, %v911
        %v944 = vadd.f32 %v875, %v912
        %v945 = vadd.f32 %v876, %v913
        %v946 = vadd.f32 %v877, %v914
        %v947 = vadd.f32 %v878, %v915
        %v948 = vadd.f32 %v879, %v916
        %v949 = vadd.f32 %v880, %v917
        %v950 = vadd.f32 %v881, %v918
        %v951 = vld [vmem:[#allocation2 + $0x1] sm:$0xff]
        %v952 = vld [vmem:[#allocation2 + $0x9] sm:$0xff]
        %v953 = vld [vmem:[#allocation2 + $0x19] sm:$0xff]
        %v954 = vld [vmem:[#allocation2 + $0x21] sm:$0xff]
        %v955 = vld [vmem:[#allocation2 + $0x31] sm:$0xff]
        %v956 = vld [vmem:[#allocation2 + $0x39] sm:$0xff]
        %v957 = vld [vmem:[#allocation2 + $0x49] sm:$0xff]
        %v958 = vld [vmem:[#allocation2 + $0x51] sm:$0xff]
        %v959 = vld [vmem:[#allocation2 + $0x61] sm:$0xff]
        %v960 = vld [vmem:[#allocation2 + $0x69] sm:$0xff]
        %v961 = vld [vmem:[#allocation2 + $0x79] sm:$0xff]
        %v962 = vld [vmem:[#allocation2 + $0x81] sm:$0xff]
        %v963 = vld [vmem:[#allocation2 + $0x91] sm:$0xff]
        %v964 = vld [vmem:[#allocation2 + $0x99] sm:$0xff]
        %v965 = vld [vmem:[#allocation2 + $0xa9] sm:$0xff]
        %v966 = vld [vmem:[#allocation2 + $0xb1] sm:$0xff]
        %v967 = vld [vmem:[#allocation2 + $0xc1] sm:$0xff]
        %v968 = vld [vmem:[#allocation2 + $0xc9] sm:$0xff]
        %v969 = vld [vmem:[#allocation2 + $0xd9] sm:$0xff]
        %v970 = vld [vmem:[#allocation2 + $0xe1] sm:$0xff]
        %v971 = vld [vmem:[#allocation2 + $0xf1] sm:$0xff]
        %v972 = vld [vmem:[#allocation2 + $0xf9] sm:$0xff]
        %v973 = vld [vmem:[#allocation2 + $0x109] sm:$0xff]
        %v974 = vld [vmem:[#allocation2 + $0x111] sm:$0xff]
        %v975 = vld [vmem:[#allocation2 + $0x121] sm:$0xff]
        %v976 = vld [vmem:[#allocation2 + $0x129] sm:$0xff]
        %v977 = vld [vmem:[#allocation2 + $0x139] sm:$0xff]
        %v978 = vld [vmem:[#allocation2 + $0x141] sm:$0xff]
        %v979 = vld [vmem:[#allocation2 + $0x151] sm:$0xff]
        %v980 = vld [vmem:[#allocation2 + $0x159] sm:$0xff]
        %v981 = vld [vmem:[#allocation2 + $0x169] sm:$0xff]
        %v982 = vld [vmem:[#allocation2 + $0x171] sm:$0xff]
        %v983 = vld [vmem:[#allocation2 + $0x181] sm:$0xff]
        %v984 = vld [vmem:[#allocation2 + $0x189] sm:$0xff]
        %v985 = vld [vmem:[#allocation2 + $0x199] sm:$0xff]
        %v986 = vld [vmem:[#allocation2 + $0x1a1] sm:$0xff]
        %v987 = vld [vmem:[#allocation2 + $0x1b1] sm:$0xff]
        %v988 = vld [vmem:[#allocation2 + $0x1b9] sm:$0xff]
        %v989 = vld [vmem:[#allocation2 + $0x1c9] sm:$0xff]
        %v990 = vld [vmem:[#allocation2 + $0x1d1] sm:$0xff]
        %v991 = vld [vmem:[#allocation2 + $0x1e1] sm:$0xff]
        %v992 = vld [vmem:[#allocation2 + $0x1e9] sm:$0xff]
        %v993 = vld [vmem:[#allocation2 + $0x1f9] sm:$0xff]
        %v994 = vld [vmem:[#allocation2 + $0x201] sm:$0xff]
        %v995 = vld [vmem:[%s1 + $0x1] sm:$0x1]
        %v996 = vlaneseq
        %v997 = vshrl.u32 %v996, 7
        %v998 = vsub.s32 0, %v997
        %v999 = vrot.slane %v995, %v998
        %v1000 = vmul.f32 %v951, %v999
        %v1001 = vmul.f32 %v952, %v999
        %v1002 = vmul.f32 %v953, %v999
        %v1003 = vmul.f32 %v954, %v999
        %v1004 = vmul.f32 %v955, %v999
        %v1005 = vmul.f32 %v956, %v999
        %v1006 = vmul.f32 %v957, %v999
        %v1007 = vmul.f32 %v958, %v999
        %v1008 = vmul.f32 %v959, %v999
        %v1009 = vmul.f32 %v960, %v999
        %v1010 = vmul.f32 %v961, %v999
        %v1011 = vmul.f32 %v962, %v999
        %v1012 = vmul.f32 %v963, %v999
        %v1013 = vmul.f32 %v964, %v999
        %v1014 = vmul.f32 %v965, %v999
        %v1015 = vmul.f32 %v966, %v999
        %v1016 = vmul.f32 %v967, %v999
        %v1017 = vmul.f32 %v968, %v999
        %v1018 = vmul.f32 %v969, %v999
        %v1019 = vmul.f32 %v970, %v999
        %v1020 = vmul.f32 %v971, %v999
        %v1021 = vmul.f32 %v972, %v999
        %v1022 = vmul.f32 %v973, %v999
        %v1023 = vmul.f32 %v974, %v999
        %v1024 = vmul.f32 %v975, %v999
        %v1025 = vmul.f32 %v976, %v999
        %v1026 = vmul.f32 %v977, %v999
        %v1027 = vmul.f32 %v978, %v999
        %v1028 = vmul.f32 %v979, %v999
        %v1029 = vmul.f32 %v980, %v999
        %v1030 = vmul.f32 %v981, %v999
        %v1031 = vmul.f32 %v982, %v999
        %v1032 = vadd.f32 %v919, %v1000
        %v1033 = vadd.f32 %v920, %v1001
        %v1034 = vadd.f32 %v921, %v1002
        %v1035 = vadd.f32 %v922, %v1003
        %v1036 = vadd.f32 %v923, %v1004
        %v1037 = vadd.f32 %v924, %v1005
        %v1038 = vadd.f32 %v925, %v1006
        %v1039 = vadd.f32 %v926, %v1007
        %v1040 = vadd.f32 %v927, %v1008
        %v1041 = vadd.f32 %v928, %v1009
        %v1042 = vadd.f32 %v929, %v1010
        %v1043 = vadd.f32 %v930, %v1011
        %v1044 = vadd.f32 %v931, %v1012
        %v1045 = vadd.f32 %v932, %v1013
        %v1046 = vadd.f32 %v933, %v1014
        %v1047 = vadd.f32 %v934, %v1015
        %v1048 = vadd.f32 %v935, %v1016
        %v1049 = vadd.f32 %v936, %v1017
        %v1050 = vadd.f32 %v937, %v1018
        %v1051 = vadd.f32 %v938, %v1019
        %v1052 = vadd.f32 %v939, %v1020
        %v1053 = vadd.f32 %v940, %v1021
        %v1054 = vadd.f32 %v941, %v1022
        %v1055 = vadd.f32 %v942, %v1023
        %v1056 = vadd.f32 %v943, %v1024
        %v1057 = vadd.f32 %v944, %v1025
        %v1058 = vadd.f32 %v945, %v1026
        %v1059 = vadd.f32 %v946, %v1027
        %v1060 = vadd.f32 %v947, %v1028
        %v1061 = vadd.f32 %v948, %v1029
        %v1062 = vadd.f32 %v949, %v1030
        %v1063 = vadd.f32 %v950, %v1031
        %v1064 = vld [vmem:[%s1 + $0x8] sm:$0x1]
        %v1065 = vlaneseq
        %v1066 = vshrl.u32 %v1065, 7
        %v1067 = vsub.s32 0, %v1066
        %v1068 = vrot.slane %v1064, %v1067
        %v1069 = vmul.f32 %v953, %v1068
        %v1070 = vmul.f32 %v954, %v1068
        %v1071 = vmul.f32 %v955, %v1068
        %v1072 = vmul.f32 %v956, %v1068
        %v1073 = vmul.f32 %v957, %v1068
        %v1074 = vmul.f32 %v958, %v1068
        %v1075 = vmul.f32 %v959, %v1068
        %v1076 = vmul.f32 %v960, %v1068
        %v1077 = vmul.f32 %v961, %v1068
        %v1078 = vmul.f32 %v962, %v1068
        %v1079 = vmul.f32 %v963, %v1068
        %v1080 = vmul.f32 %v964, %v1068
        %v1081 = vmul.f32 %v965, %v1068
        %v1082 = vmul.f32 %v966, %v1068
        %v1083 = vmul.f32 %v967, %v1068
        %v1084 = vmul.f32 %v968, %v1068
        %v1085 = vmul.f32 %v969, %v1068
        %v1086 = vmul.f32 %v970, %v1068
        %v1087 = vmul.f32 %v971, %v1068
        %v1088 = vmul.f32 %v972, %v1068
        %v1089 = vmul.f32 %v973, %v1068
        %v1090 = vmul.f32 %v974, %v1068
        %v1091 = vmul.f32 %v975, %v1068
        %v1092 = vmul.f32 %v976, %v1068
        %v1093 = vmul.f32 %v977, %v1068
        %v1094 = vmul.f32 %v978, %v1068
        %v1095 = vmul.f32 %v979, %v1068
        %v1096 = vmul.f32 %v980, %v1068
        %v1097 = vmul.f32 %v981, %v1068
        %v1098 = vmul.f32 %v982, %v1068
        %v1099 = vmul.f32 %v983, %v1068
        %v1100 = vmul.f32 %v984, %v1068
        %v1101 = vadd.f32 %v1032, %v1069
        %v1102 = vadd.f32 %v1033, %v1070
        %v1103 = vadd.f32 %v1034, %v1071
        %v1104 = vadd.f32 %v1035, %v1072
        %v1105 = vadd.f32 %v1036, %v1073
        %v1106 = vadd.f32 %v1037, %v1074
        %v1107 = vadd.f32 %v1038, %v1075
        %v1108 = vadd.f32 %v1039, %v1076
        %v1109 = vadd.f32 %v1040, %v1077
        %v1110 = vadd.f32 %v1041, %v1078
        %v1111 = vadd.f32 %v1042, %v1079
        %v1112 = vadd.f32 %v1043, %v1080
        %v1113 = vadd.f32 %v1044, %v1081
        %v1114 = vadd.f32 %v1045, %v1082
        %v1115 = vadd.f32 %v1046, %v1083
        %v1116 = vadd.f32 %v1047, %v1084
        %v1117 = vadd.f32 %v1048, %v1085
        %v1118 = vadd.f32 %v1049, %v1086
        %v1119 = vadd.f32 %v1050, %v1087
        %v1120 = vadd.f32 %v1051, %v1088
        %v1121 = vadd.f32 %v1052, %v1089
        %v1122 = vadd.f32 %v1053, %v1090
        %v1123 = vadd.f32 %v1054, %v1091
        %v1124 = vadd.f32 %v1055, %v1092
        %v1125 = vadd.f32 %v1056, %v1093
        %v1126 = vadd.f32 %v1057, %v1094
        %v1127 = vadd.f32 %v1058, %v1095
        %v1128 = vadd.f32 %v1059, %v1096
        %v1129 = vadd.f32 %v1060, %v1097
        %v1130 = vadd.f32 %v1061, %v1098
        %v1131 = vadd.f32 %v1062, %v1099
        %v1132 = vadd.f32 %v1063, %v1100
        %v1133 = vld [vmem:[%s1 + $0xf] sm:$0x1]
        %v1134 = vlaneseq
        %v1135 = vshrl.u32 %v1134, 7
        %v1136 = vsub.s32 0, %v1135
        %v1137 = vrot.slane %v1133, %v1136
        %v1138 = vmul.f32 %v955, %v1137
        %v1139 = vmul.f32 %v956, %v1137
        %v1140 = vmul.f32 %v957, %v1137
        %v1141 = vmul.f32 %v958, %v1137
        %v1142 = vmul.f32 %v959, %v1137
        %v1143 = vmul.f32 %v960, %v1137
        %v1144 = vmul.f32 %v961, %v1137
        %v1145 = vmul.f32 %v962, %v1137
        %v1146 = vmul.f32 %v963, %v1137
        %v1147 = vmul.f32 %v964, %v1137
        %v1148 = vmul.f32 %v965, %v1137
        %v1149 = vmul.f32 %v966, %v1137
        %v1150 = vmul.f32 %v967, %v1137
        %v1151 = vmul.f32 %v968, %v1137
        %v1152 = vmul.f32 %v969, %v1137
        %v1153 = vmul.f32 %v970, %v1137
        %v1154 = vmul.f32 %v971, %v1137
        %v1155 = vmul.f32 %v972, %v1137
        %v1156 = vmul.f32 %v973, %v1137
        %v1157 = vmul.f32 %v974, %v1137
        %v1158 = vmul.f32 %v975, %v1137
        %v1159 = vmul.f32 %v976, %v1137
        %v1160 = vmul.f32 %v977, %v1137
        %v1161 = vmul.f32 %v978, %v1137
        %v1162 = vmul.f32 %v979, %v1137
        %v1163 = vmul.f32 %v980, %v1137
        %v1164 = vmul.f32 %v981, %v1137
        %v1165 = vmul.f32 %v982, %v1137
        %v1166 = vmul.f32 %v983, %v1137
        %v1167 = vmul.f32 %v984, %v1137
        %v1168 = vmul.f32 %v985, %v1137
        %v1169 = vmul.f32 %v986, %v1137
        %v1170 = vadd.f32 %v1101, %v1138
        %v1171 = vadd.f32 %v1102, %v1139
        %v1172 = vadd.f32 %v1103, %v1140
        %v1173 = vadd.f32 %v1104, %v1141
        %v1174 = vadd.f32 %v1105, %v1142
        %v1175 = vadd.f32 %v1106, %v1143
        %v1176 = vadd.f32 %v1107, %v1144
        %v1177 = vadd.f32 %v1108, %v1145
        %v1178 = vadd.f32 %v1109, %v1146
        %v1179 = vadd.f32 %v1110, %v1147
        %v1180 = vadd.f32 %v1111, %v1148
        %v1181 = vadd.f32 %v1112, %v1149
        %v1182 = vadd.f32 %v1113, %v1150
        %v1183 = vadd.f32 %v1114, %v1151
        %v1184 = vadd.f32 %v1115, %v1152
        %v1185 = vadd.f32 %v1116, %v1153
        %v1186 = vadd.f32 %v1117, %v1154
        %v1187 = vadd.f32 %v1118, %v1155
        %v1188 = vadd.f32 %v1119, %v1156
        %v1189 = vadd.f32 %v1120, %v1157
        %v1190 = vadd.f32 %v1121, %v1158
        %v1191 = vadd.f32 %v1122, %v1159
        %v1192 = vadd.f32 %v1123, %v1160
        %v1193 = vadd.f32 %v1124, %v1161
        %v1194 = vadd.f32 %v1125, %v1162
        %v1195 = vadd.f32 %v1126, %v1163
        %v1196 = vadd.f32 %v1127, %v1164
        %v1197 = vadd.f32 %v1128, %v1165
        %v1198 = vadd.f32 %v1129, %v1166
        %v1199 = vadd.f32 %v1130, %v1167
        %v1200 = vadd.f32 %v1131, %v1168
        %v1201 = vadd.f32 %v1132, %v1169
        %v1202 = vld [vmem:[%s1 + $0x16] sm:$0x1]
        %v1203 = vlaneseq
        %v1204 = vshrl.u32 %v1203, 7
        %v1205 = vsub.s32 0, %v1204
        %v1206 = vrot.slane %v1202, %v1205
        %v1207 = vmul.f32 %v957, %v1206
        %v1208 = vmul.f32 %v958, %v1206
        %v1209 = vmul.f32 %v959, %v1206
        %v1210 = vmul.f32 %v960, %v1206
        %v1211 = vmul.f32 %v961, %v1206
        %v1212 = vmul.f32 %v962, %v1206
        %v1213 = vmul.f32 %v963, %v1206
        %v1214 = vmul.f32 %v964, %v1206
        %v1215 = vmul.f32 %v965, %v1206
        %v1216 = vmul.f32 %v966, %v1206
        %v1217 = vmul.f32 %v967, %v1206
        %v1218 = vmul.f32 %v968, %v1206
        %v1219 = vmul.f32 %v969, %v1206
        %v1220 = vmul.f32 %v970, %v1206
        %v1221 = vmul.f32 %v971, %v1206
        %v1222 = vmul.f32 %v972, %v1206
        %v1223 = vmul.f32 %v973, %v1206
        %v1224 = vmul.f32 %v974, %v1206
        %v1225 = vmul.f32 %v975, %v1206
        %v1226 = vmul.f32 %v976, %v1206
        %v1227 = vmul.f32 %v977, %v1206
        %v1228 = vmul.f32 %v978, %v1206
        %v1229 = vmul.f32 %v979, %v1206
        %v1230 = vmul.f32 %v980, %v1206
        %v1231 = vmul.f32 %v981, %v1206
        %v1232 = vmul.f32 %v982, %v1206
        %v1233 = vmul.f32 %v983, %v1206
        %v1234 = vmul.f32 %v984, %v1206
        %v1235 = vmul.f32 %v985, %v1206
        %v1236 = vmul.f32 %v986, %v1206
        %v1237 = vmul.f32 %v987, %v1206
        %v1238 = vmul.f32 %v988, %v1206
        %v1239 = vadd.f32 %v1170, %v1207
        %v1240 = vadd.f32 %v1171, %v1208
        %v1241 = vadd.f32 %v1172, %v1209
        %v1242 = vadd.f32 %v1173, %v1210
        %v1243 = vadd.f32 %v1174, %v1211
        %v1244 = vadd.f32 %v1175, %v1212
        %v1245 = vadd.f32 %v1176, %v1213
        %v1246 = vadd.f32 %v1177, %v1214
        %v1247 = vadd.f32 %v1178, %v1215
        %v1248 = vadd.f32 %v1179, %v1216
        %v1249 = vadd.f32 %v1180, %v1217
        %v1250 = vadd.f32 %v1181, %v1218
        %v1251 = vadd.f32 %v1182, %v1219
        %v1252 = vadd.f32 %v1183, %v1220
        %v1253 = vadd.f32 %v1184, %v1221
        %v1254 = vadd.f32 %v1185, %v1222
        %v1255 = vadd.f32 %v1186, %v1223
        %v1256 = vadd.f32 %v1187, %v1224
        %v1257 = vadd.f32 %v1188, %v1225
        %v1258 = vadd.f32 %v1189, %v1226
        %v1259 = vadd.f32 %v1190, %v1227
        %v1260 = vadd.f32 %v1191, %v1228
        %v1261 = vadd.f32 %v1192, %v1229
        %v1262 = vadd.f32 %v1193, %v1230
        %v1263 = vadd.f32 %v1194, %v1231
        %v1264 = vadd.f32 %v1195, %v1232
        %v1265 = vadd.f32 %v1196, %v1233
        %v1266 = vadd.f32 %v1197, %v1234
        %v1267 = vadd.f32 %v1198, %v1235
        %v1268 = vadd.f32 %v1199, %v1236
        %v1269 = vadd.f32 %v1200, %v1237
        %v1270 = vadd.f32 %v1201, %v1238
        %v1271 = vld [vmem:[%s1 + $0x1d] sm:$0x1]
        %v1272 = vlaneseq
        %v1273 = vshrl.u32 %v1272, 7
        %v1274 = vsub.s32 0, %v1273
        %v1275 = vrot.slane %v1271, %v1274
        %v1276 = vmul.f32 %v959, %v1275
        %v1277 = vmul.f32 %v960, %v1275
        %v1278 = vmul.f32 %v961, %v1275
        %v1279 = vmul.f32 %v962, %v1275
        %v1280 = vmul.f32 %v963, %v1275
        %v1281 = vmul.f32 %v964, %v1275
        %v1282 = vmul.f32 %v965, %v1275
        %v1283 = vmul.f32 %v966, %v1275
        %v1284 = vmul.f32 %v967, %v1275
        %v1285 = vmul.f32 %v968, %v1275
        %v1286 = vmul.f32 %v969, %v1275
        %v1287 = vmul.f32 %v970, %v1275
        %v1288 = vmul.f32 %v971, %v1275
        %v1289 = vmul.f32 %v972, %v1275
        %v1290 = vmul.f32 %v973, %v1275
        %v1291 = vmul.f32 %v974, %v1275
        %v1292 = vmul.f32 %v975, %v1275
        %v1293 = vmul.f32 %v976, %v1275
        %v1294 = vmul.f32 %v977, %v1275
        %v1295 = vmul.f32 %v978, %v1275
        %v1296 = vmul.f32 %v979, %v1275
        %v1297 = vmul.f32 %v980, %v1275
        %v1298 = vmul.f32 %v981, %v1275
        %v1299 = vmul.f32 %v982, %v1275
        %v1300 = vmul.f32 %v983, %v1275
        %v1301 = vmul.f32 %v984, %v1275
        %v1302 = vmul.f32 %v985, %v1275
        %v1303 = vmul.f32 %v986, %v1275
        %v1304 = vmul.f32 %v987, %v1275
        %v1305 = vmul.f32 %v988, %v1275
        %v1306 = vmul.f32 %v989, %v1275
        %v1307 = vmul.f32 %v990, %v1275
        %v1308 = vadd.f32 %v1239, %v1276
        %v1309 = vadd.f32 %v1240, %v1277
        %v1310 = vadd.f32 %v1241, %v1278
        %v1311 = vadd.f32 %v1242, %v1279
        %v1312 = vadd.f32 %v1243, %v1280
        %v1313 = vadd.f32 %v1244, %v1281
        %v1314 = vadd.f32 %v1245, %v1282
        %v1315 = vadd.f32 %v1246, %v1283
        %v1316 = vadd.f32 %v1247, %v1284
        %v1317 = vadd.f32 %v1248, %v1285
        %v1318 = vadd.f32 %v1249, %v1286
        %v1319 = vadd.f32 %v1250, %v1287
        %v1320 = vadd.f32 %v1251, %v1288
        %v1321 = vadd.f32 %v1252, %v1289
        %v1322 = vadd.f32 %v1253, %v1290
        %v1323 = vadd.f32 %v1254, %v1291
        %v1324 = vadd.f32 %v1255, %v1292
        %v1325 = vadd.f32 %v1256, %v1293
        %v1326 = vadd.f32 %v1257, %v1294
        %v1327 = vadd.f32 %v1258, %v1295
        %v1328 = vadd.f32 %v1259, %v1296
        %v1329 = vadd.f32 %v1260, %v1297
        %v1330 = vadd.f32 %v1261, %v1298
        %v1331 = vadd.f32 %v1262, %v1299
        %v1332 = vadd.f32 %v1263, %v1300
        %v1333 = vadd.f32 %v1264, %v1301
        %v1334 = vadd.f32 %v1265, %v1302
        %v1335 = vadd.f32 %v1266, %v1303
        %v1336 = vadd.f32 %v1267, %v1304
        %v1337 = vadd.f32 %v1268, %v1305
        %v1338 = vadd.f32 %v1269, %v1306
        %v1339 = vadd.f32 %v1270, %v1307
        %v1340 = vld [vmem:[%s1 + $0x24] sm:$0x1]
        %v1341 = vlaneseq
        %v1342 = vshrl.u32 %v1341, 7
        %v1343 = vsub.s32 0, %v1342
        %v1344 = vrot.slane %v1340, %v1343
        %v1345 = vmul.f32 %v961, %v1344
        %v1346 = vmul.f32 %v962, %v1344
        %v1347 = vmul.f32 %v963, %v1344
        %v1348 = vmul.f32 %v964, %v1344
        %v1349 = vmul.f32 %v965, %v1344
        %v1350 = vmul.f32 %v966, %v1344
        %v1351 = vmul.f32 %v967, %v1344
        %v1352 = vmul.f32 %v968, %v1344
        %v1353 = vmul.f32 %v969, %v1344
        %v1354 = vmul.f32 %v970, %v1344
        %v1355 = vmul.f32 %v971, %v1344
        %v1356 = vmul.f32 %v972, %v1344
        %v1357 = vmul.f32 %v973, %v1344
        %v1358 = vmul.f32 %v974, %v1344
        %v1359 = vmul.f32 %v975, %v1344
        %v1360 = vmul.f32 %v976, %v1344
        %v1361 = vmul.f32 %v977, %v1344
        %v1362 = vmul.f32 %v978, %v1344
        %v1363 = vmul.f32 %v979, %v1344
        %v1364 = vmul.f32 %v980, %v1344
        %v1365 = vmul.f32 %v981, %v1344
        %v1366 = vmul.f32 %v982, %v1344
        %v1367 = vmul.f32 %v983, %v1344
        %v1368 = vmul.f32 %v984, %v1344
        %v1369 = vmul.f32 %v985, %v1344
        %v1370 = vmul.f32 %v986, %v1344
        %v1371 = vmul.f32 %v987, %v1344
        %v1372 = vmul.f32 %v988, %v1344
        %v1373 = vmul.f32 %v989, %v1344
        %v1374 = vmul.f32 %v990, %v1344
        %v1375 = vmul.f32 %v991, %v1344
        %v1376 = vmul.f32 %v992, %v1344
        %v1377 = vadd.f32 %v1308, %v1345
        %v1378 = vadd.f32 %v1309, %v1346
        %v1379 = vadd.f32 %v1310, %v1347
        %v1380 = vadd.f32 %v1311, %v1348
        %v1381 = vadd.f32 %v1312, %v1349
        %v1382 = vadd.f32 %v1313, %v1350
        %v1383 = vadd.f32 %v1314, %v1351
        %v1384 = vadd.f32 %v1315, %v1352
        %v1385 = vadd.f32 %v1316, %v1353
        %v1386 = vadd.f32 %v1317, %v1354
        %v1387 = vadd.f32 %v1318, %v1355
        %v1388 = vadd.f32 %v1319, %v1356
        %v1389 = vadd.f32 %v1320, %v1357
        %v1390 = vadd.f32 %v1321, %v1358
        %v1391 = vadd.f32 %v1322, %v1359
        %v1392 = vadd.f32 %v1323, %v1360
        %v1393 = vadd.f32 %v1324, %v1361
        %v1394 = vadd.f32 %v1325, %v1362
        %v1395 = vadd.f32 %v1326, %v1363
        %v1396 = vadd.f32 %v1327, %v1364
        %v1397 = vadd.f32 %v1328, %v1365
        %v1398 = vadd.f32 %v1329, %v1366
        %v1399 = vadd.f32 %v1330, %v1367
        %v1400 = vadd.f32 %v1331, %v1368
        %v1401 = vadd.f32 %v1332, %v1369
        %v1402 = vadd.f32 %v1333, %v1370
        %v1403 = vadd.f32 %v1334, %v1371
        %v1404 = vadd.f32 %v1335, %v1372
        %v1405 = vadd.f32 %v1336, %v1373
        %v1406 = vadd.f32 %v1337, %v1374
        %v1407 = vadd.f32 %v1338, %v1375
        %v1408 = vadd.f32 %v1339, %v1376
        %v1409 = vld [vmem:[%s1 + $0x2b] sm:$0x1]
        %v1410 = vlaneseq
        %v1411 = vshrl.u32 %v1410, 7
        %v1412 = vsub.s32 0, %v1411
        %v1413 = vrot.slane %v1409, %v1412
        %v1414 = vmul.f32 %v963, %v1413
        %v1415 = vmul.f32 %v964, %v1413
        %v1416 = vmul.f32 %v965, %v1413
        %v1417 = vmul.f32 %v966, %v1413
        %v1418 = vmul.f32 %v967, %v1413
        %v1419 = vmul.f32 %v968, %v1413
        %v1420 = vmul.f32 %v969, %v1413
        %v1421 = vmul.f32 %v970, %v1413
        %v1422 = vmul.f32 %v971, %v1413
        %v1423 = vmul.f32 %v972, %v1413
        %v1424 = vmul.f32 %v973, %v1413
        %v1425 = vmul.f32 %v974, %v1413
        %v1426 = vmul.f32 %v975, %v1413
        %v1427 = vmul.f32 %v976, %v1413
        %v1428 = vmul.f32 %v977, %v1413
        %v1429 = vmul.f32 %v978, %v1413
        %v1430 = vmul.f32 %v979, %v1413
        %v1431 = vmul.f32 %v980, %v1413
        %v1432 = vmul.f32 %v981, %v1413
        %v1433 = vmul.f32 %v982, %v1413
        %v1434 = vmul.f32 %v983, %v1413
        %v1435 = vmul.f32 %v984, %v1413
        %v1436 = vmul.f32 %v985, %v1413
        %v1437 = vmul.f32 %v986, %v1413
        %v1438 = vmul.f32 %v987, %v1413
        %v1439 = vmul.f32 %v988, %v1413
        %v1440 = vmul.f32 %v989, %v1413
        %v1441 = vmul.f32 %v990, %v1413
        %v1442 = vmul.f32 %v991, %v1413
        %v1443 = vmul.f32 %v992, %v1413
        %v1444 = vmul.f32 %v993, %v1413
        %v1445 = vmul.f32 %v994, %v1413
        %v1446 = vadd.f32 %v1377, %v1414
        %v1447 = vadd.f32 %v1378, %v1415
        %v1448 = vadd.f32 %v1379, %v1416
        %v1449 = vadd.f32 %v1380, %v1417
        %v1450 = vadd.f32 %v1381, %v1418
        %v1451 = vadd.f32 %v1382, %v1419
        %v1452 = vadd.f32 %v1383, %v1420
        %v1453 = vadd.f32 %v1384, %v1421
        %v1454 = vadd.f32 %v1385, %v1422
        %v1455 = vadd.f32 %v1386, %v1423
        %v1456 = vadd.f32 %v1387, %v1424
        %v1457 = vadd.f32 %v1388, %v1425
        %v1458 = vadd.f32 %v1389, %v1426
        %v1459 = vadd.f32 %v1390, %v1427
        %v1460 = vadd.f32 %v1391, %v1428
        %v1461 = vadd.f32 %v1392, %v1429
        %v1462 = vadd.f32 %v1393, %v1430
        %v1463 = vadd.f32 %v1394, %v1431
        %v1464 = vadd.f32 %v1395, %v1432
        %v1465 = vadd.f32 %v1396, %v1433
        %v1466 = vadd.f32 %v1397, %v1434
        %v1467 = vadd.f32 %v1398, %v1435
        %v1468 = vadd.f32 %v1399, %v1436
        %v1469 = vadd.f32 %v1400, %v1437
        %v1470 = vadd.f32 %v1401, %v1438
        %v1471 = vadd.f32 %v1402, %v1439
        %v1472 = vadd.f32 %v1403, %v1440
        %v1473 = vadd.f32 %v1404, %v1441
        %v1474 = vadd.f32 %v1405, %v1442
        %v1475 = vadd.f32 %v1406, %v1443
        %v1476 = vadd.f32 %v1407, %v1444
        %v1477 = vadd.f32 %v1408, %v1445
        %v1478 = vld [vmem:[#allocation2 + $0x2] sm:$0xff]
        %v1479 = vld [vmem:[#allocation2 + $0xa] sm:$0xff]
        %v1480 = vld [vmem:[#allocation2 + $0x1a] sm:$0xff]
        %v1481 = vld [vmem:[#allocation2 + $0x22] sm:$0xff]
        %v1482 = vld [vmem:[#allocation2 + $0x32] sm:$0xff]
        %v1483 = vld [vmem:[#allocation2 + $0x3a] sm:$0xff]
        %v1484 = vld [vmem:[#allocation2 + $0x4a] sm:$0xff]
        %v1485 = vld [vmem:[#allocation2 + $0x52] sm:$0xff]
        %v1486 = vld [vmem:[#allocation2 + $0x62] sm:$0xff]
        %v1487 = vld [vmem:[#allocation2 + $0x6a] sm:$0xff]
        %v1488 = vld [vmem:[#allocation2 + $0x7a] sm:$0xff]
        %v1489 = vld [vmem:[#allocation2 + $0x82] sm:$0xff]
        %v1490 = vld [vmem:[#allocation2 + $0x92] sm:$0xff]
        %v1491 = vld [vmem:[#allocation2 + $0x9a] sm:$0xff]
        %v1492 = vld [vmem:[#allocation2 + $0xaa] sm:$0xff]
        %v1493 = vld [vmem:[#allocation2 + $0xb2] sm:$0xff]
        %v1494 = vld [vmem:[#allocation2 + $0xc2] sm:$0xff]
        %v1495 = vld [vmem:[#allocation2 + $0xca] sm:$0xff]
        %v1496 = vld [vmem:[#allocation2 + $0xda] sm:$0xff]
        %v1497 = vld [vmem:[#allocation2 + $0xe2] sm:$0xff]
        %v1498 = vld [vmem:[#allocation2 + $0xf2] sm:$0xff]
        %v1499 = vld [vmem:[#allocation2 + $0xfa] sm:$0xff]
        %v1500 = vld [vmem:[#allocation2 + $0x10a] sm:$0xff]
        %v1501 = vld [vmem:[#allocation2 + $0x112] sm:$0xff]
        %v1502 = vld [vmem:[#allocation2 + $0x122] sm:$0xff]
        %v1503 = vld [vmem:[#allocation2 + $0x12a] sm:$0xff]
        %v1504 = vld [vmem:[#allocation2 + $0x13a] sm:$0xff]
        %v1505 = vld [vmem:[#allocation2 + $0x142] sm:$0xff]
        %v1506 = vld [vmem:[#allocation2 + $0x152] sm:$0xff]
        %v1507 = vld [vmem:[#allocation2 + $0x15a] sm:$0xff]
        %v1508 = vld [vmem:[#allocation2 + $0x16a] sm:$0xff]
        %v1509 = vld [vmem:[#allocation2 + $0x172] sm:$0xff]
        %v1510 = vld [vmem:[#allocation2 + $0x182] sm:$0xff]
        %v1511 = vld [vmem:[#allocation2 + $0x18a] sm:$0xff]
        %v1512 = vld [vmem:[#allocation2 + $0x19a] sm:$0xff]
        %v1513 = vld [vmem:[#allocation2 + $0x1a2] sm:$0xff]
        %v1514 = vld [vmem:[#allocation2 + $0x1b2] sm:$0xff]
        %v1515 = vld [vmem:[#allocation2 + $0x1ba] sm:$0xff]
        %v1516 = vld [vmem:[#allocation2 + $0x1ca] sm:$0xff]
        %v1517 = vld [vmem:[#allocation2 + $0x1d2] sm:$0xff]
        %v1518 = vld [vmem:[#allocation2 + $0x1e2] sm:$0xff]
        %v1519 = vld [vmem:[#allocation2 + $0x1ea] sm:$0xff]
        %v1520 = vld [vmem:[#allocation2 + $0x1fa] sm:$0xff]
        %v1521 = vld [vmem:[#allocation2 + $0x202] sm:$0xff]
        %v1522 = vld [vmem:[%s1 + $0x2] sm:$0x1]
        %v1523 = vlaneseq
        %v1524 = vshrl.u32 %v1523, 7
        %v1525 = vsub.s32 0, %v1524
        %v1526 = vrot.slane %v1522, %v1525
        %v1527 = vmul.f32 %v1478, %v1526
        %v1528 = vmul.f32 %v1479, %v1526
        %v1529 = vmul.f32 %v1480, %v1526
        %v1530 = vmul.f32 %v1481, %v1526
        %v1531 = vmul.f32 %v1482, %v1526
        %v1532 = vmul.f32 %v1483, %v1526
        %v1533 = vmul.f32 %v1484, %v1526
        %v1534 = vmul.f32 %v1485, %v1526
        %v1535 = vmul.f32 %v1486, %v1526
        %v1536 = vmul.f32 %v1487, %v1526
        %v1537 = vmul.f32 %v1488, %v1526
        %v1538 = vmul.f32 %v1489, %v1526
        %v1539 = vmul.f32 %v1490, %v1526
        %v1540 = vmul.f32 %v1491, %v1526
        %v1541 = vmul.f32 %v1492, %v1526
        %v1542 = vmul.f32 %v1493, %v1526
        %v1543 = vmul.f32 %v1494, %v1526
        %v1544 = vmul.f32 %v1495, %v1526
        %v1545 = vmul.f32 %v1496, %v1526
        %v1546 = vmul.f32 %v1497, %v1526
        %v1547 = vmul.f32 %v1498, %v1526
        %v1548 = vmul.f32 %v1499, %v1526
        %v1549 = vmul.f32 %v1500, %v1526
        %v1550 = vmul.f32 %v1501, %v1526
        %v1551 = vmul.f32 %v1502, %v1526
        %v1552 = vmul.f32 %v1503, %v1526
        %v1553 = vmul.f32 %v1504, %v1526
        %v1554 = vmul.f32 %v1505, %v1526
        %v1555 = vmul.f32 %v1506, %v1526
        %v1556 = vmul.f32 %v1507, %v1526
        %v1557 = vmul.f32 %v1508, %v1526
        %v1558 = vmul.f32 %v1509, %v1526
        %v1559 = vadd.f32 %v1446, %v1527
        %v1560 = vadd.f32 %v1447, %v1528
        %v1561 = vadd.f32 %v1448, %v1529
        %v1562 = vadd.f32 %v1449, %v1530
        %v1563 = vadd.f32 %v1450, %v1531
        %v1564 = vadd.f32 %v1451, %v1532
        %v1565 = vadd.f32 %v1452, %v1533
        %v1566 = vadd.f32 %v1453, %v1534
        %v1567 = vadd.f32 %v1454, %v1535
        %v1568 = vadd.f32 %v1455, %v1536
        %v1569 = vadd.f32 %v1456, %v1537
        %v1570 = vadd.f32 %v1457, %v1538
        %v1571 = vadd.f32 %v1458, %v1539
        %v1572 = vadd.f32 %v1459, %v1540
        %v1573 = vadd.f32 %v1460, %v1541
        %v1574 = vadd.f32 %v1461, %v1542
        %v1575 = vadd.f32 %v1462, %v1543
        %v1576 = vadd.f32 %v1463, %v1544
        %v1577 = vadd.f32 %v1464, %v1545
        %v1578 = vadd.f32 %v1465, %v1546
        %v1579 = vadd.f32 %v1466, %v1547
        %v1580 = vadd.f32 %v1467, %v1548
        %v1581 = vadd.f32 %v1468, %v1549
        %v1582 = vadd.f32 %v1469, %v1550
        %v1583 = vadd.f32 %v1470, %v1551
        %v1584 = vadd.f32 %v1471, %v1552
        %v1585 = vadd.f32 %v1472, %v1553
        %v1586 = vadd.f32 %v1473, %v1554
        %v1587 = vadd.f32 %v1474, %v1555
        %v1588 = vadd.f32 %v1475, %v1556
        %v1589 = vadd.f32 %v1476, %v1557
        %v1590 = vadd.f32 %v1477, %v1558
        %v1591 = vld [vmem:[%s1 + $0x9] sm:$0x1]
        %v1592 = vlaneseq
        %v1593 = vshrl.u32 %v1592, 7
        %v1594 = vsub.s32 0, %v1593
        %v1595 = vrot.slane %v1591, %v1594
        %v1596 = vmul.f32 %v1480, %v1595
        %v1597 = vmul.f32 %v1481, %v1595
        %v1598 = vmul.f32 %v1482, %v1595
        %v1599 = vmul.f32 %v1483, %v1595
        %v1600 = vmul.f32 %v1484, %v1595
        %v1601 = vmul.f32 %v1485, %v1595
        %v1602 = vmul.f32 %v1486, %v1595
        %v1603 = vmul.f32 %v1487, %v1595
        %v1604 = vmul.f32 %v1488, %v1595
        %v1605 = vmul.f32 %v1489, %v1595
        %v1606 = vmul.f32 %v1490, %v1595
        %v1607 = vmul.f32 %v1491, %v1595
        %v1608 = vmul.f32 %v1492, %v1595
        %v1609 = vmul.f32 %v1493, %v1595
        %v1610 = vmul.f32 %v1494, %v1595
        %v1611 = vmul.f32 %v1495, %v1595
        %v1612 = vmul.f32 %v1496, %v1595
        %v1613 = vmul.f32 %v1497, %v1595
        %v1614 = vmul.f32 %v1498, %v1595
        %v1615 = vmul.f32 %v1499, %v1595
        %v1616 = vmul.f32 %v1500, %v1595
        %v1617 = vmul.f32 %v1501, %v1595
        %v1618 = vmul.f32 %v1502, %v1595
        %v1619 = vmul.f32 %v1503, %v1595
        %v1620 = vmul.f32 %v1504, %v1595
        %v1621 = vmul.f32 %v1505, %v1595
        %v1622 = vmul.f32 %v1506, %v1595
        %v1623 = vmul.f32 %v1507, %v1595
        %v1624 = vmul.f32 %v1508, %v1595
        %v1625 = vmul.f32 %v1509, %v1595
        %v1626 = vmul.f32 %v1510, %v1595
        %v1627 = vmul.f32 %v1511, %v1595
        %v1628 = vadd.f32 %v1559, %v1596
        %v1629 = vadd.f32 %v1560, %v1597
        %v1630 = vadd.f32 %v1561, %v1598
        %v1631 = vadd.f32 %v1562, %v1599
        %v1632 = vadd.f32 %v1563, %v1600
        %v1633 = vadd.f32 %v1564, %v1601
        %v1634 = vadd.f32 %v1565, %v1602
        %v1635 = vadd.f32 %v1566, %v1603
        %v1636 = vadd.f32 %v1567, %v1604
        %v1637 = vadd.f32 %v1568, %v1605
        %v1638 = vadd.f32 %v1569, %v1606
        %v1639 = vadd.f32 %v1570, %v1607
        %v1640 = vadd.f32 %v1571, %v1608
        %v1641 = vadd.f32 %v1572, %v1609
        %v1642 = vadd.f32 %v1573, %v1610
        %v1643 = vadd.f32 %v1574, %v1611
        %v1644 = vadd.f32 %v1575, %v1612
        %v1645 = vadd.f32 %v1576, %v1613
        %v1646 = vadd.f32 %v1577, %v1614
        %v1647 = vadd.f32 %v1578, %v1615
        %v1648 = vadd.f32 %v1579, %v1616
        %v1649 = vadd.f32 %v1580, %v1617
        %v1650 = vadd.f32 %v1581, %v1618
        %v1651 = vadd.f32 %v1582, %v1619
        %v1652 = vadd.f32 %v1583, %v1620
        %v1653 = vadd.f32 %v1584, %v1621
        %v1654 = vadd.f32 %v1585, %v1622
        %v1655 = vadd.f32 %v1586, %v1623
        %v1656 = vadd.f32 %v1587, %v1624
        %v1657 = vadd.f32 %v1588, %v1625
        %v1658 = vadd.f32 %v1589, %v1626
        %v1659 = vadd.f32 %v1590, %v1627
        %v1660 = vld [vmem:[%s1 + $0x10] sm:$0x1]
        %v1661 = vlaneseq
        %v1662 = vshrl.u32 %v1661, 7
        %v1663 = vsub.s32 0, %v1662
        %v1664 = vrot.slane %v1660, %v1663
        %v1665 = vmul.f32 %v1482, %v1664
        %v1666 = vmul.f32 %v1483, %v1664
        %v1667 = vmul.f32 %v1484, %v1664
        %v1668 = vmul.f32 %v1485, %v1664
        %v1669 = vmul.f32 %v1486, %v1664
        %v1670 = vmul.f32 %v1487, %v1664
        %v1671 = vmul.f32 %v1488, %v1664
        %v1672 = vmul.f32 %v1489, %v1664
        %v1673 = vmul.f32 %v1490, %v1664
        %v1674 = vmul.f32 %v1491, %v1664
        %v1675 = vmul.f32 %v1492, %v1664
        %v1676 = vmul.f32 %v1493, %v1664
        %v1677 = vmul.f32 %v1494, %v1664
        %v1678 = vmul.f32 %v1495, %v1664
        %v1679 = vmul.f32 %v1496, %v1664
        %v1680 = vmul.f32 %v1497, %v1664
        %v1681 = vmul.f32 %v1498, %v1664
        %v1682 = vmul.f32 %v1499, %v1664
        %v1683 = vmul.f32 %v1500, %v1664
        %v1684 = vmul.f32 %v1501, %v1664
        %v1685 = vmul.f32 %v1502, %v1664
        %v1686 = vmul.f32 %v1503, %v1664
        %v1687 = vmul.f32 %v1504, %v1664
        %v1688 = vmul.f32 %v1505, %v1664
        %v1689 = vmul.f32 %v1506, %v1664
        %v1690 = vmul.f32 %v1507, %v1664
        %v1691 = vmul.f32 %v1508, %v1664
        %v1692 = vmul.f32 %v1509, %v1664
        %v1693 = vmul.f32 %v1510, %v1664
        %v1694 = vmul.f32 %v1511, %v1664
        %v1695 = vmul.f32 %v1512, %v1664
        %v1696 = vmul.f32 %v1513, %v1664
        %v1697 = vadd.f32 %v1628, %v1665
        %v1698 = vadd.f32 %v1629, %v1666
        %v1699 = vadd.f32 %v1630, %v1667
        %v1700 = vadd.f32 %v1631, %v1668
        %v1701 = vadd.f32 %v1632, %v1669
        %v1702 = vadd.f32 %v1633, %v1670
        %v1703 = vadd.f32 %v1634, %v1671
        %v1704 = vadd.f32 %v1635, %v1672
        %v1705 = vadd.f32 %v1636, %v1673
        %v1706 = vadd.f32 %v1637, %v1674
        %v1707 = vadd.f32 %v1638, %v1675
        %v1708 = vadd.f32 %v1639, %v1676
        %v1709 = vadd.f32 %v1640, %v1677
        %v1710 = vadd.f32 %v1641, %v1678
        %v1711 = vadd.f32 %v1642, %v1679
        %v1712 = vadd.f32 %v1643, %v1680
        %v1713 = vadd.f32 %v1644, %v1681
        %v1714 = vadd.f32 %v1645, %v1682
        %v1715 = vadd.f32 %v1646, %v1683
        %v1716 = vadd.f32 %v1647, %v1684
        %v1717 = vadd.f32 %v1648, %v1685
        %v1718 = vadd.f32 %v1649, %v1686
        %v1719 = vadd.f32 %v1650, %v1687
        %v1720 = vadd.f32 %v1651, %v1688
        %v1721 = vadd.f32 %v1652, %v1689
        %v1722 = vadd.f32 %v1653, %v1690
        %v1723 = vadd.f32 %v1654, %v1691
        %v1724 = vadd.f32 %v1655, %v1692
        %v1725 = vadd.f32 %v1656, %v1693
        %v1726 = vadd.f32 %v1657, %v1694
        %v1727 = vadd.f32 %v1658, %v1695
        %v1728 = vadd.f32 %v1659, %v1696
        %v1729 = vld [vmem:[%s1 + $0x17] sm:$0x1]
        %v1730 = vlaneseq
        %v1731 = vshrl.u32 %v1730, 7
        %v1732 = vsub.s32 0, %v1731
        %v1733 = vrot.slane %v1729, %v1732
        %v1734 = vmul.f32 %v1484, %v1733
        %v1735 = vmul.f32 %v1485, %v1733
        %v1736 = vmul.f32 %v1486, %v1733
        %v1737 = vmul.f32 %v1487, %v1733
        %v1738 = vmul.f32 %v1488, %v1733
        %v1739 = vmul.f32 %v1489, %v1733
        %v1740 = vmul.f32 %v1490, %v1733
        %v1741 = vmul.f32 %v1491, %v1733
        %v1742 = vmul.f32 %v1492, %v1733
        %v1743 = vmul.f32 %v1493, %v1733
        %v1744 = vmul.f32 %v1494, %v1733
        %v1745 = vmul.f32 %v1495, %v1733
        %v1746 = vmul.f32 %v1496, %v1733
        %v1747 = vmul.f32 %v1497, %v1733
        %v1748 = vmul.f32 %v1498, %v1733
        %v1749 = vmul.f32 %v1499, %v1733
        %v1750 = vmul.f32 %v1500, %v1733
        %v1751 = vmul.f32 %v1501, %v1733
        %v1752 = vmul.f32 %v1502, %v1733
        %v1753 = vmul.f32 %v1503, %v1733
        %v1754 = vmul.f32 %v1504, %v1733
        %v1755 = vmul.f32 %v1505, %v1733
        %v1756 = vmul.f32 %v1506, %v1733
        %v1757 = vmul.f32 %v1507, %v1733
        %v1758 = vmul.f32 %v1508, %v1733
        %v1759 = vmul.f32 %v1509, %v1733
        %v1760 = vmul.f32 %v1510, %v1733
        %v1761 = vmul.f32 %v1511, %v1733
        %v1762 = vmul.f32 %v1512, %v1733
        %v1763 = vmul.f32 %v1513, %v1733
        %v1764 = vmul.f32 %v1514, %v1733
        %v1765 = vmul.f32 %v1515, %v1733
        %v1766 = vadd.f32 %v1697, %v1734
        %v1767 = vadd.f32 %v1698, %v1735
        %v1768 = vadd.f32 %v1699, %v1736
        %v1769 = vadd.f32 %v1700, %v1737
        %v1770 = vadd.f32 %v1701, %v1738
        %v1771 = vadd.f32 %v1702, %v1739
        %v1772 = vadd.f32 %v1703, %v1740
        %v1773 = vadd.f32 %v1704, %v1741
        %v1774 = vadd.f32 %v1705, %v1742
        %v1775 = vadd.f32 %v1706, %v1743
        %v1776 = vadd.f32 %v1707, %v1744
        %v1777 = vadd.f32 %v1708, %v1745
        %v1778 = vadd.f32 %v1709, %v1746
        %v1779 = vadd.f32 %v1710, %v1747
        %v1780 = vadd.f32 %v1711, %v1748
        %v1781 = vadd.f32 %v1712, %v1749
        %v1782 = vadd.f32 %v1713, %v1750
        %v1783 = vadd.f32 %v1714, %v1751
        %v1784 = vadd.f32 %v1715, %v1752
        %v1785 = vadd.f32 %v1716, %v1753
        %v1786 = vadd.f32 %v1717, %v1754
        %v1787 = vadd.f32 %v1718, %v1755
        %v1788 = vadd.f32 %v1719, %v1756
        %v1789 = vadd.f32 %v1720, %v1757
        %v1790 = vadd.f32 %v1721, %v1758
        %v1791 = vadd.f32 %v1722, %v1759
        %v1792 = vadd.f32 %v1723, %v1760
        %v1793 = vadd.f32 %v1724, %v1761
        %v1794 = vadd.f32 %v1725, %v1762
        %v1795 = vadd.f32 %v1726, %v1763
        %v1796 = vadd.f32 %v1727, %v1764
        %v1797 = vadd.f32 %v1728, %v1765
        %v1798 = vld [vmem:[%s1 + $0x1e] sm:$0x1]
        %v1799 = vlaneseq
        %v1800 = vshrl.u32 %v1799, 7
        %v1801 = vsub.s32 0, %v1800
        %v1802 = vrot.slane %v1798, %v1801
        %v1803 = vmul.f32 %v1486, %v1802
        %v1804 = vmul.f32 %v1487, %v1802
        %v1805 = vmul.f32 %v1488, %v1802
        %v1806 = vmul.f32 %v1489, %v1802
        %v1807 = vmul.f32 %v1490, %v1802
        %v1808 = vmul.f32 %v1491, %v1802
        %v1809 = vmul.f32 %v1492, %v1802
        %v1810 = vmul.f32 %v1493, %v1802
        %v1811 = vmul.f32 %v1494, %v1802
        %v1812 = vmul.f32 %v1495, %v1802
        %v1813 = vmul.f32 %v1496, %v1802
        %v1814 = vmul.f32 %v1497, %v1802
        %v1815 = vmul.f32 %v1498, %v1802
        %v1816 = vmul.f32 %v1499, %v1802
        %v1817 = vmul.f32 %v1500, %v1802
        %v1818 = vmul.f32 %v1501, %v1802
        %v1819 = vmul.f32 %v1502, %v1802
        %v1820 = vmul.f32 %v1503, %v1802
        %v1821 = vmul.f32 %v1504, %v1802
        %v1822 = vmul.f32 %v1505, %v1802
        %v1823 = vmul.f32 %v1506, %v1802
        %v1824 = vmul.f32 %v1507, %v1802
        %v1825 = vmul.f32 %v1508, %v1802
        %v1826 = vmul.f32 %v1509, %v1802
        %v1827 = vmul.f32 %v1510, %v1802
        %v1828 = vmul.f32 %v1511, %v1802
        %v1829 = vmul.f32 %v1512, %v1802
        %v1830 = vmul.f32 %v1513, %v1802
        %v1831 = vmul.f32 %v1514, %v1802
        %v1832 = vmul.f32 %v1515, %v1802
        %v1833 = vmul.f32 %v1516, %v1802
        %v1834 = vmul.f32 %v1517, %v1802
        %v1835 = vadd.f32 %v1766, %v1803
        %v1836 = vadd.f32 %v1767, %v1804
        %v1837 = vadd.f32 %v1768, %v1805
        %v1838 = vadd.f32 %v1769, %v1806
        %v1839 = vadd.f32 %v1770, %v1807
        %v1840 = vadd.f32 %v1771, %v1808
        %v1841 = vadd.f32 %v1772, %v1809
        %v1842 = vadd.f32 %v1773, %v1810
        %v1843 = vadd.f32 %v1774, %v1811
        %v1844 = vadd.f32 %v1775, %v1812
        %v1845 = vadd.f32 %v1776, %v1813
        %v1846 = vadd.f32 %v1777, %v1814
        %v1847 = vadd.f32 %v1778, %v1815
        %v1848 = vadd.f32 %v1779, %v1816
        %v1849 = vadd.f32 %v1780, %v1817
        %v1850 = vadd.f32 %v1781, %v1818
        %v1851 = vadd.f32 %v1782, %v1819
        %v1852 = vadd.f32 %v1783, %v1820
        %v1853 = vadd.f32 %v1784, %v1821
        %v1854 = vadd.f32 %v1785, %v1822
        %v1855 = vadd.f32 %v1786, %v1823
        %v1856 = vadd.f32 %v1787, %v1824
        %v1857 = vadd.f32 %v1788, %v1825
        %v1858 = vadd.f32 %v1789, %v1826
        %v1859 = vadd.f32 %v1790, %v1827
        %v1860 = vadd.f32 %v1791, %v1828
        %v1861 = vadd.f32 %v1792, %v1829
        %v1862 = vadd.f32 %v1793, %v1830
        %v1863 = vadd.f32 %v1794, %v1831
        %v1864 = vadd.f32 %v1795, %v1832
        %v1865 = vadd.f32 %v1796, %v1833
        %v1866 = vadd.f32 %v1797, %v1834
        %v1867 = vld [vmem:[%s1 + $0x25] sm:$0x1]
        %v1868 = vlaneseq
        %v1869 = vshrl.u32 %v1868, 7
        %v1870 = vsub.s32 0, %v1869
        %v1871 = vrot.slane %v1867, %v1870
        %v1872 = vmul.f32 %v1488, %v1871
        %v1873 = vmul.f32 %v1489, %v1871
        %v1874 = vmul.f32 %v1490, %v1871
        %v1875 = vmul.f32 %v1491, %v1871
        %v1876 = vmul.f32 %v1492, %v1871
        %v1877 = vmul.f32 %v1493, %v1871
        %v1878 = vmul.f32 %v1494, %v1871
        %v1879 = vmul.f32 %v1495, %v1871
        %v1880 = vmul.f32 %v1496, %v1871
        %v1881 = vmul.f32 %v1497, %v1871
        %v1882 = vmul.f32 %v1498, %v1871
        %v1883 = vmul.f32 %v1499, %v1871
        %v1884 = vmul.f32 %v1500, %v1871
        %v1885 = vmul.f32 %v1501, %v1871
        %v1886 = vmul.f32 %v1502, %v1871
        %v1887 = vmul.f32 %v1503, %v1871
        %v1888 = vmul.f32 %v1504, %v1871
        %v1889 = vmul.f32 %v1505, %v1871
        %v1890 = vmul.f32 %v1506, %v1871
        %v1891 = vmul.f32 %v1507, %v1871
        %v1892 = vmul.f32 %v1508, %v1871
        %v1893 = vmul.f32 %v1509, %v1871
        %v1894 = vmul.f32 %v1510, %v1871
        %v1895 = vmul.f32 %v1511, %v1871
        %v1896 = vmul.f32 %v1512, %v1871
        %v1897 = vmul.f32 %v1513, %v1871
        %v1898 = vmul.f32 %v1514, %v1871
        %v1899 = vmul.f32 %v1515, %v1871
        %v1900 = vmul.f32 %v1516, %v1871
        %v1901 = vmul.f32 %v1517, %v1871
        %v1902 = vmul.f32 %v1518, %v1871
        %v1903 = vmul.f32 %v1519, %v1871
        %v1904 = vadd.f32 %v1835, %v1872
        %v1905 = vadd.f32 %v1836, %v1873
        %v1906 = vadd.f32 %v1837, %v1874
        %v1907 = vadd.f32 %v1838, %v1875
        %v1908 = vadd.f32 %v1839, %v1876
        %v1909 = vadd.f32 %v1840, %v1877
        %v1910 = vadd.f32 %v1841, %v1878
        %v1911 = vadd.f32 %v1842, %v1879
        %v1912 = vadd.f32 %v1843, %v1880
        %v1913 = vadd.f32 %v1844, %v1881
        %v1914 = vadd.f32 %v1845, %v1882
        %v1915 = vadd.f32 %v1846, %v1883
        %v1916 = vadd.f32 %v1847, %v1884
        %v1917 = vadd.f32 %v1848, %v1885
        %v1918 = vadd.f32 %v1849, %v1886
        %v1919 = vadd.f32 %v1850, %v1887
        %v1920 = vadd.f32 %v1851, %v1888
        %v1921 = vadd.f32 %v1852, %v1889
        %v1922 = vadd.f32 %v1853, %v1890
        %v1923 = vadd.f32 %v1854, %v1891
        %v1924 = vadd.f32 %v1855, %v1892
        %v1925 = vadd.f32 %v1856, %v1893
        %v1926 = vadd.f32 %v1857, %v1894
        %v1927 = vadd.f32 %v1858, %v1895
        %v1928 = vadd.f32 %v1859, %v1896
        %v1929 = vadd.f32 %v1860, %v1897
        %v1930 = vadd.f32 %v1861, %v1898
        %v1931 = vadd.f32 %v1862, %v1899
        %v1932 = vadd.f32 %v1863, %v1900
        %v1933 = vadd.f32 %v1864, %v1901
        %v1934 = vadd.f32 %v1865, %v1902
        %v1935 = vadd.f32 %v1866, %v1903
        %v1936 = vld [vmem:[%s1 + $0x2c] sm:$0x1]
        %v1937 = vlaneseq
        %v1938 = vshrl.u32 %v1937, 7
        %v1939 = vsub.s32 0, %v1938
        %v1940 = vrot.slane %v1936, %v1939
        %v1941 = vmul.f32 %v1490, %v1940
        %v1942 = vmul.f32 %v1491, %v1940
        %v1943 = vmul.f32 %v1492, %v1940
        %v1944 = vmul.f32 %v1493, %v1940
        %v1945 = vmul.f32 %v1494, %v1940
        %v1946 = vmul.f32 %v1495, %v1940
        %v1947 = vmul.f32 %v1496, %v1940
        %v1948 = vmul.f32 %v1497, %v1940
        %v1949 = vmul.f32 %v1498, %v1940
        %v1950 = vmul.f32 %v1499, %v1940
        %v1951 = vmul.f32 %v1500, %v1940
        %v1952 = vmul.f32 %v1501, %v1940
        %v1953 = vmul.f32 %v1502, %v1940
        %v1954 = vmul.f32 %v1503, %v1940
        %v1955 = vmul.f32 %v1504, %v1940
        %v1956 = vmul.f32 %v1505, %v1940
        %v1957 = vmul.f32 %v1506, %v1940
        %v1958 = vmul.f32 %v1507, %v1940
        %v1959 = vmul.f32 %v1508, %v1940
        %v1960 = vmul.f32 %v1509, %v1940
        %v1961 = vmul.f32 %v1510, %v1940
        %v1962 = vmul.f32 %v1511, %v1940
        %v1963 = vmul.f32 %v1512, %v1940
        %v1964 = vmul.f32 %v1513, %v1940
        %v1965 = vmul.f32 %v1514, %v1940
        %v1966 = vmul.f32 %v1515, %v1940
        %v1967 = vmul.f32 %v1516, %v1940
        %v1968 = vmul.f32 %v1517, %v1940
        %v1969 = vmul.f32 %v1518, %v1940
        %v1970 = vmul.f32 %v1519, %v1940
        %v1971 = vmul.f32 %v1520, %v1940
        %v1972 = vmul.f32 %v1521, %v1940
        %v1973 = vadd.f32 %v1904, %v1941
        %v1974 = vadd.f32 %v1905, %v1942
        %v1975 = vadd.f32 %v1906, %v1943
        %v1976 = vadd.f32 %v1907, %v1944
        %v1977 = vadd.f32 %v1908, %v1945
        %v1978 = vadd.f32 %v1909, %v1946
        %v1979 = vadd.f32 %v1910, %v1947
        %v1980 = vadd.f32 %v1911, %v1948
        %v1981 = vadd.f32 %v1912, %v1949
        %v1982 = vadd.f32 %v1913, %v1950
        %v1983 = vadd.f32 %v1914, %v1951
        %v1984 = vadd.f32 %v1915, %v1952
        %v1985 = vadd.f32 %v1916, %v1953
        %v1986 = vadd.f32 %v1917, %v1954
        %v1987 = vadd.f32 %v1918, %v1955
        %v1988 = vadd.f32 %v1919, %v1956
        %v1989 = vadd.f32 %v1920, %v1957
        %v1990 = vadd.f32 %v1921, %v1958
        %v1991 = vadd.f32 %v1922, %v1959
        %v1992 = vadd.f32 %v1923, %v1960
        %v1993 = vadd.f32 %v1924, %v1961
        %v1994 = vadd.f32 %v1925, %v1962
        %v1995 = vadd.f32 %v1926, %v1963
        %v1996 = vadd.f32 %v1927, %v1964
        %v1997 = vadd.f32 %v1928, %v1965
        %v1998 = vadd.f32 %v1929, %v1966
        %v1999 = vadd.f32 %v1930, %v1967
        %v2000 = vadd.f32 %v1931, %v1968
        %v2001 = vadd.f32 %v1932, %v1969
        %v2002 = vadd.f32 %v1933, %v1970
        %v2003 = vadd.f32 %v1934, %v1971
        %v2004 = vadd.f32 %v1935, %v1972
        %v2005 = vld [vmem:[#allocation2 + $0x3] sm:$0xff]
        %v2006 = vld [vmem:[#allocation2 + $0xb] sm:$0xff]
        %v2007 = vld [vmem:[#allocation2 + $0x1b] sm:$0xff]
        %v2008 = vld [vmem:[#allocation2 + $0x23] sm:$0xff]
        %v2009 = vld [vmem:[#allocation2 + $0x33] sm:$0xff]
        %v2010 = vld [vmem:[#allocation2 + $0x3b] sm:$0xff]
        %v2011 = vld [vmem:[#allocation2 + $0x4b] sm:$0xff]
        %v2012 = vld [vmem:[#allocation2 + $0x53] sm:$0xff]
        %v2013 = vld [vmem:[#allocation2 + $0x63] sm:$0xff]
        %v2014 = vld [vmem:[#allocation2 + $0x6b] sm:$0xff]
        %v2015 = vld [vmem:[#allocation2 + $0x7b] sm:$0xff]
        %v2016 = vld [vmem:[#allocation2 + $0x83] sm:$0xff]
        %v2017 = vld [vmem:[#allocation2 + $0x93] sm:$0xff]
        %v2018 = vld [vmem:[#allocation2 + $0x9b] sm:$0xff]
        %v2019 = vld [vmem:[#allocation2 + $0xab] sm:$0xff]
        %v2020 = vld [vmem:[#allocation2 + $0xb3] sm:$0xff]
        %v2021 = vld [vmem:[#allocation2 + $0xc3] sm:$0xff]
        %v2022 = vld [vmem:[#allocation2 + $0xcb] sm:$0xff]
        %v2023 = vld [vmem:[#allocation2 + $0xdb] sm:$0xff]
        %v2024 = vld [vmem:[#allocation2 + $0xe3] sm:$0xff]
        %v2025 = vld [vmem:[#allocation2 + $0xf3] sm:$0xff]
        %v2026 = vld [vmem:[#allocation2 + $0xfb] sm:$0xff]
        %v2027 = vld [vmem:[#allocation2 + $0x10b] sm:$0xff]
        %v2028 = vld [vmem:[#allocation2 + $0x113] sm:$0xff]
        %v2029 = vld [vmem:[#allocation2 + $0x123] sm:$0xff]
        %v2030 = vld [vmem:[#allocation2 + $0x12b] sm:$0xff]
        %v2031 = vld [vmem:[#allocation2 + $0x13b] sm:$0xff]
        %v2032 = vld [vmem:[#allocation2 + $0x143] sm:$0xff]
        %v2033 = vld [vmem:[#allocation2 + $0x153] sm:$0xff]
        %v2034 = vld [vmem:[#allocation2 + $0x15b] sm:$0xff]
        %v2035 = vld [vmem:[#allocation2 + $0x16b] sm:$0xff]
        %v2036 = vld [vmem:[#allocation2 + $0x173] sm:$0xff]
        %v2037 = vld [vmem:[#allocation2 + $0x183] sm:$0xff]
        %v2038 = vld [vmem:[#allocation2 + $0x18b] sm:$0xff]
        %v2039 = vld [vmem:[#allocation2 + $0x19b] sm:$0xff]
        %v2040 = vld [vmem:[#allocation2 + $0x1a3] sm:$0xff]
        %v2041 = vld [vmem:[#allocation2 + $0x1b3] sm:$0xff]
        %v2042 = vld [vmem:[#allocation2 + $0x1bb] sm:$0xff]
        %v2043 = vld [vmem:[#allocation2 + $0x1cb] sm:$0xff]
        %v2044 = vld [vmem:[#allocation2 + $0x1d3] sm:$0xff]
        %v2045 = vld [vmem:[#allocation2 + $0x1e3] sm:$0xff]
        %v2046 = vld [vmem:[#allocation2 + $0x1eb] sm:$0xff]
        %v2047 = vld [vmem:[#allocation2 + $0x1fb] sm:$0xff]
        %v2048 = vld [vmem:[#allocation2 + $0x203] sm:$0xff]
        %v2049 = vld [vmem:[%s1 + $0x3] sm:$0x1]
        %v2050 = vlaneseq
        %v2051 = vshrl.u32 %v2050, 7
        %v2052 = vsub.s32 0, %v2051
        %v2053 = vrot.slane %v2049, %v2052
        %v2054 = vmul.f32 %v2005, %v2053
        %v2055 = vmul.f32 %v2006, %v2053
        %v2056 = vmul.f32 %v2007, %v2053
        %v2057 = vmul.f32 %v2008, %v2053
        %v2058 = vmul.f32 %v2009, %v2053
        %v2059 = vmul.f32 %v2010, %v2053
        %v2060 = vmul.f32 %v2011, %v2053
        %v2061 = vmul.f32 %v2012, %v2053
        %v2062 = vmul.f32 %v2013, %v2053
        %v2063 = vmul.f32 %v2014, %v2053
        %v2064 = vmul.f32 %v2015, %v2053
        %v2065 = vmul.f32 %v2016, %v2053
        %v2066 = vmul.f32 %v2017, %v2053
        %v2067 = vmul.f32 %v2018, %v2053
        %v2068 = vmul.f32 %v2019, %v2053
        %v2069 = vmul.f32 %v2020, %v2053
        %v2070 = vmul.f32 %v2021, %v2053
        %v2071 = vmul.f32 %v2022, %v2053
        %v2072 = vmul.f32 %v2023, %v2053
        %v2073 = vmul.f32 %v2024, %v2053
        %v2074 = vmul.f32 %v2025, %v2053
        %v2075 = vmul.f32 %v2026, %v2053
        %v2076 = vmul.f32 %v2027, %v2053
        %v2077 = vmul.f32 %v2028, %v2053
        %v2078 = vmul.f32 %v2029, %v2053
        %v2079 = vmul.f32 %v2030, %v2053
        %v2080 = vmul.f32 %v2031, %v2053
        %v2081 = vmul.f32 %v2032, %v2053
        %v2082 = vmul.f32 %v2033, %v2053
        %v2083 = vmul.f32 %v2034, %v2053
        %v2084 = vmul.f32 %v2035, %v2053
        %v2085 = vmul.f32 %v2036, %v2053
        %v2086 = vadd.f32 %v1973, %v2054
        %v2087 = vadd.f32 %v1974, %v2055
        %v2088 = vadd.f32 %v1975, %v2056
        %v2089 = vadd.f32 %v1976, %v2057
        %v2090 = vadd.f32 %v1977, %v2058
        %v2091 = vadd.f32 %v1978, %v2059
        %v2092 = vadd.f32 %v1979, %v2060
        %v2093 = vadd.f32 %v1980, %v2061
        %v2094 = vadd.f32 %v1981, %v2062
        %v2095 = vadd.f32 %v1982, %v2063
        %v2096 = vadd.f32 %v1983, %v2064
        %v2097 = vadd.f32 %v1984, %v2065
        %v2098 = vadd.f32 %v1985, %v2066
        %v2099 = vadd.f32 %v1986, %v2067
        %v2100 = vadd.f32 %v1987, %v2068
        %v2101 = vadd.f32 %v1988, %v2069
        %v2102 = vadd.f32 %v1989, %v2070
        %v2103 = vadd.f32 %v1990, %v2071
        %v2104 = vadd.f32 %v1991, %v2072
        %v2105 = vadd.f32 %v1992, %v2073
        %v2106 = vadd.f32 %v1993, %v2074
        %v2107 = vadd.f32 %v1994, %v2075
        %v2108 = vadd.f32 %v1995, %v2076
        %v2109 = vadd.f32 %v1996, %v2077
        %v2110 = vadd.f32 %v1997, %v2078
        %v2111 = vadd.f32 %v1998, %v2079
        %v2112 = vadd.f32 %v1999, %v2080
        %v2113 = vadd.f32 %v2000, %v2081
        %v2114 = vadd.f32 %v2001, %v2082
        %v2115 = vadd.f32 %v2002, %v2083
        %v2116 = vadd.f32 %v2003, %v2084
        %v2117 = vadd.f32 %v2004, %v2085
        %v2118 = vld [vmem:[%s1 + $0xa] sm:$0x1]
        %v2119 = vlaneseq
        %v2120 = vshrl.u32 %v2119, 7
        %v2121 = vsub.s32 0, %v2120
        %v2122 = vrot.slane %v2118, %v2121
        %v2123 = vmul.f32 %v2007, %v2122
        %v2124 = vmul.f32 %v2008, %v2122
        %v2125 = vmul.f32 %v2009, %v2122
        %v2126 = vmul.f32 %v2010, %v2122
        %v2127 = vmul.f32 %v2011, %v2122
        %v2128 = vmul.f32 %v2012, %v2122
        %v2129 = vmul.f32 %v2013, %v2122
        %v2130 = vmul.f32 %v2014, %v2122
        %v2131 = vmul.f32 %v2015, %v2122
        %v2132 = vmul.f32 %v2016, %v2122
        %v2133 = vmul.f32 %v2017, %v2122
        %v2134 = vmul.f32 %v2018, %v2122
        %v2135 = vmul.f32 %v2019, %v2122
        %v2136 = vmul.f32 %v2020, %v2122
        %v2137 = vmul.f32 %v2021, %v2122
        %v2138 = vmul.f32 %v2022, %v2122
        %v2139 = vmul.f32 %v2023, %v2122
        %v2140 = vmul.f32 %v2024, %v2122
        %v2141 = vmul.f32 %v2025, %v2122
        %v2142 = vmul.f32 %v2026, %v2122
        %v2143 = vmul.f32 %v2027, %v2122
        %v2144 = vmul.f32 %v2028, %v2122
        %v2145 = vmul.f32 %v2029, %v2122
        %v2146 = vmul.f32 %v2030, %v2122
        %v2147 = vmul.f32 %v2031, %v2122
        %v2148 = vmul.f32 %v2032, %v2122
        %v2149 = vmul.f32 %v2033, %v2122
        %v2150 = vmul.f32 %v2034, %v2122
        %v2151 = vmul.f32 %v2035, %v2122
        %v2152 = vmul.f32 %v2036, %v2122
        %v2153 = vmul.f32 %v2037, %v2122
        %v2154 = vmul.f32 %v2038, %v2122
        %v2155 = vadd.f32 %v2086, %v2123
        %v2156 = vadd.f32 %v2087, %v2124
        %v2157 = vadd.f32 %v2088, %v2125
        %v2158 = vadd.f32 %v2089, %v2126
        %v2159 = vadd.f32 %v2090, %v2127
        %v2160 = vadd.f32 %v2091, %v2128
        %v2161 = vadd.f32 %v2092, %v2129
        %v2162 = vadd.f32 %v2093, %v2130
        %v2163 = vadd.f32 %v2094, %v2131
        %v2164 = vadd.f32 %v2095, %v2132
        %v2165 = vadd.f32 %v2096, %v2133
        %v2166 = vadd.f32 %v2097, %v2134
        %v2167 = vadd.f32 %v2098, %v2135
        %v2168 = vadd.f32 %v2099, %v2136
        %v2169 = vadd.f32 %v2100, %v2137
        %v2170 = vadd.f32 %v2101, %v2138
        %v2171 = vadd.f32 %v2102, %v2139
        %v2172 = vadd.f32 %v2103, %v2140
        %v2173 = vadd.f32 %v2104, %v2141
        %v2174 = vadd.f32 %v2105, %v2142
        %v2175 = vadd.f32 %v2106, %v2143
        %v2176 = vadd.f32 %v2107, %v2144
        %v2177 = vadd.f32 %v2108, %v2145
        %v2178 = vadd.f32 %v2109, %v2146
        %v2179 = vadd.f32 %v2110, %v2147
        %v2180 = vadd.f32 %v2111, %v2148
        %v2181 = vadd.f32 %v2112, %v2149
        %v2182 = vadd.f32 %v2113, %v2150
        %v2183 = vadd.f32 %v2114, %v2151
        %v2184 = vadd.f32 %v2115, %v2152
        %v2185 = vadd.f32 %v2116, %v2153
        %v2186 = vadd.f32 %v2117, %v2154
        %v2187 = vld [vmem:[%s1 + $0x11] sm:$0x1]
        %v2188 = vlaneseq
        %v2189 = vshrl.u32 %v2188, 7
        %v2190 = vsub.s32 0, %v2189
        %v2191 = vrot.slane %v2187, %v2190
        %v2192 = vmul.f32 %v2009, %v2191
        %v2193 = vmul.f32 %v2010, %v2191
        %v2194 = vmul.f32 %v2011, %v2191
        %v2195 = vmul.f32 %v2012, %v2191
        %v2196 = vmul.f32 %v2013, %v2191
        %v2197 = vmul.f32 %v2014, %v2191
        %v2198 = vmul.f32 %v2015, %v2191
        %v2199 = vmul.f32 %v2016, %v2191
        %v2200 = vmul.f32 %v2017, %v2191
        %v2201 = vmul.f32 %v2018, %v2191
        %v2202 = vmul.f32 %v2019, %v2191
        %v2203 = vmul.f32 %v2020, %v2191
        %v2204 = vmul.f32 %v2021, %v2191
        %v2205 = vmul.f32 %v2022, %v2191
        %v2206 = vmul.f32 %v2023, %v2191
        %v2207 = vmul.f32 %v2024, %v2191
        %v2208 = vmul.f32 %v2025, %v2191
        %v2209 = vmul.f32 %v2026, %v2191
        %v2210 = vmul.f32 %v2027, %v2191
        %v2211 = vmul.f32 %v2028, %v2191
        %v2212 = vmul.f32 %v2029, %v2191
        %v2213 = vmul.f32 %v2030, %v2191
        %v2214 = vmul.f32 %v2031, %v2191
        %v2215 = vmul.f32 %v2032, %v2191
        %v2216 = vmul.f32 %v2033, %v2191
        %v2217 = vmul.f32 %v2034, %v2191
        %v2218 = vmul.f32 %v2035, %v2191
        %v2219 = vmul.f32 %v2036, %v2191
        %v2220 = vmul.f32 %v2037, %v2191
        %v2221 = vmul.f32 %v2038, %v2191
        %v2222 = vmul.f32 %v2039, %v2191
        %v2223 = vmul.f32 %v2040, %v2191
        %v2224 = vadd.f32 %v2155, %v2192
        %v2225 = vadd.f32 %v2156, %v2193
        %v2226 = vadd.f32 %v2157, %v2194
        %v2227 = vadd.f32 %v2158, %v2195
        %v2228 = vadd.f32 %v2159, %v2196
        %v2229 = vadd.f32 %v2160, %v2197
        %v2230 = vadd.f32 %v2161, %v2198
        %v2231 = vadd.f32 %v2162, %v2199
        %v2232 = vadd.f32 %v2163, %v2200
        %v2233 = vadd.f32 %v2164, %v2201
        %v2234 = vadd.f32 %v2165, %v2202
        %v2235 = vadd.f32 %v2166, %v2203
        %v2236 = vadd.f32 %v2167, %v2204
        %v2237 = vadd.f32 %v2168, %v2205
        %v2238 = vadd.f32 %v2169, %v2206
        %v2239 = vadd.f32 %v2170, %v2207
        %v2240 = vadd.f32 %v2171, %v2208
        %v2241 = vadd.f32 %v2172, %v2209
        %v2242 = vadd.f32 %v2173, %v2210
        %v2243 = vadd.f32 %v2174, %v2211
        %v2244 = vadd.f32 %v2175, %v2212
        %v2245 = vadd.f32 %v2176, %v2213
        %v2246 = vadd.f32 %v2177, %v2214
        %v2247 = vadd.f32 %v2178, %v2215
        %v2248 = vadd.f32 %v2179, %v2216
        %v2249 = vadd.f32 %v2180, %v2217
        %v2250 = vadd.f32 %v2181, %v2218
        %v2251 = vadd.f32 %v2182, %v2219
        %v2252 = vadd.f32 %v2183, %v2220
        %v2253 = vadd.f32 %v2184, %v2221
        %v2254 = vadd.f32 %v2185, %v2222
        %v2255 = vadd.f32 %v2186, %v2223
        %v2256 = vld [vmem:[%s1 + $0x18] sm:$0x1]
        %v2257 = vlaneseq
        %v2258 = vshrl.u32 %v2257, 7
        %v2259 = vsub.s32 0, %v2258
        %v2260 = vrot.slane %v2256, %v2259
        %v2261 = vmul.f32 %v2011, %v2260
        %v2262 = vmul.f32 %v2012, %v2260
        %v2263 = vmul.f32 %v2013, %v2260
        %v2264 = vmul.f32 %v2014, %v2260
        %v2265 = vmul.f32 %v2015, %v2260
        %v2266 = vmul.f32 %v2016, %v2260
        %v2267 = vmul.f32 %v2017, %v2260
        %v2268 = vmul.f32 %v2018, %v2260
        %v2269 = vmul.f32 %v2019, %v2260
        %v2270 = vmul.f32 %v2020, %v2260
        %v2271 = vmul.f32 %v2021, %v2260
        %v2272 = vmul.f32 %v2022, %v2260
        %v2273 = vmul.f32 %v2023, %v2260
        %v2274 = vmul.f32 %v2024, %v2260
        %v2275 = vmul.f32 %v2025, %v2260
        %v2276 = vmul.f32 %v2026, %v2260
        %v2277 = vmul.f32 %v2027, %v2260
        %v2278 = vmul.f32 %v2028, %v2260
        %v2279 = vmul.f32 %v2029, %v2260
        %v2280 = vmul.f32 %v2030, %v2260
        %v2281 = vmul.f32 %v2031, %v2260
        %v2282 = vmul.f32 %v2032, %v2260
        %v2283 = vmul.f32 %v2033, %v2260
        %v2284 = vmul.f32 %v2034, %v2260
        %v2285 = vmul.f32 %v2035, %v2260
        %v2286 = vmul.f32 %v2036, %v2260
        %v2287 = vmul.f32 %v2037, %v2260
        %v2288 = vmul.f32 %v2038, %v2260
        %v2289 = vmul.f32 %v2039, %v2260
        %v2290 = vmul.f32 %v2040, %v2260
        %v2291 = vmul.f32 %v2041, %v2260
        %v2292 = vmul.f32 %v2042, %v2260
        %v2293 = vadd.f32 %v2224, %v2261
        %v2294 = vadd.f32 %v2225, %v2262
        %v2295 = vadd.f32 %v2226, %v2263
        %v2296 = vadd.f32 %v2227, %v2264
        %v2297 = vadd.f32 %v2228, %v2265
        %v2298 = vadd.f32 %v2229, %v2266
        %v2299 = vadd.f32 %v2230, %v2267
        %v2300 = vadd.f32 %v2231, %v2268
        %v2301 = vadd.f32 %v2232, %v2269
        %v2302 = vadd.f32 %v2233, %v2270
        %v2303 = vadd.f32 %v2234, %v2271
        %v2304 = vadd.f32 %v2235, %v2272
        %v2305 = vadd.f32 %v2236, %v2273
        %v2306 = vadd.f32 %v2237, %v2274
        %v2307 = vadd.f32 %v2238, %v2275
        %v2308 = vadd.f32 %v2239, %v2276
        %v2309 = vadd.f32 %v2240, %v2277
        %v2310 = vadd.f32 %v2241, %v2278
        %v2311 = vadd.f32 %v2242, %v2279
        %v2312 = vadd.f32 %v2243, %v2280
        %v2313 = vadd.f32 %v2244, %v2281
        %v2314 = vadd.f32 %v2245, %v2282
        %v2315 = vadd.f32 %v2246, %v2283
        %v2316 = vadd.f32 %v2247, %v2284
        %v2317 = vadd.f32 %v2248, %v2285
        %v2318 = vadd.f32 %v2249, %v2286
        %v2319 = vadd.f32 %v2250, %v2287
        %v2320 = vadd.f32 %v2251, %v2288
        %v2321 = vadd.f32 %v2252, %v2289
        %v2322 = vadd.f32 %v2253, %v2290
        %v2323 = vadd.f32 %v2254, %v2291
        %v2324 = vadd.f32 %v2255, %v2292
        %v2325 = vld [vmem:[%s1 + $0x1f] sm:$0x1]
        %v2326 = vlaneseq
        %v2327 = vshrl.u32 %v2326, 7
        %v2328 = vsub.s32 0, %v2327
        %v2329 = vrot.slane %v2325, %v2328
        %v2330 = vmul.f32 %v2013, %v2329
        %v2331 = vmul.f32 %v2014, %v2329
        %v2332 = vmul.f32 %v2015, %v2329
        %v2333 = vmul.f32 %v2016, %v2329
        %v2334 = vmul.f32 %v2017, %v2329
        %v2335 = vmul.f32 %v2018, %v2329
        %v2336 = vmul.f32 %v2019, %v2329
        %v2337 = vmul.f32 %v2020, %v2329
        %v2338 = vmul.f32 %v2021, %v2329
        %v2339 = vmul.f32 %v2022, %v2329
        %v2340 = vmul.f32 %v2023, %v2329
        %v2341 = vmul.f32 %v2024, %v2329
        %v2342 = vmul.f32 %v2025, %v2329
        %v2343 = vmul.f32 %v2026, %v2329
        %v2344 = vmul.f32 %v2027, %v2329
        %v2345 = vmul.f32 %v2028, %v2329
        %v2346 = vmul.f32 %v2029, %v2329
        %v2347 = vmul.f32 %v2030, %v2329
        %v2348 = vmul.f32 %v2031, %v2329
        %v2349 = vmul.f32 %v2032, %v2329
        %v2350 = vmul.f32 %v2033, %v2329
        %v2351 = vmul.f32 %v2034, %v2329
        %v2352 = vmul.f32 %v2035, %v2329
        %v2353 = vmul.f32 %v2036, %v2329
        %v2354 = vmul.f32 %v2037, %v2329
        %v2355 = vmul.f32 %v2038, %v2329
        %v2356 = vmul.f32 %v2039, %v2329
        %v2357 = vmul.f32 %v2040, %v2329
        %v2358 = vmul.f32 %v2041, %v2329
        %v2359 = vmul.f32 %v2042, %v2329
        %v2360 = vmul.f32 %v2043, %v2329
        %v2361 = vmul.f32 %v2044, %v2329
        %v2362 = vadd.f32 %v2293, %v2330
        %v2363 = vadd.f32 %v2294, %v2331
        %v2364 = vadd.f32 %v2295, %v2332
        %v2365 = vadd.f32 %v2296, %v2333
        %v2366 = vadd.f32 %v2297, %v2334
        %v2367 = vadd.f32 %v2298, %v2335
        %v2368 = vadd.f32 %v2299, %v2336
        %v2369 = vadd.f32 %v2300, %v2337
        %v2370 = vadd.f32 %v2301, %v2338
        %v2371 = vadd.f32 %v2302, %v2339
        %v2372 = vadd.f32 %v2303, %v2340
        %v2373 = vadd.f32 %v2304, %v2341
        %v2374 = vadd.f32 %v2305, %v2342
        %v2375 = vadd.f32 %v2306, %v2343
        %v2376 = vadd.f32 %v2307, %v2344
        %v2377 = vadd.f32 %v2308, %v2345
        %v2378 = vadd.f32 %v2309, %v2346
        %v2379 = vadd.f32 %v2310, %v2347
        %v2380 = vadd.f32 %v2311, %v2348
        %v2381 = vadd.f32 %v2312, %v2349
        %v2382 = vadd.f32 %v2313, %v2350
        %v2383 = vadd.f32 %v2314, %v2351
        %v2384 = vadd.f32 %v2315, %v2352
        %v2385 = vadd.f32 %v2316, %v2353
        %v2386 = vadd.f32 %v2317, %v2354
        %v2387 = vadd.f32 %v2318, %v2355
        %v2388 = vadd.f32 %v2319, %v2356
        %v2389 = vadd.f32 %v2320, %v2357
        %v2390 = vadd.f32 %v2321, %v2358
        %v2391 = vadd.f32 %v2322, %v2359
        %v2392 = vadd.f32 %v2323, %v2360
        %v2393 = vadd.f32 %v2324, %v2361
        %v2394 = vld [vmem:[%s1 + $0x26] sm:$0x1]
        %v2395 = vlaneseq
        %v2396 = vshrl.u32 %v2395, 7
        %v2397 = vsub.s32 0, %v2396
        %v2398 = vrot.slane %v2394, %v2397
        %v2399 = vmul.f32 %v2015, %v2398
        %v2400 = vmul.f32 %v2016, %v2398
        %v2401 = vmul.f32 %v2017, %v2398
        %v2402 = vmul.f32 %v2018, %v2398
        %v2403 = vmul.f32 %v2019, %v2398
        %v2404 = vmul.f32 %v2020, %v2398
        %v2405 = vmul.f32 %v2021, %v2398
        %v2406 = vmul.f32 %v2022, %v2398
        %v2407 = vmul.f32 %v2023, %v2398
        %v2408 = vmul.f32 %v2024, %v2398
        %v2409 = vmul.f32 %v2025, %v2398
        %v2410 = vmul.f32 %v2026, %v2398
        %v2411 = vmul.f32 %v2027, %v2398
        %v2412 = vmul.f32 %v2028, %v2398
        %v2413 = vmul.f32 %v2029, %v2398
        %v2414 = vmul.f32 %v2030, %v2398
        %v2415 = vmul.f32 %v2031, %v2398
        %v2416 = vmul.f32 %v2032, %v2398
        %v2417 = vmul.f32 %v2033, %v2398
        %v2418 = vmul.f32 %v2034, %v2398
        %v2419 = vmul.f32 %v2035, %v2398
        %v2420 = vmul.f32 %v2036, %v2398
        %v2421 = vmul.f32 %v2037, %v2398
        %v2422 = vmul.f32 %v2038, %v2398
        %v2423 = vmul.f32 %v2039, %v2398
        %v2424 = vmul.f32 %v2040, %v2398
        %v2425 = vmul.f32 %v2041, %v2398
        %v2426 = vmul.f32 %v2042, %v2398
        %v2427 = vmul.f32 %v2043, %v2398
        %v2428 = vmul.f32 %v2044, %v2398
        %v2429 = vmul.f32 %v2045, %v2398
        %v2430 = vmul.f32 %v2046, %v2398
        %v2431 = vadd.f32 %v2362, %v2399
        %v2432 = vadd.f32 %v2363, %v2400
        %v2433 = vadd.f32 %v2364, %v2401
        %v2434 = vadd.f32 %v2365, %v2402
        %v2435 = vadd.f32 %v2366, %v2403
        %v2436 = vadd.f32 %v2367, %v2404
        %v2437 = vadd.f32 %v2368, %v2405
        %v2438 = vadd.f32 %v2369, %v2406
        %v2439 = vadd.f32 %v2370, %v2407
        %v2440 = vadd.f32 %v2371, %v2408
        %v2441 = vadd.f32 %v2372, %v2409
        %v2442 = vadd.f32 %v2373, %v2410
        %v2443 = vadd.f32 %v2374, %v2411
        %v2444 = vadd.f32 %v2375, %v2412
        %v2445 = vadd.f32 %v2376, %v2413
        %v2446 = vadd.f32 %v2377, %v2414
        %v2447 = vadd.f32 %v2378, %v2415
        %v2448 = vadd.f32 %v2379, %v2416
        %v2449 = vadd.f32 %v2380, %v2417
        %v2450 = vadd.f32 %v2381, %v2418
        %v2451 = vadd.f32 %v2382, %v2419
        %v2452 = vadd.f32 %v2383, %v2420
        %v2453 = vadd.f32 %v2384, %v2421
        %v2454 = vadd.f32 %v2385, %v2422
        %v2455 = vadd.f32 %v2386, %v2423
        %v2456 = vadd.f32 %v2387, %v2424
        %v2457 = vadd.f32 %v2388, %v2425
        %v2458 = vadd.f32 %v2389, %v2426
        %v2459 = vadd.f32 %v2390, %v2427
        %v2460 = vadd.f32 %v2391, %v2428
        %v2461 = vadd.f32 %v2392, %v2429
        %v2462 = vadd.f32 %v2393, %v2430
        %v2463 = vld [vmem:[%s1 + $0x2d] sm:$0x1]
        %v2464 = vlaneseq
        %v2465 = vshrl.u32 %v2464, 7
        %v2466 = vsub.s32 0, %v2465
        %v2467 = vrot.slane %v2463, %v2466
        %v2468 = vmul.f32 %v2017, %v2467
        %v2469 = vmul.f32 %v2018, %v2467
        %v2470 = vmul.f32 %v2019, %v2467
        %v2471 = vmul.f32 %v2020, %v2467
        %v2472 = vmul.f32 %v2021, %v2467
        %v2473 = vmul.f32 %v2022, %v2467
        %v2474 = vmul.f32 %v2023, %v2467
        %v2475 = vmul.f32 %v2024, %v2467
        %v2476 = vmul.f32 %v2025, %v2467
        %v2477 = vmul.f32 %v2026, %v2467
        %v2478 = vmul.f32 %v2027, %v2467
        %v2479 = vmul.f32 %v2028, %v2467
        %v2480 = vmul.f32 %v2029, %v2467
        %v2481 = vmul.f32 %v2030, %v2467
        %v2482 = vmul.f32 %v2031, %v2467
        %v2483 = vmul.f32 %v2032, %v2467
        %v2484 = vmul.f32 %v2033, %v2467
        %v2485 = vmul.f32 %v2034, %v2467
        %v2486 = vmul.f32 %v2035, %v2467
        %v2487 = vmul.f32 %v2036, %v2467
        %v2488 = vmul.f32 %v2037, %v2467
        %v2489 = vmul.f32 %v2038, %v2467
        %v2490 = vmul.f32 %v2039, %v2467
        %v2491 = vmul.f32 %v2040, %v2467
        %v2492 = vmul.f32 %v2041, %v2467
        %v2493 = vmul.f32 %v2042, %v2467
        %v2494 = vmul.f32 %v2043, %v2467
        %v2495 = vmul.f32 %v2044, %v2467
        %v2496 = vmul.f32 %v2045, %v2467
        %v2497 = vmul.f32 %v2046, %v2467
        %v2498 = vmul.f32 %v2047, %v2467
        %v2499 = vmul.f32 %v2048, %v2467
        %v2500 = vadd.f32 %v2431, %v2468
        %v2501 = vadd.f32 %v2432, %v2469
        %v2502 = vadd.f32 %v2433, %v2470
        %v2503 = vadd.f32 %v2434, %v2471
        %v2504 = vadd.f32 %v2435, %v2472
        %v2505 = vadd.f32 %v2436, %v2473
        %v2506 = vadd.f32 %v2437, %v2474
        %v2507 = vadd.f32 %v2438, %v2475
        %v2508 = vadd.f32 %v2439, %v2476
        %v2509 = vadd.f32 %v2440, %v2477
        %v2510 = vadd.f32 %v2441, %v2478
        %v2511 = vadd.f32 %v2442, %v2479
        %v2512 = vadd.f32 %v2443, %v2480
        %v2513 = vadd.f32 %v2444, %v2481
        %v2514 = vadd.f32 %v2445, %v2482
        %v2515 = vadd.f32 %v2446, %v2483
        %v2516 = vadd.f32 %v2447, %v2484
        %v2517 = vadd.f32 %v2448, %v2485
        %v2518 = vadd.f32 %v2449, %v2486
        %v2519 = vadd.f32 %v2450, %v2487
        %v2520 = vadd.f32 %v2451, %v2488
        %v2521 = vadd.f32 %v2452, %v2489
        %v2522 = vadd.f32 %v2453, %v2490
        %v2523 = vadd.f32 %v2454, %v2491
        %v2524 = vadd.f32 %v2455, %v2492
        %v2525 = vadd.f32 %v2456, %v2493
        %v2526 = vadd.f32 %v2457, %v2494
        %v2527 = vadd.f32 %v2458, %v2495
        %v2528 = vadd.f32 %v2459, %v2496
        %v2529 = vadd.f32 %v2460, %v2497
        %v2530 = vadd.f32 %v2461, %v2498
        %v2531 = vadd.f32 %v2462, %v2499
        %v2532 = vld [vmem:[#allocation2 + $0x4] sm:$0xff]
        %v2533 = vld [vmem:[#allocation2 + $0xc] sm:$0xff]
        %v2534 = vld [vmem:[#allocation2 + $0x1c] sm:$0xff]
        %v2535 = vld [vmem:[#allocation2 + $0x24] sm:$0xff]
        %v2536 = vld [vmem:[#allocation2 + $0x34] sm:$0xff]
        %v2537 = vld [vmem:[#allocation2 + $0x3c] sm:$0xff]
        %v2538 = vld [vmem:[#allocation2 + $0x4c] sm:$0xff]
        %v2539 = vld [vmem:[#allocation2 + $0x54] sm:$0xff]
        %v2540 = vld [vmem:[#allocation2 + $0x64] sm:$0xff]
        %v2541 = vld [vmem:[#allocation2 + $0x6c] sm:$0xff]
        %v2542 = vld [vmem:[#allocation2 + $0x7c] sm:$0xff]
        %v2543 = vld [vmem:[#allocation2 + $0x84] sm:$0xff]
        %v2544 = vld [vmem:[#allocation2 + $0x94] sm:$0xff]
        %v2545 = vld [vmem:[#allocation2 + $0x9c] sm:$0xff]
        %v2546 = vld [vmem:[#allocation2 + $0xac] sm:$0xff]
        %v2547 = vld [vmem:[#allocation2 + $0xb4] sm:$0xff]
        %v2548 = vld [vmem:[#allocation2 + $0xc4] sm:$0xff]
        %v2549 = vld [vmem:[#allocation2 + $0xcc] sm:$0xff]
        %v2550 = vld [vmem:[#allocation2 + $0xdc] sm:$0xff]
        %v2551 = vld [vmem:[#allocation2 + $0xe4] sm:$0xff]
        %v2552 = vld [vmem:[#allocation2 + $0xf4] sm:$0xff]
        %v2553 = vld [vmem:[#allocation2 + $0xfc] sm:$0xff]
        %v2554 = vld [vmem:[#allocation2 + $0x10c] sm:$0xff]
        %v2555 = vld [vmem:[#allocation2 + $0x114] sm:$0xff]
        %v2556 = vld [vmem:[#allocation2 + $0x124] sm:$0xff]
        %v2557 = vld [vmem:[#allocation2 + $0x12c] sm:$0xff]
        %v2558 = vld [vmem:[#allocation2 + $0x13c] sm:$0xff]
        %v2559 = vld [vmem:[#allocation2 + $0x144] sm:$0xff]
        %v2560 = vld [vmem:[#allocation2 + $0x154] sm:$0xff]
        %v2561 = vld [vmem:[#allocation2 + $0x15c] sm:$0xff]
        %v2562 = vld [vmem:[#allocation2 + $0x16c] sm:$0xff]
        %v2563 = vld [vmem:[#allocation2 + $0x174] sm:$0xff]
        %v2564 = vld [vmem:[#allocation2 + $0x184] sm:$0xff]
        %v2565 = vld [vmem:[#allocation2 + $0x18c] sm:$0xff]
        %v2566 = vld [vmem:[#allocation2 + $0x19c] sm:$0xff]
        %v2567 = vld [vmem:[#allocation2 + $0x1a4] sm:$0xff]
        %v2568 = vld [vmem:[#allocation2 + $0x1b4] sm:$0xff]
        %v2569 = vld [vmem:[#allocation2 + $0x1bc] sm:$0xff]
        %v2570 = vld [vmem:[#allocation2 + $0x1cc] sm:$0xff]
        %v2571 = vld [vmem:[#allocation2 + $0x1d4] sm:$0xff]
        %v2572 = vld [vmem:[#allocation2 + $0x1e4] sm:$0xff]
        %v2573 = vld [vmem:[#allocation2 + $0x1ec] sm:$0xff]
        %v2574 = vld [vmem:[#allocation2 + $0x1fc] sm:$0xff]
        %v2575 = vld [vmem:[#allocation2 + $0x204] sm:$0xff]
        %v2576 = vld [vmem:[%s1 + $0x4] sm:$0x1]
        %v2577 = vlaneseq
        %v2578 = vshrl.u32 %v2577, 7
        %v2579 = vsub.s32 0, %v2578
        %v2580 = vrot.slane %v2576, %v2579
        %v2581 = vmul.f32 %v2532, %v2580
        %v2582 = vmul.f32 %v2533, %v2580
        %v2583 = vmul.f32 %v2534, %v2580
        %v2584 = vmul.f32 %v2535, %v2580
        %v2585 = vmul.f32 %v2536, %v2580
        %v2586 = vmul.f32 %v2537, %v2580
        %v2587 = vmul.f32 %v2538, %v2580
        %v2588 = vmul.f32 %v2539, %v2580
        %v2589 = vmul.f32 %v2540, %v2580
        %v2590 = vmul.f32 %v2541, %v2580
        %v2591 = vmul.f32 %v2542, %v2580
        %v2592 = vmul.f32 %v2543, %v2580
        %v2593 = vmul.f32 %v2544, %v2580
        %v2594 = vmul.f32 %v2545, %v2580
        %v2595 = vmul.f32 %v2546, %v2580
        %v2596 = vmul.f32 %v2547, %v2580
        %v2597 = vmul.f32 %v2548, %v2580
        %v2598 = vmul.f32 %v2549, %v2580
        %v2599 = vmul.f32 %v2550, %v2580
        %v2600 = vmul.f32 %v2551, %v2580
        %v2601 = vmul.f32 %v2552, %v2580
        %v2602 = vmul.f32 %v2553, %v2580
        %v2603 = vmul.f32 %v2554, %v2580
        %v2604 = vmul.f32 %v2555, %v2580
        %v2605 = vmul.f32 %v2556, %v2580
        %v2606 = vmul.f32 %v2557, %v2580
        %v2607 = vmul.f32 %v2558, %v2580
        %v2608 = vmul.f32 %v2559, %v2580
        %v2609 = vmul.f32 %v2560, %v2580
        %v2610 = vmul.f32 %v2561, %v2580
        %v2611 = vmul.f32 %v2562, %v2580
        %v2612 = vmul.f32 %v2563, %v2580
        %v2613 = vadd.f32 %v2500, %v2581
        %v2614 = vadd.f32 %v2501, %v2582
        %v2615 = vadd.f32 %v2502, %v2583
        %v2616 = vadd.f32 %v2503, %v2584
        %v2617 = vadd.f32 %v2504, %v2585
        %v2618 = vadd.f32 %v2505, %v2586
        %v2619 = vadd.f32 %v2506, %v2587
        %v2620 = vadd.f32 %v2507, %v2588
        %v2621 = vadd.f32 %v2508, %v2589
        %v2622 = vadd.f32 %v2509, %v2590
        %v2623 = vadd.f32 %v2510, %v2591
        %v2624 = vadd.f32 %v2511, %v2592
        %v2625 = vadd.f32 %v2512, %v2593
        %v2626 = vadd.f32 %v2513, %v2594
        %v2627 = vadd.f32 %v2514, %v2595
        %v2628 = vadd.f32 %v2515, %v2596
        %v2629 = vadd.f32 %v2516, %v2597
        %v2630 = vadd.f32 %v2517, %v2598
        %v2631 = vadd.f32 %v2518, %v2599
        %v2632 = vadd.f32 %v2519, %v2600
        %v2633 = vadd.f32 %v2520, %v2601
        %v2634 = vadd.f32 %v2521, %v2602
        %v2635 = vadd.f32 %v2522, %v2603
        %v2636 = vadd.f32 %v2523, %v2604
        %v2637 = vadd.f32 %v2524, %v2605
        %v2638 = vadd.f32 %v2525, %v2606
        %v2639 = vadd.f32 %v2526, %v2607
        %v2640 = vadd.f32 %v2527, %v2608
        %v2641 = vadd.f32 %v2528, %v2609
        %v2642 = vadd.f32 %v2529, %v2610
        %v2643 = vadd.f32 %v2530, %v2611
        %v2644 = vadd.f32 %v2531, %v2612
        %v2645 = vld [vmem:[%s1 + $0xb] sm:$0x1]
        %v2646 = vlaneseq
        %v2647 = vshrl.u32 %v2646, 7
        %v2648 = vsub.s32 0, %v2647
        %v2649 = vrot.slane %v2645, %v2648
        %v2650 = vmul.f32 %v2534, %v2649
        %v2651 = vmul.f32 %v2535, %v2649
        %v2652 = vmul.f32 %v2536, %v2649
        %v2653 = vmul.f32 %v2537, %v2649
        %v2654 = vmul.f32 %v2538, %v2649
        %v2655 = vmul.f32 %v2539, %v2649
        %v2656 = vmul.f32 %v2540, %v2649
        %v2657 = vmul.f32 %v2541, %v2649
        %v2658 = vmul.f32 %v2542, %v2649
        %v2659 = vmul.f32 %v2543, %v2649
        %v2660 = vmul.f32 %v2544, %v2649
        %v2661 = vmul.f32 %v2545, %v2649
        %v2662 = vmul.f32 %v2546, %v2649
        %v2663 = vmul.f32 %v2547, %v2649
        %v2664 = vmul.f32 %v2548, %v2649
        %v2665 = vmul.f32 %v2549, %v2649
        %v2666 = vmul.f32 %v2550, %v2649
        %v2667 = vmul.f32 %v2551, %v2649
        %v2668 = vmul.f32 %v2552, %v2649
        %v2669 = vmul.f32 %v2553, %v2649
        %v2670 = vmul.f32 %v2554, %v2649
        %v2671 = vmul.f32 %v2555, %v2649
        %v2672 = vmul.f32 %v2556, %v2649
        %v2673 = vmul.f32 %v2557, %v2649
        %v2674 = vmul.f32 %v2558, %v2649
        %v2675 = vmul.f32 %v2559, %v2649
        %v2676 = vmul.f32 %v2560, %v2649
        %v2677 = vmul.f32 %v2561, %v2649
        %v2678 = vmul.f32 %v2562, %v2649
        %v2679 = vmul.f32 %v2563, %v2649
        %v2680 = vmul.f32 %v2564, %v2649
        %v2681 = vmul.f32 %v2565, %v2649
        %v2682 = vadd.f32 %v2613, %v2650
        %v2683 = vadd.f32 %v2614, %v2651
        %v2684 = vadd.f32 %v2615, %v2652
        %v2685 = vadd.f32 %v2616, %v2653
        %v2686 = vadd.f32 %v2617, %v2654
        %v2687 = vadd.f32 %v2618, %v2655
        %v2688 = vadd.f32 %v2619, %v2656
        %v2689 = vadd.f32 %v2620, %v2657
        %v2690 = vadd.f32 %v2621, %v2658
        %v2691 = vadd.f32 %v2622, %v2659
        %v2692 = vadd.f32 %v2623, %v2660
        %v2693 = vadd.f32 %v2624, %v2661
        %v2694 = vadd.f32 %v2625, %v2662
        %v2695 = vadd.f32 %v2626, %v2663
        %v2696 = vadd.f32 %v2627, %v2664
        %v2697 = vadd.f32 %v2628, %v2665
        %v2698 = vadd.f32 %v2629, %v2666
        %v2699 = vadd.f32 %v2630, %v2667
        %v2700 = vadd.f32 %v2631, %v2668
        %v2701 = vadd.f32 %v2632, %v2669
        %v2702 = vadd.f32 %v2633, %v2670
        %v2703 = vadd.f32 %v2634, %v2671
        %v2704 = vadd.f32 %v2635, %v2672
        %v2705 = vadd.f32 %v2636, %v2673
        %v2706 = vadd.f32 %v2637, %v2674
        %v2707 = vadd.f32 %v2638, %v2675
        %v2708 = vadd.f32 %v2639, %v2676
        %v2709 = vadd.f32 %v2640, %v2677
        %v2710 = vadd.f32 %v2641, %v2678
        %v2711 = vadd.f32 %v2642, %v2679
        %v2712 = vadd.f32 %v2643, %v2680
        %v2713 = vadd.f32 %v2644, %v2681
        %v2714 = vld [vmem:[%s1 + $0x12] sm:$0x1]
        %v2715 = vlaneseq
        %v2716 = vshrl.u32 %v2715, 7
        %v2717 = vsub.s32 0, %v2716
        %v2718 = vrot.slane %v2714, %v2717
        %v2719 = vmul.f32 %v2536, %v2718
        %v2720 = vmul.f32 %v2537, %v2718
        %v2721 = vmul.f32 %v2538, %v2718
        %v2722 = vmul.f32 %v2539, %v2718
        %v2723 = vmul.f32 %v2540, %v2718
        %v2724 = vmul.f32 %v2541, %v2718
        %v2725 = vmul.f32 %v2542, %v2718
        %v2726 = vmul.f32 %v2543, %v2718
        %v2727 = vmul.f32 %v2544, %v2718
        %v2728 = vmul.f32 %v2545, %v2718
        %v2729 = vmul.f32 %v2546, %v2718
        %v2730 = vmul.f32 %v2547, %v2718
        %v2731 = vmul.f32 %v2548, %v2718
        %v2732 = vmul.f32 %v2549, %v2718
        %v2733 = vmul.f32 %v2550, %v2718
        %v2734 = vmul.f32 %v2551, %v2718
        %v2735 = vmul.f32 %v2552, %v2718
        %v2736 = vmul.f32 %v2553, %v2718
        %v2737 = vmul.f32 %v2554, %v2718
        %v2738 = vmul.f32 %v2555, %v2718
        %v2739 = vmul.f32 %v2556, %v2718
        %v2740 = vmul.f32 %v2557, %v2718
        %v2741 = vmul.f32 %v2558, %v2718
        %v2742 = vmul.f32 %v2559, %v2718
        %v2743 = vmul.f32 %v2560, %v2718
        %v2744 = vmul.f32 %v2561, %v2718
        %v2745 = vmul.f32 %v2562, %v2718
        %v2746 = vmul.f32 %v2563, %v2718
        %v2747 = vmul.f32 %v2564, %v2718
        %v2748 = vmul.f32 %v2565, %v2718
        %v2749 = vmul.f32 %v2566, %v2718
        %v2750 = vmul.f32 %v2567, %v2718
        %v2751 = vadd.f32 %v2682, %v2719
        %v2752 = vadd.f32 %v2683, %v2720
        %v2753 = vadd.f32 %v2684, %v2721
        %v2754 = vadd.f32 %v2685, %v2722
        %v2755 = vadd.f32 %v2686, %v2723
        %v2756 = vadd.f32 %v2687, %v2724
        %v2757 = vadd.f32 %v2688, %v2725
        %v2758 = vadd.f32 %v2689, %v2726
        %v2759 = vadd.f32 %v2690, %v2727
        %v2760 = vadd.f32 %v2691, %v2728
        %v2761 = vadd.f32 %v2692, %v2729
        %v2762 = vadd.f32 %v2693, %v2730
        %v2763 = vadd.f32 %v2694, %v2731
        %v2764 = vadd.f32 %v2695, %v2732
        %v2765 = vadd.f32 %v2696, %v2733
        %v2766 = vadd.f32 %v2697, %v2734
        %v2767 = vadd.f32 %v2698, %v2735
        %v2768 = vadd.f32 %v2699, %v2736
        %v2769 = vadd.f32 %v2700, %v2737
        %v2770 = vadd.f32 %v2701, %v2738
        %v2771 = vadd.f32 %v2702, %v2739
        %v2772 = vadd.f32 %v2703, %v2740
        %v2773 = vadd.f32 %v2704, %v2741
        %v2774 = vadd.f32 %v2705, %v2742
        %v2775 = vadd.f32 %v2706, %v2743
        %v2776 = vadd.f32 %v2707, %v2744
        %v2777 = vadd.f32 %v2708, %v2745
        %v2778 = vadd.f32 %v2709, %v2746
        %v2779 = vadd.f32 %v2710, %v2747
        %v2780 = vadd.f32 %v2711, %v2748
        %v2781 = vadd.f32 %v2712, %v2749
        %v2782 = vadd.f32 %v2713, %v2750
        %v2783 = vld [vmem:[%s1 + $0x19] sm:$0x1]
        %v2784 = vlaneseq
        %v2785 = vshrl.u32 %v2784, 7
        %v2786 = vsub.s32 0, %v2785
        %v2787 = vrot.slane %v2783, %v2786
        %v2788 = vmul.f32 %v2538, %v2787
        %v2789 = vmul.f32 %v2539, %v2787
        %v2790 = vmul.f32 %v2540, %v2787
        %v2791 = vmul.f32 %v2541, %v2787
        %v2792 = vmul.f32 %v2542, %v2787
        %v2793 = vmul.f32 %v2543, %v2787
        %v2794 = vmul.f32 %v2544, %v2787
        %v2795 = vmul.f32 %v2545, %v2787
        %v2796 = vmul.f32 %v2546, %v2787
        %v2797 = vmul.f32 %v2547, %v2787
        %v2798 = vmul.f32 %v2548, %v2787
        %v2799 = vmul.f32 %v2549, %v2787
        %v2800 = vmul.f32 %v2550, %v2787
        %v2801 = vmul.f32 %v2551, %v2787
        %v2802 = vmul.f32 %v2552, %v2787
        %v2803 = vmul.f32 %v2553, %v2787
        %v2804 = vmul.f32 %v2554, %v2787
        %v2805 = vmul.f32 %v2555, %v2787
        %v2806 = vmul.f32 %v2556, %v2787
        %v2807 = vmul.f32 %v2557, %v2787
        %v2808 = vmul.f32 %v2558, %v2787
        %v2809 = vmul.f32 %v2559, %v2787
        %v2810 = vmul.f32 %v2560, %v2787
        %v2811 = vmul.f32 %v2561, %v2787
        %v2812 = vmul.f32 %v2562, %v2787
        %v2813 = vmul.f32 %v2563, %v2787
        %v2814 = vmul.f32 %v2564, %v2787
        %v2815 = vmul.f32 %v2565, %v2787
        %v2816 = vmul.f32 %v2566, %v2787
        %v2817 = vmul.f32 %v2567, %v2787
        %v2818 = vmul.f32 %v2568, %v2787
        %v2819 = vmul.f32 %v2569, %v2787
        %v2820 = vadd.f32 %v2751, %v2788
        %v2821 = vadd.f32 %v2752, %v2789
        %v2822 = vadd.f32 %v2753, %v2790
        %v2823 = vadd.f32 %v2754, %v2791
        %v2824 = vadd.f32 %v2755, %v2792
        %v2825 = vadd.f32 %v2756, %v2793
        %v2826 = vadd.f32 %v2757, %v2794
        %v2827 = vadd.f32 %v2758, %v2795
        %v2828 = vadd.f32 %v2759, %v2796
        %v2829 = vadd.f32 %v2760, %v2797
        %v2830 = vadd.f32 %v2761, %v2798
        %v2831 = vadd.f32 %v2762, %v2799
        %v2832 = vadd.f32 %v2763, %v2800
        %v2833 = vadd.f32 %v2764, %v2801
        %v2834 = vadd.f32 %v2765, %v2802
        %v2835 = vadd.f32 %v2766, %v2803
        %v2836 = vadd.f32 %v2767, %v2804
        %v2837 = vadd.f32 %v2768, %v2805
        %v2838 = vadd.f32 %v2769, %v2806
        %v2839 = vadd.f32 %v2770, %v2807
        %v2840 = vadd.f32 %v2771, %v2808
        %v2841 = vadd.f32 %v2772, %v2809
        %v2842 = vadd.f32 %v2773, %v2810
        %v2843 = vadd.f32 %v2774, %v2811
        %v2844 = vadd.f32 %v2775, %v2812
        %v2845 = vadd.f32 %v2776, %v2813
        %v2846 = vadd.f32 %v2777, %v2814
        %v2847 = vadd.f32 %v2778, %v2815
        %v2848 = vadd.f32 %v2779, %v2816
        %v2849 = vadd.f32 %v2780, %v2817
        %v2850 = vadd.f32 %v2781, %v2818
        %v2851 = vadd.f32 %v2782, %v2819
        %v2852 = vld [vmem:[%s1 + $0x20] sm:$0x1]
        %v2853 = vlaneseq
        %v2854 = vshrl.u32 %v2853, 7
        %v2855 = vsub.s32 0, %v2854
        %v2856 = vrot.slane %v2852, %v2855
        %v2857 = vmul.f32 %v2540, %v2856
        %v2858 = vmul.f32 %v2541, %v2856
        %v2859 = vmul.f32 %v2542, %v2856
        %v2860 = vmul.f32 %v2543, %v2856
        %v2861 = vmul.f32 %v2544, %v2856
        %v2862 = vmul.f32 %v2545, %v2856
        %v2863 = vmul.f32 %v2546, %v2856
        %v2864 = vmul.f32 %v2547, %v2856
        %v2865 = vmul.f32 %v2548, %v2856
        %v2866 = vmul.f32 %v2549, %v2856
        %v2867 = vmul.f32 %v2550, %v2856
        %v2868 = vmul.f32 %v2551, %v2856
        %v2869 = vmul.f32 %v2552, %v2856
        %v2870 = vmul.f32 %v2553, %v2856
        %v2871 = vmul.f32 %v2554, %v2856
        %v2872 = vmul.f32 %v2555, %v2856
        %v2873 = vmul.f32 %v2556, %v2856
        %v2874 = vmul.f32 %v2557, %v2856
        %v2875 = vmul.f32 %v2558, %v2856
        %v2876 = vmul.f32 %v2559, %v2856
        %v2877 = vmul.f32 %v2560, %v2856
        %v2878 = vmul.f32 %v2561, %v2856
        %v2879 = vmul.f32 %v2562, %v2856
        %v2880 = vmul.f32 %v2563, %v2856
        %v2881 = vmul.f32 %v2564, %v2856
        %v2882 = vmul.f32 %v2565, %v2856
        %v2883 = vmul.f32 %v2566, %v2856
        %v2884 = vmul.f32 %v2567, %v2856
        %v2885 = vmul.f32 %v2568, %v2856
        %v2886 = vmul.f32 %v2569, %v2856
        %v2887 = vmul.f32 %v2570, %v2856
        %v2888 = vmul.f32 %v2571, %v2856
        %v2889 = vadd.f32 %v2820, %v2857
        %v2890 = vadd.f32 %v2821, %v2858
        %v2891 = vadd.f32 %v2822, %v2859
        %v2892 = vadd.f32 %v2823, %v2860
        %v2893 = vadd.f32 %v2824, %v2861
        %v2894 = vadd.f32 %v2825, %v2862
        %v2895 = vadd.f32 %v2826, %v2863
        %v2896 = vadd.f32 %v2827, %v2864
        %v2897 = vadd.f32 %v2828, %v2865
        %v2898 = vadd.f32 %v2829, %v2866
        %v2899 = vadd.f32 %v2830, %v2867
        %v2900 = vadd.f32 %v2831, %v2868
        %v2901 = vadd.f32 %v2832, %v2869
        %v2902 = vadd.f32 %v2833, %v2870
        %v2903 = vadd.f32 %v2834, %v2871
        %v2904 = vadd.f32 %v2835, %v2872
        %v2905 = vadd.f32 %v2836, %v2873
        %v2906 = vadd.f32 %v2837, %v2874
        %v2907 = vadd.f32 %v2838, %v2875
        %v2908 = vadd.f32 %v2839, %v2876
        %v2909 = vadd.f32 %v2840, %v2877
        %v2910 = vadd.f32 %v2841, %v2878
        %v2911 = vadd.f32 %v2842, %v2879
        %v2912 = vadd.f32 %v2843, %v2880
        %v2913 = vadd.f32 %v2844, %v2881
        %v2914 = vadd.f32 %v2845, %v2882
        %v2915 = vadd.f32 %v2846, %v2883
        %v2916 = vadd.f32 %v2847, %v2884
        %v2917 = vadd.f32 %v2848, %v2885
        %v2918 = vadd.f32 %v2849, %v2886
        %v2919 = vadd.f32 %v2850, %v2887
        %v2920 = vadd.f32 %v2851, %v2888
        %v2921 = vld [vmem:[%s1 + $0x27] sm:$0x1]
        %v2922 = vlaneseq
        %v2923 = vshrl.u32 %v2922, 7
        %v2924 = vsub.s32 0, %v2923
        %v2925 = vrot.slane %v2921, %v2924
        %v2926 = vmul.f32 %v2542, %v2925
        %v2927 = vmul.f32 %v2543, %v2925
        %v2928 = vmul.f32 %v2544, %v2925
        %v2929 = vmul.f32 %v2545, %v2925
        %v2930 = vmul.f32 %v2546, %v2925
        %v2931 = vmul.f32 %v2547, %v2925
        %v2932 = vmul.f32 %v2548, %v2925
        %v2933 = vmul.f32 %v2549, %v2925
        %v2934 = vmul.f32 %v2550, %v2925
        %v2935 = vmul.f32 %v2551, %v2925
        %v2936 = vmul.f32 %v2552, %v2925
        %v2937 = vmul.f32 %v2553, %v2925
        %v2938 = vmul.f32 %v2554, %v2925
        %v2939 = vmul.f32 %v2555, %v2925
        %v2940 = vmul.f32 %v2556, %v2925
        %v2941 = vmul.f32 %v2557, %v2925
        %v2942 = vmul.f32 %v2558, %v2925
        %v2943 = vmul.f32 %v2559, %v2925
        %v2944 = vmul.f32 %v2560, %v2925
        %v2945 = vmul.f32 %v2561, %v2925
        %v2946 = vmul.f32 %v2562, %v2925
        %v2947 = vmul.f32 %v2563, %v2925
        %v2948 = vmul.f32 %v2564, %v2925
        %v2949 = vmul.f32 %v2565, %v2925
        %v2950 = vmul.f32 %v2566, %v2925
        %v2951 = vmul.f32 %v2567, %v2925
        %v2952 = vmul.f32 %v2568, %v2925
        %v2953 = vmul.f32 %v2569, %v2925
        %v2954 = vmul.f32 %v2570, %v2925
        %v2955 = vmul.f32 %v2571, %v2925
        %v2956 = vmul.f32 %v2572, %v2925
        %v2957 = vmul.f32 %v2573, %v2925
        %v2958 = vadd.f32 %v2889, %v2926
        %v2959 = vadd.f32 %v2890, %v2927
        %v2960 = vadd.f32 %v2891, %v2928
        %v2961 = vadd.f32 %v2892, %v2929
        %v2962 = vadd.f32 %v2893, %v2930
        %v2963 = vadd.f32 %v2894, %v2931
        %v2964 = vadd.f32 %v2895, %v2932
        %v2965 = vadd.f32 %v2896, %v2933
        %v2966 = vadd.f32 %v2897, %v2934
        %v2967 = vadd.f32 %v2898, %v2935
        %v2968 = vadd.f32 %v2899, %v2936
        %v2969 = vadd.f32 %v2900, %v2937
        %v2970 = vadd.f32 %v2901, %v2938
        %v2971 = vadd.f32 %v2902, %v2939
        %v2972 = vadd.f32 %v2903, %v2940
        %v2973 = vadd.f32 %v2904, %v2941
        %v2974 = vadd.f32 %v2905, %v2942
        %v2975 = vadd.f32 %v2906, %v2943
        %v2976 = vadd.f32 %v2907, %v2944
        %v2977 = vadd.f32 %v2908, %v2945
        %v2978 = vadd.f32 %v2909, %v2946
        %v2979 = vadd.f32 %v2910, %v2947
        %v2980 = vadd.f32 %v2911, %v2948
        %v2981 = vadd.f32 %v2912, %v2949
        %v2982 = vadd.f32 %v2913, %v2950
        %v2983 = vadd.f32 %v2914, %v2951
        %v2984 = vadd.f32 %v2915, %v2952
        %v2985 = vadd.f32 %v2916, %v2953
        %v2986 = vadd.f32 %v2917, %v2954
        %v2987 = vadd.f32 %v2918, %v2955
        %v2988 = vadd.f32 %v2919, %v2956
        %v2989 = vadd.f32 %v2920, %v2957
        %v2990 = vld [vmem:[%s1 + $0x2e] sm:$0x1]
        %v2991 = vlaneseq
        %v2992 = vshrl.u32 %v2991, 7
        %v2993 = vsub.s32 0, %v2992
        %v2994 = vrot.slane %v2990, %v2993
        %v2995 = vmul.f32 %v2544, %v2994
        %v2996 = vmul.f32 %v2545, %v2994
        %v2997 = vmul.f32 %v2546, %v2994
        %v2998 = vmul.f32 %v2547, %v2994
        %v2999 = vmul.f32 %v2548, %v2994
        %v3000 = vmul.f32 %v2549, %v2994
        %v3001 = vmul.f32 %v2550, %v2994
        %v3002 = vmul.f32 %v2551, %v2994
        %v3003 = vmul.f32 %v2552, %v2994
        %v3004 = vmul.f32 %v2553, %v2994
        %v3005 = vmul.f32 %v2554, %v2994
        %v3006 = vmul.f32 %v2555, %v2994
        %v3007 = vmul.f32 %v2556, %v2994
        %v3008 = vmul.f32 %v2557, %v2994
        %v3009 = vmul.f32 %v2558, %v2994
        %v3010 = vmul.f32 %v2559, %v2994
        %v3011 = vmul.f32 %v2560, %v2994
        %v3012 = vmul.f32 %v2561, %v2994
        %v3013 = vmul.f32 %v2562, %v2994
        %v3014 = vmul.f32 %v2563, %v2994
        %v3015 = vmul.f32 %v2564, %v2994
        %v3016 = vmul.f32 %v2565, %v2994
        %v3017 = vmul.f32 %v2566, %v2994
        %v3018 = vmul.f32 %v2567, %v2994
        %v3019 = vmul.f32 %v2568, %v2994
        %v3020 = vmul.f32 %v2569, %v2994
        %v3021 = vmul.f32 %v2570, %v2994
        %v3022 = vmul.f32 %v2571, %v2994
        %v3023 = vmul.f32 %v2572, %v2994
        %v3024 = vmul.f32 %v2573, %v2994
        %v3025 = vmul.f32 %v2574, %v2994
        %v3026 = vmul.f32 %v2575, %v2994
        %v3027 = vadd.f32 %v2958, %v2995
        %v3028 = vadd.f32 %v2959, %v2996
        %v3029 = vadd.f32 %v2960, %v2997
        %v3030 = vadd.f32 %v2961, %v2998
        %v3031 = vadd.f32 %v2962, %v2999
        %v3032 = vadd.f32 %v2963, %v3000
        %v3033 = vadd.f32 %v2964, %v3001
        %v3034 = vadd.f32 %v2965, %v3002
        %v3035 = vadd.f32 %v2966, %v3003
        %v3036 = vadd.f32 %v2967, %v3004
        %v3037 = vadd.f32 %v2968, %v3005
        %v3038 = vadd.f32 %v2969, %v3006
        %v3039 = vadd.f32 %v2970, %v3007
        %v3040 = vadd.f32 %v2971, %v3008
        %v3041 = vadd.f32 %v2972, %v3009
        %v3042 = vadd.f32 %v2973, %v3010
        %v3043 = vadd.f32 %v2974, %v3011
        %v3044 = vadd.f32 %v2975, %v3012
        %v3045 = vadd.f32 %v2976, %v3013
        %v3046 = vadd.f32 %v2977, %v3014
        %v3047 = vadd.f32 %v2978, %v3015
        %v3048 = vadd.f32 %v2979, %v3016
        %v3049 = vadd.f32 %v2980, %v3017
        %v3050 = vadd.f32 %v2981, %v3018
        %v3051 = vadd.f32 %v2982, %v3019
        %v3052 = vadd.f32 %v2983, %v3020
        %v3053 = vadd.f32 %v2984, %v3021
        %v3054 = vadd.f32 %v2985, %v3022
        %v3055 = vadd.f32 %v2986, %v3023
        %v3056 = vadd.f32 %v2987, %v3024
        %v3057 = vadd.f32 %v2988, %v3025
        %v3058 = vadd.f32 %v2989, %v3026
        %v3059 = vld [vmem:[#allocation2 + $0x5] sm:$0xff]
        %v3060 = vld [vmem:[#allocation2 + $0xd] sm:$0xff]
        %v3061 = vld [vmem:[#allocation2 + $0x1d] sm:$0xff]
        %v3062 = vld [vmem:[#allocation2 + $0x25] sm:$0xff]
        %v3063 = vld [vmem:[#allocation2 + $0x35] sm:$0xff]
        %v3064 = vld [vmem:[#allocation2 + $0x3d] sm:$0xff]
        %v3065 = vld [vmem:[#allocation2 + $0x4d] sm:$0xff]
        %v3066 = vld [vmem:[#allocation2 + $0x55] sm:$0xff]
        %v3067 = vld [vmem:[#allocation2 + $0x65] sm:$0xff]
        %v3068 = vld [vmem:[#allocation2 + $0x6d] sm:$0xff]
        %v3069 = vld [vmem:[#allocation2 + $0x7d] sm:$0xff]
        %v3070 = vld [vmem:[#allocation2 + $0x85] sm:$0xff]
        %v3071 = vld [vmem:[#allocation2 + $0x95] sm:$0xff]
        %v3072 = vld [vmem:[#allocation2 + $0x9d] sm:$0xff]
        %v3073 = vld [vmem:[#allocation2 + $0xad] sm:$0xff]
        %v3074 = vld [vmem:[#allocation2 + $0xb5] sm:$0xff]
        %v3075 = vld [vmem:[#allocation2 + $0xc5] sm:$0xff]
        %v3076 = vld [vmem:[#allocation2 + $0xcd] sm:$0xff]
        %v3077 = vld [vmem:[#allocation2 + $0xdd] sm:$0xff]
        %v3078 = vld [vmem:[#allocation2 + $0xe5] sm:$0xff]
        %v3079 = vld [vmem:[#allocation2 + $0xf5] sm:$0xff]
        %v3080 = vld [vmem:[#allocation2 + $0xfd] sm:$0xff]
        %v3081 = vld [vmem:[#allocation2 + $0x10d] sm:$0xff]
        %v3082 = vld [vmem:[#allocation2 + $0x115] sm:$0xff]
        %v3083 = vld [vmem:[#allocation2 + $0x125] sm:$0xff]
        %v3084 = vld [vmem:[#allocation2 + $0x12d] sm:$0xff]
        %v3085 = vld [vmem:[#allocation2 + $0x13d] sm:$0xff]
        %v3086 = vld [vmem:[#allocation2 + $0x145] sm:$0xff]
        %v3087 = vld [vmem:[#allocation2 + $0x155] sm:$0xff]
        %v3088 = vld [vmem:[#allocation2 + $0x15d] sm:$0xff]
        %v3089 = vld [vmem:[#allocation2 + $0x16d] sm:$0xff]
        %v3090 = vld [vmem:[#allocation2 + $0x175] sm:$0xff]
        %v3091 = vld [vmem:[#allocation2 + $0x185] sm:$0xff]
        %v3092 = vld [vmem:[#allocation2 + $0x18d] sm:$0xff]
        %v3093 = vld [vmem:[#allocation2 + $0x19d] sm:$0xff]
        %v3094 = vld [vmem:[#allocation2 + $0x1a5] sm:$0xff]
        %v3095 = vld [vmem:[#allocation2 + $0x1b5] sm:$0xff]
        %v3096 = vld [vmem:[#allocation2 + $0x1bd] sm:$0xff]
        %v3097 = vld [vmem:[#allocation2 + $0x1cd] sm:$0xff]
        %v3098 = vld [vmem:[#allocation2 + $0x1d5] sm:$0xff]
        %v3099 = vld [vmem:[#allocation2 + $0x1e5] sm:$0xff]
        %v3100 = vld [vmem:[#allocation2 + $0x1ed] sm:$0xff]
        %v3101 = vld [vmem:[#allocation2 + $0x1fd] sm:$0xff]
        %v3102 = vld [vmem:[#allocation2 + $0x205] sm:$0xff]
        %v3103 = vld [vmem:[%s1 + $0x5] sm:$0x1]
        %v3104 = vlaneseq
        %v3105 = vshrl.u32 %v3104, 7
        %v3106 = vsub.s32 0, %v3105
        %v3107 = vrot.slane %v3103, %v3106
        %v3108 = vmul.f32 %v3059, %v3107
        %v3109 = vmul.f32 %v3060, %v3107
        %v3110 = vmul.f32 %v3061, %v3107
        %v3111 = vmul.f32 %v3062, %v3107
        %v3112 = vmul.f32 %v3063, %v3107
        %v3113 = vmul.f32 %v3064, %v3107
        %v3114 = vmul.f32 %v3065, %v3107
        %v3115 = vmul.f32 %v3066, %v3107
        %v3116 = vmul.f32 %v3067, %v3107
        %v3117 = vmul.f32 %v3068, %v3107
        %v3118 = vmul.f32 %v3069, %v3107
        %v3119 = vmul.f32 %v3070, %v3107
        %v3120 = vmul.f32 %v3071, %v3107
        %v3121 = vmul.f32 %v3072, %v3107
        %v3122 = vmul.f32 %v3073, %v3107
        %v3123 = vmul.f32 %v3074, %v3107
        %v3124 = vmul.f32 %v3075, %v3107
        %v3125 = vmul.f32 %v3076, %v3107
        %v3126 = vmul.f32 %v3077, %v3107
        %v3127 = vmul.f32 %v3078, %v3107
        %v3128 = vmul.f32 %v3079, %v3107
        %v3129 = vmul.f32 %v3080, %v3107
        %v3130 = vmul.f32 %v3081, %v3107
        %v3131 = vmul.f32 %v3082, %v3107
        %v3132 = vmul.f32 %v3083, %v3107
        %v3133 = vmul.f32 %v3084, %v3107
        %v3134 = vmul.f32 %v3085, %v3107
        %v3135 = vmul.f32 %v3086, %v3107
        %v3136 = vmul.f32 %v3087, %v3107
        %v3137 = vmul.f32 %v3088, %v3107
        %v3138 = vmul.f32 %v3089, %v3107
        %v3139 = vmul.f32 %v3090, %v3107
        %v3140 = vadd.f32 %v3027, %v3108
        %v3141 = vadd.f32 %v3028, %v3109
        %v3142 = vadd.f32 %v3029, %v3110
        %v3143 = vadd.f32 %v3030, %v3111
        %v3144 = vadd.f32 %v3031, %v3112
        %v3145 = vadd.f32 %v3032, %v3113
        %v3146 = vadd.f32 %v3033, %v3114
        %v3147 = vadd.f32 %v3034, %v3115
        %v3148 = vadd.f32 %v3035, %v3116
        %v3149 = vadd.f32 %v3036, %v3117
        %v3150 = vadd.f32 %v3037, %v3118
        %v3151 = vadd.f32 %v3038, %v3119
        %v3152 = vadd.f32 %v3039, %v3120
        %v3153 = vadd.f32 %v3040, %v3121
        %v3154 = vadd.f32 %v3041, %v3122
        %v3155 = vadd.f32 %v3042, %v3123
        %v3156 = vadd.f32 %v3043, %v3124
        %v3157 = vadd.f32 %v3044, %v3125
        %v3158 = vadd.f32 %v3045, %v3126
        %v3159 = vadd.f32 %v3046, %v3127
        %v3160 = vadd.f32 %v3047, %v3128
        %v3161 = vadd.f32 %v3048, %v3129
        %v3162 = vadd.f32 %v3049, %v3130
        %v3163 = vadd.f32 %v3050, %v3131
        %v3164 = vadd.f32 %v3051, %v3132
        %v3165 = vadd.f32 %v3052, %v3133
        %v3166 = vadd.f32 %v3053, %v3134
        %v3167 = vadd.f32 %v3054, %v3135
        %v3168 = vadd.f32 %v3055, %v3136
        %v3169 = vadd.f32 %v3056, %v3137
        %v3170 = vadd.f32 %v3057, %v3138
        %v3171 = vadd.f32 %v3058, %v3139
        %v3172 = vld [vmem:[%s1 + $0xc] sm:$0x1]
        %v3173 = vlaneseq
        %v3174 = vshrl.u32 %v3173, 7
        %v3175 = vsub.s32 0, %v3174
        %v3176 = vrot.slane %v3172, %v3175
        %v3177 = vmul.f32 %v3061, %v3176
        %v3178 = vmul.f32 %v3062, %v3176
        %v3179 = vmul.f32 %v3063, %v3176
        %v3180 = vmul.f32 %v3064, %v3176
        %v3181 = vmul.f32 %v3065, %v3176
        %v3182 = vmul.f32 %v3066, %v3176
        %v3183 = vmul.f32 %v3067, %v3176
        %v3184 = vmul.f32 %v3068, %v3176
        %v3185 = vmul.f32 %v3069, %v3176
        %v3186 = vmul.f32 %v3070, %v3176
        %v3187 = vmul.f32 %v3071, %v3176
        %v3188 = vmul.f32 %v3072, %v3176
        %v3189 = vmul.f32 %v3073, %v3176
        %v3190 = vmul.f32 %v3074, %v3176
        %v3191 = vmul.f32 %v3075, %v3176
        %v3192 = vmul.f32 %v3076, %v3176
        %v3193 = vmul.f32 %v3077, %v3176
        %v3194 = vmul.f32 %v3078, %v3176
        %v3195 = vmul.f32 %v3079, %v3176
        %v3196 = vmul.f32 %v3080, %v3176
        %v3197 = vmul.f32 %v3081, %v3176
        %v3198 = vmul.f32 %v3082, %v3176
        %v3199 = vmul.f32 %v3083, %v3176
        %v3200 = vmul.f32 %v3084, %v3176
        %v3201 = vmul.f32 %v3085, %v3176
        %v3202 = vmul.f32 %v3086, %v3176
        %v3203 = vmul.f32 %v3087, %v3176
        %v3204 = vmul.f32 %v3088, %v3176
        %v3205 = vmul.f32 %v3089, %v3176
        %v3206 = vmul.f32 %v3090, %v3176
        %v3207 = vmul.f32 %v3091, %v3176
        %v3208 = vmul.f32 %v3092, %v3176
        %v3209 = vadd.f32 %v3140, %v3177
        %v3210 = vadd.f32 %v3141, %v3178
        %v3211 = vadd.f32 %v3142, %v3179
        %v3212 = vadd.f32 %v3143, %v3180
        %v3213 = vadd.f32 %v3144, %v3181
        %v3214 = vadd.f32 %v3145, %v3182
        %v3215 = vadd.f32 %v3146, %v3183
        %v3216 = vadd.f32 %v3147, %v3184
        %v3217 = vadd.f32 %v3148, %v3185
        %v3218 = vadd.f32 %v3149, %v3186
        %v3219 = vadd.f32 %v3150, %v3187
        %v3220 = vadd.f32 %v3151, %v3188
        %v3221 = vadd.f32 %v3152, %v3189
        %v3222 = vadd.f32 %v3153, %v3190
        %v3223 = vadd.f32 %v3154, %v3191
        %v3224 = vadd.f32 %v3155, %v3192
        %v3225 = vadd.f32 %v3156, %v3193
        %v3226 = vadd.f32 %v3157, %v3194
        %v3227 = vadd.f32 %v3158, %v3195
        %v3228 = vadd.f32 %v3159, %v3196
        %v3229 = vadd.f32 %v3160, %v3197
        %v3230 = vadd.f32 %v3161, %v3198
        %v3231 = vadd.f32 %v3162, %v3199
        %v3232 = vadd.f32 %v3163, %v3200
        %v3233 = vadd.f32 %v3164, %v3201
        %v3234 = vadd.f32 %v3165, %v3202
        %v3235 = vadd.f32 %v3166, %v3203
        %v3236 = vadd.f32 %v3167, %v3204
        %v3237 = vadd.f32 %v3168, %v3205
        %v3238 = vadd.f32 %v3169, %v3206
        %v3239 = vadd.f32 %v3170, %v3207
        %v3240 = vadd.f32 %v3171, %v3208
        %v3241 = vld [vmem:[%s1 + $0x13] sm:$0x1]
        %v3242 = vlaneseq
        %v3243 = vshrl.u32 %v3242, 7
        %v3244 = vsub.s32 0, %v3243
        %v3245 = vrot.slane %v3241, %v3244
        %v3246 = vmul.f32 %v3063, %v3245
        %v3247 = vmul.f32 %v3064, %v3245
        %v3248 = vmul.f32 %v3065, %v3245
        %v3249 = vmul.f32 %v3066, %v3245
        %v3250 = vmul.f32 %v3067, %v3245
        %v3251 = vmul.f32 %v3068, %v3245
        %v3252 = vmul.f32 %v3069, %v3245
        %v3253 = vmul.f32 %v3070, %v3245
        %v3254 = vmul.f32 %v3071, %v3245
        %v3255 = vmul.f32 %v3072, %v3245
        %v3256 = vmul.f32 %v3073, %v3245
        %v3257 = vmul.f32 %v3074, %v3245
        %v3258 = vmul.f32 %v3075, %v3245
        %v3259 = vmul.f32 %v3076, %v3245
        %v3260 = vmul.f32 %v3077, %v3245
        %v3261 = vmul.f32 %v3078, %v3245
        %v3262 = vmul.f32 %v3079, %v3245
        %v3263 = vmul.f32 %v3080, %v3245
        %v3264 = vmul.f32 %v3081, %v3245
        %v3265 = vmul.f32 %v3082, %v3245
        %v3266 = vmul.f32 %v3083, %v3245
        %v3267 = vmul.f32 %v3084, %v3245
        %v3268 = vmul.f32 %v3085, %v3245
        %v3269 = vmul.f32 %v3086, %v3245
        %v3270 = vmul.f32 %v3087, %v3245
        %v3271 = vmul.f32 %v3088, %v3245
        %v3272 = vmul.f32 %v3089, %v3245
        %v3273 = vmul.f32 %v3090, %v3245
        %v3274 = vmul.f32 %v3091, %v3245
        %v3275 = vmul.f32 %v3092, %v3245
        %v3276 = vmul.f32 %v3093, %v3245
        %v3277 = vmul.f32 %v3094, %v3245
        %v3278 = vadd.f32 %v3209, %v3246
        %v3279 = vadd.f32 %v3210, %v3247
        %v3280 = vadd.f32 %v3211, %v3248
        %v3281 = vadd.f32 %v3212, %v3249
        %v3282 = vadd.f32 %v3213, %v3250
        %v3283 = vadd.f32 %v3214, %v3251
        %v3284 = vadd.f32 %v3215, %v3252
        %v3285 = vadd.f32 %v3216, %v3253
        %v3286 = vadd.f32 %v3217, %v3254
        %v3287 = vadd.f32 %v3218, %v3255
        %v3288 = vadd.f32 %v3219, %v3256
        %v3289 = vadd.f32 %v3220, %v3257
        %v3290 = vadd.f32 %v3221, %v3258
        %v3291 = vadd.f32 %v3222, %v3259
        %v3292 = vadd.f32 %v3223, %v3260
        %v3293 = vadd.f32 %v3224, %v3261
        %v3294 = vadd.f32 %v3225, %v3262
        %v3295 = vadd.f32 %v3226, %v3263
        %v3296 = vadd.f32 %v3227, %v3264
        %v3297 = vadd.f32 %v3228, %v3265
        %v3298 = vadd.f32 %v3229, %v3266
        %v3299 = vadd.f32 %v3230, %v3267
        %v3300 = vadd.f32 %v3231, %v3268
        %v3301 = vadd.f32 %v3232, %v3269
        %v3302 = vadd.f32 %v3233, %v3270
        %v3303 = vadd.f32 %v3234, %v3271
        %v3304 = vadd.f32 %v3235, %v3272
        %v3305 = vadd.f32 %v3236, %v3273
        %v3306 = vadd.f32 %v3237, %v3274
        %v3307 = vadd.f32 %v3238, %v3275
        %v3308 = vadd.f32 %v3239, %v3276
        %v3309 = vadd.f32 %v3240, %v3277
        %v3310 = vld [vmem:[%s1 + $0x1a] sm:$0x1]
        %v3311 = vlaneseq
        %v3312 = vshrl.u32 %v3311, 7
        %v3313 = vsub.s32 0, %v3312
        %v3314 = vrot.slane %v3310, %v3313
        %v3315 = vmul.f32 %v3065, %v3314
        %v3316 = vmul.f32 %v3066, %v3314
        %v3317 = vmul.f32 %v3067, %v3314
        %v3318 = vmul.f32 %v3068, %v3314
        %v3319 = vmul.f32 %v3069, %v3314
        %v3320 = vmul.f32 %v3070, %v3314
        %v3321 = vmul.f32 %v3071, %v3314
        %v3322 = vmul.f32 %v3072, %v3314
        %v3323 = vmul.f32 %v3073, %v3314
        %v3324 = vmul.f32 %v3074, %v3314
        %v3325 = vmul.f32 %v3075, %v3314
        %v3326 = vmul.f32 %v3076, %v3314
        %v3327 = vmul.f32 %v3077, %v3314
        %v3328 = vmul.f32 %v3078, %v3314
        %v3329 = vmul.f32 %v3079, %v3314
        %v3330 = vmul.f32 %v3080, %v3314
        %v3331 = vmul.f32 %v3081, %v3314
        %v3332 = vmul.f32 %v3082, %v3314
        %v3333 = vmul.f32 %v3083, %v3314
        %v3334 = vmul.f32 %v3084, %v3314
        %v3335 = vmul.f32 %v3085, %v3314
        %v3336 = vmul.f32 %v3086, %v3314
        %v3337 = vmul.f32 %v3087, %v3314
        %v3338 = vmul.f32 %v3088, %v3314
        %v3339 = vmul.f32 %v3089, %v3314
        %v3340 = vmul.f32 %v3090, %v3314
        %v3341 = vmul.f32 %v3091, %v3314
        %v3342 = vmul.f32 %v3092, %v3314
        %v3343 = vmul.f32 %v3093, %v3314
        %v3344 = vmul.f32 %v3094, %v3314
        %v3345 = vmul.f32 %v3095, %v3314
        %v3346 = vmul.f32 %v3096, %v3314
        %v3347 = vadd.f32 %v3278, %v3315
        %v3348 = vadd.f32 %v3279, %v3316
        %v3349 = vadd.f32 %v3280, %v3317
        %v3350 = vadd.f32 %v3281, %v3318
        %v3351 = vadd.f32 %v3282, %v3319
        %v3352 = vadd.f32 %v3283, %v3320
        %v3353 = vadd.f32 %v3284, %v3321
        %v3354 = vadd.f32 %v3285, %v3322
        %v3355 = vadd.f32 %v3286, %v3323
        %v3356 = vadd.f32 %v3287, %v3324
        %v3357 = vadd.f32 %v3288, %v3325
        %v3358 = vadd.f32 %v3289, %v3326
        %v3359 = vadd.f32 %v3290, %v3327
        %v3360 = vadd.f32 %v3291, %v3328
        %v3361 = vadd.f32 %v3292, %v3329
        %v3362 = vadd.f32 %v3293, %v3330
        %v3363 = vadd.f32 %v3294, %v3331
        %v3364 = vadd.f32 %v3295, %v3332
        %v3365 = vadd.f32 %v3296, %v3333
        %v3366 = vadd.f32 %v3297, %v3334
        %v3367 = vadd.f32 %v3298, %v3335
        %v3368 = vadd.f32 %v3299, %v3336
        %v3369 = vadd.f32 %v3300, %v3337
        %v3370 = vadd.f32 %v3301, %v3338
        %v3371 = vadd.f32 %v3302, %v3339
        %v3372 = vadd.f32 %v3303, %v3340
        %v3373 = vadd.f32 %v3304, %v3341
        %v3374 = vadd.f32 %v3305, %v3342
        %v3375 = vadd.f32 %v3306, %v3343
        %v3376 = vadd.f32 %v3307, %v3344
        %v3377 = vadd.f32 %v3308, %v3345
        %v3378 = vadd.f32 %v3309, %v3346
        %v3379 = vld [vmem:[%s1 + $0x21] sm:$0x1]
        %v3380 = vlaneseq
        %v3381 = vshrl.u32 %v3380, 7
        %v3382 = vsub.s32 0, %v3381
        %v3383 = vrot.slane %v3379, %v3382
        %v3384 = vmul.f32 %v3067, %v3383
        %v3385 = vmul.f32 %v3068, %v3383
        %v3386 = vmul.f32 %v3069, %v3383
        %v3387 = vmul.f32 %v3070, %v3383
        %v3388 = vmul.f32 %v3071, %v3383
        %v3389 = vmul.f32 %v3072, %v3383
        %v3390 = vmul.f32 %v3073, %v3383
        %v3391 = vmul.f32 %v3074, %v3383
        %v3392 = vmul.f32 %v3075, %v3383
        %v3393 = vmul.f32 %v3076, %v3383
        %v3394 = vmul.f32 %v3077, %v3383
        %v3395 = vmul.f32 %v3078, %v3383
        %v3396 = vmul.f32 %v3079, %v3383
        %v3397 = vmul.f32 %v3080, %v3383
        %v3398 = vmul.f32 %v3081, %v3383
        %v3399 = vmul.f32 %v3082, %v3383
        %v3400 = vmul.f32 %v3083, %v3383
        %v3401 = vmul.f32 %v3084, %v3383
        %v3402 = vmul.f32 %v3085, %v3383
        %v3403 = vmul.f32 %v3086, %v3383
        %v3404 = vmul.f32 %v3087, %v3383
        %v3405 = vmul.f32 %v3088, %v3383
        %v3406 = vmul.f32 %v3089, %v3383
        %v3407 = vmul.f32 %v3090, %v3383
        %v3408 = vmul.f32 %v3091, %v3383
        %v3409 = vmul.f32 %v3092, %v3383
        %v3410 = vmul.f32 %v3093, %v3383
        %v3411 = vmul.f32 %v3094, %v3383
        %v3412 = vmul.f32 %v3095, %v3383
        %v3413 = vmul.f32 %v3096, %v3383
        %v3414 = vmul.f32 %v3097, %v3383
        %v3415 = vmul.f32 %v3098, %v3383
        %v3416 = vadd.f32 %v3347, %v3384
        %v3417 = vadd.f32 %v3348, %v3385
        %v3418 = vadd.f32 %v3349, %v3386
        %v3419 = vadd.f32 %v3350, %v3387
        %v3420 = vadd.f32 %v3351, %v3388
        %v3421 = vadd.f32 %v3352, %v3389
        %v3422 = vadd.f32 %v3353, %v3390
        %v3423 = vadd.f32 %v3354, %v3391
        %v3424 = vadd.f32 %v3355, %v3392
        %v3425 = vadd.f32 %v3356, %v3393
        %v3426 = vadd.f32 %v3357, %v3394
        %v3427 = vadd.f32 %v3358, %v3395
        %v3428 = vadd.f32 %v3359, %v3396
        %v3429 = vadd.f32 %v3360, %v3397
        %v3430 = vadd.f32 %v3361, %v3398
        %v3431 = vadd.f32 %v3362, %v3399
        %v3432 = vadd.f32 %v3363, %v3400
        %v3433 = vadd.f32 %v3364, %v3401
        %v3434 = vadd.f32 %v3365, %v3402
        %v3435 = vadd.f32 %v3366, %v3403
        %v3436 = vadd.f32 %v3367, %v3404
        %v3437 = vadd.f32 %v3368, %v3405
        %v3438 = vadd.f32 %v3369, %v3406
        %v3439 = vadd.f32 %v3370, %v3407
        %v3440 = vadd.f32 %v3371, %v3408
        %v3441 = vadd.f32 %v3372, %v3409
        %v3442 = vadd.f32 %v3373, %v3410
        %v3443 = vadd.f32 %v3374, %v3411
        %v3444 = vadd.f32 %v3375, %v3412
        %v3445 = vadd.f32 %v3376, %v3413
        %v3446 = vadd.f32 %v3377, %v3414
        %v3447 = vadd.f32 %v3378, %v3415
        %v3448 = vld [vmem:[%s1 + $0x28] sm:$0x1]
        %v3449 = vlaneseq
        %v3450 = vshrl.u32 %v3449, 7
        %v3451 = vsub.s32 0, %v3450
        %v3452 = vrot.slane %v3448, %v3451
        %v3453 = vmul.f32 %v3069, %v3452
        %v3454 = vmul.f32 %v3070, %v3452
        %v3455 = vmul.f32 %v3071, %v3452
        %v3456 = vmul.f32 %v3072, %v3452
        %v3457 = vmul.f32 %v3073, %v3452
        %v3458 = vmul.f32 %v3074, %v3452
        %v3459 = vmul.f32 %v3075, %v3452
        %v3460 = vmul.f32 %v3076, %v3452
        %v3461 = vmul.f32 %v3077, %v3452
        %v3462 = vmul.f32 %v3078, %v3452
        %v3463 = vmul.f32 %v3079, %v3452
        %v3464 = vmul.f32 %v3080, %v3452
        %v3465 = vmul.f32 %v3081, %v3452
        %v3466 = vmul.f32 %v3082, %v3452
        %v3467 = vmul.f32 %v3083, %v3452
        %v3468 = vmul.f32 %v3084, %v3452
        %v3469 = vmul.f32 %v3085, %v3452
        %v3470 = vmul.f32 %v3086, %v3452
        %v3471 = vmul.f32 %v3087, %v3452
        %v3472 = vmul.f32 %v3088, %v3452
        %v3473 = vmul.f32 %v3089, %v3452
        %v3474 = vmul.f32 %v3090, %v3452
        %v3475 = vmul.f32 %v3091, %v3452
        %v3476 = vmul.f32 %v3092, %v3452
        %v3477 = vmul.f32 %v3093, %v3452
        %v3478 = vmul.f32 %v3094, %v3452
        %v3479 = vmul.f32 %v3095, %v3452
        %v3480 = vmul.f32 %v3096, %v3452
        %v3481 = vmul.f32 %v3097, %v3452
        %v3482 = vmul.f32 %v3098, %v3452
        %v3483 = vmul.f32 %v3099, %v3452
        %v3484 = vmul.f32 %v3100, %v3452
        %v3485 = vadd.f32 %v3416, %v3453
        %v3486 = vadd.f32 %v3417, %v3454
        %v3487 = vadd.f32 %v3418, %v3455
        %v3488 = vadd.f32 %v3419, %v3456
        %v3489 = vadd.f32 %v3420, %v3457
        %v3490 = vadd.f32 %v3421, %v3458
        %v3491 = vadd.f32 %v3422, %v3459
        %v3492 = vadd.f32 %v3423, %v3460
        %v3493 = vadd.f32 %v3424, %v3461
        %v3494 = vadd.f32 %v3425, %v3462
        %v3495 = vadd.f32 %v3426, %v3463
        %v3496 = vadd.f32 %v3427, %v3464
        %v3497 = vadd.f32 %v3428, %v3465
        %v3498 = vadd.f32 %v3429, %v3466
        %v3499 = vadd.f32 %v3430, %v3467
        %v3500 = vadd.f32 %v3431, %v3468
        %v3501 = vadd.f32 %v3432, %v3469
        %v3502 = vadd.f32 %v3433, %v3470
        %v3503 = vadd.f32 %v3434, %v3471
        %v3504 = vadd.f32 %v3435, %v3472
        %v3505 = vadd.f32 %v3436, %v3473
        %v3506 = vadd.f32 %v3437, %v3474
        %v3507 = vadd.f32 %v3438, %v3475
        %v3508 = vadd.f32 %v3439, %v3476
        %v3509 = vadd.f32 %v3440, %v3477
        %v3510 = vadd.f32 %v3441, %v3478
        %v3511 = vadd.f32 %v3442, %v3479
        %v3512 = vadd.f32 %v3443, %v3480
        %v3513 = vadd.f32 %v3444, %v3481
        %v3514 = vadd.f32 %v3445, %v3482
        %v3515 = vadd.f32 %v3446, %v3483
        %v3516 = vadd.f32 %v3447, %v3484
        %v3517 = vld [vmem:[%s1 + $0x2f] sm:$0x1]
        %v3518 = vlaneseq
        %v3519 = vshrl.u32 %v3518, 7
        %v3520 = vsub.s32 0, %v3519
        %v3521 = vrot.slane %v3517, %v3520
        %v3522 = vmul.f32 %v3071, %v3521
        %v3523 = vmul.f32 %v3072, %v3521
        %v3524 = vmul.f32 %v3073, %v3521
        %v3525 = vmul.f32 %v3074, %v3521
        %v3526 = vmul.f32 %v3075, %v3521
        %v3527 = vmul.f32 %v3076, %v3521
        %v3528 = vmul.f32 %v3077, %v3521
        %v3529 = vmul.f32 %v3078, %v3521
        %v3530 = vmul.f32 %v3079, %v3521
        %v3531 = vmul.f32 %v3080, %v3521
        %v3532 = vmul.f32 %v3081, %v3521
        %v3533 = vmul.f32 %v3082, %v3521
        %v3534 = vmul.f32 %v3083, %v3521
        %v3535 = vmul.f32 %v3084, %v3521
        %v3536 = vmul.f32 %v3085, %v3521
        %v3537 = vmul.f32 %v3086, %v3521
        %v3538 = vmul.f32 %v3087, %v3521
        %v3539 = vmul.f32 %v3088, %v3521
        %v3540 = vmul.f32 %v3089, %v3521
        %v3541 = vmul.f32 %v3090, %v3521
        %v3542 = vmul.f32 %v3091, %v3521
        %v3543 = vmul.f32 %v3092, %v3521
        %v3544 = vmul.f32 %v3093, %v3521
        %v3545 = vmul.f32 %v3094, %v3521
        %v3546 = vmul.f32 %v3095, %v3521
        %v3547 = vmul.f32 %v3096, %v3521
        %v3548 = vmul.f32 %v3097, %v3521
        %v3549 = vmul.f32 %v3098, %v3521
        %v3550 = vmul.f32 %v3099, %v3521
        %v3551 = vmul.f32 %v3100, %v3521
        %v3552 = vmul.f32 %v3101, %v3521
        %v3553 = vmul.f32 %v3102, %v3521
        %v3554 = vadd.f32 %v3485, %v3522
        %v3555 = vadd.f32 %v3486, %v3523
        %v3556 = vadd.f32 %v3487, %v3524
        %v3557 = vadd.f32 %v3488, %v3525
        %v3558 = vadd.f32 %v3489, %v3526
        %v3559 = vadd.f32 %v3490, %v3527
        %v3560 = vadd.f32 %v3491, %v3528
        %v3561 = vadd.f32 %v3492, %v3529
        %v3562 = vadd.f32 %v3493, %v3530
        %v3563 = vadd.f32 %v3494, %v3531
        %v3564 = vadd.f32 %v3495, %v3532
        %v3565 = vadd.f32 %v3496, %v3533
        %v3566 = vadd.f32 %v3497, %v3534
        %v3567 = vadd.f32 %v3498, %v3535
        %v3568 = vadd.f32 %v3499, %v3536
        %v3569 = vadd.f32 %v3500, %v3537
        %v3570 = vadd.f32 %v3501, %v3538
        %v3571 = vadd.f32 %v3502, %v3539
        %v3572 = vadd.f32 %v3503, %v3540
        %v3573 = vadd.f32 %v3504, %v3541
        %v3574 = vadd.f32 %v3505, %v3542
        %v3575 = vadd.f32 %v3506, %v3543
        %v3576 = vadd.f32 %v3507, %v3544
        %v3577 = vadd.f32 %v3508, %v3545
        %v3578 = vadd.f32 %v3509, %v3546
        %v3579 = vadd.f32 %v3510, %v3547
        %v3580 = vadd.f32 %v3511, %v3548
        %v3581 = vadd.f32 %v3512, %v3549
        %v3582 = vadd.f32 %v3513, %v3550
        %v3583 = vadd.f32 %v3514, %v3551
        %v3584 = vadd.f32 %v3515, %v3552
        %v3585 = vadd.f32 %v3516, %v3553
        %v3586 = vld [vmem:[#allocation2 + $0x6] sm:$0xff]
        %v3587 = vld [vmem:[#allocation2 + $0xe] sm:$0xff]
        %v3588 = vld [vmem:[#allocation2 + $0x1e] sm:$0xff]
        %v3589 = vld [vmem:[#allocation2 + $0x26] sm:$0xff]
        %v3590 = vld [vmem:[#allocation2 + $0x36] sm:$0xff]
        %v3591 = vld [vmem:[#allocation2 + $0x3e] sm:$0xff]
        %v3592 = vld [vmem:[#allocation2 + $0x4e] sm:$0xff]
        %v3593 = vld [vmem:[#allocation2 + $0x56] sm:$0xff]
        %v3594 = vld [vmem:[#allocation2 + $0x66] sm:$0xff]
        %v3595 = vld [vmem:[#allocation2 + $0x6e] sm:$0xff]
        %v3596 = vld [vmem:[#allocation2 + $0x7e] sm:$0xff]
        %v3597 = vld [vmem:[#allocation2 + $0x86] sm:$0xff]
        %v3598 = vld [vmem:[#allocation2 + $0x96] sm:$0xff]
        %v3599 = vld [vmem:[#allocation2 + $0x9e] sm:$0xff]
        %v3600 = vld [vmem:[#allocation2 + $0xae] sm:$0xff]
        %v3601 = vld [vmem:[#allocation2 + $0xb6] sm:$0xff]
        %v3602 = vld [vmem:[#allocation2 + $0xc6] sm:$0xff]
        %v3603 = vld [vmem:[#allocation2 + $0xce] sm:$0xff]
        %v3604 = vld [vmem:[#allocation2 + $0xde] sm:$0xff]
        %v3605 = vld [vmem:[#allocation2 + $0xe6] sm:$0xff]
        %v3606 = vld [vmem:[#allocation2 + $0xf6] sm:$0xff]
        %v3607 = vld [vmem:[#allocation2 + $0xfe] sm:$0xff]
        %v3608 = vld [vmem:[#allocation2 + $0x10e] sm:$0xff]
        %v3609 = vld [vmem:[#allocation2 + $0x116] sm:$0xff]
        %v3610 = vld [vmem:[#allocation2 + $0x126] sm:$0xff]
        %v3611 = vld [vmem:[#allocation2 + $0x12e] sm:$0xff]
        %v3612 = vld [vmem:[#allocation2 + $0x13e] sm:$0xff]
        %v3613 = vld [vmem:[#allocation2 + $0x146] sm:$0xff]
        %v3614 = vld [vmem:[#allocation2 + $0x156] sm:$0xff]
        %v3615 = vld [vmem:[#allocation2 + $0x15e] sm:$0xff]
        %v3616 = vld [vmem:[#allocation2 + $0x16e] sm:$0xff]
        %v3617 = vld [vmem:[#allocation2 + $0x176] sm:$0xff]
        %v3618 = vld [vmem:[#allocation2 + $0x186] sm:$0xff]
        %v3619 = vld [vmem:[#allocation2 + $0x18e] sm:$0xff]
        %v3620 = vld [vmem:[#allocation2 + $0x19e] sm:$0xff]
        %v3621 = vld [vmem:[#allocation2 + $0x1a6] sm:$0xff]
        %v3622 = vld [vmem:[#allocation2 + $0x1b6] sm:$0xff]
        %v3623 = vld [vmem:[#allocation2 + $0x1be] sm:$0xff]
        %v3624 = vld [vmem:[#allocation2 + $0x1ce] sm:$0xff]
        %v3625 = vld [vmem:[#allocation2 + $0x1d6] sm:$0xff]
        %v3626 = vld [vmem:[#allocation2 + $0x1e6] sm:$0xff]
        %v3627 = vld [vmem:[#allocation2 + $0x1ee] sm:$0xff]
        %v3628 = vld [vmem:[#allocation2 + $0x1fe] sm:$0xff]
        %v3629 = vld [vmem:[#allocation2 + $0x206] sm:$0xff]
        %v3630 = vld [vmem:[%s1 + $0x6] sm:$0x1]
        %v3631 = vlaneseq
        %v3632 = vshrl.u32 %v3631, 7
        %v3633 = vsub.s32 0, %v3632
        %v3634 = vrot.slane %v3630, %v3633
        %v3635 = vmul.f32 %v3586, %v3634
        %v3636 = vmul.f32 %v3587, %v3634
        %v3637 = vmul.f32 %v3588, %v3634
        %v3638 = vmul.f32 %v3589, %v3634
        %v3639 = vmul.f32 %v3590, %v3634
        %v3640 = vmul.f32 %v3591, %v3634
        %v3641 = vmul.f32 %v3592, %v3634
        %v3642 = vmul.f32 %v3593, %v3634
        %v3643 = vmul.f32 %v3594, %v3634
        %v3644 = vmul.f32 %v3595, %v3634
        %v3645 = vmul.f32 %v3596, %v3634
        %v3646 = vmul.f32 %v3597, %v3634
        %v3647 = vmul.f32 %v3598, %v3634
        %v3648 = vmul.f32 %v3599, %v3634
        %v3649 = vmul.f32 %v3600, %v3634
        %v3650 = vmul.f32 %v3601, %v3634
        %v3651 = vmul.f32 %v3602, %v3634
        %v3652 = vmul.f32 %v3603, %v3634
        %v3653 = vmul.f32 %v3604, %v3634
        %v3654 = vmul.f32 %v3605, %v3634
        %v3655 = vmul.f32 %v3606, %v3634
        %v3656 = vmul.f32 %v3607, %v3634
        %v3657 = vmul.f32 %v3608, %v3634
        %v3658 = vmul.f32 %v3609, %v3634
        %v3659 = vmul.f32 %v3610, %v3634
        %v3660 = vmul.f32 %v3611, %v3634
        %v3661 = vmul.f32 %v3612, %v3634
        %v3662 = vmul.f32 %v3613, %v3634
        %v3663 = vmul.f32 %v3614, %v3634
        %v3664 = vmul.f32 %v3615, %v3634
        %v3665 = vmul.f32 %v3616, %v3634
        %v3666 = vmul.f32 %v3617, %v3634
        %v3667 = vadd.f32 %v3554, %v3635
        %v3668 = vadd.f32 %v3555, %v3636
        %v3669 = vadd.f32 %v3556, %v3637
        %v3670 = vadd.f32 %v3557, %v3638
        %v3671 = vadd.f32 %v3558, %v3639
        %v3672 = vadd.f32 %v3559, %v3640
        %v3673 = vadd.f32 %v3560, %v3641
        %v3674 = vadd.f32 %v3561, %v3642
        %v3675 = vadd.f32 %v3562, %v3643
        %v3676 = vadd.f32 %v3563, %v3644
        %v3677 = vadd.f32 %v3564, %v3645
        %v3678 = vadd.f32 %v3565, %v3646
        %v3679 = vadd.f32 %v3566, %v3647
        %v3680 = vadd.f32 %v3567, %v3648
        %v3681 = vadd.f32 %v3568, %v3649
        %v3682 = vadd.f32 %v3569, %v3650
        %v3683 = vadd.f32 %v3570, %v3651
        %v3684 = vadd.f32 %v3571, %v3652
        %v3685 = vadd.f32 %v3572, %v3653
        %v3686 = vadd.f32 %v3573, %v3654
        %v3687 = vadd.f32 %v3574, %v3655
        %v3688 = vadd.f32 %v3575, %v3656
        %v3689 = vadd.f32 %v3576, %v3657
        %v3690 = vadd.f32 %v3577, %v3658
        %v3691 = vadd.f32 %v3578, %v3659
        %v3692 = vadd.f32 %v3579, %v3660
        %v3693 = vadd.f32 %v3580, %v3661
        %v3694 = vadd.f32 %v3581, %v3662
        %v3695 = vadd.f32 %v3582, %v3663
        %v3696 = vadd.f32 %v3583, %v3664
        %v3697 = vadd.f32 %v3584, %v3665
        %v3698 = vadd.f32 %v3585, %v3666
        %v3699 = vld [vmem:[%s1 + $0xd] sm:$0x1]
        %v3700 = vlaneseq
        %v3701 = vshrl.u32 %v3700, 7
        %v3702 = vsub.s32 0, %v3701
        %v3703 = vrot.slane %v3699, %v3702
        %v3704 = vmul.f32 %v3588, %v3703
        %v3705 = vmul.f32 %v3589, %v3703
        %v3706 = vmul.f32 %v3590, %v3703
        %v3707 = vmul.f32 %v3591, %v3703
        %v3708 = vmul.f32 %v3592, %v3703
        %v3709 = vmul.f32 %v3593, %v3703
        %v3710 = vmul.f32 %v3594, %v3703
        %v3711 = vmul.f32 %v3595, %v3703
        %v3712 = vmul.f32 %v3596, %v3703
        %v3713 = vmul.f32 %v3597, %v3703
        %v3714 = vmul.f32 %v3598, %v3703
        %v3715 = vmul.f32 %v3599, %v3703
        %v3716 = vmul.f32 %v3600, %v3703
        %v3717 = vmul.f32 %v3601, %v3703
        %v3718 = vmul.f32 %v3602, %v3703
        %v3719 = vmul.f32 %v3603, %v3703
        %v3720 = vmul.f32 %v3604, %v3703
        %v3721 = vmul.f32 %v3605, %v3703
        %v3722 = vmul.f32 %v3606, %v3703
        %v3723 = vmul.f32 %v3607, %v3703
        %v3724 = vmul.f32 %v3608, %v3703
        %v3725 = vmul.f32 %v3609, %v3703
        %v3726 = vmul.f32 %v3610, %v3703
        %v3727 = vmul.f32 %v3611, %v3703
        %v3728 = vmul.f32 %v3612, %v3703
        %v3729 = vmul.f32 %v3613, %v3703
        %v3730 = vmul.f32 %v3614, %v3703
        %v3731 = vmul.f32 %v3615, %v3703
        %v3732 = vmul.f32 %v3616, %v3703
        %v3733 = vmul.f32 %v3617, %v3703
        %v3734 = vmul.f32 %v3618, %v3703
        %v3735 = vmul.f32 %v3619, %v3703
        %v3736 = vadd.f32 %v3667, %v3704
        %v3737 = vadd.f32 %v3668, %v3705
        %v3738 = vadd.f32 %v3669, %v3706
        %v3739 = vadd.f32 %v3670, %v3707
        %v3740 = vadd.f32 %v3671, %v3708
        %v3741 = vadd.f32 %v3672, %v3709
        %v3742 = vadd.f32 %v3673, %v3710
        %v3743 = vadd.f32 %v3674, %v3711
        %v3744 = vadd.f32 %v3675, %v3712
        %v3745 = vadd.f32 %v3676, %v3713
        %v3746 = vadd.f32 %v3677, %v3714
        %v3747 = vadd.f32 %v3678, %v3715
        %v3748 = vadd.f32 %v3679, %v3716
        %v3749 = vadd.f32 %v3680, %v3717
        %v3750 = vadd.f32 %v3681, %v3718
        %v3751 = vadd.f32 %v3682, %v3719
        %v3752 = vadd.f32 %v3683, %v3720
        %v3753 = vadd.f32 %v3684, %v3721
        %v3754 = vadd.f32 %v3685, %v3722
        %v3755 = vadd.f32 %v3686, %v3723
        %v3756 = vadd.f32 %v3687, %v3724
        %v3757 = vadd.f32 %v3688, %v3725
        %v3758 = vadd.f32 %v3689, %v3726
        %v3759 = vadd.f32 %v3690, %v3727
        %v3760 = vadd.f32 %v3691, %v3728
        %v3761 = vadd.f32 %v3692, %v3729
        %v3762 = vadd.f32 %v3693, %v3730
        %v3763 = vadd.f32 %v3694, %v3731
        %v3764 = vadd.f32 %v3695, %v3732
        %v3765 = vadd.f32 %v3696, %v3733
        %v3766 = vadd.f32 %v3697, %v3734
        %v3767 = vadd.f32 %v3698, %v3735
        %v3768 = vld [vmem:[%s1 + $0x14] sm:$0x1]
        %v3769 = vlaneseq
        %v3770 = vshrl.u32 %v3769, 7
        %v3771 = vsub.s32 0, %v3770
        %v3772 = vrot.slane %v3768, %v3771
        %v3773 = vmul.f32 %v3590, %v3772
        %v3774 = vmul.f32 %v3591, %v3772
        %v3775 = vmul.f32 %v3592, %v3772
        %v3776 = vmul.f32 %v3593, %v3772
        %v3777 = vmul.f32 %v3594, %v3772
        %v3778 = vmul.f32 %v3595, %v3772
        %v3779 = vmul.f32 %v3596, %v3772
        %v3780 = vmul.f32 %v3597, %v3772
        %v3781 = vmul.f32 %v3598, %v3772
        %v3782 = vmul.f32 %v3599, %v3772
        %v3783 = vmul.f32 %v3600, %v3772
        %v3784 = vmul.f32 %v3601, %v3772
        %v3785 = vmul.f32 %v3602, %v3772
        %v3786 = vmul.f32 %v3603, %v3772
        %v3787 = vmul.f32 %v3604, %v3772
        %v3788 = vmul.f32 %v3605, %v3772
        %v3789 = vmul.f32 %v3606, %v3772
        %v3790 = vmul.f32 %v3607, %v3772
        %v3791 = vmul.f32 %v3608, %v3772
        %v3792 = vmul.f32 %v3609, %v3772
        %v3793 = vmul.f32 %v3610, %v3772
        %v3794 = vmul.f32 %v3611, %v3772
        %v3795 = vmul.f32 %v3612, %v3772
        %v3796 = vmul.f32 %v3613, %v3772
        %v3797 = vmul.f32 %v3614, %v3772
        %v3798 = vmul.f32 %v3615, %v3772
        %v3799 = vmul.f32 %v3616, %v3772
        %v3800 = vmul.f32 %v3617, %v3772
        %v3801 = vmul.f32 %v3618, %v3772
        %v3802 = vmul.f32 %v3619, %v3772
        %v3803 = vmul.f32 %v3620, %v3772
        %v3804 = vmul.f32 %v3621, %v3772
        %v3805 = vadd.f32 %v3736, %v3773
        %v3806 = vadd.f32 %v3737, %v3774
        %v3807 = vadd.f32 %v3738, %v3775
        %v3808 = vadd.f32 %v3739, %v3776
        %v3809 = vadd.f32 %v3740, %v3777
        %v3810 = vadd.f32 %v3741, %v3778
        %v3811 = vadd.f32 %v3742, %v3779
        %v3812 = vadd.f32 %v3743, %v3780
        %v3813 = vadd.f32 %v3744, %v3781
        %v3814 = vadd.f32 %v3745, %v3782
        %v3815 = vadd.f32 %v3746, %v3783
        %v3816 = vadd.f32 %v3747, %v3784
        %v3817 = vadd.f32 %v3748, %v3785
        %v3818 = vadd.f32 %v3749, %v3786
        %v3819 = vadd.f32 %v3750, %v3787
        %v3820 = vadd.f32 %v3751, %v3788
        %v3821 = vadd.f32 %v3752, %v3789
        %v3822 = vadd.f32 %v3753, %v3790
        %v3823 = vadd.f32 %v3754, %v3791
        %v3824 = vadd.f32 %v3755, %v3792
        %v3825 = vadd.f32 %v3756, %v3793
        %v3826 = vadd.f32 %v3757, %v3794
        %v3827 = vadd.f32 %v3758, %v3795
        %v3828 = vadd.f32 %v3759, %v3796
        %v3829 = vadd.f32 %v3760, %v3797
        %v3830 = vadd.f32 %v3761, %v3798
        %v3831 = vadd.f32 %v3762, %v3799
        %v3832 = vadd.f32 %v3763, %v3800
        %v3833 = vadd.f32 %v3764, %v3801
        %v3834 = vadd.f32 %v3765, %v3802
        %v3835 = vadd.f32 %v3766, %v3803
        %v3836 = vadd.f32 %v3767, %v3804
        %v3837 = vld [vmem:[%s1 + $0x1b] sm:$0x1]
        %v3838 = vlaneseq
        %v3839 = vshrl.u32 %v3838, 7
        %v3840 = vsub.s32 0, %v3839
        %v3841 = vrot.slane %v3837, %v3840
        %v3842 = vmul.f32 %v3592, %v3841
        %v3843 = vmul.f32 %v3593, %v3841
        %v3844 = vmul.f32 %v3594, %v3841
        %v3845 = vmul.f32 %v3595, %v3841
        %v3846 = vmul.f32 %v3596, %v3841
        %v3847 = vmul.f32 %v3597, %v3841
        %v3848 = vmul.f32 %v3598, %v3841
        %v3849 = vmul.f32 %v3599, %v3841
        %v3850 = vmul.f32 %v3600, %v3841
        %v3851 = vmul.f32 %v3601, %v3841
        %v3852 = vmul.f32 %v3602, %v3841
        %v3853 = vmul.f32 %v3603, %v3841
        %v3854 = vmul.f32 %v3604, %v3841
        %v3855 = vmul.f32 %v3605, %v3841
        %v3856 = vmul.f32 %v3606, %v3841
        %v3857 = vmul.f32 %v3607, %v3841
        %v3858 = vmul.f32 %v3608, %v3841
        %v3859 = vmul.f32 %v3609, %v3841
        %v3860 = vmul.f32 %v3610, %v3841
        %v3861 = vmul.f32 %v3611, %v3841
        %v3862 = vmul.f32 %v3612, %v3841
        %v3863 = vmul.f32 %v3613, %v3841
        %v3864 = vmul.f32 %v3614, %v3841
        %v3865 = vmul.f32 %v3615, %v3841
        %v3866 = vmul.f32 %v3616, %v3841
        %v3867 = vmul.f32 %v3617, %v3841
        %v3868 = vmul.f32 %v3618, %v3841
        %v3869 = vmul.f32 %v3619, %v3841
        %v3870 = vmul.f32 %v3620, %v3841
        %v3871 = vmul.f32 %v3621, %v3841
        %v3872 = vmul.f32 %v3622, %v3841
        %v3873 = vmul.f32 %v3623, %v3841
        %v3874 = vadd.f32 %v3805, %v3842
        %v3875 = vadd.f32 %v3806, %v3843
        %v3876 = vadd.f32 %v3807, %v3844
        %v3877 = vadd.f32 %v3808, %v3845
        %v3878 = vadd.f32 %v3809, %v3846
        %v3879 = vadd.f32 %v3810, %v3847
        %v3880 = vadd.f32 %v3811, %v3848
        %v3881 = vadd.f32 %v3812, %v3849
        %v3882 = vadd.f32 %v3813, %v3850
        %v3883 = vadd.f32 %v3814, %v3851
        %v3884 = vadd.f32 %v3815, %v3852
        %v3885 = vadd.f32 %v3816, %v3853
        %v3886 = vadd.f32 %v3817, %v3854
        %v3887 = vadd.f32 %v3818, %v3855
        %v3888 = vadd.f32 %v3819, %v3856
        %v3889 = vadd.f32 %v3820, %v3857
        %v3890 = vadd.f32 %v3821, %v3858
        %v3891 = vadd.f32 %v3822, %v3859
        %v3892 = vadd.f32 %v3823, %v3860
        %v3893 = vadd.f32 %v3824, %v3861
        %v3894 = vadd.f32 %v3825, %v3862
        %v3895 = vadd.f32 %v3826, %v3863
        %v3896 = vadd.f32 %v3827, %v3864
        %v3897 = vadd.f32 %v3828, %v3865
        %v3898 = vadd.f32 %v3829, %v3866
        %v3899 = vadd.f32 %v3830, %v3867
        %v3900 = vadd.f32 %v3831, %v3868
        %v3901 = vadd.f32 %v3832, %v3869
        %v3902 = vadd.f32 %v3833, %v3870
        %v3903 = vadd.f32 %v3834, %v3871
        %v3904 = vadd.f32 %v3835, %v3872
        %v3905 = vadd.f32 %v3836, %v3873
        %v3906 = vld [vmem:[%s1 + $0x22] sm:$0x1]
        %v3907 = vlaneseq
        %v3908 = vshrl.u32 %v3907, 7
        %v3909 = vsub.s32 0, %v3908
        %v3910 = vrot.slane %v3906, %v3909
        %v3911 = vmul.f32 %v3594, %v3910
        %v3912 = vmul.f32 %v3595, %v3910
        %v3913 = vmul.f32 %v3596, %v3910
        %v3914 = vmul.f32 %v3597, %v3910
        %v3915 = vmul.f32 %v3598, %v3910
        %v3916 = vmul.f32 %v3599, %v3910
        %v3917 = vmul.f32 %v3600, %v3910
        %v3918 = vmul.f32 %v3601, %v3910
        %v3919 = vmul.f32 %v3602, %v3910
        %v3920 = vmul.f32 %v3603, %v3910
        %v3921 = vmul.f32 %v3604, %v3910
        %v3922 = vmul.f32 %v3605, %v3910
        %v3923 = vmul.f32 %v3606, %v3910
        %v3924 = vmul.f32 %v3607, %v3910
        %v3925 = vmul.f32 %v3608, %v3910
        %v3926 = vmul.f32 %v3609, %v3910
        %v3927 = vmul.f32 %v3610, %v3910
        %v3928 = vmul.f32 %v3611, %v3910
        %v3929 = vmul.f32 %v3612, %v3910
        %v3930 = vmul.f32 %v3613, %v3910
        %v3931 = vmul.f32 %v3614, %v3910
        %v3932 = vmul.f32 %v3615, %v3910
        %v3933 = vmul.f32 %v3616, %v3910
        %v3934 = vmul.f32 %v3617, %v3910
        %v3935 = vmul.f32 %v3618, %v3910
        %v3936 = vmul.f32 %v3619, %v3910
        %v3937 = vmul.f32 %v3620, %v3910
        %v3938 = vmul.f32 %v3621, %v3910
        %v3939 = vmul.f32 %v3622, %v3910
        %v3940 = vmul.f32 %v3623, %v3910
        %v3941 = vmul.f32 %v3624, %v3910
        %v3942 = vmul.f32 %v3625, %v3910
        %v3943 = vadd.f32 %v3874, %v3911
        %v3944 = vadd.f32 %v3875, %v3912
        %v3945 = vadd.f32 %v3876, %v3913
        %v3946 = vadd.f32 %v3877, %v3914
        %v3947 = vadd.f32 %v3878, %v3915
        %v3948 = vadd.f32 %v3879, %v3916
        %v3949 = vadd.f32 %v3880, %v3917
        %v3950 = vadd.f32 %v3881, %v3918
        %v3951 = vadd.f32 %v3882, %v3919
        %v3952 = vadd.f32 %v3883, %v3920
        %v3953 = vadd.f32 %v3884, %v3921
        %v3954 = vadd.f32 %v3885, %v3922
        %v3955 = vadd.f32 %v3886, %v3923
        %v3956 = vadd.f32 %v3887, %v3924
        %v3957 = vadd.f32 %v3888, %v3925
        %v3958 = vadd.f32 %v3889, %v3926
        %v3959 = vadd.f32 %v3890, %v3927
        %v3960 = vadd.f32 %v3891, %v3928
        %v3961 = vadd.f32 %v3892, %v3929
        %v3962 = vadd.f32 %v3893, %v3930
        %v3963 = vadd.f32 %v3894, %v3931
        %v3964 = vadd.f32 %v3895, %v3932
        %v3965 = vadd.f32 %v3896, %v3933
        %v3966 = vadd.f32 %v3897, %v3934
        %v3967 = vadd.f32 %v3898, %v3935
        %v3968 = vadd.f32 %v3899, %v3936
        %v3969 = vadd.f32 %v3900, %v3937
        %v3970 = vadd.f32 %v3901, %v3938
        %v3971 = vadd.f32 %v3902, %v3939
        %v3972 = vadd.f32 %v3903, %v3940
        %v3973 = vadd.f32 %v3904, %v3941
        %v3974 = vadd.f32 %v3905, %v3942
        %v3975 = vld [vmem:[%s1 + $0x29] sm:$0x1]
        %v3976 = vlaneseq
        %v3977 = vshrl.u32 %v3976, 7
        %v3978 = vsub.s32 0, %v3977
        %v3979 = vrot.slane %v3975, %v3978
        %v3980 = vmul.f32 %v3596, %v3979
        %v3981 = vmul.f32 %v3597, %v3979
        %v3982 = vmul.f32 %v3598, %v3979
        %v3983 = vmul.f32 %v3599, %v3979
        %v3984 = vmul.f32 %v3600, %v3979
        %v3985 = vmul.f32 %v3601, %v3979
        %v3986 = vmul.f32 %v3602, %v3979
        %v3987 = vmul.f32 %v3603, %v3979
        %v3988 = vmul.f32 %v3604, %v3979
        %v3989 = vmul.f32 %v3605, %v3979
        %v3990 = vmul.f32 %v3606, %v3979
        %v3991 = vmul.f32 %v3607, %v3979
        %v3992 = vmul.f32 %v3608, %v3979
        %v3993 = vmul.f32 %v3609, %v3979
        %v3994 = vmul.f32 %v3610, %v3979
        %v3995 = vmul.f32 %v3611, %v3979
        %v3996 = vmul.f32 %v3612, %v3979
        %v3997 = vmul.f32 %v3613, %v3979
        %v3998 = vmul.f32 %v3614, %v3979
        %v3999 = vmul.f32 %v3615, %v3979
        %v4000 = vmul.f32 %v3616, %v3979
        %v4001 = vmul.f32 %v3617, %v3979
        %v4002 = vmul.f32 %v3618, %v3979
        %v4003 = vmul.f32 %v3619, %v3979
        %v4004 = vmul.f32 %v3620, %v3979
        %v4005 = vmul.f32 %v3621, %v3979
        %v4006 = vmul.f32 %v3622, %v3979
        %v4007 = vmul.f32 %v3623, %v3979
        %v4008 = vmul.f32 %v3624, %v3979
        %v4009 = vmul.f32 %v3625, %v3979
        %v4010 = vmul.f32 %v3626, %v3979
        %v4011 = vmul.f32 %v3627, %v3979
        %v4012 = vadd.f32 %v3943, %v3980
        %v4013 = vadd.f32 %v3944, %v3981
        %v4014 = vadd.f32 %v3945, %v3982
        %v4015 = vadd.f32 %v3946, %v3983
        %v4016 = vadd.f32 %v3947, %v3984
        %v4017 = vadd.f32 %v3948, %v3985
        %v4018 = vadd.f32 %v3949, %v3986
        %v4019 = vadd.f32 %v3950, %v3987
        %v4020 = vadd.f32 %v3951, %v3988
        %v4021 = vadd.f32 %v3952, %v3989
        %v4022 = vadd.f32 %v3953, %v3990
        %v4023 = vadd.f32 %v3954, %v3991
        %v4024 = vadd.f32 %v3955, %v3992
        %v4025 = vadd.f32 %v3956, %v3993
        %v4026 = vadd.f32 %v3957, %v3994
        %v4027 = vadd.f32 %v3958, %v3995
        %v4028 = vadd.f32 %v3959, %v3996
        %v4029 = vadd.f32 %v3960, %v3997
        %v4030 = vadd.f32 %v3961, %v3998
        %v4031 = vadd.f32 %v3962, %v3999
        %v4032 = vadd.f32 %v3963, %v4000
        %v4033 = vadd.f32 %v3964, %v4001
        %v4034 = vadd.f32 %v3965, %v4002
        %v4035 = vadd.f32 %v3966, %v4003
        %v4036 = vadd.f32 %v3967, %v4004
        %v4037 = vadd.f32 %v3968, %v4005
        %v4038 = vadd.f32 %v3969, %v4006
        %v4039 = vadd.f32 %v3970, %v4007
        %v4040 = vadd.f32 %v3971, %v4008
        %v4041 = vadd.f32 %v3972, %v4009
        %v4042 = vadd.f32 %v3973, %v4010
        %v4043 = vadd.f32 %v3974, %v4011
        %v4044 = vld [vmem:[%s1 + $0x30] sm:$0x1]
        %v4045 = vlaneseq
        %v4046 = vshrl.u32 %v4045, 7
        %v4047 = vsub.s32 0, %v4046
        %v4048 = vrot.slane %v4044, %v4047
        %v4049 = vmul.f32 %v3598, %v4048
        %v4050 = vmul.f32 %v3599, %v4048
        %v4051 = vmul.f32 %v3600, %v4048
        %v4052 = vmul.f32 %v3601, %v4048
        %v4053 = vmul.f32 %v3602, %v4048
        %v4054 = vmul.f32 %v3603, %v4048
        %v4055 = vmul.f32 %v3604, %v4048
        %v4056 = vmul.f32 %v3605, %v4048
        %v4057 = vmul.f32 %v3606, %v4048
        %v4058 = vmul.f32 %v3607, %v4048
        %v4059 = vmul.f32 %v3608, %v4048
        %v4060 = vmul.f32 %v3609, %v4048
        %v4061 = vmul.f32 %v3610, %v4048
        %v4062 = vmul.f32 %v3611, %v4048
        %v4063 = vmul.f32 %v3612, %v4048
        %v4064 = vmul.f32 %v3613, %v4048
        %v4065 = vmul.f32 %v3614, %v4048
        %v4066 = vmul.f32 %v3615, %v4048
        %v4067 = vmul.f32 %v3616, %v4048
        %v4068 = vmul.f32 %v3617, %v4048
        %v4069 = vmul.f32 %v3618, %v4048
        %v4070 = vmul.f32 %v3619, %v4048
        %v4071 = vmul.f32 %v3620, %v4048
        %v4072 = vmul.f32 %v3621, %v4048
        %v4073 = vmul.f32 %v3622, %v4048
        %v4074 = vmul.f32 %v3623, %v4048
        %v4075 = vmul.f32 %v3624, %v4048
        %v4076 = vmul.f32 %v3625, %v4048
        %v4077 = vmul.f32 %v3626, %v4048
        %v4078 = vmul.f32 %v3627, %v4048
        %v4079 = vmul.f32 %v3628, %v4048
        %v4080 = vmul.f32 %v3629, %v4048
        %v4081 = vadd.f32 %v4012, %v4049
        %v4082 = vadd.f32 %v4013, %v4050
        %v4083 = vadd.f32 %v4014, %v4051
        %v4084 = vadd.f32 %v4015, %v4052
        %v4085 = vadd.f32 %v4016, %v4053
        %v4086 = vadd.f32 %v4017, %v4054
        %v4087 = vadd.f32 %v4018, %v4055
        %v4088 = vadd.f32 %v4019, %v4056
        %v4089 = vadd.f32 %v4020, %v4057
        %v4090 = vadd.f32 %v4021, %v4058
        %v4091 = vadd.f32 %v4022, %v4059
        %v4092 = vadd.f32 %v4023, %v4060
        %v4093 = vadd.f32 %v4024, %v4061
        %v4094 = vadd.f32 %v4025, %v4062
        %v4095 = vadd.f32 %v4026, %v4063
        %v4096 = vadd.f32 %v4027, %v4064
        %v4097 = vadd.f32 %v4028, %v4065
        %v4098 = vadd.f32 %v4029, %v4066
        %v4099 = vadd.f32 %v4030, %v4067
        %v4100 = vadd.f32 %v4031, %v4068
        %v4101 = vadd.f32 %v4032, %v4069
        %v4102 = vadd.f32 %v4033, %v4070
        %v4103 = vadd.f32 %v4034, %v4071
        %v4104 = vadd.f32 %v4035, %v4072
        %v4105 = vadd.f32 %v4036, %v4073
        %v4106 = vadd.f32 %v4037, %v4074
        %v4107 = vadd.f32 %v4038, %v4075
        %v4108 = vadd.f32 %v4039, %v4076
        %v4109 = vadd.f32 %v4040, %v4077
        %v4110 = vadd.f32 %v4041, %v4078
        %v4111 = vadd.f32 %v4042, %v4079
        %v4112 = vadd.f32 %v4043, %v4080
        %v4113 = vpack.c.bf16 %v4082, %v4081
        %v4114 = vpack.c.bf16 %v4084, %v4083
        %v4115 = vpack.c.bf16 %v4086, %v4085
        %v4116 = vpack.c.bf16 %v4088, %v4087
        %v4117 = vpack.c.bf16 %v4090, %v4089
        %v4118 = vpack.c.bf16 %v4092, %v4091
        %v4119 = vpack.c.bf16 %v4094, %v4093
        %v4120 = vpack.c.bf16 %v4096, %v4095
        %v4121 = vpack.c.bf16 %v4098, %v4097
        %v4122 = vpack.c.bf16 %v4100, %v4099
        %v4123 = vpack.c.bf16 %v4102, %v4101
        %v4124 = vpack.c.bf16 %v4104, %v4103
        %v4125 = vpack.c.bf16 %v4106, %v4105
        %v4126 = vpack.c.bf16 %v4108, %v4107
        %v4127 = vpack.c.bf16 %v4110, %v4109
        %v4128 = vpack.c.bf16 %v4112, %v4111
        %v4129 = vld [vmem:[%s2] sm:$0xf]
        %v4130 = vld [vmem:[%s2 + $0x4] sm:$0xf]
        %v4131 = vld [vmem:[%s2 + $0x8] sm:$0xf]
        %v4132 = vld [vmem:[%s2 + $0xc] sm:$0xf]
        %v4133 = vld [vmem:[%s3] sm:$0x1]
        %v4135 = vlaneseq
        %v4136 = vshrl.u32 %v4135, 7
        %v4137 = vsub.s32 0, %v4136
        %v4138 = vrot.slane %v4133, %v4137
        %v4144 = vunpack.c.l.b16 %v4129
        %v4145 = vunpack.c.l.b16 %v4130
        %v4146 = vunpack.c.l.b16 %v4131
        %v4147 = vunpack.c.l.b16 %v4132
        %v4148 = vpack.c.b16 %v4145, %v4144
        %v4149 = vpack.c.b16 %v4147, %v4146
        %v4153 = vsel %vm323, %v4113, 0
        %v4156 = vsel %vm323, %v4114, 0
        %v4159 = vsel %vm323, %v4115, 0
        %v4162 = vsel %vm323, %v4116, 0
        %v4165 = vsel %vm323, %v4117, 0
        %v4168 = vsel %vm323, %v4118, 0
        %v4171 = vsel %vm323, %v4119, 0
        %v4174 = vsel %vm323, %v4120, 0
        %v4177 = vsel %vm323, %v4121, 0
        %v4180 = vsel %vm323, %v4122, 0
        %v4183 = vsel %vm323, %v4123, 0
        %v4186 = vsel %vm323, %v4124, 0
        %v4189 = vsel %vm323, %v4125, 0
        %v4192 = vsel %vm323, %v4126, 0
        %v4195 = vsel %vm323, %v4127, 0
        %v4198 = vsel %vm323, %v4128, 0
        %4200 = vmatprep.subr.bf16.mxu0 0
        %4201 = vmatpush1.bf16.msra.mxu0 %v4148
        %4202 = vmatprep.subr.bf16.mxu0 0
        %4203 = vmatpush1.bf16.msra.mxu0 %v4149
        %4204 = vmatprep.subr.bf16.mxu0 0
        %4205 = vmatpush1.bf16.msra.mxu0 0
        %4206 = vmatprep.subr.bf16.mxu0 0
        %4207 = vmatpush1.bf16.msra.mxu0 0
        %4208 = vmatprep.subr.bf16.mxu0 0
        %4209 = vmatpush1.bf16.msra.mxu0 0
        %4210 = vmatprep.subr.bf16.mxu0 0
        %4211 = vmatpush1.bf16.msra.mxu0 0
        %4212 = vmatprep.subr.bf16.mxu0 0
        %4213 = vmatpush1.bf16.msra.mxu0 0
        %4214 = vmatprep.subr.bf16.mxu0 0
        %4215 = vmatpush1.bf16.msra.mxu0 0
        %4216 = vmatprep.subr.bf16.mxu0 0
        %4217 = vmatpush1.bf16.msra.mxu0 0
        %4218 = vmatprep.subr.bf16.mxu0 0
        %4219 = vmatpush1.bf16.msra.mxu0 0
        %4220 = vmatprep.subr.bf16.mxu0 0
        %4221 = vmatpush1.bf16.msra.mxu0 0
        %4222 = vmatprep.subr.bf16.mxu0 0
        %4223 = vmatpush1.bf16.msra.mxu0 0
        %4224 = vmatprep.subr.bf16.mxu0 0
        %4225 = vmatpush1.bf16.msra.mxu0 0
        %4226 = vmatprep.subr.bf16.mxu0 0
        %4227 = vmatpush1.bf16.msra.mxu0 0
        %4228 = vmatprep.subr.bf16.mxu0 0
        %4229 = vmatpush1.bf16.msra.mxu0 0
        %4230 = vmatprep.subr.bf16.mxu0 0
        %4231 = vmatpush1.bf16.msra.mxu0 0
        %4232 = vmatprep.mubr.bf16.mxu0 0
        %4233 = vmatmul.mubr.bf16.gmra.mrb[0].mxu0 %v4153
        %v4234 = vpop.f32.mrb[0].mxu0
        %v4235 = vadd.f32 %v4138, %v4234
        %v4236 = vpop.f32.mrb[0].mxu0
        %v4237 = vpop.f32.mrb[0].mxu0
        %v4238 = vadd.f32 %v4138, %v4237
        %v4239 = vpop.f32.mrb[0].mxu0
        %4240 = vmatprep.mubr.bf16.mxu0 0
        %4241 = vmatmul.mubr.bf16.gmra.mrb[0].mxu0 %v4156
        %v4242 = vpop.f32.mrb[0].mxu0
        %v4243 = vadd.f32 %v4138, %v4242
        %v4244 = vpop.f32.mrb[0].mxu0
        %v4245 = vpop.f32.mrb[0].mxu0
        %v4246 = vadd.f32 %v4138, %v4245
        %v4247 = vpop.f32.mrb[0].mxu0
        %4248 = vmatprep.mubr.bf16.mxu0 0
        %4249 = vmatmul.mubr.bf16.gmra.mrb[0].mxu0 %v4159
        %v4250 = vpop.f32.mrb[0].mxu0
        %v4251 = vadd.f32 %v4138, %v4250
        %v4252 = vpop.f32.mrb[0].mxu0
        %v4253 = vpop.f32.mrb[0].mxu0
        %v4254 = vadd.f32 %v4138, %v4253
        %v4255 = vpop.f32.mrb[0].mxu0
        %4256 = vmatprep.mubr.bf16.mxu0 0
        %4257 = vmatmul.mubr.bf16.gmra.mrb[0].mxu0 %v4162
        %v4258 = vpop.f32.mrb[0].mxu0
        %v4259 = vadd.f32 %v4138, %v4258
        %v4260 = vpop.f32.mrb[0].mxu0
        %v4261 = vpop.f32.mrb[0].mxu0
        %v4262 = vadd.f32 %v4138, %v4261
        %v4263 = vpop.f32.mrb[0].mxu0
        %4264 = vmatprep.mubr.bf16.mxu0 0
        %4265 = vmatmul.mubr.bf16.gmra.mrb[0].mxu0 %v4165
        %v4266 = vpop.f32.mrb[0].mxu0
        %v4267 = vadd.f32 %v4138, %v4266
        %v4268 = vpop.f32.mrb[0].mxu0
        %v4269 = vpop.f32.mrb[0].mxu0
        %v4270 = vadd.f32 %v4138, %v4269
        %v4271 = vpop.f32.mrb[0].mxu0
        %4272 = vmatprep.mubr.bf16.mxu0 0
        %4273 = vmatmul.mubr.bf16.gmra.mrb[0].mxu0 %v4168
        %v4274 = vpop.f32.mrb[0].mxu0
        %v4275 = vadd.f32 %v4138, %v4274
        %v4276 = vpop.f32.mrb[0].mxu0
        %v4277 = vpop.f32.mrb[0].mxu0
        %v4278 = vadd.f32 %v4138, %v4277
        %v4279 = vpop.f32.mrb[0].mxu0
        %4280 = vmatprep.mubr.bf16.mxu0 0
        %4281 = vmatmul.mubr.bf16.gmra.mrb[0].mxu0 %v4171
        %v4282 = vpop.f32.mrb[0].mxu0
        %v4283 = vadd.f32 %v4138, %v4282
        %v4284 = vpop.f32.mrb[0].mxu0
        %v4285 = vpop.f32.mrb[0].mxu0
        %v4286 = vadd.f32 %v4138, %v4285
        %v4287 = vpop.f32.mrb[0].mxu0
        %4288 = vmatprep.mubr.bf16.mxu0 0
        %4289 = vmatmul.mubr.bf16.gmra.mrb[0].mxu0 %v4174
        %v4290 = vpop.f32.mrb[0].mxu0
        %v4291 = vadd.f32 %v4138, %v4290
        %v4292 = vpop.f32.mrb[0].mxu0
        %v4293 = vpop.f32.mrb[0].mxu0
        %v4294 = vadd.f32 %v4138, %v4293
        %v4295 = vpop.f32.mrb[0].mxu0
        %4296 = vmatprep.mubr.bf16.mxu0 0
        %4297 = vmatmul.mubr.bf16.gmra.mrb[0].mxu0 %v4177
        %v4298 = vpop.f32.mrb[0].mxu0
        %v4299 = vadd.f32 %v4138, %v4298
        %v4300 = vpop.f32.mrb[0].mxu0
        %v4301 = vpop.f32.mrb[0].mxu0
        %v4302 = vadd.f32 %v4138, %v4301
        %v4303 = vpop.f32.mrb[0].mxu0
        %4304 = vmatprep.mubr.bf16.mxu0 0
        %4305 = vmatmul.mubr.bf16.gmra.mrb[0].mxu0 %v4180
        %v4306 = vpop.f32.mrb[0].mxu0
        %v4307 = vadd.f32 %v4138, %v4306
        %v4308 = vpop.f32.mrb[0].mxu0
        %v4309 = vpop.f32.mrb[0].mxu0
        %v4310 = vadd.f32 %v4138, %v4309
        %v4311 = vpop.f32.mrb[0].mxu0
        %4312 = vmatprep.mubr.bf16.mxu0 0
        %4313 = vmatmul.mubr.bf16.gmra.mrb[0].mxu0 %v4183
        %v4314 = vpop.f32.mrb[0].mxu0
        %v4315 = vadd.f32 %v4138, %v4314
        %v4316 = vpop.f32.mrb[0].mxu0
        %v4317 = vpop.f32.mrb[0].mxu0
        %v4318 = vadd.f32 %v4138, %v4317
        %v4319 = vpop.f32.mrb[0].mxu0
        %4320 = vmatprep.mubr.bf16.mxu0 0
        %4321 = vmatmul.mubr.bf16.gmra.mrb[0].mxu0 %v4186
        %v4322 = vpop.f32.mrb[0].mxu0
        %v4323 = vadd.f32 %v4138, %v4322
        %v4324 = vpop.f32.mrb[0].mxu0
        %v4325 = vpop.f32.mrb[0].mxu0
        %v4326 = vadd.f32 %v4138, %v4325
        %v4327 = vpop.f32.mrb[0].mxu0
        %4328 = vmatprep.mubr.bf16.mxu0 0
        %4329 = vmatmul.mubr.bf16.gmra.mrb[0].mxu0 %v4189
        %v4330 = vpop.f32.mrb[0].mxu0
        %v4331 = vadd.f32 %v4138, %v4330
        %v4332 = vpop.f32.mrb[0].mxu0
        %v4333 = vpop.f32.mrb[0].mxu0
        %v4334 = vadd.f32 %v4138, %v4333
        %v4335 = vpop.f32.mrb[0].mxu0
        %4336 = vmatprep.mubr.bf16.mxu0 0
        %4337 = vmatmul.mubr.bf16.gmra.mrb[0].mxu0 %v4192
        %v4338 = vpop.f32.mrb[0].mxu0
        %v4339 = vadd.f32 %v4138, %v4338
        %v4340 = vpop.f32.mrb[0].mxu0
        %v4341 = vpop.f32.mrb[0].mxu0
        %v4342 = vadd.f32 %v4138, %v4341
        %v4343 = vpop.f32.mrb[0].mxu0
        %4344 = vmatprep.mubr.bf16.mxu0 0
        %4345 = vmatmul.mubr.bf16.gmra.mrb[0].mxu0 %v4195
        %v4346 = vpop.f32.mrb[0].mxu0
        %v4347 = vadd.f32 %v4138, %v4346
        %v4348 = vpop.f32.mrb[0].mxu0
        %v4349 = vpop.f32.mrb[0].mxu0
        %v4350 = vadd.f32 %v4138, %v4349
        %v4351 = vpop.f32.mrb[0].mxu0
        %4352 = vmatprep.mubr.bf16.mxu0 0
        %4353 = vmatmul.mubr.bf16.gmra.mrb[0].mxu0 %v4198
        %v4354 = vpop.f32.mrb[0].mxu0
        %v4355 = vadd.f32 %v4138, %v4354
        %v4356 = vpop.f32.mrb[0].mxu0
        %v4357 = vpop.f32.mrb[0].mxu0
        %v4358 = vadd.f32 %v4138, %v4357
        %v4359 = vpop.f32.mrb[0].mxu0
        %4360 = vdwg.mxu0
        %v4361 = vmul.f32 %v4235, 0.5
        %v4362 = vmul.f32 %v4238, 0.5
        %v4363 = vmul.f32 %v4243, 0.5
        %v4364 = vmul.f32 %v4246, 0.5
        %v4365 = vmul.f32 %v4251, 0.5
        %v4366 = vmul.f32 %v4254, 0.5
        %v4367 = vmul.f32 %v4259, 0.5
        %v4368 = vmul.f32 %v4262, 0.5
        %v4369 = vmul.f32 %v4267, 0.5
        %v4370 = vmul.f32 %v4270, 0.5
        %v4371 = vmul.f32 %v4275, 0.5
        %v4372 = vmul.f32 %v4278, 0.5
        %v4373 = vmul.f32 %v4283, 0.5
        %v4374 = vmul.f32 %v4286, 0.5
        %v4375 = vmul.f32 %v4291, 0.5
        %v4376 = vmul.f32 %v4294, 0.5
        %v4377 = vmul.f32 %v4299, 0.5
        %v4378 = vmul.f32 %v4302, 0.5
        %v4379 = vmul.f32 %v4307, 0.5
        %v4380 = vmul.f32 %v4310, 0.5
        %v4381 = vmul.f32 %v4315, 0.5
        %v4382 = vmul.f32 %v4318, 0.5
        %v4383 = vmul.f32 %v4323, 0.5
        %v4384 = vmul.f32 %v4326, 0.5
        %v4385 = vmul.f32 %v4331, 0.5
        %v4386 = vmul.f32 %v4334, 0.5
        %v4387 = vmul.f32 %v4339, 0.5
        %v4388 = vmul.f32 %v4342, 0.5
        %v4389 = vmul.f32 %v4347, 0.5
        %v4390 = vmul.f32 %v4350, 0.5
        %v4391 = vmul.f32 %v4355, 0.5
        %v4392 = vmul.f32 %v4358, 0.5
        %v4393 = vmul.f32 %v4235, 0.70710677
        %v4394 = vmul.f32 %v4238, 0.70710677
        %v4395 = vmul.f32 %v4243, 0.70710677
        %v4396 = vmul.f32 %v4246, 0.70710677
        %v4397 = vmul.f32 %v4251, 0.70710677
        %v4398 = vmul.f32 %v4254, 0.70710677
        %v4399 = vmul.f32 %v4259, 0.70710677
        %v4400 = vmul.f32 %v4262, 0.70710677
        %v4401 = vmul.f32 %v4267, 0.70710677
        %v4402 = vmul.f32 %v4270, 0.70710677
        %v4403 = vmul.f32 %v4275, 0.70710677
        %v4404 = vmul.f32 %v4278, 0.70710677
        %v4405 = vmul.f32 %v4283, 0.70710677
        %v4406 = vmul.f32 %v4286, 0.70710677
        %v4407 = vmul.f32 %v4291, 0.70710677
        %v4408 = vmul.f32 %v4294, 0.70710677
        %v4409 = vmul.f32 %v4299, 0.70710677
        %v4410 = vmul.f32 %v4302, 0.70710677
        %v4411 = vmul.f32 %v4307, 0.70710677
        %v4412 = vmul.f32 %v4310, 0.70710677
        %v4413 = vmul.f32 %v4315, 0.70710677
        %v4414 = vmul.f32 %v4318, 0.70710677
        %v4415 = vmul.f32 %v4323, 0.70710677
        %v4416 = vmul.f32 %v4326, 0.70710677
        %v4417 = vmul.f32 %v4331, 0.70710677
        %v4418 = vmul.f32 %v4334, 0.70710677
        %v4419 = vmul.f32 %v4339, 0.70710677
        %v4420 = vmul.f32 %v4342, 0.70710677
        %v4421 = vmul.f32 %v4347, 0.70710677
        %v4422 = vmul.f32 %v4350, 0.70710677
        %v4423 = vmul.f32 %v4355, 0.70710677
        %v4424 = vmul.f32 %v4358, 0.70710677
        %v4425 = vand.u32 2147483647, %v4393
        %v4426 = vand.u32 2147483647, %v4394
        %v4427 = vand.u32 2147483647, %v4395
        %v4428 = vand.u32 2147483647, %v4396
        %v4429 = vand.u32 2147483647, %v4397
        %v4430 = vand.u32 2147483647, %v4398
        %v4431 = vand.u32 2147483647, %v4399
        %v4432 = vand.u32 2147483647, %v4400
        %v4433 = vand.u32 2147483647, %v4401
        %v4434 = vand.u32 2147483647, %v4402
        %v4435 = vand.u32 2147483647, %v4403
        %v4436 = vand.u32 2147483647, %v4404
        %v4437 = vand.u32 2147483647, %v4405
        %v4438 = vand.u32 2147483647, %v4406
        %v4439 = vand.u32 2147483647, %v4407
        %v4440 = vand.u32 2147483647, %v4408
        %v4441 = vand.u32 2147483647, %v4409
        %v4442 = vand.u32 2147483647, %v4410
        %v4443 = vand.u32 2147483647, %v4411
        %v4444 = vand.u32 2147483647, %v4412
        %v4445 = vand.u32 2147483647, %v4413
        %v4446 = vand.u32 2147483647, %v4414
        %v4447 = vand.u32 2147483647, %v4415
        %v4448 = vand.u32 2147483647, %v4416
        %v4449 = vand.u32 2147483647, %v4417
        %v4450 = vand.u32 2147483647, %v4418
        %v4451 = vand.u32 2147483647, %v4419
        %v4452 = vand.u32 2147483647, %v4420
        %v4453 = vand.u32 2147483647, %v4421
        %v4454 = vand.u32 2147483647, %v4422
        %v4455 = vand.u32 2147483647, %v4423
        %v4456 = vand.u32 2147483647, %v4424
        %v4457 = vmul.f32 %v4425, 0.3275911
        %v4458 = vmul.f32 %v4426, 0.3275911
        %v4459 = vmul.f32 %v4427, 0.3275911
        %v4460 = vmul.f32 %v4428, 0.3275911
        %v4461 = vmul.f32 %v4429, 0.3275911
        %v4462 = vmul.f32 %v4430, 0.3275911
        %v4463 = vmul.f32 %v4431, 0.3275911
        %v4464 = vmul.f32 %v4432, 0.3275911
        %v4465 = vmul.f32 %v4433, 0.3275911
        %v4466 = vmul.f32 %v4434, 0.3275911
        %v4467 = vmul.f32 %v4435, 0.3275911
        %v4468 = vmul.f32 %v4436, 0.3275911
        %v4469 = vmul.f32 %v4437, 0.3275911
        %v4470 = vmul.f32 %v4438, 0.3275911
        %v4471 = vmul.f32 %v4439, 0.3275911
        %v4472 = vmul.f32 %v4440, 0.3275911
        %v4473 = vmul.f32 %v4441, 0.3275911
        %v4474 = vmul.f32 %v4442, 0.3275911
        %v4475 = vmul.f32 %v4443, 0.3275911
        %v4476 = vmul.f32 %v4444, 0.3275911
        %v4477 = vmul.f32 %v4445, 0.3275911
        %v4478 = vmul.f32 %v4446, 0.3275911
        %v4479 = vmul.f32 %v4447, 0.3275911
        %v4480 = vmul.f32 %v4448, 0.3275911
        %v4481 = vmul.f32 %v4449, 0.3275911
        %v4482 = vmul.f32 %v4450, 0.3275911
        %v4483 = vmul.f32 %v4451, 0.3275911
        %v4484 = vmul.f32 %v4452, 0.3275911
        %v4485 = vmul.f32 %v4453, 0.3275911
        %v4486 = vmul.f32 %v4454, 0.3275911
        %v4487 = vmul.f32 %v4455, 0.3275911
        %v4488 = vmul.f32 %v4456, 0.3275911
        %v4489 = vadd.f32 %v4457, 1.0
        %v4490 = vadd.f32 %v4458, 1.0
        %v4491 = vadd.f32 %v4459, 1.0
        %v4492 = vadd.f32 %v4460, 1.0
        %v4493 = vadd.f32 %v4461, 1.0
        %v4494 = vadd.f32 %v4462, 1.0
        %v4495 = vadd.f32 %v4463, 1.0
        %v4496 = vadd.f32 %v4464, 1.0
        %v4497 = vadd.f32 %v4465, 1.0
        %v4498 = vadd.f32 %v4466, 1.0
        %v4499 = vadd.f32 %v4467, 1.0
        %v4500 = vadd.f32 %v4468, 1.0
        %v4501 = vadd.f32 %v4469, 1.0
        %v4502 = vadd.f32 %v4470, 1.0
        %v4503 = vadd.f32 %v4471, 1.0
        %v4504 = vadd.f32 %v4472, 1.0
        %v4505 = vadd.f32 %v4473, 1.0
        %v4506 = vadd.f32 %v4474, 1.0
        %v4507 = vadd.f32 %v4475, 1.0
        %v4508 = vadd.f32 %v4476, 1.0
        %v4509 = vadd.f32 %v4477, 1.0
        %v4510 = vadd.f32 %v4478, 1.0
        %v4511 = vadd.f32 %v4479, 1.0
        %v4512 = vadd.f32 %v4480, 1.0
        %v4513 = vadd.f32 %v4481, 1.0
        %v4514 = vadd.f32 %v4482, 1.0
        %v4515 = vadd.f32 %v4483, 1.0
        %v4516 = vadd.f32 %v4484, 1.0
        %v4517 = vadd.f32 %v4485, 1.0
        %v4518 = vadd.f32 %v4486, 1.0
        %v4519 = vadd.f32 %v4487, 1.0
        %v4520 = vadd.f32 %v4488, 1.0
        %v4521 = vrcp.pop %v4489
        %v4522 = vmul.f32 1.0, %v4521
        %v4523 = vrcp.pop %v4490
        %v4524 = vmul.f32 1.0, %v4523
        %v4525 = vrcp.pop %v4491
        %v4526 = vmul.f32 1.0, %v4525
        %v4527 = vrcp.pop %v4492
        %v4528 = vmul.f32 1.0, %v4527
        %v4529 = vrcp.pop %v4493
        %v4530 = vmul.f32 1.0, %v4529
        %v4531 = vrcp.pop %v4494
        %v4532 = vmul.f32 1.0, %v4531
        %v4533 = vrcp.pop %v4495
        %v4534 = vmul.f32 1.0, %v4533
        %v4535 = vrcp.pop %v4496
        %v4536 = vmul.f32 1.0, %v4535
        %v4537 = vrcp.pop %v4497
        %v4538 = vmul.f32 1.0, %v4537
        %v4539 = vrcp.pop %v4498
        %v4540 = vmul.f32 1.0, %v4539
        %v4541 = vrcp.pop %v4499
        %v4542 = vmul.f32 1.0, %v4541
        %v4543 = vrcp.pop %v4500
        %v4544 = vmul.f32 1.0, %v4543
        %v4545 = vrcp.pop %v4501
        %v4546 = vmul.f32 1.0, %v4545
        %v4547 = vrcp.pop %v4502
        %v4548 = vmul.f32 1.0, %v4547
        %v4549 = vrcp.pop %v4503
        %v4550 = vmul.f32 1.0, %v4549
        %v4551 = vrcp.pop %v4504
        %v4552 = vmul.f32 1.0, %v4551
        %v4553 = vrcp.pop %v4505
        %v4554 = vmul.f32 1.0, %v4553
        %v4555 = vrcp.pop %v4506
        %v4556 = vmul.f32 1.0, %v4555
        %v4557 = vrcp.pop %v4507
        %v4558 = vmul.f32 1.0, %v4557
        %v4559 = vrcp.pop %v4508
        %v4560 = vmul.f32 1.0, %v4559
        %v4561 = vrcp.pop %v4509
        %v4562 = vmul.f32 1.0, %v4561
        %v4563 = vrcp.pop %v4510
        %v4564 = vmul.f32 1.0, %v4563
        %v4565 = vrcp.pop %v4511
        %v4566 = vmul.f32 1.0, %v4565
        %v4567 = vrcp.pop %v4512
        %v4568 = vmul.f32 1.0, %v4567
        %v4569 = vrcp.pop %v4513
        %v4570 = vmul.f32 1.0, %v4569
        %v4571 = vrcp.pop %v4514
        %v4572 = vmul.f32 1.0, %v4571
        %v4573 = vrcp.pop %v4515
        %v4574 = vmul.f32 1.0, %v4573
        %v4575 = vrcp.pop %v4516
        %v4576 = vmul.f32 1.0, %v4575
        %v4577 = vrcp.pop %v4517
        %v4578 = vmul.f32 1.0, %v4577
        %v4579 = vrcp.pop %v4518
        %v4580 = vmul.f32 1.0, %v4579
        %v4581 = vrcp.pop %v4519
        %v4582 = vmul.f32 1.0, %v4581
        %v4583 = vrcp.pop %v4520
        %v4584 = vmul.f32 1.0, %v4583
        %v4585 = vmul.f32 %v4522, 1.0614054
        %v4586 = vmul.f32 %v4524, 1.0614054
        %v4587 = vmul.f32 %v4526, 1.0614054
        %v4588 = vmul.f32 %v4528, 1.0614054
        %v4589 = vmul.f32 %v4530, 1.0614054
        %v4590 = vmul.f32 %v4532, 1.0614054
        %v4591 = vmul.f32 %v4534, 1.0614054
        %v4592 = vmul.f32 %v4536, 1.0614054
        %v4593 = vmul.f32 %v4538, 1.0614054
        %v4594 = vmul.f32 %v4540, 1.0614054
        %v4595 = vmul.f32 %v4542, 1.0614054
        %v4596 = vmul.f32 %v4544, 1.0614054
        %v4597 = vmul.f32 %v4546, 1.0614054
        %v4598 = vmul.f32 %v4548, 1.0614054
        %v4599 = vmul.f32 %v4550, 1.0614054
        %v4600 = vmul.f32 %v4552, 1.0614054
        %v4601 = vmul.f32 %v4554, 1.0614054
        %v4602 = vmul.f32 %v4556, 1.0614054
        %v4603 = vmul.f32 %v4558, 1.0614054
        %v4604 = vmul.f32 %v4560, 1.0614054
        %v4605 = vmul.f32 %v4562, 1.0614054
        %v4606 = vmul.f32 %v4564, 1.0614054
        %v4607 = vmul.f32 %v4566, 1.0614054
        %v4608 = vmul.f32 %v4568, 1.0614054
        %v4609 = vmul.f32 %v4570, 1.0614054
        %v4610 = vmul.f32 %v4572, 1.0614054
        %v4611 = vmul.f32 %v4574, 1.0614054
        %v4612 = vmul.f32 %v4576, 1.0614054
        %v4613 = vmul.f32 %v4578, 1.0614054
        %v4614 = vmul.f32 %v4580, 1.0614054
        %v4615 = vmul.f32 %v4582, 1.0614054
        %v4616 = vmul.f32 %v4584, 1.0614054
        %v4617 = vadd.f32 %v4585, -1.4531521
        %v4618 = vadd.f32 %v4586, -1.4531521
        %v4619 = vadd.f32 %v4587, -1.4531521
        %v4620 = vadd.f32 %v4588, -1.4531521
        %v4621 = vadd.f32 %v4589, -1.4531521
        %v4622 = vadd.f32 %v4590, -1.4531521
        %v4623 = vadd.f32 %v4591, -1.4531521
        %v4624 = vadd.f32 %v4592, -1.4531521
        %v4625 = vadd.f32 %v4593, -1.4531521
        %v4626 = vadd.f32 %v4594, -1.4531521
        %v4627 = vadd.f32 %v4595, -1.4531521
        %v4628 = vadd.f32 %v4596, -1.4531521
        %v4629 = vadd.f32 %v4597, -1.4531521
        %v4630 = vadd.f32 %v4598, -1.4531521
        %v4631 = vadd.f32 %v4599, -1.4531521
        %v4632 = vadd.f32 %v4600, -1.4531521
        %v4633 = vadd.f32 %v4601, -1.4531521
        %v4634 = vadd.f32 %v4602, -1.4531521
        %v4635 = vadd.f32 %v4603, -1.4531521
        %v4636 = vadd.f32 %v4604, -1.4531521
        %v4637 = vadd.f32 %v4605, -1.4531521
        %v4638 = vadd.f32 %v4606, -1.4531521
        %v4639 = vadd.f32 %v4607, -1.4531521
        %v4640 = vadd.f32 %v4608, -1.4531521
        %v4641 = vadd.f32 %v4609, -1.4531521
        %v4642 = vadd.f32 %v4610, -1.4531521
        %v4643 = vadd.f32 %v4611, -1.4531521
        %v4644 = vadd.f32 %v4612, -1.4531521
        %v4645 = vadd.f32 %v4613, -1.4531521
        %v4646 = vadd.f32 %v4614, -1.4531521
        %v4647 = vadd.f32 %v4615, -1.4531521
        %v4648 = vadd.f32 %v4616, -1.4531521
        %v4649 = vmul.f32 %v4522, %v4617
        %v4650 = vmul.f32 %v4524, %v4618
        %v4651 = vmul.f32 %v4526, %v4619
        %v4652 = vmul.f32 %v4528, %v4620
        %v4653 = vmul.f32 %v4530, %v4621
        %v4654 = vmul.f32 %v4532, %v4622
        %v4655 = vmul.f32 %v4534, %v4623
        %v4656 = vmul.f32 %v4536, %v4624
        %v4657 = vmul.f32 %v4538, %v4625
        %v4658 = vmul.f32 %v4540, %v4626
        %v4659 = vmul.f32 %v4542, %v4627
        %v4660 = vmul.f32 %v4544, %v4628
        %v4661 = vmul.f32 %v4546, %v4629
        %v4662 = vmul.f32 %v4548, %v4630
        %v4663 = vmul.f32 %v4550, %v4631
        %v4664 = vmul.f32 %v4552, %v4632
        %v4665 = vmul.f32 %v4554, %v4633
        %v4666 = vmul.f32 %v4556, %v4634
        %v4667 = vmul.f32 %v4558, %v4635
        %v4668 = vmul.f32 %v4560, %v4636
        %v4669 = vmul.f32 %v4562, %v4637
        %v4670 = vmul.f32 %v4564, %v4638
        %v4671 = vmul.f32 %v4566, %v4639
        %v4672 = vmul.f32 %v4568, %v4640
        %v4673 = vmul.f32 %v4570, %v4641
        %v4674 = vmul.f32 %v4572, %v4642
        %v4675 = vmul.f32 %v4574, %v4643
        %v4676 = vmul.f32 %v4576, %v4644
        %v4677 = vmul.f32 %v4578, %v4645
        %v4678 = vmul.f32 %v4580, %v4646
        %v4679 = vmul.f32 %v4582, %v4647
        %v4680 = vmul.f32 %v4584, %v4648
        %v4681 = vadd.f32 %v4649, 1.4214138
        %v4682 = vadd.f32 %v4650, 1.4214138
        %v4683 = vadd.f32 %v4651, 1.4214138
        %v4684 = vadd.f32 %v4652, 1.4214138
        %v4685 = vadd.f32 %v4653, 1.4214138
        %v4686 = vadd.f32 %v4654, 1.4214138
        %v4687 = vadd.f32 %v4655, 1.4214138
        %v4688 = vadd.f32 %v4656, 1.4214138
        %v4689 = vadd.f32 %v4657, 1.4214138
        %v4690 = vadd.f32 %v4658, 1.4214138
        %v4691 = vadd.f32 %v4659, 1.4214138
        %v4692 = vadd.f32 %v4660, 1.4214138
        %v4693 = vadd.f32 %v4661, 1.4214138
        %v4694 = vadd.f32 %v4662, 1.4214138
        %v4695 = vadd.f32 %v4663, 1.4214138
        %v4696 = vadd.f32 %v4664, 1.4214138
        %v4697 = vadd.f32 %v4665, 1.4214138
        %v4698 = vadd.f32 %v4666, 1.4214138
        %v4699 = vadd.f32 %v4667, 1.4214138
        %v4700 = vadd.f32 %v4668, 1.4214138
        %v4701 = vadd.f32 %v4669, 1.4214138
        %v4702 = vadd.f32 %v4670, 1.4214138
        %v4703 = vadd.f32 %v4671, 1.4214138
        %v4704 = vadd.f32 %v4672, 1.4214138
        %v4705 = vadd.f32 %v4673, 1.4214138
        %v4706 = vadd.f32 %v4674, 1.4214138
        %v4707 = vadd.f32 %v4675, 1.4214138
        %v4708 = vadd.f32 %v4676, 1.4214138
        %v4709 = vadd.f32 %v4677, 1.4214138
        %v4710 = vadd.f32 %v4678, 1.4214138
        %v4711 = vadd.f32 %v4679, 1.4214138
        %v4712 = vadd.f32 %v4680, 1.4214138
        %v4713 = vmul.f32 %v4522, %v4681
        %v4714 = vmul.f32 %v4524, %v4682
        %v4715 = vmul.f32 %v4526, %v4683
        %v4716 = vmul.f32 %v4528, %v4684
        %v4717 = vmul.f32 %v4530, %v4685
        %v4718 = vmul.f32 %v4532, %v4686
        %v4719 = vmul.f32 %v4534, %v4687
        %v4720 = vmul.f32 %v4536, %v4688
        %v4721 = vmul.f32 %v4538, %v4689
        %v4722 = vmul.f32 %v4540, %v4690
        %v4723 = vmul.f32 %v4542, %v4691
        %v4724 = vmul.f32 %v4544, %v4692
        %v4725 = vmul.f32 %v4546, %v4693
        %v4726 = vmul.f32 %v4548, %v4694
        %v4727 = vmul.f32 %v4550, %v4695
        %v4728 = vmul.f32 %v4552, %v4696
        %v4729 = vmul.f32 %v4554, %v4697
        %v4730 = vmul.f32 %v4556, %v4698
        %v4731 = vmul.f32 %v4558, %v4699
        %v4732 = vmul.f32 %v4560, %v4700
        %v4733 = vmul.f32 %v4562, %v4701
        %v4734 = vmul.f32 %v4564, %v4702
        %v4735 = vmul.f32 %v4566, %v4703
        %v4736 = vmul.f32 %v4568, %v4704
        %v4737 = vmul.f32 %v4570, %v4705
        %v4738 = vmul.f32 %v4572, %v4706
        %v4739 = vmul.f32 %v4574, %v4707
        %v4740 = vmul.f32 %v4576, %v4708
        %v4741 = vmul.f32 %v4578, %v4709
        %v4742 = vmul.f32 %v4580, %v4710
        %v4743 = vmul.f32 %v4582, %v4711
        %v4744 = vmul.f32 %v4584, %v4712
        %v4745 = vadd.f32 %v4713, -0.28449672
        %v4746 = vadd.f32 %v4714, -0.28449672
        %v4747 = vadd.f32 %v4715, -0.28449672
        %v4748 = vadd.f32 %v4716, -0.28449672
        %v4749 = vadd.f32 %v4717, -0.28449672
        %v4750 = vadd.f32 %v4718, -0.28449672
        %v4751 = vadd.f32 %v4719, -0.28449672
        %v4752 = vadd.f32 %v4720, -0.28449672
        %v4753 = vadd.f32 %v4721, -0.28449672
        %v4754 = vadd.f32 %v4722, -0.28449672
        %v4755 = vadd.f32 %v4723, -0.28449672
        %v4756 = vadd.f32 %v4724, -0.28449672
        %v4757 = vadd.f32 %v4725, -0.28449672
        %v4758 = vadd.f32 %v4726, -0.28449672
        %v4759 = vadd.f32 %v4727, -0.28449672
        %v4760 = vadd.f32 %v4728, -0.28449672
        %v4761 = vadd.f32 %v4729, -0.28449672
        %v4762 = vadd.f32 %v4730, -0.28449672
        %v4763 = vadd.f32 %v4731, -0.28449672
        %v4764 = vadd.f32 %v4732, -0.28449672
        %v4765 = vadd.f32 %v4733, -0.28449672
        %v4766 = vadd.f32 %v4734, -0.28449672
        %v4767 = vadd.f32 %v4735, -0.28449672
        %v4768 = vadd.f32 %v4736, -0.28449672
        %v4769 = vadd.f32 %v4737, -0.28449672
        %v4770 = vadd.f32 %v4738, -0.28449672
        %v4771 = vadd.f32 %v4739, -0.28449672
        %v4772 = vadd.f32 %v4740, -0.28449672
        %v4773 = vadd.f32 %v4741, -0.28449672
        %v4774 = vadd.f32 %v4742, -0.28449672
        %v4775 = vadd.f32 %v4743, -0.28449672
        %v4776 = vadd.f32 %v4744, -0.28449672
        %v4777 = vmul.f32 %v4522, %v4745
        %v4778 = vmul.f32 %v4524, %v4746
        %v4779 = vmul.f32 %v4526, %v4747
        %v4780 = vmul.f32 %v4528, %v4748
        %v4781 = vmul.f32 %v4530, %v4749
        %v4782 = vmul.f32 %v4532, %v4750
        %v4783 = vmul.f32 %v4534, %v4751
        %v4784 = vmul.f32 %v4536, %v4752
        %v4785 = vmul.f32 %v4538, %v4753
        %v4786 = vmul.f32 %v4540, %v4754
        %v4787 = vmul.f32 %v4542, %v4755
        %v4788 = vmul.f32 %v4544, %v4756
        %v4789 = vmul.f32 %v4546, %v4757
        %v4790 = vmul.f32 %v4548, %v4758
        %v4791 = vmul.f32 %v4550, %v4759
        %v4792 = vmul.f32 %v4552, %v4760
        %v4793 = vmul.f32 %v4554, %v4761
        %v4794 = vmul.f32 %v4556, %v4762
        %v4795 = vmul.f32 %v4558, %v4763
        %v4796 = vmul.f32 %v4560, %v4764
        %v4797 = vmul.f32 %v4562, %v4765
        %v4798 = vmul.f32 %v4564, %v4766
        %v4799 = vmul.f32 %v4566, %v4767
        %v4800 = vmul.f32 %v4568, %v4768
        %v4801 = vmul.f32 %v4570, %v4769
        %v4802 = vmul.f32 %v4572, %v4770
        %v4803 = vmul.f32 %v4574, %v4771
        %v4804 = vmul.f32 %v4576, %v4772
        %v4805 = vmul.f32 %v4578, %v4773
        %v4806 = vmul.f32 %v4580, %v4774
        %v4807 = vmul.f32 %v4582, %v4775
        %v4808 = vmul.f32 %v4584, %v4776
        %v4809 = vadd.f32 %v4777, 0.2548296
        %v4810 = vadd.f32 %v4778, 0.2548296
        %v4811 = vadd.f32 %v4779, 0.2548296
        %v4812 = vadd.f32 %v4780, 0.2548296
        %v4813 = vadd.f32 %v4781, 0.2548296
        %v4814 = vadd.f32 %v4782, 0.2548296
        %v4815 = vadd.f32 %v4783, 0.2548296
        %v4816 = vadd.f32 %v4784, 0.2548296
        %v4817 = vadd.f32 %v4785, 0.2548296
        %v4818 = vadd.f32 %v4786, 0.2548296
        %v4819 = vadd.f32 %v4787, 0.2548296
        %v4820 = vadd.f32 %v4788, 0.2548296
        %v4821 = vadd.f32 %v4789, 0.2548296
        %v4822 = vadd.f32 %v4790, 0.2548296
        %v4823 = vadd.f32 %v4791, 0.2548296
        %v4824 = vadd.f32 %v4792, 0.2548296
        %v4825 = vadd.f32 %v4793, 0.2548296
        %v4826 = vadd.f32 %v4794, 0.2548296
        %v4827 = vadd.f32 %v4795, 0.2548296
        %v4828 = vadd.f32 %v4796, 0.2548296
        %v4829 = vadd.f32 %v4797, 0.2548296
        %v4830 = vadd.f32 %v4798, 0.2548296
        %v4831 = vadd.f32 %v4799, 0.2548296
        %v4832 = vadd.f32 %v4800, 0.2548296
        %v4833 = vadd.f32 %v4801, 0.2548296
        %v4834 = vadd.f32 %v4802, 0.2548296
        %v4835 = vadd.f32 %v4803, 0.2548296
        %v4836 = vadd.f32 %v4804, 0.2548296
        %v4837 = vadd.f32 %v4805, 0.2548296
        %v4838 = vadd.f32 %v4806, 0.2548296
        %v4839 = vadd.f32 %v4807, 0.2548296
        %v4840 = vadd.f32 %v4808, 0.2548296
        %v4841 = vmul.f32 %v4522, %v4809
        %v4842 = vmul.f32 %v4524, %v4810
        %v4843 = vmul.f32 %v4526, %v4811
        %v4844 = vmul.f32 %v4528, %v4812
        %v4845 = vmul.f32 %v4530, %v4813
        %v4846 = vmul.f32 %v4532, %v4814
        %v4847 = vmul.f32 %v4534, %v4815
        %v4848 = vmul.f32 %v4536, %v4816
        %v4849 = vmul.f32 %v4538, %v4817
        %v4850 = vmul.f32 %v4540, %v4818
        %v4851 = vmul.f32 %v4542, %v4819
        %v4852 = vmul.f32 %v4544, %v4820
        %v4853 = vmul.f32 %v4546, %v4821
        %v4854 = vmul.f32 %v4548, %v4822
        %v4855 = vmul.f32 %v4550, %v4823
        %v4856 = vmul.f32 %v4552, %v4824
        %v4857 = vmul.f32 %v4554, %v4825
        %v4858 = vmul.f32 %v4556, %v4826
        %v4859 = vmul.f32 %v4558, %v4827
        %v4860 = vmul.f32 %v4560, %v4828
        %v4861 = vmul.f32 %v4562, %v4829
        %v4862 = vmul.f32 %v4564, %v4830
        %v4863 = vmul.f32 %v4566, %v4831
        %v4864 = vmul.f32 %v4568, %v4832
        %v4865 = vmul.f32 %v4570, %v4833
        %v4866 = vmul.f32 %v4572, %v4834
        %v4867 = vmul.f32 %v4574, %v4835
        %v4868 = vmul.f32 %v4576, %v4836
        %v4869 = vmul.f32 %v4578, %v4837
        %v4870 = vmul.f32 %v4580, %v4838
        %v4871 = vmul.f32 %v4582, %v4839
        %v4872 = vmul.f32 %v4584, %v4840
        %v4873 = vmul.f32 %v4425, %v4425
        %v4874 = vmul.f32 %v4426, %v4426
        %v4875 = vmul.f32 %v4427, %v4427
        %v4876 = vmul.f32 %v4428, %v4428
        %v4877 = vmul.f32 %v4429, %v4429
        %v4878 = vmul.f32 %v4430, %v4430
        %v4879 = vmul.f32 %v4431, %v4431
        %v4880 = vmul.f32 %v4432, %v4432
        %v4881 = vmul.f32 %v4433, %v4433
        %v4882 = vmul.f32 %v4434, %v4434
        %v4883 = vmul.f32 %v4435, %v4435
        %v4884 = vmul.f32 %v4436, %v4436
        %v4885 = vmul.f32 %v4437, %v4437
        %v4886 = vmul.f32 %v4438, %v4438
        %v4887 = vmul.f32 %v4439, %v4439
        %v4888 = vmul.f32 %v4440, %v4440
        %v4889 = vmul.f32 %v4441, %v4441
        %v4890 = vmul.f32 %v4442, %v4442
        %v4891 = vmul.f32 %v4443, %v4443
        %v4892 = vmul.f32 %v4444, %v4444
        %v4893 = vmul.f32 %v4445, %v4445
        %v4894 = vmul.f32 %v4446, %v4446
        %v4895 = vmul.f32 %v4447, %v4447
        %v4896 = vmul.f32 %v4448, %v4448
        %v4897 = vmul.f32 %v4449, %v4449
        %v4898 = vmul.f32 %v4450, %v4450
        %v4899 = vmul.f32 %v4451, %v4451
        %v4900 = vmul.f32 %v4452, %v4452
        %v4901 = vmul.f32 %v4453, %v4453
        %v4902 = vmul.f32 %v4454, %v4454
        %v4903 = vmul.f32 %v4455, %v4455
        %v4904 = vmul.f32 %v4456, %v4456
        %v4905 = vsub.f32 0.0, %v4873
        %v4906 = vsub.f32 0.0, %v4874
        %v4907 = vsub.f32 0.0, %v4875
        %v4908 = vsub.f32 0.0, %v4876
        %v4909 = vsub.f32 0.0, %v4877
        %v4910 = vsub.f32 0.0, %v4878
        %v4911 = vsub.f32 0.0, %v4879
        %v4912 = vsub.f32 0.0, %v4880
        %v4913 = vsub.f32 0.0, %v4881
        %v4914 = vsub.f32 0.0, %v4882
        %v4915 = vsub.f32 0.0, %v4883
        %v4916 = vsub.f32 0.0, %v4884
        %v4917 = vsub.f32 0.0, %v4885
        %v4918 = vsub.f32 0.0, %v4886
        %v4919 = vsub.f32 0.0, %v4887
        %v4920 = vsub.f32 0.0, %v4888
        %v4921 = vsub.f32 0.0, %v4889
        %v4922 = vsub.f32 0.0, %v4890
        %v4923 = vsub.f32 0.0, %v4891
        %v4924 = vsub.f32 0.0, %v4892
        %v4925 = vsub.f32 0.0, %v4893
        %v4926 = vsub.f32 0.0, %v4894
        %v4927 = vsub.f32 0.0, %v4895
        %v4928 = vsub.f32 0.0, %v4896
        %v4929 = vsub.f32 0.0, %v4897
        %v4930 = vsub.f32 0.0, %v4898
        %v4931 = vsub.f32 0.0, %v4899
        %v4932 = vsub.f32 0.0, %v4900
        %v4933 = vsub.f32 0.0, %v4901
        %v4934 = vsub.f32 0.0, %v4902
        %v4935 = vsub.f32 0.0, %v4903
        %v4936 = vsub.f32 0.0, %v4904
        %v4937 = vmul.f32 %v4905, 1.442695
        %v4938 = vpow.pop %v4937
        %v4939 = vmul.f32 %v4906, 1.442695
        %v4940 = vpow.pop %v4939
        %v4941 = vmul.f32 %v4907, 1.442695
        %v4942 = vpow.pop %v4941
        %v4943 = vmul.f32 %v4908, 1.442695
        %v4944 = vpow.pop %v4943
        %v4945 = vmul.f32 %v4909, 1.442695
        %v4946 = vpow.pop %v4945
        %v4947 = vmul.f32 %v4910, 1.442695
        %v4948 = vpow.pop %v4947
        %v4949 = vmul.f32 %v4911, 1.442695
        %v4950 = vpow.pop %v4949
        %v4951 = vmul.f32 %v4912, 1.442695
        %v4952 = vpow.pop %v4951
        %v4953 = vmul.f32 %v4913, 1.442695
        %v4954 = vpow.pop %v4953
        %v4955 = vmul.f32 %v4914, 1.442695
        %v4956 = vpow.pop %v4955
        %v4957 = vmul.f32 %v4915, 1.442695
        %v4958 = vpow.pop %v4957
        %v4959 = vmul.f32 %v4916, 1.442695
        %v4960 = vpow.pop %v4959
        %v4961 = vmul.f32 %v4917, 1.442695
        %v4962 = vpow.pop %v4961
        %v4963 = vmul.f32 %v4918, 1.442695
        %v4964 = vpow.pop %v4963
        %v4965 = vmul.f32 %v4919, 1.442695
        %v4966 = vpow.pop %v4965
        %v4967 = vmul.f32 %v4920, 1.442695
        %v4968 = vpow.pop %v4967
        %v4969 = vmul.f32 %v4921, 1.442695
        %v4970 = vpow.pop %v4969
        %v4971 = vmul.f32 %v4922, 1.442695
        %v4972 = vpow.pop %v4971
        %v4973 = vmul.f32 %v4923, 1.442695
        %v4974 = vpow.pop %v4973
        %v4975 = vmul.f32 %v4924, 1.442695
        %v4976 = vpow.pop %v4975
        %v4977 = vmul.f32 %v4925, 1.442695
        %v4978 = vpow.pop %v4977
        %v4979 = vmul.f32 %v4926, 1.442695
        %v4980 = vpow.pop %v4979
        %v4981 = vmul.f32 %v4927, 1.442695
        %v4982 = vpow.pop %v4981
        %v4983 = vmul.f32 %v4928, 1.442695
        %v4984 = vpow.pop %v4983
        %v4985 = vmul.f32 %v4929, 1.442695
        %v4986 = vpow.pop %v4985
        %v4987 = vmul.f32 %v4930, 1.442695
        %v4988 = vpow.pop %v4987
        %v4989 = vmul.f32 %v4931, 1.442695
        %v4990 = vpow.pop %v4989
        %v4991 = vmul.f32 %v4932, 1.442695
        %v4992 = vpow.pop %v4991
        %v4993 = vmul.f32 %v4933, 1.442695
        %v4994 = vpow.pop %v4993
        %v4995 = vmul.f32 %v4934, 1.442695
        %v4996 = vpow.pop %v4995
        %v4997 = vmul.f32 %v4935, 1.442695
        %v4998 = vpow.pop %v4997
        %v4999 = vmul.f32 %v4936, 1.442695
        %v5000 = vpow.pop %v4999
        %v5001 = vmul.f32 %v4841, %v4938
        %v5002 = vmul.f32 %v4842, %v4940
        %v5003 = vmul.f32 %v4843, %v4942
        %v5004 = vmul.f32 %v4844, %v4944
        %v5005 = vmul.f32 %v4845, %v4946
        %v5006 = vmul.f32 %v4846, %v4948
        %v5007 = vmul.f32 %v4847, %v4950
        %v5008 = vmul.f32 %v4848, %v4952
        %v5009 = vmul.f32 %v4849, %v4954
        %v5010 = vmul.f32 %v4850, %v4956
        %v5011 = vmul.f32 %v4851, %v4958
        %v5012 = vmul.f32 %v4852, %v4960
        %v5013 = vmul.f32 %v4853, %v4962
        %v5014 = vmul.f32 %v4854, %v4964
        %v5015 = vmul.f32 %v4855, %v4966
        %v5016 = vmul.f32 %v4856, %v4968
        %v5017 = vmul.f32 %v4857, %v4970
        %v5018 = vmul.f32 %v4858, %v4972
        %v5019 = vmul.f32 %v4859, %v4974
        %v5020 = vmul.f32 %v4860, %v4976
        %v5021 = vmul.f32 %v4861, %v4978
        %v5022 = vmul.f32 %v4862, %v4980
        %v5023 = vmul.f32 %v4863, %v4982
        %v5024 = vmul.f32 %v4864, %v4984
        %v5025 = vmul.f32 %v4865, %v4986
        %v5026 = vmul.f32 %v4866, %v4988
        %v5027 = vmul.f32 %v4867, %v4990
        %v5028 = vmul.f32 %v4868, %v4992
        %v5029 = vmul.f32 %v4869, %v4994
        %v5030 = vmul.f32 %v4870, %v4996
        %v5031 = vmul.f32 %v4871, %v4998
        %v5032 = vmul.f32 %v4872, %v5000
        %v5033 = vsub.f32 1.0, %v5001
        %v5034 = vsub.f32 1.0, %v5002
        %v5035 = vsub.f32 1.0, %v5003
        %v5036 = vsub.f32 1.0, %v5004
        %v5037 = vsub.f32 1.0, %v5005
        %v5038 = vsub.f32 1.0, %v5006
        %v5039 = vsub.f32 1.0, %v5007
        %v5040 = vsub.f32 1.0, %v5008
        %v5041 = vsub.f32 1.0, %v5009
        %v5042 = vsub.f32 1.0, %v5010
        %v5043 = vsub.f32 1.0, %v5011
        %v5044 = vsub.f32 1.0, %v5012
        %v5045 = vsub.f32 1.0, %v5013
        %v5046 = vsub.f32 1.0, %v5014
        %v5047 = vsub.f32 1.0, %v5015
        %v5048 = vsub.f32 1.0, %v5016
        %v5049 = vsub.f32 1.0, %v5017
        %v5050 = vsub.f32 1.0, %v5018
        %v5051 = vsub.f32 1.0, %v5019
        %v5052 = vsub.f32 1.0, %v5020
        %v5053 = vsub.f32 1.0, %v5021
        %v5054 = vsub.f32 1.0, %v5022
        %v5055 = vsub.f32 1.0, %v5023
        %v5056 = vsub.f32 1.0, %v5024
        %v5057 = vsub.f32 1.0, %v5025
        %v5058 = vsub.f32 1.0, %v5026
        %v5059 = vsub.f32 1.0, %v5027
        %v5060 = vsub.f32 1.0, %v5028
        %v5061 = vsub.f32 1.0, %v5029
        %v5062 = vsub.f32 1.0, %v5030
        %v5063 = vsub.f32 1.0, %v5031
        %v5064 = vsub.f32 1.0, %v5032
        %vm5065 = vcmp.lt.f32.partialorder %v4393, 0.0
        %vm5066 = vcmp.lt.f32.partialorder %v4394, 0.0
        %vm5067 = vcmp.lt.f32.partialorder %v4395, 0.0
        %vm5068 = vcmp.lt.f32.partialorder %v4396, 0.0
        %vm5069 = vcmp.lt.f32.partialorder %v4397, 0.0
        %vm5070 = vcmp.lt.f32.partialorder %v4398, 0.0
        %vm5071 = vcmp.lt.f32.partialorder %v4399, 0.0
        %vm5072 = vcmp.lt.f32.partialorder %v4400, 0.0
        %vm5073 = vcmp.lt.f32.partialorder %v4401, 0.0
        %vm5074 = vcmp.lt.f32.partialorder %v4402, 0.0
        %vm5075 = vcmp.lt.f32.partialorder %v4403, 0.0
        %vm5076 = vcmp.lt.f32.partialorder %v4404, 0.0
        %vm5077 = vcmp.lt.f32.partialorder %v4405, 0.0
        %vm5078 = vcmp.lt.f32.partialorder %v4406, 0.0
        %vm5079 = vcmp.lt.f32.partialorder %v4407, 0.0
        %vm5080 = vcmp.lt.f32.partialorder %v4408, 0.0
        %vm5081 = vcmp.lt.f32.partialorder %v4409, 0.0
        %vm5082 = vcmp.lt.f32.partialorder %v4410, 0.0
        %vm5083 = vcmp.lt.f32.partialorder %v4411, 0.0
        %vm5084 = vcmp.lt.f32.partialorder %v4412, 0.0
        %vm5085 = vcmp.lt.f32.partialorder %v4413, 0.0
        %vm5086 = vcmp.lt.f32.partialorder %v4414, 0.0
        %vm5087 = vcmp.lt.f32.partialorder %v4415, 0.0
        %vm5088 = vcmp.lt.f32.partialorder %v4416, 0.0
        %vm5089 = vcmp.lt.f32.partialorder %v4417, 0.0
        %vm5090 = vcmp.lt.f32.partialorder %v4418, 0.0
        %vm5091 = vcmp.lt.f32.partialorder %v4419, 0.0
        %vm5092 = vcmp.lt.f32.partialorder %v4420, 0.0
        %vm5093 = vcmp.lt.f32.partialorder %v4421, 0.0
        %vm5094 = vcmp.lt.f32.partialorder %v4422, 0.0
        %vm5095 = vcmp.lt.f32.partialorder %v4423, 0.0
        %vm5096 = vcmp.lt.f32.partialorder %v4424, 0.0
        %v5097 = vsub.f32 0.0, %v5033
        %v5098 = vsub.f32 0.0, %v5034
        %v5099 = vsub.f32 0.0, %v5035
        %v5100 = vsub.f32 0.0, %v5036
        %v5101 = vsub.f32 0.0, %v5037
        %v5102 = vsub.f32 0.0, %v5038
        %v5103 = vsub.f32 0.0, %v5039
        %v5104 = vsub.f32 0.0, %v5040
        %v5105 = vsub.f32 0.0, %v5041
        %v5106 = vsub.f32 0.0, %v5042
        %v5107 = vsub.f32 0.0, %v5043
        %v5108 = vsub.f32 0.0, %v5044
        %v5109 = vsub.f32 0.0, %v5045
        %v5110 = vsub.f32 0.0, %v5046
        %v5111 = vsub.f32 0.0, %v5047
        %v5112 = vsub.f32 0.0, %v5048
        %v5113 = vsub.f32 0.0, %v5049
        %v5114 = vsub.f32 0.0, %v5050
        %v5115 = vsub.f32 0.0, %v5051
        %v5116 = vsub.f32 0.0, %v5052
        %v5117 = vsub.f32 0.0, %v5053
        %v5118 = vsub.f32 0.0, %v5054
        %v5119 = vsub.f32 0.0, %v5055
        %v5120 = vsub.f32 0.0, %v5056
        %v5121 = vsub.f32 0.0, %v5057
        %v5122 = vsub.f32 0.0, %v5058
        %v5123 = vsub.f32 0.0, %v5059
        %v5124 = vsub.f32 0.0, %v5060
        %v5125 = vsub.f32 0.0, %v5061
        %v5126 = vsub.f32 0.0, %v5062
        %v5127 = vsub.f32 0.0, %v5063
        %v5128 = vsub.f32 0.0, %v5064
        %v5129 = vsel %vm5065, %v5097, %v5033
        %v5130 = vsel %vm5066, %v5098, %v5034
        %v5131 = vsel %vm5067, %v5099, %v5035
        %v5132 = vsel %vm5068, %v5100, %v5036
        %v5133 = vsel %vm5069, %v5101, %v5037
        %v5134 = vsel %vm5070, %v5102, %v5038
        %v5135 = vsel %vm5071, %v5103, %v5039
        %v5136 = vsel %vm5072, %v5104, %v5040
        %v5137 = vsel %vm5073, %v5105, %v5041
        %v5138 = vsel %vm5074, %v5106, %v5042
        %v5139 = vsel %vm5075, %v5107, %v5043
        %v5140 = vsel %vm5076, %v5108, %v5044
        %v5141 = vsel %vm5077, %v5109, %v5045
        %v5142 = vsel %vm5078, %v5110, %v5046
        %v5143 = vsel %vm5079, %v5111, %v5047
        %v5144 = vsel %vm5080, %v5112, %v5048
        %v5145 = vsel %vm5081, %v5113, %v5049
        %v5146 = vsel %vm5082, %v5114, %v5050
        %v5147 = vsel %vm5083, %v5115, %v5051
        %v5148 = vsel %vm5084, %v5116, %v5052
        %v5149 = vsel %vm5085, %v5117, %v5053
        %v5150 = vsel %vm5086, %v5118, %v5054
        %v5151 = vsel %vm5087, %v5119, %v5055
        %v5152 = vsel %vm5088, %v5120, %v5056
        %v5153 = vsel %vm5089, %v5121, %v5057
        %v5154 = vsel %vm5090, %v5122, %v5058
        %v5155 = vsel %vm5091, %v5123, %v5059
        %v5156 = vsel %vm5092, %v5124, %v5060
        %v5157 = vsel %vm5093, %v5125, %v5061
        %v5158 = vsel %vm5094, %v5126, %v5062
        %v5159 = vsel %vm5095, %v5127, %v5063
        %v5160 = vsel %vm5096, %v5128, %v5064
        %v5161 = vadd.f32 %v5129, 1.0
        %v5162 = vadd.f32 %v5130, 1.0
        %v5163 = vadd.f32 %v5131, 1.0
        %v5164 = vadd.f32 %v5132, 1.0
        %v5165 = vadd.f32 %v5133, 1.0
        %v5166 = vadd.f32 %v5134, 1.0
        %v5167 = vadd.f32 %v5135, 1.0
        %v5168 = vadd.f32 %v5136, 1.0
        %v5169 = vadd.f32 %v5137, 1.0
        %v5170 = vadd.f32 %v5138, 1.0
        %v5171 = vadd.f32 %v5139, 1.0
        %v5172 = vadd.f32 %v5140, 1.0
        %v5173 = vadd.f32 %v5141, 1.0
        %v5174 = vadd.f32 %v5142, 1.0
        %v5175 = vadd.f32 %v5143, 1.0
        %v5176 = vadd.f32 %v5144, 1.0
        %v5177 = vadd.f32 %v5145, 1.0
        %v5178 = vadd.f32 %v5146, 1.0
        %v5179 = vadd.f32 %v5147, 1.0
        %v5180 = vadd.f32 %v5148, 1.0
        %v5181 = vadd.f32 %v5149, 1.0
        %v5182 = vadd.f32 %v5150, 1.0
        %v5183 = vadd.f32 %v5151, 1.0
        %v5184 = vadd.f32 %v5152, 1.0
        %v5185 = vadd.f32 %v5153, 1.0
        %v5186 = vadd.f32 %v5154, 1.0
        %v5187 = vadd.f32 %v5155, 1.0
        %v5188 = vadd.f32 %v5156, 1.0
        %v5189 = vadd.f32 %v5157, 1.0
        %v5190 = vadd.f32 %v5158, 1.0
        %v5191 = vadd.f32 %v5159, 1.0
        %v5192 = vadd.f32 %v5160, 1.0
        %v5193 = vmul.f32 %v4361, %v5161
        %v5194 = vmul.f32 %v4362, %v5162
        %v5195 = vmul.f32 %v4363, %v5163
        %v5196 = vmul.f32 %v4364, %v5164
        %v5197 = vmul.f32 %v4365, %v5165
        %v5198 = vmul.f32 %v4366, %v5166
        %v5199 = vmul.f32 %v4367, %v5167
        %v5200 = vmul.f32 %v4368, %v5168
        %v5201 = vmul.f32 %v4369, %v5169
        %v5202 = vmul.f32 %v4370, %v5170
        %v5203 = vmul.f32 %v4371, %v5171
        %v5204 = vmul.f32 %v4372, %v5172
        %v5205 = vmul.f32 %v4373, %v5173
        %v5206 = vmul.f32 %v4374, %v5174
        %v5207 = vmul.f32 %v4375, %v5175
        %v5208 = vmul.f32 %v4376, %v5176
        %v5209 = vmul.f32 %v4377, %v5177
        %v5210 = vmul.f32 %v4378, %v5178
        %v5211 = vmul.f32 %v4379, %v5179
        %v5212 = vmul.f32 %v4380, %v5180
        %v5213 = vmul.f32 %v4381, %v5181
        %v5214 = vmul.f32 %v4382, %v5182
        %v5215 = vmul.f32 %v4383, %v5183
        %v5216 = vmul.f32 %v4384, %v5184
        %v5217 = vmul.f32 %v4385, %v5185
        %v5218 = vmul.f32 %v4386, %v5186
        %v5219 = vmul.f32 %v4387, %v5187
        %v5220 = vmul.f32 %v4388, %v5188
        %v5221 = vmul.f32 %v4389, %v5189
        %v5222 = vmul.f32 %v4390, %v5190
        %v5223 = vmul.f32 %v4391, %v5191
        %v5224 = vmul.f32 %v4392, %v5192
        %v5225 = vpack.c.bf16 %v5194, %v5193
        %v5226 = vpack.c.bf16 %v5196, %v5195
        %v5227 = vpack.c.bf16 %v5198, %v5197
        %v5228 = vpack.c.bf16 %v5200, %v5199
        %v5229 = vpack.c.bf16 %v5202, %v5201
        %v5230 = vpack.c.bf16 %v5204, %v5203
        %v5231 = vpack.c.bf16 %v5206, %v5205
        %v5232 = vpack.c.bf16 %v5208, %v5207
        %v5233 = vpack.c.bf16 %v5210, %v5209
        %v5234 = vpack.c.bf16 %v5212, %v5211
        %v5235 = vpack.c.bf16 %v5214, %v5213
        %v5236 = vpack.c.bf16 %v5216, %v5215
        %v5237 = vpack.c.bf16 %v5218, %v5217
        %v5238 = vpack.c.bf16 %v5220, %v5219
        %v5239 = vpack.c.bf16 %v5222, %v5221
        %v5240 = vpack.c.bf16 %v5224, %v5223
        %v5241 = vld [vmem:[%s4] sm:$0xf]
        %v5242 = vld [vmem:[%s4 + $0x4] sm:$0xf]
        %v5243 = vld [vmem:[%s4 + $0x8] sm:$0xf]
        %v5244 = vld [vmem:[%s4 + $0xc] sm:$0xf]
        %v5245 = vld [vmem:[%s4 + $0x10] sm:$0xf]
        %v5246 = vld [vmem:[%s4 + $0x14] sm:$0xf]
        %v5247 = vld [vmem:[%s4 + $0x18] sm:$0xf]
        %v5248 = vld [vmem:[%s4 + $0x1c] sm:$0xf]
        %v5249 = vld [vmem:[%s4 + $0x20] sm:$0xf]
        %v5250 = vld [vmem:[%s4 + $0x24] sm:$0xf]
        %v5251 = vld [vmem:[%s4 + $0x28] sm:$0xf]
        %v5252 = vld [vmem:[%s4 + $0x2c] sm:$0xf]
        %v5253 = vld [vmem:[%s4 + $0x30] sm:$0xf]
        %v5254 = vld [vmem:[%s4 + $0x34] sm:$0xf]
        %v5255 = vld [vmem:[%s4 + $0x38] sm:$0xf]
        %v5256 = vld [vmem:[%s4 + $0x3c] sm:$0xf]
        %v5257 = vld [vmem:[%s5] sm:$0x1]
        %v5259 = vlaneseq
        %v5260 = vshrl.u32 %v5259, 7
        %v5261 = vsub.s32 0, %v5260
        %v5262 = vrot.slane %v5257, %v5261
        %v5280 = vunpack.c.l.b16 %v5241
        %v5281 = vunpack.c.l.b16 %v5242
        %v5282 = vunpack.c.l.b16 %v5243
        %v5283 = vunpack.c.l.b16 %v5244
        %v5284 = vunpack.c.l.b16 %v5245
        %v5285 = vunpack.c.l.b16 %v5246
        %v5286 = vunpack.c.l.b16 %v5247
        %v5287 = vunpack.c.l.b16 %v5248
        %v5288 = vunpack.c.l.b16 %v5249
        %v5289 = vunpack.c.l.b16 %v5250
        %v5290 = vunpack.c.l.b16 %v5251
        %v5291 = vunpack.c.l.b16 %v5252
        %v5292 = vunpack.c.l.b16 %v5253
        %v5293 = vunpack.c.l.b16 %v5254
        %v5294 = vunpack.c.l.b16 %v5255
        %v5295 = vunpack.c.l.b16 %v5256
        %v5296 = vpack.c.b16 %v5281, %v5280
        %v5297 = vpack.c.b16 %v5283, %v5282
        %v5298 = vpack.c.b16 %v5285, %v5284
        %v5299 = vpack.c.b16 %v5287, %v5286
        %v5300 = vpack.c.b16 %v5289, %v5288
        %v5301 = vpack.c.b16 %v5291, %v5290
        %v5302 = vpack.c.b16 %v5293, %v5292
        %v5303 = vpack.c.b16 %v5295, %v5294
        %5312 = vmatprep.subr.bf16.mxu0 0
        %5313 = vmatpush1.bf16.msra.mxu0 %v5296
        %5314 = vmatprep.subr.bf16.mxu0 0
        %5315 = vmatpush1.bf16.msra.mxu0 %v5297
        %5316 = vmatprep.subr.bf16.mxu0 0
        %5317 = vmatpush1.bf16.msra.mxu0 %v5298
        %5318 = vmatprep.subr.bf16.mxu0 0
        %5319 = vmatpush1.bf16.msra.mxu0 %v5299
        %5320 = vmatprep.subr.bf16.mxu0 0
        %5321 = vmatpush1.bf16.msra.mxu0 %v5300
        %5322 = vmatprep.subr.bf16.mxu0 0
        %5323 = vmatpush1.bf16.msra.mxu0 %v5301
        %5324 = vmatprep.subr.bf16.mxu0 0
        %5325 = vmatpush1.bf16.msra.mxu0 %v5302
        %5326 = vmatprep.subr.bf16.mxu0 0
        %5327 = vmatpush1.bf16.msra.mxu0 %v5303
        %5328 = vmatprep.subr.bf16.mxu0 0
        %5329 = vmatpush1.bf16.msra.mxu0 0
        %5330 = vmatprep.subr.bf16.mxu0 0
        %5331 = vmatpush1.bf16.msra.mxu0 0
        %5332 = vmatprep.subr.bf16.mxu0 0
        %5333 = vmatpush1.bf16.msra.mxu0 0
        %5334 = vmatprep.subr.bf16.mxu0 0
        %5335 = vmatpush1.bf16.msra.mxu0 0
        %5336 = vmatprep.subr.bf16.mxu0 0
        %5337 = vmatpush1.bf16.msra.mxu0 0
        %5338 = vmatprep.subr.bf16.mxu0 0
        %5339 = vmatpush1.bf16.msra.mxu0 0
        %5340 = vmatprep.subr.bf16.mxu0 0
        %5341 = vmatpush1.bf16.msra.mxu0 0
        %5342 = vmatprep.subr.bf16.mxu0 0
        %5343 = vmatpush1.bf16.msra.mxu0 0
        %5344 = vmatprep.mubr.bf16.mxu0 0
        %5345 = vmatmul.mubr.bf16.gmra.mrb[0].mxu0 %v5225
        %v5346 = vpop.f32.mrb[0].mxu0
        %v5347 = vadd.f32 %v5262, %v5346
        %v5348 = vpop.f32.mrb[0].mxu0
        %v5349 = vpop.f32.mrb[0].mxu0
        %v5350 = vadd.f32 %v5262, %v5349
        %v5351 = vpop.f32.mrb[0].mxu0
        %5352 = vmatprep.mubr.bf16.mxu0 0
        %5353 = vmatmul.mubr.bf16.gmra.mrb[0].mxu0 %v5226
        %v5354 = vpop.f32.mrb[0].mxu0
        %v5355 = vadd.f32 %v5262, %v5354
        %v5356 = vpop.f32.mrb[0].mxu0
        %v5357 = vpop.f32.mrb[0].mxu0
        %v5358 = vadd.f32 %v5262, %v5357
        %v5359 = vpop.f32.mrb[0].mxu0
        %5360 = vmatprep.mubr.bf16.mxu0 0
        %5361 = vmatmul.mubr.bf16.gmra.mrb[0].mxu0 %v5227
        %v5362 = vpop.f32.mrb[0].mxu0
        %v5363 = vadd.f32 %v5262, %v5362
        %v5364 = vpop.f32.mrb[0].mxu0
        %v5365 = vpop.f32.mrb[0].mxu0
        %v5366 = vadd.f32 %v5262, %v5365
        %v5367 = vpop.f32.mrb[0].mxu0
        %5368 = vmatprep.mubr.bf16.mxu0 0
        %5369 = vmatmul.mubr.bf16.gmra.mrb[0].mxu0 %v5228
        %v5370 = vpop.f32.mrb[0].mxu0
        %v5371 = vadd.f32 %v5262, %v5370
        %v5372 = vpop.f32.mrb[0].mxu0
        %v5373 = vpop.f32.mrb[0].mxu0
        %v5374 = vadd.f32 %v5262, %v5373
        %v5375 = vpop.f32.mrb[0].mxu0
        %5376 = vmatprep.mubr.bf16.mxu0 0
        %5377 = vmatmul.mubr.bf16.gmra.mrb[0].mxu0 %v5229
        %v5378 = vpop.f32.mrb[0].mxu0
        %v5379 = vadd.f32 %v5262, %v5378
        %v5380 = vpop.f32.mrb[0].mxu0
        %v5381 = vpop.f32.mrb[0].mxu0
        %v5382 = vadd.f32 %v5262, %v5381
        %v5383 = vpop.f32.mrb[0].mxu0
        %5384 = vmatprep.mubr.bf16.mxu0 0
        %5385 = vmatmul.mubr.bf16.gmra.mrb[0].mxu0 %v5230
        %v5386 = vpop.f32.mrb[0].mxu0
        %v5387 = vadd.f32 %v5262, %v5386
        %v5388 = vpop.f32.mrb[0].mxu0
        %v5389 = vpop.f32.mrb[0].mxu0
        %v5390 = vadd.f32 %v5262, %v5389
        %v5391 = vpop.f32.mrb[0].mxu0
        %5392 = vmatprep.mubr.bf16.mxu0 0
        %5393 = vmatmul.mubr.bf16.gmra.mrb[0].mxu0 %v5231
        %v5394 = vpop.f32.mrb[0].mxu0
        %v5395 = vadd.f32 %v5262, %v5394
        %v5396 = vpop.f32.mrb[0].mxu0
        %v5397 = vpop.f32.mrb[0].mxu0
        %v5398 = vadd.f32 %v5262, %v5397
        %v5399 = vpop.f32.mrb[0].mxu0
        %5400 = vmatprep.mubr.bf16.mxu0 0
        %5401 = vmatmul.mubr.bf16.gmra.mrb[0].mxu0 %v5232
        %v5402 = vpop.f32.mrb[0].mxu0
        %v5403 = vadd.f32 %v5262, %v5402
        %v5404 = vpop.f32.mrb[0].mxu0
        %v5405 = vpop.f32.mrb[0].mxu0
        %v5406 = vadd.f32 %v5262, %v5405
        %v5407 = vpop.f32.mrb[0].mxu0
        %5408 = vmatprep.mubr.bf16.mxu0 0
        %5409 = vmatmul.mubr.bf16.gmra.mrb[0].mxu0 %v5233
        %v5410 = vpop.f32.mrb[0].mxu0
        %v5411 = vadd.f32 %v5262, %v5410
        %v5412 = vpop.f32.mrb[0].mxu0
        %v5413 = vpop.f32.mrb[0].mxu0
        %v5414 = vadd.f32 %v5262, %v5413
        %v5415 = vpop.f32.mrb[0].mxu0
        %5416 = vmatprep.mubr.bf16.mxu0 0
        %5417 = vmatmul.mubr.bf16.gmra.mrb[0].mxu0 %v5234
        %v5418 = vpop.f32.mrb[0].mxu0
        %v5419 = vadd.f32 %v5262, %v5418
        %v5420 = vpop.f32.mrb[0].mxu0
        %v5421 = vpop.f32.mrb[0].mxu0
        %v5422 = vadd.f32 %v5262, %v5421
        %v5423 = vpop.f32.mrb[0].mxu0
        %5424 = vmatprep.mubr.bf16.mxu0 0
        %5425 = vmatmul.mubr.bf16.gmra.mrb[0].mxu0 %v5235
        %v5426 = vpop.f32.mrb[0].mxu0
        %v5427 = vadd.f32 %v5262, %v5426
        %v5428 = vpop.f32.mrb[0].mxu0
        %v5429 = vpop.f32.mrb[0].mxu0
        %v5430 = vadd.f32 %v5262, %v5429
        %v5431 = vpop.f32.mrb[0].mxu0
        %5432 = vmatprep.mubr.bf16.mxu0 0
        %5433 = vmatmul.mubr.bf16.gmra.mrb[0].mxu0 %v5236
        %v5434 = vpop.f32.mrb[0].mxu0
        %v5435 = vadd.f32 %v5262, %v5434
        %v5436 = vpop.f32.mrb[0].mxu0
        %v5437 = vpop.f32.mrb[0].mxu0
        %v5438 = vadd.f32 %v5262, %v5437
        %v5439 = vpop.f32.mrb[0].mxu0
        %5440 = vmatprep.mubr.bf16.mxu0 0
        %5441 = vmatmul.mubr.bf16.gmra.mrb[0].mxu0 %v5237
        %v5442 = vpop.f32.mrb[0].mxu0
        %v5443 = vadd.f32 %v5262, %v5442
        %v5444 = vpop.f32.mrb[0].mxu0
        %v5445 = vpop.f32.mrb[0].mxu0
        %v5446 = vadd.f32 %v5262, %v5445
        %v5447 = vpop.f32.mrb[0].mxu0
        %5448 = vmatprep.mubr.bf16.mxu0 0
        %5449 = vmatmul.mubr.bf16.gmra.mrb[0].mxu0 %v5238
        %v5450 = vpop.f32.mrb[0].mxu0
        %v5451 = vadd.f32 %v5262, %v5450
        %v5452 = vpop.f32.mrb[0].mxu0
        %v5453 = vpop.f32.mrb[0].mxu0
        %v5454 = vadd.f32 %v5262, %v5453
        %v5455 = vpop.f32.mrb[0].mxu0
        %5456 = vmatprep.mubr.bf16.mxu0 0
        %5457 = vmatmul.mubr.bf16.gmra.mrb[0].mxu0 %v5239
        %v5458 = vpop.f32.mrb[0].mxu0
        %v5459 = vadd.f32 %v5262, %v5458
        %v5460 = vpop.f32.mrb[0].mxu0
        %v5461 = vpop.f32.mrb[0].mxu0
        %v5462 = vadd.f32 %v5262, %v5461
        %v5463 = vpop.f32.mrb[0].mxu0
        %5464 = vmatprep.mubr.bf16.mxu0 0
        %5465 = vmatmul.mubr.bf16.gmra.mrb[0].mxu0 %v5240
        %v5466 = vpop.f32.mrb[0].mxu0
        %v5467 = vadd.f32 %v5262, %v5466
        %v5468 = vpop.f32.mrb[0].mxu0
        %v5469 = vpop.f32.mrb[0].mxu0
        %v5470 = vadd.f32 %v5262, %v5469
        %v5471 = vpop.f32.mrb[0].mxu0
        %5472 = vdwg.mxu0
        %v5473 = vmul.f32 %v275, 0.5
        %v5474 = vmul.f32 %v276, 0.5
        %v5475 = vmul.f32 %v277, 0.5
        %v5476 = vmul.f32 %v278, 0.5
        %v5477 = vmul.f32 %v279, 0.5
        %v5478 = vmul.f32 %v280, 0.5
        %v5479 = vmul.f32 %v281, 0.5
        %v5480 = vmul.f32 %v282, 0.5
        %v5481 = vmul.f32 %v283, 0.5
        %v5482 = vmul.f32 %v284, 0.5
        %v5483 = vmul.f32 %v285, 0.5
        %v5484 = vmul.f32 %v286, 0.5
        %v5485 = vmul.f32 %v287, 0.5
        %v5486 = vmul.f32 %v288, 0.5
        %v5487 = vmul.f32 %v289, 0.5
        %v5488 = vmul.f32 %v290, 0.5
        %v5489 = vmul.f32 %v307, 0.5
        %v5490 = vmul.f32 %v308, 0.5
        %v5491 = vmul.f32 %v309, 0.5
        %v5492 = vmul.f32 %v310, 0.5
        %v5493 = vmul.f32 %v311, 0.5
        %v5494 = vmul.f32 %v312, 0.5
        %v5495 = vmul.f32 %v313, 0.5
        %v5496 = vmul.f32 %v314, 0.5
        %v5497 = vmul.f32 %v315, 0.5
        %v5498 = vmul.f32 %v316, 0.5
        %v5499 = vmul.f32 %v317, 0.5
        %v5500 = vmul.f32 %v318, 0.5
        %v5501 = vmul.f32 %v319, 0.5
        %v5502 = vmul.f32 %v320, 0.5
        %v5503 = vmul.f32 %v321, 0.5
        %v5504 = vmul.f32 %v322, 0.5
        %v5505 = vmul.f32 %v275, 0.70710677
        %v5506 = vmul.f32 %v276, 0.70710677
        %v5507 = vmul.f32 %v277, 0.70710677
        %v5508 = vmul.f32 %v278, 0.70710677
        %v5509 = vmul.f32 %v279, 0.70710677
        %v5510 = vmul.f32 %v280, 0.70710677
        %v5511 = vmul.f32 %v281, 0.70710677
        %v5512 = vmul.f32 %v282, 0.70710677
        %v5513 = vmul.f32 %v283, 0.70710677
        %v5514 = vmul.f32 %v284, 0.70710677
        %v5515 = vmul.f32 %v285, 0.70710677
        %v5516 = vmul.f32 %v286, 0.70710677
        %v5517 = vmul.f32 %v287, 0.70710677
        %v5518 = vmul.f32 %v288, 0.70710677
        %v5519 = vmul.f32 %v289, 0.70710677
        %v5520 = vmul.f32 %v290, 0.70710677
        %v5521 = vmul.f32 %v307, 0.70710677
        %v5522 = vmul.f32 %v308, 0.70710677
        %v5523 = vmul.f32 %v309, 0.70710677
        %v5524 = vmul.f32 %v310, 0.70710677
        %v5525 = vmul.f32 %v311, 0.70710677
        %v5526 = vmul.f32 %v312, 0.70710677
        %v5527 = vmul.f32 %v313, 0.70710677
        %v5528 = vmul.f32 %v314, 0.70710677
        %v5529 = vmul.f32 %v315, 0.70710677
        %v5530 = vmul.f32 %v316, 0.70710677
        %v5531 = vmul.f32 %v317, 0.70710677
        %v5532 = vmul.f32 %v318, 0.70710677
        %v5533 = vmul.f32 %v319, 0.70710677
        %v5534 = vmul.f32 %v320, 0.70710677
        %v5535 = vmul.f32 %v321, 0.70710677
        %v5536 = vmul.f32 %v322, 0.70710677
        %v5537 = vand.u32 2147483647, %v5505
        %v5538 = vand.u32 2147483647, %v5506
        %v5539 = vand.u32 2147483647, %v5507
        %v5540 = vand.u32 2147483647, %v5508
        %v5541 = vand.u32 2147483647, %v5509
        %v5542 = vand.u32 2147483647, %v5510
        %v5543 = vand.u32 2147483647, %v5511
        %v5544 = vand.u32 2147483647, %v5512
        %v5545 = vand.u32 2147483647, %v5513
        %v5546 = vand.u32 2147483647, %v5514
        %v5547 = vand.u32 2147483647, %v5515
        %v5548 = vand.u32 2147483647, %v5516
        %v5549 = vand.u32 2147483647, %v5517
        %v5550 = vand.u32 2147483647, %v5518
        %v5551 = vand.u32 2147483647, %v5519
        %v5552 = vand.u32 2147483647, %v5520
        %v5553 = vand.u32 2147483647, %v5521
        %v5554 = vand.u32 2147483647, %v5522
        %v5555 = vand.u32 2147483647, %v5523
        %v5556 = vand.u32 2147483647, %v5524
        %v5557 = vand.u32 2147483647, %v5525
        %v5558 = vand.u32 2147483647, %v5526
        %v5559 = vand.u32 2147483647, %v5527
        %v5560 = vand.u32 2147483647, %v5528
        %v5561 = vand.u32 2147483647, %v5529
        %v5562 = vand.u32 2147483647, %v5530
        %v5563 = vand.u32 2147483647, %v5531
        %v5564 = vand.u32 2147483647, %v5532
        %v5565 = vand.u32 2147483647, %v5533
        %v5566 = vand.u32 2147483647, %v5534
        %v5567 = vand.u32 2147483647, %v5535
        %v5568 = vand.u32 2147483647, %v5536
        %v5569 = vmul.f32 %v5537, 0.3275911
        %v5570 = vmul.f32 %v5538, 0.3275911
        %v5571 = vmul.f32 %v5539, 0.3275911
        %v5572 = vmul.f32 %v5540, 0.3275911
        %v5573 = vmul.f32 %v5541, 0.3275911
        %v5574 = vmul.f32 %v5542, 0.3275911
        %v5575 = vmul.f32 %v5543, 0.3275911
        %v5576 = vmul.f32 %v5544, 0.3275911
        %v5577 = vmul.f32 %v5545, 0.3275911
        %v5578 = vmul.f32 %v5546, 0.3275911
        %v5579 = vmul.f32 %v5547, 0.3275911
        %v5580 = vmul.f32 %v5548, 0.3275911
        %v5581 = vmul.f32 %v5549, 0.3275911
        %v5582 = vmul.f32 %v5550, 0.3275911
        %v5583 = vmul.f32 %v5551, 0.3275911
        %v5584 = vmul.f32 %v5552, 0.3275911
        %v5585 = vmul.f32 %v5553, 0.3275911
        %v5586 = vmul.f32 %v5554, 0.3275911
        %v5587 = vmul.f32 %v5555, 0.3275911
        %v5588 = vmul.f32 %v5556, 0.3275911
        %v5589 = vmul.f32 %v5557, 0.3275911
        %v5590 = vmul.f32 %v5558, 0.3275911
        %v5591 = vmul.f32 %v5559, 0.3275911
        %v5592 = vmul.f32 %v5560, 0.3275911
        %v5593 = vmul.f32 %v5561, 0.3275911
        %v5594 = vmul.f32 %v5562, 0.3275911
        %v5595 = vmul.f32 %v5563, 0.3275911
        %v5596 = vmul.f32 %v5564, 0.3275911
        %v5597 = vmul.f32 %v5565, 0.3275911
        %v5598 = vmul.f32 %v5566, 0.3275911
        %v5599 = vmul.f32 %v5567, 0.3275911
        %v5600 = vmul.f32 %v5568, 0.3275911
        %v5601 = vadd.f32 %v5569, 1.0
        %v5602 = vadd.f32 %v5570, 1.0
        %v5603 = vadd.f32 %v5571, 1.0
        %v5604 = vadd.f32 %v5572, 1.0
        %v5605 = vadd.f32 %v5573, 1.0
        %v5606 = vadd.f32 %v5574, 1.0
        %v5607 = vadd.f32 %v5575, 1.0
        %v5608 = vadd.f32 %v5576, 1.0
        %v5609 = vadd.f32 %v5577, 1.0
        %v5610 = vadd.f32 %v5578, 1.0
        %v5611 = vadd.f32 %v5579, 1.0
        %v5612 = vadd.f32 %v5580, 1.0
        %v5613 = vadd.f32 %v5581, 1.0
        %v5614 = vadd.f32 %v5582, 1.0
        %v5615 = vadd.f32 %v5583, 1.0
        %v5616 = vadd.f32 %v5584, 1.0
        %v5617 = vadd.f32 %v5585, 1.0
        %v5618 = vadd.f32 %v5586, 1.0
        %v5619 = vadd.f32 %v5587, 1.0
        %v5620 = vadd.f32 %v5588, 1.0
        %v5621 = vadd.f32 %v5589, 1.0
        %v5622 = vadd.f32 %v5590, 1.0
        %v5623 = vadd.f32 %v5591, 1.0
        %v5624 = vadd.f32 %v5592, 1.0
        %v5625 = vadd.f32 %v5593, 1.0
        %v5626 = vadd.f32 %v5594, 1.0
        %v5627 = vadd.f32 %v5595, 1.0
        %v5628 = vadd.f32 %v5596, 1.0
        %v5629 = vadd.f32 %v5597, 1.0
        %v5630 = vadd.f32 %v5598, 1.0
        %v5631 = vadd.f32 %v5599, 1.0
        %v5632 = vadd.f32 %v5600, 1.0
        %v5633 = vrcp.pop %v5601
        %v5634 = vmul.f32 1.0, %v5633
        %v5635 = vrcp.pop %v5602
        %v5636 = vmul.f32 1.0, %v5635
        %v5637 = vrcp.pop %v5603
        %v5638 = vmul.f32 1.0, %v5637
        %v5639 = vrcp.pop %v5604
        %v5640 = vmul.f32 1.0, %v5639
        %v5641 = vrcp.pop %v5605
        %v5642 = vmul.f32 1.0, %v5641
        %v5643 = vrcp.pop %v5606
        %v5644 = vmul.f32 1.0, %v5643
        %v5645 = vrcp.pop %v5607
        %v5646 = vmul.f32 1.0, %v5645
        %v5647 = vrcp.pop %v5608
        %v5648 = vmul.f32 1.0, %v5647
        %v5649 = vrcp.pop %v5609
        %v5650 = vmul.f32 1.0, %v5649
        %v5651 = vrcp.pop %v5610
        %v5652 = vmul.f32 1.0, %v5651
        %v5653 = vrcp.pop %v5611
        %v5654 = vmul.f32 1.0, %v5653
        %v5655 = vrcp.pop %v5612
        %v5656 = vmul.f32 1.0, %v5655
        %v5657 = vrcp.pop %v5613
        %v5658 = vmul.f32 1.0, %v5657
        %v5659 = vrcp.pop %v5614
        %v5660 = vmul.f32 1.0, %v5659
        %v5661 = vrcp.pop %v5615
        %v5662 = vmul.f32 1.0, %v5661
        %v5663 = vrcp.pop %v5616
        %v5664 = vmul.f32 1.0, %v5663
        %v5665 = vrcp.pop %v5617
        %v5666 = vmul.f32 1.0, %v5665
        %v5667 = vrcp.pop %v5618
        %v5668 = vmul.f32 1.0, %v5667
        %v5669 = vrcp.pop %v5619
        %v5670 = vmul.f32 1.0, %v5669
        %v5671 = vrcp.pop %v5620
        %v5672 = vmul.f32 1.0, %v5671
        %v5673 = vrcp.pop %v5621
        %v5674 = vmul.f32 1.0, %v5673
        %v5675 = vrcp.pop %v5622
        %v5676 = vmul.f32 1.0, %v5675
        %v5677 = vrcp.pop %v5623
        %v5678 = vmul.f32 1.0, %v5677
        %v5679 = vrcp.pop %v5624
        %v5680 = vmul.f32 1.0, %v5679
        %v5681 = vrcp.pop %v5625
        %v5682 = vmul.f32 1.0, %v5681
        %v5683 = vrcp.pop %v5626
        %v5684 = vmul.f32 1.0, %v5683
        %v5685 = vrcp.pop %v5627
        %v5686 = vmul.f32 1.0, %v5685
        %v5687 = vrcp.pop %v5628
        %v5688 = vmul.f32 1.0, %v5687
        %v5689 = vrcp.pop %v5629
        %v5690 = vmul.f32 1.0, %v5689
        %v5691 = vrcp.pop %v5630
        %v5692 = vmul.f32 1.0, %v5691
        %v5693 = vrcp.pop %v5631
        %v5694 = vmul.f32 1.0, %v5693
        %v5695 = vrcp.pop %v5632
        %v5696 = vmul.f32 1.0, %v5695
        %v5697 = vmul.f32 %v5634, 1.0614054
        %v5698 = vmul.f32 %v5636, 1.0614054
        %v5699 = vmul.f32 %v5638, 1.0614054
        %v5700 = vmul.f32 %v5640, 1.0614054
        %v5701 = vmul.f32 %v5642, 1.0614054
        %v5702 = vmul.f32 %v5644, 1.0614054
        %v5703 = vmul.f32 %v5646, 1.0614054
        %v5704 = vmul.f32 %v5648, 1.0614054
        %v5705 = vmul.f32 %v5650, 1.0614054
        %v5706 = vmul.f32 %v5652, 1.0614054
        %v5707 = vmul.f32 %v5654, 1.0614054
        %v5708 = vmul.f32 %v5656, 1.0614054
        %v5709 = vmul.f32 %v5658, 1.0614054
        %v5710 = vmul.f32 %v5660, 1.0614054
        %v5711 = vmul.f32 %v5662, 1.0614054
        %v5712 = vmul.f32 %v5664, 1.0614054
        %v5713 = vmul.f32 %v5666, 1.0614054
        %v5714 = vmul.f32 %v5668, 1.0614054
        %v5715 = vmul.f32 %v5670, 1.0614054
        %v5716 = vmul.f32 %v5672, 1.0614054
        %v5717 = vmul.f32 %v5674, 1.0614054
        %v5718 = vmul.f32 %v5676, 1.0614054
        %v5719 = vmul.f32 %v5678, 1.0614054
        %v5720 = vmul.f32 %v5680, 1.0614054
        %v5721 = vmul.f32 %v5682, 1.0614054
        %v5722 = vmul.f32 %v5684, 1.0614054
        %v5723 = vmul.f32 %v5686, 1.0614054
        %v5724 = vmul.f32 %v5688, 1.0614054
        %v5725 = vmul.f32 %v5690, 1.0614054
        %v5726 = vmul.f32 %v5692, 1.0614054
        %v5727 = vmul.f32 %v5694, 1.0614054
        %v5728 = vmul.f32 %v5696, 1.0614054
        %v5729 = vadd.f32 %v5697, -1.4531521
        %v5730 = vadd.f32 %v5698, -1.4531521
        %v5731 = vadd.f32 %v5699, -1.4531521
        %v5732 = vadd.f32 %v5700, -1.4531521
        %v5733 = vadd.f32 %v5701, -1.4531521
        %v5734 = vadd.f32 %v5702, -1.4531521
        %v5735 = vadd.f32 %v5703, -1.4531521
        %v5736 = vadd.f32 %v5704, -1.4531521
        %v5737 = vadd.f32 %v5705, -1.4531521
        %v5738 = vadd.f32 %v5706, -1.4531521
        %v5739 = vadd.f32 %v5707, -1.4531521
        %v5740 = vadd.f32 %v5708, -1.4531521
        %v5741 = vadd.f32 %v5709, -1.4531521
        %v5742 = vadd.f32 %v5710, -1.4531521
        %v5743 = vadd.f32 %v5711, -1.4531521
        %v5744 = vadd.f32 %v5712, -1.4531521
        %v5745 = vadd.f32 %v5713, -1.4531521
        %v5746 = vadd.f32 %v5714, -1.4531521
        %v5747 = vadd.f32 %v5715, -1.4531521
        %v5748 = vadd.f32 %v5716, -1.4531521
        %v5749 = vadd.f32 %v5717, -1.4531521
        %v5750 = vadd.f32 %v5718, -1.4531521
        %v5751 = vadd.f32 %v5719, -1.4531521
        %v5752 = vadd.f32 %v5720, -1.4531521
        %v5753 = vadd.f32 %v5721, -1.4531521
        %v5754 = vadd.f32 %v5722, -1.4531521
        %v5755 = vadd.f32 %v5723, -1.4531521
        %v5756 = vadd.f32 %v5724, -1.4531521
        %v5757 = vadd.f32 %v5725, -1.4531521
        %v5758 = vadd.f32 %v5726, -1.4531521
        %v5759 = vadd.f32 %v5727, -1.4531521
        %v5760 = vadd.f32 %v5728, -1.4531521
        %v5761 = vmul.f32 %v5634, %v5729
        %v5762 = vmul.f32 %v5636, %v5730
        %v5763 = vmul.f32 %v5638, %v5731
        %v5764 = vmul.f32 %v5640, %v5732
        %v5765 = vmul.f32 %v5642, %v5733
        %v5766 = vmul.f32 %v5644, %v5734
        %v5767 = vmul.f32 %v5646, %v5735
        %v5768 = vmul.f32 %v5648, %v5736
        %v5769 = vmul.f32 %v5650, %v5737
        %v5770 = vmul.f32 %v5652, %v5738
        %v5771 = vmul.f32 %v5654, %v5739
        %v5772 = vmul.f32 %v5656, %v5740
        %v5773 = vmul.f32 %v5658, %v5741
        %v5774 = vmul.f32 %v5660, %v5742
        %v5775 = vmul.f32 %v5662, %v5743
        %v5776 = vmul.f32 %v5664, %v5744
        %v5777 = vmul.f32 %v5666, %v5745
        %v5778 = vmul.f32 %v5668, %v5746
        %v5779 = vmul.f32 %v5670, %v5747
        %v5780 = vmul.f32 %v5672, %v5748
        %v5781 = vmul.f32 %v5674, %v5749
        %v5782 = vmul.f32 %v5676, %v5750
        %v5783 = vmul.f32 %v5678, %v5751
        %v5784 = vmul.f32 %v5680, %v5752
        %v5785 = vmul.f32 %v5682, %v5753
        %v5786 = vmul.f32 %v5684, %v5754
        %v5787 = vmul.f32 %v5686, %v5755
        %v5788 = vmul.f32 %v5688, %v5756
        %v5789 = vmul.f32 %v5690, %v5757
        %v5790 = vmul.f32 %v5692, %v5758
        %v5791 = vmul.f32 %v5694, %v5759
        %v5792 = vmul.f32 %v5696, %v5760
        %v5793 = vadd.f32 %v5761, 1.4214138
        %v5794 = vadd.f32 %v5762, 1.4214138
        %v5795 = vadd.f32 %v5763, 1.4214138
        %v5796 = vadd.f32 %v5764, 1.4214138
        %v5797 = vadd.f32 %v5765, 1.4214138
        %v5798 = vadd.f32 %v5766, 1.4214138
        %v5799 = vadd.f32 %v5767, 1.4214138
        %v5800 = vadd.f32 %v5768, 1.4214138
        %v5801 = vadd.f32 %v5769, 1.4214138
        %v5802 = vadd.f32 %v5770, 1.4214138
        %v5803 = vadd.f32 %v5771, 1.4214138
        %v5804 = vadd.f32 %v5772, 1.4214138
        %v5805 = vadd.f32 %v5773, 1.4214138
        %v5806 = vadd.f32 %v5774, 1.4214138
        %v5807 = vadd.f32 %v5775, 1.4214138
        %v5808 = vadd.f32 %v5776, 1.4214138
        %v5809 = vadd.f32 %v5777, 1.4214138
        %v5810 = vadd.f32 %v5778, 1.4214138
        %v5811 = vadd.f32 %v5779, 1.4214138
        %v5812 = vadd.f32 %v5780, 1.4214138
        %v5813 = vadd.f32 %v5781, 1.4214138
        %v5814 = vadd.f32 %v5782, 1.4214138
        %v5815 = vadd.f32 %v5783, 1.4214138
        %v5816 = vadd.f32 %v5784, 1.4214138
        %v5817 = vadd.f32 %v5785, 1.4214138
        %v5818 = vadd.f32 %v5786, 1.4214138
        %v5819 = vadd.f32 %v5787, 1.4214138
        %v5820 = vadd.f32 %v5788, 1.4214138
        %v5821 = vadd.f32 %v5789, 1.4214138
        %v5822 = vadd.f32 %v5790, 1.4214138
        %v5823 = vadd.f32 %v5791, 1.4214138
        %v5824 = vadd.f32 %v5792, 1.4214138
        %v5825 = vmul.f32 %v5634, %v5793
        %v5826 = vmul.f32 %v5636, %v5794
        %v5827 = vmul.f32 %v5638, %v5795
        %v5828 = vmul.f32 %v5640, %v5796
        %v5829 = vmul.f32 %v5642, %v5797
        %v5830 = vmul.f32 %v5644, %v5798
        %v5831 = vmul.f32 %v5646, %v5799
        %v5832 = vmul.f32 %v5648, %v5800
        %v5833 = vmul.f32 %v5650, %v5801
        %v5834 = vmul.f32 %v5652, %v5802
        %v5835 = vmul.f32 %v5654, %v5803
        %v5836 = vmul.f32 %v5656, %v5804
        %v5837 = vmul.f32 %v5658, %v5805
        %v5838 = vmul.f32 %v5660, %v5806
        %v5839 = vmul.f32 %v5662, %v5807
        %v5840 = vmul.f32 %v5664, %v5808
        %v5841 = vmul.f32 %v5666, %v5809
        %v5842 = vmul.f32 %v5668, %v5810
        %v5843 = vmul.f32 %v5670, %v5811
        %v5844 = vmul.f32 %v5672, %v5812
        %v5845 = vmul.f32 %v5674, %v5813
        %v5846 = vmul.f32 %v5676, %v5814
        %v5847 = vmul.f32 %v5678, %v5815
        %v5848 = vmul.f32 %v5680, %v5816
        %v5849 = vmul.f32 %v5682, %v5817
        %v5850 = vmul.f32 %v5684, %v5818
        %v5851 = vmul.f32 %v5686, %v5819
        %v5852 = vmul.f32 %v5688, %v5820
        %v5853 = vmul.f32 %v5690, %v5821
        %v5854 = vmul.f32 %v5692, %v5822
        %v5855 = vmul.f32 %v5694, %v5823
        %v5856 = vmul.f32 %v5696, %v5824
        %v5857 = vadd.f32 %v5825, -0.28449672
        %v5858 = vadd.f32 %v5826, -0.28449672
        %v5859 = vadd.f32 %v5827, -0.28449672
        %v5860 = vadd.f32 %v5828, -0.28449672
        %v5861 = vadd.f32 %v5829, -0.28449672
        %v5862 = vadd.f32 %v5830, -0.28449672
        %v5863 = vadd.f32 %v5831, -0.28449672
        %v5864 = vadd.f32 %v5832, -0.28449672
        %v5865 = vadd.f32 %v5833, -0.28449672
        %v5866 = vadd.f32 %v5834, -0.28449672
        %v5867 = vadd.f32 %v5835, -0.28449672
        %v5868 = vadd.f32 %v5836, -0.28449672
        %v5869 = vadd.f32 %v5837, -0.28449672
        %v5870 = vadd.f32 %v5838, -0.28449672
        %v5871 = vadd.f32 %v5839, -0.28449672
        %v5872 = vadd.f32 %v5840, -0.28449672
        %v5873 = vadd.f32 %v5841, -0.28449672
        %v5874 = vadd.f32 %v5842, -0.28449672
        %v5875 = vadd.f32 %v5843, -0.28449672
        %v5876 = vadd.f32 %v5844, -0.28449672
        %v5877 = vadd.f32 %v5845, -0.28449672
        %v5878 = vadd.f32 %v5846, -0.28449672
        %v5879 = vadd.f32 %v5847, -0.28449672
        %v5880 = vadd.f32 %v5848, -0.28449672
        %v5881 = vadd.f32 %v5849, -0.28449672
        %v5882 = vadd.f32 %v5850, -0.28449672
        %v5883 = vadd.f32 %v5851, -0.28449672
        %v5884 = vadd.f32 %v5852, -0.28449672
        %v5885 = vadd.f32 %v5853, -0.28449672
        %v5886 = vadd.f32 %v5854, -0.28449672
        %v5887 = vadd.f32 %v5855, -0.28449672
        %v5888 = vadd.f32 %v5856, -0.28449672
        %v5889 = vmul.f32 %v5634, %v5857
        %v5890 = vmul.f32 %v5636, %v5858
        %v5891 = vmul.f32 %v5638, %v5859
        %v5892 = vmul.f32 %v5640, %v5860
        %v5893 = vmul.f32 %v5642, %v5861
        %v5894 = vmul.f32 %v5644, %v5862
        %v5895 = vmul.f32 %v5646, %v5863
        %v5896 = vmul.f32 %v5648, %v5864
        %v5897 = vmul.f32 %v5650, %v5865
        %v5898 = vmul.f32 %v5652, %v5866
        %v5899 = vmul.f32 %v5654, %v5867
        %v5900 = vmul.f32 %v5656, %v5868
        %v5901 = vmul.f32 %v5658, %v5869
        %v5902 = vmul.f32 %v5660, %v5870
        %v5903 = vmul.f32 %v5662, %v5871
        %v5904 = vmul.f32 %v5664, %v5872
        %v5905 = vmul.f32 %v5666, %v5873
        %v5906 = vmul.f32 %v5668, %v5874
        %v5907 = vmul.f32 %v5670, %v5875
        %v5908 = vmul.f32 %v5672, %v5876
        %v5909 = vmul.f32 %v5674, %v5877
        %v5910 = vmul.f32 %v5676, %v5878
        %v5911 = vmul.f32 %v5678, %v5879
        %v5912 = vmul.f32 %v5680, %v5880
        %v5913 = vmul.f32 %v5682, %v5881
        %v5914 = vmul.f32 %v5684, %v5882
        %v5915 = vmul.f32 %v5686, %v5883
        %v5916 = vmul.f32 %v5688, %v5884
        %v5917 = vmul.f32 %v5690, %v5885
        %v5918 = vmul.f32 %v5692, %v5886
        %v5919 = vmul.f32 %v5694, %v5887
        %v5920 = vmul.f32 %v5696, %v5888
        %v5921 = vadd.f32 %v5889, 0.2548296
        %v5922 = vadd.f32 %v5890, 0.2548296
        %v5923 = vadd.f32 %v5891, 0.2548296
        %v5924 = vadd.f32 %v5892, 0.2548296
        %v5925 = vadd.f32 %v5893, 0.2548296
        %v5926 = vadd.f32 %v5894, 0.2548296
        %v5927 = vadd.f32 %v5895, 0.2548296
        %v5928 = vadd.f32 %v5896, 0.2548296
        %v5929 = vadd.f32 %v5897, 0.2548296
        %v5930 = vadd.f32 %v5898, 0.2548296
        %v5931 = vadd.f32 %v5899, 0.2548296
        %v5932 = vadd.f32 %v5900, 0.2548296
        %v5933 = vadd.f32 %v5901, 0.2548296
        %v5934 = vadd.f32 %v5902, 0.2548296
        %v5935 = vadd.f32 %v5903, 0.2548296
        %v5936 = vadd.f32 %v5904, 0.2548296
        %v5937 = vadd.f32 %v5905, 0.2548296
        %v5938 = vadd.f32 %v5906, 0.2548296
        %v5939 = vadd.f32 %v5907, 0.2548296
        %v5940 = vadd.f32 %v5908, 0.2548296
        %v5941 = vadd.f32 %v5909, 0.2548296
        %v5942 = vadd.f32 %v5910, 0.2548296
        %v5943 = vadd.f32 %v5911, 0.2548296
        %v5944 = vadd.f32 %v5912, 0.2548296
        %v5945 = vadd.f32 %v5913, 0.2548296
        %v5946 = vadd.f32 %v5914, 0.2548296
        %v5947 = vadd.f32 %v5915, 0.2548296
        %v5948 = vadd.f32 %v5916, 0.2548296
        %v5949 = vadd.f32 %v5917, 0.2548296
        %v5950 = vadd.f32 %v5918, 0.2548296
        %v5951 = vadd.f32 %v5919, 0.2548296
        %v5952 = vadd.f32 %v5920, 0.2548296
        %v5953 = vmul.f32 %v5634, %v5921
        %v5954 = vmul.f32 %v5636, %v5922
        %v5955 = vmul.f32 %v5638, %v5923
        %v5956 = vmul.f32 %v5640, %v5924
        %v5957 = vmul.f32 %v5642, %v5925
        %v5958 = vmul.f32 %v5644, %v5926
        %v5959 = vmul.f32 %v5646, %v5927
        %v5960 = vmul.f32 %v5648, %v5928
        %v5961 = vmul.f32 %v5650, %v5929
        %v5962 = vmul.f32 %v5652, %v5930
        %v5963 = vmul.f32 %v5654, %v5931
        %v5964 = vmul.f32 %v5656, %v5932
        %v5965 = vmul.f32 %v5658, %v5933
        %v5966 = vmul.f32 %v5660, %v5934
        %v5967 = vmul.f32 %v5662, %v5935
        %v5968 = vmul.f32 %v5664, %v5936
        %v5969 = vmul.f32 %v5666, %v5937
        %v5970 = vmul.f32 %v5668, %v5938
        %v5971 = vmul.f32 %v5670, %v5939
        %v5972 = vmul.f32 %v5672, %v5940
        %v5973 = vmul.f32 %v5674, %v5941
        %v5974 = vmul.f32 %v5676, %v5942
        %v5975 = vmul.f32 %v5678, %v5943
        %v5976 = vmul.f32 %v5680, %v5944
        %v5977 = vmul.f32 %v5682, %v5945
        %v5978 = vmul.f32 %v5684, %v5946
        %v5979 = vmul.f32 %v5686, %v5947
        %v5980 = vmul.f32 %v5688, %v5948
        %v5981 = vmul.f32 %v5690, %v5949
        %v5982 = vmul.f32 %v5692, %v5950
        %v5983 = vmul.f32 %v5694, %v5951
        %v5984 = vmul.f32 %v5696, %v5952
        %v5985 = vmul.f32 %v5537, %v5537
        %v5986 = vmul.f32 %v5538, %v5538
        %v5987 = vmul.f32 %v5539, %v5539
        %v5988 = vmul.f32 %v5540, %v5540
        %v5989 = vmul.f32 %v5541, %v5541
        %v5990 = vmul.f32 %v5542, %v5542
        %v5991 = vmul.f32 %v5543, %v5543
        %v5992 = vmul.f32 %v5544, %v5544
        %v5993 = vmul.f32 %v5545, %v5545
        %v5994 = vmul.f32 %v5546, %v5546
        %v5995 = vmul.f32 %v5547, %v5547
        %v5996 = vmul.f32 %v5548, %v5548
        %v5997 = vmul.f32 %v5549, %v5549
        %v5998 = vmul.f32 %v5550, %v5550
        %v5999 = vmul.f32 %v5551, %v5551
        %v6000 = vmul.f32 %v5552, %v5552
        %v6001 = vmul.f32 %v5553, %v5553
        %v6002 = vmul.f32 %v5554, %v5554
        %v6003 = vmul.f32 %v5555, %v5555
        %v6004 = vmul.f32 %v5556, %v5556
        %v6005 = vmul.f32 %v5557, %v5557
        %v6006 = vmul.f32 %v5558, %v5558
        %v6007 = vmul.f32 %v5559, %v5559
        %v6008 = vmul.f32 %v5560, %v5560
        %v6009 = vmul.f32 %v5561, %v5561
        %v6010 = vmul.f32 %v5562, %v5562
        %v6011 = vmul.f32 %v5563, %v5563
        %v6012 = vmul.f32 %v5564, %v5564
        %v6013 = vmul.f32 %v5565, %v5565
        %v6014 = vmul.f32 %v5566, %v5566
        %v6015 = vmul.f32 %v5567, %v5567
        %v6016 = vmul.f32 %v5568, %v5568
        %v6017 = vsub.f32 0.0, %v5985
        %v6018 = vsub.f32 0.0, %v5986
        %v6019 = vsub.f32 0.0, %v5987
        %v6020 = vsub.f32 0.0, %v5988
        %v6021 = vsub.f32 0.0, %v5989
        %v6022 = vsub.f32 0.0, %v5990
        %v6023 = vsub.f32 0.0, %v5991
        %v6024 = vsub.f32 0.0, %v5992
        %v6025 = vsub.f32 0.0, %v5993
        %v6026 = vsub.f32 0.0, %v5994
        %v6027 = vsub.f32 0.0, %v5995
        %v6028 = vsub.f32 0.0, %v5996
        %v6029 = vsub.f32 0.0, %v5997
        %v6030 = vsub.f32 0.0, %v5998
        %v6031 = vsub.f32 0.0, %v5999
        %v6032 = vsub.f32 0.0, %v6000
        %v6033 = vsub.f32 0.0, %v6001
        %v6034 = vsub.f32 0.0, %v6002
        %v6035 = vsub.f32 0.0, %v6003
        %v6036 = vsub.f32 0.0, %v6004
        %v6037 = vsub.f32 0.0, %v6005
        %v6038 = vsub.f32 0.0, %v6006
        %v6039 = vsub.f32 0.0, %v6007
        %v6040 = vsub.f32 0.0, %v6008
        %v6041 = vsub.f32 0.0, %v6009
        %v6042 = vsub.f32 0.0, %v6010
        %v6043 = vsub.f32 0.0, %v6011
        %v6044 = vsub.f32 0.0, %v6012
        %v6045 = vsub.f32 0.0, %v6013
        %v6046 = vsub.f32 0.0, %v6014
        %v6047 = vsub.f32 0.0, %v6015
        %v6048 = vsub.f32 0.0, %v6016
        %v6049 = vmul.f32 %v6017, 1.442695
        %v6050 = vpow.pop %v6049
        %v6051 = vmul.f32 %v6018, 1.442695
        %v6052 = vpow.pop %v6051
        %v6053 = vmul.f32 %v6019, 1.442695
        %v6054 = vpow.pop %v6053
        %v6055 = vmul.f32 %v6020, 1.442695
        %v6056 = vpow.pop %v6055
        %v6057 = vmul.f32 %v6021, 1.442695
        %v6058 = vpow.pop %v6057
        %v6059 = vmul.f32 %v6022, 1.442695
        %v6060 = vpow.pop %v6059
        %v6061 = vmul.f32 %v6023, 1.442695
        %v6062 = vpow.pop %v6061
        %v6063 = vmul.f32 %v6024, 1.442695
        %v6064 = vpow.pop %v6063
        %v6065 = vmul.f32 %v6025, 1.442695
        %v6066 = vpow.pop %v6065
        %v6067 = vmul.f32 %v6026, 1.442695
        %v6068 = vpow.pop %v6067
        %v6069 = vmul.f32 %v6027, 1.442695
        %v6070 = vpow.pop %v6069
        %v6071 = vmul.f32 %v6028, 1.442695
        %v6072 = vpow.pop %v6071
        %v6073 = vmul.f32 %v6029, 1.442695
        %v6074 = vpow.pop %v6073
        %v6075 = vmul.f32 %v6030, 1.442695
        %v6076 = vpow.pop %v6075
        %v6077 = vmul.f32 %v6031, 1.442695
        %v6078 = vpow.pop %v6077
        %v6079 = vmul.f32 %v6032, 1.442695
        %v6080 = vpow.pop %v6079
        %v6081 = vmul.f32 %v6033, 1.442695
        %v6082 = vpow.pop %v6081
        %v6083 = vmul.f32 %v6034, 1.442695
        %v6084 = vpow.pop %v6083
        %v6085 = vmul.f32 %v6035, 1.442695
        %v6086 = vpow.pop %v6085
        %v6087 = vmul.f32 %v6036, 1.442695
        %v6088 = vpow.pop %v6087
        %v6089 = vmul.f32 %v6037, 1.442695
        %v6090 = vpow.pop %v6089
        %v6091 = vmul.f32 %v6038, 1.442695
        %v6092 = vpow.pop %v6091
        %v6093 = vmul.f32 %v6039, 1.442695
        %v6094 = vpow.pop %v6093
        %v6095 = vmul.f32 %v6040, 1.442695
        %v6096 = vpow.pop %v6095
        %v6097 = vmul.f32 %v6041, 1.442695
        %v6098 = vpow.pop %v6097
        %v6099 = vmul.f32 %v6042, 1.442695
        %v6100 = vpow.pop %v6099
        %v6101 = vmul.f32 %v6043, 1.442695
        %v6102 = vpow.pop %v6101
        %v6103 = vmul.f32 %v6044, 1.442695
        %v6104 = vpow.pop %v6103
        %v6105 = vmul.f32 %v6045, 1.442695
        %v6106 = vpow.pop %v6105
        %v6107 = vmul.f32 %v6046, 1.442695
        %v6108 = vpow.pop %v6107
        %v6109 = vmul.f32 %v6047, 1.442695
        %v6110 = vpow.pop %v6109
        %v6111 = vmul.f32 %v6048, 1.442695
        %v6112 = vpow.pop %v6111
        %v6113 = vmul.f32 %v5953, %v6050
        %v6114 = vmul.f32 %v5954, %v6052
        %v6115 = vmul.f32 %v5955, %v6054
        %v6116 = vmul.f32 %v5956, %v6056
        %v6117 = vmul.f32 %v5957, %v6058
        %v6118 = vmul.f32 %v5958, %v6060
        %v6119 = vmul.f32 %v5959, %v6062
        %v6120 = vmul.f32 %v5960, %v6064
        %v6121 = vmul.f32 %v5961, %v6066
        %v6122 = vmul.f32 %v5962, %v6068
        %v6123 = vmul.f32 %v5963, %v6070
        %v6124 = vmul.f32 %v5964, %v6072
        %v6125 = vmul.f32 %v5965, %v6074
        %v6126 = vmul.f32 %v5966, %v6076
        %v6127 = vmul.f32 %v5967, %v6078
        %v6128 = vmul.f32 %v5968, %v6080
        %v6129 = vmul.f32 %v5969, %v6082
        %v6130 = vmul.f32 %v5970, %v6084
        %v6131 = vmul.f32 %v5971, %v6086
        %v6132 = vmul.f32 %v5972, %v6088
        %v6133 = vmul.f32 %v5973, %v6090
        %v6134 = vmul.f32 %v5974, %v6092
        %v6135 = vmul.f32 %v5975, %v6094
        %v6136 = vmul.f32 %v5976, %v6096
        %v6137 = vmul.f32 %v5977, %v6098
        %v6138 = vmul.f32 %v5978, %v6100
        %v6139 = vmul.f32 %v5979, %v6102
        %v6140 = vmul.f32 %v5980, %v6104
        %v6141 = vmul.f32 %v5981, %v6106
        %v6142 = vmul.f32 %v5982, %v6108
        %v6143 = vmul.f32 %v5983, %v6110
        %v6144 = vmul.f32 %v5984, %v6112
        %v6145 = vsub.f32 1.0, %v6113
        %v6146 = vsub.f32 1.0, %v6114
        %v6147 = vsub.f32 1.0, %v6115
        %v6148 = vsub.f32 1.0, %v6116
        %v6149 = vsub.f32 1.0, %v6117
        %v6150 = vsub.f32 1.0, %v6118
        %v6151 = vsub.f32 1.0, %v6119
        %v6152 = vsub.f32 1.0, %v6120
        %v6153 = vsub.f32 1.0, %v6121
        %v6154 = vsub.f32 1.0, %v6122
        %v6155 = vsub.f32 1.0, %v6123
        %v6156 = vsub.f32 1.0, %v6124
        %v6157 = vsub.f32 1.0, %v6125
        %v6158 = vsub.f32 1.0, %v6126
        %v6159 = vsub.f32 1.0, %v6127
        %v6160 = vsub.f32 1.0, %v6128
        %v6161 = vsub.f32 1.0, %v6129
        %v6162 = vsub.f32 1.0, %v6130
        %v6163 = vsub.f32 1.0, %v6131
        %v6164 = vsub.f32 1.0, %v6132
        %v6165 = vsub.f32 1.0, %v6133
        %v6166 = vsub.f32 1.0, %v6134
        %v6167 = vsub.f32 1.0, %v6135
        %v6168 = vsub.f32 1.0, %v6136
        %v6169 = vsub.f32 1.0, %v6137
        %v6170 = vsub.f32 1.0, %v6138
        %v6171 = vsub.f32 1.0, %v6139
        %v6172 = vsub.f32 1.0, %v6140
        %v6173 = vsub.f32 1.0, %v6141
        %v6174 = vsub.f32 1.0, %v6142
        %v6175 = vsub.f32 1.0, %v6143
        %v6176 = vsub.f32 1.0, %v6144
        %vm6177 = vcmp.lt.f32.partialorder %v5505, 0.0
        %vm6178 = vcmp.lt.f32.partialorder %v5506, 0.0
        %vm6179 = vcmp.lt.f32.partialorder %v5507, 0.0
        %vm6180 = vcmp.lt.f32.partialorder %v5508, 0.0
        %vm6181 = vcmp.lt.f32.partialorder %v5509, 0.0
        %vm6182 = vcmp.lt.f32.partialorder %v5510, 0.0
        %vm6183 = vcmp.lt.f32.partialorder %v5511, 0.0
        %vm6184 = vcmp.lt.f32.partialorder %v5512, 0.0
        %vm6185 = vcmp.lt.f32.partialorder %v5513, 0.0
        %vm6186 = vcmp.lt.f32.partialorder %v5514, 0.0
        %vm6187 = vcmp.lt.f32.partialorder %v5515, 0.0
        %vm6188 = vcmp.lt.f32.partialorder %v5516, 0.0
        %vm6189 = vcmp.lt.f32.partialorder %v5517, 0.0
        %vm6190 = vcmp.lt.f32.partialorder %v5518, 0.0
        %vm6191 = vcmp.lt.f32.partialorder %v5519, 0.0
        %vm6192 = vcmp.lt.f32.partialorder %v5520, 0.0
        %vm6193 = vcmp.lt.f32.partialorder %v5521, 0.0
        %vm6194 = vcmp.lt.f32.partialorder %v5522, 0.0
        %vm6195 = vcmp.lt.f32.partialorder %v5523, 0.0
        %vm6196 = vcmp.lt.f32.partialorder %v5524, 0.0
        %vm6197 = vcmp.lt.f32.partialorder %v5525, 0.0
        %vm6198 = vcmp.lt.f32.partialorder %v5526, 0.0
        %vm6199 = vcmp.lt.f32.partialorder %v5527, 0.0
        %vm6200 = vcmp.lt.f32.partialorder %v5528, 0.0
        %vm6201 = vcmp.lt.f32.partialorder %v5529, 0.0
        %vm6202 = vcmp.lt.f32.partialorder %v5530, 0.0
        %vm6203 = vcmp.lt.f32.partialorder %v5531, 0.0
        %vm6204 = vcmp.lt.f32.partialorder %v5532, 0.0
        %vm6205 = vcmp.lt.f32.partialorder %v5533, 0.0
        %vm6206 = vcmp.lt.f32.partialorder %v5534, 0.0
        %vm6207 = vcmp.lt.f32.partialorder %v5535, 0.0
        %vm6208 = vcmp.lt.f32.partialorder %v5536, 0.0
        %v6209 = vsub.f32 0.0, %v6145
        %v6210 = vsub.f32 0.0, %v6146
        %v6211 = vsub.f32 0.0, %v6147
        %v6212 = vsub.f32 0.0, %v6148
        %v6213 = vsub.f32 0.0, %v6149
        %v6214 = vsub.f32 0.0, %v6150
        %v6215 = vsub.f32 0.0, %v6151
        %v6216 = vsub.f32 0.0, %v6152
        %v6217 = vsub.f32 0.0, %v6153
        %v6218 = vsub.f32 0.0, %v6154
        %v6219 = vsub.f32 0.0, %v6155
        %v6220 = vsub.f32 0.0, %v6156
        %v6221 = vsub.f32 0.0, %v6157
        %v6222 = vsub.f32 0.0, %v6158
        %v6223 = vsub.f32 0.0, %v6159
        %v6224 = vsub.f32 0.0, %v6160
        %v6225 = vsub.f32 0.0, %v6161
        %v6226 = vsub.f32 0.0, %v6162
        %v6227 = vsub.f32 0.0, %v6163
        %v6228 = vsub.f32 0.0, %v6164
        %v6229 = vsub.f32 0.0, %v6165
        %v6230 = vsub.f32 0.0, %v6166
        %v6231 = vsub.f32 0.0, %v6167
        %v6232 = vsub.f32 0.0, %v6168
        %v6233 = vsub.f32 0.0, %v6169
        %v6234 = vsub.f32 0.0, %v6170
        %v6235 = vsub.f32 0.0, %v6171
        %v6236 = vsub.f32 0.0, %v6172
        %v6237 = vsub.f32 0.0, %v6173
        %v6238 = vsub.f32 0.0, %v6174
        %v6239 = vsub.f32 0.0, %v6175
        %v6240 = vsub.f32 0.0, %v6176
        %v6241 = vsel %vm6177, %v6209, %v6145
        %v6242 = vsel %vm6178, %v6210, %v6146
        %v6243 = vsel %vm6179, %v6211, %v6147
        %v6244 = vsel %vm6180, %v6212, %v6148
        %v6245 = vsel %vm6181, %v6213, %v6149
        %v6246 = vsel %vm6182, %v6214, %v6150
        %v6247 = vsel %vm6183, %v6215, %v6151
        %v6248 = vsel %vm6184, %v6216, %v6152
        %v6249 = vsel %vm6185, %v6217, %v6153
        %v6250 = vsel %vm6186, %v6218, %v6154
        %v6251 = vsel %vm6187, %v6219, %v6155
        %v6252 = vsel %vm6188, %v6220, %v6156
        %v6253 = vsel %vm6189, %v6221, %v6157
        %v6254 = vsel %vm6190, %v6222, %v6158
        %v6255 = vsel %vm6191, %v6223, %v6159
        %v6256 = vsel %vm6192, %v6224, %v6160
        %v6257 = vsel %vm6193, %v6225, %v6161
        %v6258 = vsel %vm6194, %v6226, %v6162
        %v6259 = vsel %vm6195, %v6227, %v6163
        %v6260 = vsel %vm6196, %v6228, %v6164
        %v6261 = vsel %vm6197, %v6229, %v6165
        %v6262 = vsel %vm6198, %v6230, %v6166
        %v6263 = vsel %vm6199, %v6231, %v6167
        %v6264 = vsel %vm6200, %v6232, %v6168
        %v6265 = vsel %vm6201, %v6233, %v6169
        %v6266 = vsel %vm6202, %v6234, %v6170
        %v6267 = vsel %vm6203, %v6235, %v6171
        %v6268 = vsel %vm6204, %v6236, %v6172
        %v6269 = vsel %vm6205, %v6237, %v6173
        %v6270 = vsel %vm6206, %v6238, %v6174
        %v6271 = vsel %vm6207, %v6239, %v6175
        %v6272 = vsel %vm6208, %v6240, %v6176
        %v6273 = vadd.f32 %v6241, 1.0
        %v6274 = vadd.f32 %v6242, 1.0
        %v6275 = vadd.f32 %v6243, 1.0
        %v6276 = vadd.f32 %v6244, 1.0
        %v6277 = vadd.f32 %v6245, 1.0
        %v6278 = vadd.f32 %v6246, 1.0
        %v6279 = vadd.f32 %v6247, 1.0
        %v6280 = vadd.f32 %v6248, 1.0
        %v6281 = vadd.f32 %v6249, 1.0
        %v6282 = vadd.f32 %v6250, 1.0
        %v6283 = vadd.f32 %v6251, 1.0
        %v6284 = vadd.f32 %v6252, 1.0
        %v6285 = vadd.f32 %v6253, 1.0
        %v6286 = vadd.f32 %v6254, 1.0
        %v6287 = vadd.f32 %v6255, 1.0
        %v6288 = vadd.f32 %v6256, 1.0
        %v6289 = vadd.f32 %v6257, 1.0
        %v6290 = vadd.f32 %v6258, 1.0
        %v6291 = vadd.f32 %v6259, 1.0
        %v6292 = vadd.f32 %v6260, 1.0
        %v6293 = vadd.f32 %v6261, 1.0
        %v6294 = vadd.f32 %v6262, 1.0
        %v6295 = vadd.f32 %v6263, 1.0
        %v6296 = vadd.f32 %v6264, 1.0
        %v6297 = vadd.f32 %v6265, 1.0
        %v6298 = vadd.f32 %v6266, 1.0
        %v6299 = vadd.f32 %v6267, 1.0
        %v6300 = vadd.f32 %v6268, 1.0
        %v6301 = vadd.f32 %v6269, 1.0
        %v6302 = vadd.f32 %v6270, 1.0
        %v6303 = vadd.f32 %v6271, 1.0
        %v6304 = vadd.f32 %v6272, 1.0
        %v6305 = vmul.f32 %v5473, %v6273
        %v6306 = vmul.f32 %v5474, %v6274
        %v6307 = vmul.f32 %v5475, %v6275
        %v6308 = vmul.f32 %v5476, %v6276
        %v6309 = vmul.f32 %v5477, %v6277
        %v6310 = vmul.f32 %v5478, %v6278
        %v6311 = vmul.f32 %v5479, %v6279
        %v6312 = vmul.f32 %v5480, %v6280
        %v6313 = vmul.f32 %v5481, %v6281
        %v6314 = vmul.f32 %v5482, %v6282
        %v6315 = vmul.f32 %v5483, %v6283
        %v6316 = vmul.f32 %v5484, %v6284
        %v6317 = vmul.f32 %v5485, %v6285
        %v6318 = vmul.f32 %v5486, %v6286
        %v6319 = vmul.f32 %v5487, %v6287
        %v6320 = vmul.f32 %v5488, %v6288
        %v6321 = vmul.f32 %v5489, %v6289
        %v6322 = vmul.f32 %v5490, %v6290
        %v6323 = vmul.f32 %v5491, %v6291
        %v6324 = vmul.f32 %v5492, %v6292
        %v6325 = vmul.f32 %v5493, %v6293
        %v6326 = vmul.f32 %v5494, %v6294
        %v6327 = vmul.f32 %v5495, %v6295
        %v6328 = vmul.f32 %v5496, %v6296
        %v6329 = vmul.f32 %v5497, %v6297
        %v6330 = vmul.f32 %v5498, %v6298
        %v6331 = vmul.f32 %v5499, %v6299
        %v6332 = vmul.f32 %v5500, %v6300
        %v6333 = vmul.f32 %v5501, %v6301
        %v6334 = vmul.f32 %v5502, %v6302
        %v6335 = vmul.f32 %v5503, %v6303
        %v6336 = vmul.f32 %v5504, %v6304
        %v6337 = vadd.f32 %v6305, %v5347
        %v6338 = vadd.f32 %v6306, %v5350
        %v6339 = vadd.f32 %v6307, %v5355
        %v6340 = vadd.f32 %v6308, %v5358
        %v6341 = vadd.f32 %v6309, %v5363
        %v6342 = vadd.f32 %v6310, %v5366
        %v6343 = vadd.f32 %v6311, %v5371
        %v6344 = vadd.f32 %v6312, %v5374
        %v6345 = vadd.f32 %v6313, %v5379
        %v6346 = vadd.f32 %v6314, %v5382
        %v6347 = vadd.f32 %v6315, %v5387
        %v6348 = vadd.f32 %v6316, %v5390
        %v6349 = vadd.f32 %v6317, %v5395
        %v6350 = vadd.f32 %v6318, %v5398
        %v6351 = vadd.f32 %v6319, %v5403
        %v6352 = vadd.f32 %v6320, %v5406
        %v6353 = vadd.f32 %v6321, %v5411
        %v6354 = vadd.f32 %v6322, %v5414
        %v6355 = vadd.f32 %v6323, %v5419
        %v6356 = vadd.f32 %v6324, %v5422
        %v6357 = vadd.f32 %v6325, %v5427
        %v6358 = vadd.f32 %v6326, %v5430
        %v6359 = vadd.f32 %v6327, %v5435
        %v6360 = vadd.f32 %v6328, %v5438
        %v6361 = vadd.f32 %v6329, %v5443
        %v6362 = vadd.f32 %v6330, %v5446
        %v6363 = vadd.f32 %v6331, %v5451
        %v6364 = vadd.f32 %v6332, %v5454
        %v6365 = vadd.f32 %v6333, %v5459
        %v6366 = vadd.f32 %v6334, %v5462
        %v6367 = vadd.f32 %v6335, %v5467
        %v6368 = vadd.f32 %v6336, %v5470
        %6369 = vxpose.xlu0.b32.start [1/16] %v6337, 128
        %6370 = vxpose.xlu0.b32.cont [2/16] %v6338, 128
        %6371 = vxpose.xlu0.b32.cont [3/16] %v6339, 128
        %6372 = vxpose.xlu0.b32.cont [4/16] %v6340, 128
        %6373 = vxpose.xlu0.b32.cont [5/16] %v6341, 128
        %6374 = vxpose.xlu0.b32.cont [6/16] %v6342, 128
        %6375 = vxpose.xlu0.b32.cont [7/16] %v6343, 128
        %6376 = vxpose.xlu0.b32.cont [8/16] %v6344, 128
        %6377 = vxpose.xlu0.b32.cont [9/16] %v6345, 128
        %6378 = vxpose.xlu0.b32.cont [10/16] %v6346, 128
        %6379 = vxpose.xlu0.b32.cont [11/16] %v6347, 128
        %6380 = vxpose.xlu0.b32.cont [12/16] %v6348, 128
        %6381 = vxpose.xlu0.b32.cont [13/16] %v6349, 128
        %6382 = vxpose.xlu0.b32.cont [14/16] %v6350, 128
        %6383 = vxpose.xlu0.b32.cont [15/16] %v6351, 128
        %6384 = vxpose.xlu0.b32.end [16/16] %v6352, 128
        %v6385 = vpop.trf.xlu0
        %v6386 = vpop.trf.xlu0
        %v6387 = vpop.trf.xlu0
        %v6388 = vpop.trf.xlu0
        %v6389 = vpop.trf.xlu0
        %v6390 = vpop.trf.xlu0
        %v6391 = vpop.trf.xlu0
        %v6392 = vpop.trf.xlu0
        %v6393 = vpop.trf.xlu0
        %v6394 = vpop.trf.xlu0
        %v6395 = vpop.trf.xlu0
        %v6396 = vpop.trf.xlu0
        %v6397 = vpop.trf.xlu0
        %v6398 = vpop.trf.xlu0
        %v6399 = vpop.trf.xlu0
        %v6400 = vpop.trf.xlu0
        %6401 = vxpose.xlu0.b32.start [1/16] %v6353, 128
        %6402 = vxpose.xlu0.b32.cont [2/16] %v6354, 128
        %6403 = vxpose.xlu0.b32.cont [3/16] %v6355, 128
        %6404 = vxpose.xlu0.b32.cont [4/16] %v6356, 128
        %6405 = vxpose.xlu0.b32.cont [5/16] %v6357, 128
        %6406 = vxpose.xlu0.b32.cont [6/16] %v6358, 128
        %6407 = vxpose.xlu0.b32.cont [7/16] %v6359, 128
        %6408 = vxpose.xlu0.b32.cont [8/16] %v6360, 128
        %6409 = vxpose.xlu0.b32.cont [9/16] %v6361, 128
        %6410 = vxpose.xlu0.b32.cont [10/16] %v6362, 128
        %6411 = vxpose.xlu0.b32.cont [11/16] %v6363, 128
        %6412 = vxpose.xlu0.b32.cont [12/16] %v6364, 128
        %6413 = vxpose.xlu0.b32.cont [13/16] %v6365, 128
        %6414 = vxpose.xlu0.b32.cont [14/16] %v6366, 128
        %6415 = vxpose.xlu0.b32.cont [15/16] %v6367, 128
        %6416 = vxpose.xlu0.b32.end [16/16] %v6368, 128
        %v6417 = vpop.trf.xlu0
        %v6418 = vpop.trf.xlu0
        %v6419 = vpop.trf.xlu0
        %v6420 = vpop.trf.xlu0
        %v6421 = vpop.trf.xlu0
        %v6422 = vpop.trf.xlu0
        %v6423 = vpop.trf.xlu0
        %v6424 = vpop.trf.xlu0
        %v6425 = vpop.trf.xlu0
        %v6426 = vpop.trf.xlu0
        %v6427 = vpop.trf.xlu0
        %v6428 = vpop.trf.xlu0
        %v6429 = vpop.trf.xlu0
        %v6430 = vpop.trf.xlu0
        %v6431 = vpop.trf.xlu0
        %v6432 = vpop.trf.xlu0
        %6433 = vst [vmem:[%s244] sm:$0xff] %v6385
        %6434 = vst [vmem:[%s244 + $0x8] sm:$0xff] %v6417
        %6435 = vst [vmem:[%s244 + $0x10] sm:$0xff] %v6386
        %6436 = vst [vmem:[%s244 + $0x18] sm:$0xff] %v6418
        %6437 = vst [vmem:[%s244 + $0x20] sm:$0xff] %v6387
        %6438 = vst [vmem:[%s244 + $0x28] sm:$0xff] %v6419
        %6439 = vst [vmem:[%s244 + $0x30] sm:$0xff] %v6388
        %6440 = vst [vmem:[%s244 + $0x38] sm:$0xff] %v6420
        %s6441 = sand.u32 %s159, 1
        %s6442 = scalar_lea.sflag [#allocation4], %s6441
        %s6443 = sand.u32 %s159, 1
        %s6444 = smul.addr %s6443, 64
        %s6445 = scalar_lea.vmem [#allocation3], %s6444
        // Predicated region
        $region45: #{tpu_custom_call.1} parent=43 // pred_check
          %p6446 = pneg %p169
        $region46: #{tpu_custom_call.1} parent=43 // pred_check_branch
          %6448 = sbr.rel (%p6446) target = $region48
        $region47: #{tpu_custom_call.1} parent=43 // pred_region
          %s6450 = ssub.s32 1024, 1024
          %6451 = vsyncadd %s6442, %s6450
          %s6452 = smul.addr %s20, 8
          %s6453 = smul.addr %s6452, 128
          %s6454 = scalar_lea.hbm %s6, %s6453
          %s6455 = sshll.u32 %s6445, 4
          %s6456 = int_to_ptr.vmem [resolvable:$true] %s6455
          %6461 = dma.vmem_to_hbm [thread:$0]  %s6456, 1024, %s6454, %s6442, 256, 256, 16
        $region48: #{tpu_custom_call.1} parent=43 // pred_fallthru
          _
      $region44: #{tpu_custom_call.1} parent=5 // pred_fallthru
        _
      %p6462 = scmp.le.s32.totalorder 2, %s15
      // Predicated region
      $region49: #{tpu_custom_call.1} parent=5 // pred_check
        %p6463 = pneg %p6462
      $region50: #{tpu_custom_call.1} parent=5 // pred_check_branch
        %6465 = sbr.rel (%p6463) target = $region52
      $region51: #{tpu_custom_call.1} parent=5 // pred_region
        %s6466 = ssub.s32 %s15, 2
        // Predicated region
        $region53: #{tpu_custom_call.1} parent=51 // pred_check
          %p6467 = pneg %p175
        $region54: #{tpu_custom_call.1} parent=51 // pred_check_branch
          %6469 = sbr.rel (%p6467) target = $region56
        $region55: #{tpu_custom_call.1} parent=51 // pred_region
          %s6470 = sand.u32 %s160, 1
          %s6471 = scalar_lea.sflag [#allocation4], %s6470
          %s6472 = sand.u32 %s160, 1
          %s6473 = smul.addr %s6472, 64
          %s6474 = scalar_lea.vmem [#allocation3], %s6473
          %6475 = dma.done %s6471, 1024
        $region56: #{tpu_custom_call.1} parent=51 // pred_fallthru
          _
      $region52: #{tpu_custom_call.1} parent=5 // pred_fallthru
        _
    $region6: #{tpu_custom_call.1} parent=1 // loop_footer
      %s19 = sadd.s32 1, %s15
    $region7: #{tpu_custom_call.1} parent=1 // loop_footer_branch
      %14 = sbr.rel target = $region3
    $region8: #{tpu_custom_call.1} parent=1 // loop_exit
      _
    %6476 = vsyncpa [#allocation4], 1
    %s6477 = scalar_lea.sflag [#allocation4], 1
    %6478 = vsyncpa %s6477, 1

</llo_original>
